<compile_context>
chip_gen: v7x
topology: tpu7x:2x2x1
jax: 0.10.0
libtpu: 0.0.40
codegen_flags: <defaults>
</compile_context>

<pallas_src>
import functools

import jax
import jax.numpy as jnp
import numpy as np
from jax.experimental import pallas as pl
from jax.experimental.pallas import tpu as pltpu

_LANE = 128
_NODE_PAD = 512                       # keeps tiles in the 85%+ DMA regime
_VMEM_CAP = 48 * 1024 * 1024          # stays under v7x's 64 MiB physical VMEM


def _round_up(x, m):
    return ((x + m - 1) // m) * m


def _tiles(npad):
    """Asymmetric adjacency tiles: moderate row block, large reduction block."""
    tm = 256                                           # npad % 256 == 0 always
    tk = max(t for t in (2048, 1024, 512) if npad % t == 0)
    return tm, tk


def _pad_to(a, shape):
    return jnp.pad(a, [(0, t - s) for s, t in zip(a.shape, shape)])


def _compiler_params(semantics, vmem_bytes):
    limit = int(min(_VMEM_CAP, max(vmem_bytes + (4 << 20), 16 << 20)))
    return pltpu.CompilerParams(dimension_semantics=semantics,
                                vmem_limit_bytes=limit)


# ----------------------------------------------------------------------------
# Kernels
# ----------------------------------------------------------------------------
def _gcn_layer_kernel(adj_ref, feat_ref, w_ref, b_ref, out_ref, acc_ref,
                      *, tk, apply_relu):
    """One GCNConv: out = act((Â @ X) @ W + b); k is the node-reduction axis."""
    k = pl.program_id(1)

    @pl.when(k == 0)
    def _():
        acc_ref[...] = jnp.zeros_like(acc_ref)

    # Â tile (TM, TK) bf16 x resident feature rows (TK, F) bf16 -> f32 acc.
    start = pl.multiple_of(k * tk, tk)
    acc_ref[...] += jnp.dot(adj_ref[...], feat_ref[pl.ds(start, tk), :],
                            preferred_element_type=jnp.float32)

    @pl.when(k == pl.num_programs(1) - 1)
    def _():
        # Finalize once per row block: bf16 x bf16 -> f32 on the MXU.
        y = jnp.dot(acc_ref[...].astype(jnp.bfloat16), w_ref[...],
                    preferred_element_type=jnp.float32) + b_ref[...]
        if apply_relu:
            y = jnp.maximum(y, 0.0)
        out_ref[...] = y.astype(out_ref.dtype)


def _gcn_dual_kernel(adj_ref, feat_ref, w_ref, b_ref, xr_ref, hr_ref, acc_ref,
                     *, tk, fa):
    """Fused attr-decoder layer 1 + struct decoder: one shared Â @ h pass,
    one 256-wide finalize matmul on the concatenated weight."""
    k = pl.program_id(1)

    @pl.when(k == 0)
    def _():
        acc_ref[...] = jnp.zeros_like(acc_ref)

    start = pl.multiple_of(k * tk, tk)
    acc_ref[...] += jnp.dot(adj_ref[...], feat_ref[pl.ds(start, tk), :],
                            preferred_element_type=jnp.float32)

    @pl.when(k == pl.num_programs(1) - 1)
    def _():
        y = jnp.dot(acc_ref[...].astype(jnp.bfloat16), w_ref[...],
                    preferred_element_type=jnp.float32) + b_ref[...]
        xr_ref[...] = jnp.maximum(y[:, :fa], 0.0).astype(xr_ref.dtype)
        hr_ref[...] = y[:, fa:].astype(hr_ref.dtype)


def _gram_kernel(hi_ref, hj_ref, s_ref):
    """s block (i, j) = hr_i @ hr_j.T  (bf16 x bf16 -> f32 on the MXU)."""
    s_ref[...] = jax.lax.dot_general(
        hi_ref[...], hj_ref[...],
        dimension_numbers=(((1,), (1,)), ((), ())),
        preferred_element_type=jnp.float32)


# ----------------------------------------------------------------------------
# pallas_call wrappers
# ----------------------------------------------------------------------------
def _gcn_layer(adj_bf16, feat_bf16, w_bf16, b_f32, *, apply_relu, out_dtype):
    npad = adj_bf16.shape[0]
    f_in = feat_bf16.shape[1]
    f_out = w_bf16.shape[1]
    out_bytes = jnp.dtype(out_dtype).itemsize
    tm, tk = _tiles(npad)
    gi, gk = npad // tm, npad // tk

    kernel = functools.partial(_gcn_layer_kernel, tk=tk, apply_relu=apply_relu)
    flops = 2 * npad * npad * f_in + 2 * npad * f_in * f_out
    bytes_acc = (2 * npad * npad                # Â bf16, streamed once
                 + 2 * npad * f_in              # resident features, read once
                 + out_bytes * npad * f_out     # output
                 + 2 * f_in * f_out + 4 * f_out)
    vmem = (2 * tm * tk * 2                     # adj double buffer
            + 2 * npad * f_in * 2               # resident feat buffers
            + 2 * tm * f_out * out_bytes        # output buffers
            + tm * f_in * 4                     # acc scratch
            + 2 * (f_in * f_out * 2 + f_out * 4))

    return pl.pallas_call(
        kernel,
        out_shape=jax.ShapeDtypeStruct((npad, f_out), out_dtype),
        grid_spec=pltpu.PrefetchScalarGridSpec(
            num_scalar_prefetch=0,
            grid=(gi, gk),
            in_specs=[
                pl.BlockSpec((tm, tk), lambda i, k: (i, k)),       # Â tile
                pl.BlockSpec((npad, f_in), lambda i, k: (0, 0)),   # feat resident
                pl.BlockSpec((f_in, f_out), lambda i, k: (0, 0)),  # W resident
                pl.BlockSpec((1, f_out), lambda i, k: (0, 0)),     # b resident
            ],
            out_specs=pl.BlockSpec((tm, f_out), lambda i, k: (i, 0)),
            scratch_shapes=[pltpu.VMEM((tm, f_in), jnp.float32)],
        ),
        compiler_params=_compiler_params(("parallel", "arbitrary"), vmem),
        cost_estimate=pl.CostEstimate(flops=int(flops), transcendentals=0,
                                      bytes_accessed=int(bytes_acc)),
    )(adj_bf16, feat_bf16, w_bf16, b_f32)


def _gcn_dual(adj_bf16, feat_bf16, w_dual_bf16, b_dual_f32, *, fa):
    npad = adj_bf16.shape[0]
    f_in = feat_bf16.shape[1]
    f_tot = w_dual_bf16.shape[1]
    fs = f_tot - fa
    tm, tk = _tiles(npad)
    gi, gk = npad // tm, npad // tk

    kernel = functools.partial(_gcn_dual_kernel, tk=tk, fa=fa)
    flops = 2 * npad * npad * f_in + 2 * npad * f_in * f_tot
    bytes_acc = (2 * npad * npad + 2 * npad * f_in + 2 * npad * f_tot
                 + 2 * f_in * f_tot + 4 * f_tot)
    vmem = (2 * tm * tk * 2 + 2 * npad * f_in * 2
            + 2 * tm * f_tot * 2 + tm * f_in * 4
            + 2 * (f_in * f_tot * 2 + f_tot * 4))

    return pl.pallas_call(
        kernel,
        out_shape=(jax.ShapeDtypeStruct((npad, fa), jnp.bfloat16),
                   jax.ShapeDtypeStruct((npad, fs), jnp.bfloat16)),
        grid_spec=pltpu.PrefetchScalarGridSpec(
            num_scalar_prefetch=0,
            grid=(gi, gk),
            in_specs=[
                pl.BlockSpec((tm, tk), lambda i, k: (i, k)),
                pl.BlockSpec((npad, f_in), lambda i, k: (0, 0)),
                pl.BlockSpec((f_in, f_tot), lambda i, k: (0, 0)),
                pl.BlockSpec((1, f_tot), lambda i, k: (0, 0)),
            ],
            out_specs=(pl.BlockSpec((tm, fa), lambda i, k: (i, 0)),
                       pl.BlockSpec((tm, fs), lambda i, k: (i, 0))),
            scratch_shapes=[pltpu.VMEM((tm, f_in), jnp.float32)],
        ),
        compiler_params=_compiler_params(("parallel", "arbitrary"), vmem),
        cost_estimate=pl.CostEstimate(flops=int(flops), transcendentals=0,
                                      bytes_accessed=int(bytes_acc)),
    )(adj_bf16, feat_bf16, w_dual_bf16, b_dual_f32)


def _gram(hr_bf16):
    npad, f = hr_bf16.shape
    tm, _ = _tiles(npad)
    nblk = npad // tm
    flops = 2 * npad * npad * f
    bytes_acc = 2 * 2 * npad * f * nblk + 4 * npad * npad
    vmem = 2 * 2 * tm * f * 2 + 2 * tm * tm * 4

    return pl.pallas_call(
        _gram_kernel,
        out_shape=jax.ShapeDtypeStruct((npad, npad), jnp.float32),
        grid_spec=pltpu.PrefetchScalarGridSpec(
            num_scalar_prefetch=0,
            grid=(nblk, nblk),
            in_specs=[
                pl.BlockSpec((tm, f), lambda i, j: (i, 0)),
                pl.BlockSpec((tm, f), lambda i, j: (j, 0)),
            ],
            out_specs=pl.BlockSpec((tm, tm), lambda i, j: (i, j)),
        ),
        compiler_params=_compiler_params(("parallel", "parallel"), vmem),
        cost_estimate=pl.CostEstimate(flops=int(flops), transcendentals=0,
                                      bytes_accessed=int(bytes_acc)),
    )(hr_bf16, hr_bf16)


# ----------------------------------------------------------------------------
# Model glue
# ----------------------------------------------------------------------------
def _normalized_adj_padded(edge_index, num_nodes, npad):
    """Dense Â = D^{-1/2}(A + I)D^{-1/2}, built directly at padded size and
    cast to bf16 once (padded rows/cols have degree 0 -> stay zero)."""
    a = jnp.zeros((npad, npad), jnp.float32)
    a = a.at[edge_index[0], edge_index[1]].set(1.0)
    idx = jnp.arange(num_nodes)
    a = a.at[idx, idx].set(1.0)                      # self-loops (real nodes only)
    deg = a.sum(axis=1)
    d_inv_sqrt = jnp.where(deg > 0, jax.lax.rsqrt(deg), 0.0)
    return (a * d_inv_sqrt[:, None] * d_inv_sqrt[None, :]).astype(jnp.bfloat16)


def init_conad_params(key, in_dim, hid_dim):
    """Glorot-style init for the 5 GCNConv layers of CONAD_Base (num_layers=4)."""
    shapes = [
        (in_dim, hid_dim),   # encoder layer 1
        (hid_dim, hid_dim),  # encoder layer 2
        (hid_dim, hid_dim),  # attr decoder layer 1
        (hid_dim, in_dim),   # attr decoder layer 2
        (hid_dim, in_dim),   # struct decoder layer 1
    ]
    params = []
    keys = jax.random.split(key, len(shapes))
    for k, (fin, fout) in zip(keys, shapes):
        limit = jnp.sqrt(6.0 / (fin + fout))
        w = jax.random.uniform(k, (fin, fout), jnp.float32, -limit, limit)
        b = jnp.zeros((1, fout), jnp.float32)
        params.append((w, b))
    return params


@jax.jit
def conad_forward(x, edge_index, params):
    n, in_dim = x.shape
    hid_dim = params[0][0].shape[1]

    npad = _round_up(n, _NODE_PAD)
    pad_in = _round_up(in_dim, _LANE)
    pad_hid = _round_up(hid_dim, _LANE)

    # Dense normalized adjacency (glue), built padded, bf16 for the MXU.
    # TODO(synk): for genuinely sparse graphs a block-sparse adjacency path
    # (scalar-prefetch block index list) would skip all-zero Â tiles.
    adj = _normalized_adj_padded(edge_index, n, npad)

    # Node features stream as bf16 end-to-end; accumulation stays f32.
    xp = _pad_to(x, (npad, pad_in)).astype(jnp.bfloat16)

    (w_e1, b_e1), (w_e2, b_e2), (w_a1, b_a1), (w_a2, b_a2), (w_s1, b_s1) = params
    w_e1 = _pad_to(w_e1, (pad_in, pad_hid)).astype(jnp.bfloat16)
    b_e1 = _pad_to(b_e1, (1, pad_hid))
    w_e2 = _pad_to(w_e2, (pad_hid, pad_hid)).astype(jnp.bfloat16)
    b_e2 = _pad_to(b_e2, (1, pad_hid))
    # attr-dec layer 1 and struct decoder share one Â@h pass; concatenate their
    # weights so the per-row-block finalize matmul is 256 lanes wide.
    w_dual = jnp.concatenate(
        [_pad_to(w_a1, (pad_hid, pad_hid)), _pad_to(w_s1, (pad_hid, pad_in))],
        axis=1).astype(jnp.bfloat16)
    b_dual = jnp.concatenate(
        [_pad_to(b_a1, (1, pad_hid)), _pad_to(b_s1, (1, pad_in))], axis=1)
    w_a2 = _pad_to(w_a2, (pad_hid, pad_in)).astype(jnp.bfloat16)
    b_a2 = _pad_to(b_a2, (1, pad_in))

    # shared_encoder: GCN(in -> hid) + ReLU, GCN(hid -> hid).
    # TODO(synk): dropout between layers is identity in eval mode, omitted.
    h = _gcn_layer(adj, xp, w_e1, b_e1, apply_relu=True, out_dtype=jnp.bfloat16)
    h = _gcn_layer(adj, h, w_e2, b_e2, apply_relu=False, out_dtype=jnp.bfloat16)

    # attr_decoder layer 1 + struct_decoder fused (shared Â @ h aggregation).
    xr, hr = _gcn_dual(adj, h, w_dual, b_dual, fa=pad_hid)

    # attr_decoder layer 2 (final attribute reconstruction in f32).
    x_rec = _gcn_layer(adj, xr, w_a2, b_a2, apply_relu=False,
                       out_dtype=jnp.float32)

    # s_ = h_ @ h_.T  (bf16 operands, f32 result).
    s = _gram(hr)

    return x_rec[:n, :in_dim], s[:n, :n]


def _reference_forward(x, edge_index, params):
    """Plain-JAX f32 reference for a numerical sanity check."""
    n = x.shape[0]
    a = jnp.zeros((n, n), jnp.float32)
    a = a.at[edge_index[0], edge_index[1]].set(1.0)
    idx = jnp.arange(n)
    a = a.at[idx, idx].set(1.0)
    deg = a.sum(axis=1)
    dis = jnp.where(deg > 0, jax.lax.rsqrt(deg), 0.0)
    adj = a * dis[:, None] * dis[None, :]
    (w_e1, b_e1), (w_e2, b_e2), (w_a1, b_a1), (w_a2, b_a2), (w_s1, b_s1) = params
    h = jax.nn.relu(adj @ (x @ w_e1) + b_e1)
    h = adj @ (h @ w_e2) + b_e2
    xr = jax.nn.relu(adj @ (h @ w_a1) + b_a1)
    xr = adj @ (xr @ w_a2) + b_a2
    hr = adj @ (h @ w_s1) + b_s1
    return xr, hr @ hr.T


if __name__ == "__main__":
    # Small deterministic problem consistent with CONAD_Base(in_dim, hid_dim,
    # num_layers=4, dropout, act=relu) applied to a graph with N nodes.
    N, IN_DIM, HID_DIM = 8, 16, 32

    key = jax.random.PRNGKey(0)
    kx, kp = jax.random.split(key)
    x = jax.random.normal(kx, (N, IN_DIM), jnp.float32)

    # Deterministic bidirectional ring graph, edge_index shape (2, 2N).
    src = jnp.arange(N, dtype=jnp.int32)
    dst = (src + 1) % N
    edge_index = jnp.stack(
        [jnp.concatenate([src, dst]), jnp.concatenate([dst, src])], axis=0)

    params = init_conad_params(kp, IN_DIM, HID_DIM)

    x_rec, s_rec = conad_forward(x, edge_index, params)
    jax.block_until_ready((x_rec, s_rec))

    assert x_rec.shape == (N, IN_DIM) and s_rec.shape == (N, N)

    # Numerical sanity check vs plain-JAX f32 reference (bf16 adjacency and
    # bf16 intermediate features => loose tolerance).
    x_ref, s_ref = _reference_forward(x, edge_index, params)
    np.testing.assert_allclose(np.asarray(x_rec), np.asarray(x_ref),
                               rtol=5e-2, atol=1e-1)
    np.testing.assert_allclose(np.asarray(s_rec), np.asarray(s_ref),
                               rtol=5e-2, atol=1e-1)

    print("KERNEL_OK")
</pallas_src>

<mosaic_0001>
module attributes {stable_mosaic.version = 11 : i64} {
  func.func @_gcn_layer_kernel(%arg0: i32, %arg1: i32, %arg2: memref<256x512xbf16, #tpu.memory_space<vmem>>, %arg3: memref<512x128xbf16, #tpu.memory_space<vmem>>, %arg4: memref<128x128xbf16, #tpu.memory_space<vmem>>, %arg5: memref<1x128xf32, #tpu.memory_space<vmem>>, %arg6: memref<256x128xbf16, #tpu.memory_space<vmem>>, %arg7: memref<256x128xf32, #tpu.memory_space<vmem>>) attributes {dimension_semantics = [#tpu.dimension_semantics<parallel>, #tpu.dimension_semantics<arbitrary>], iteration_bounds = array<i64: 2, 1>, scalar_prefetch = 0 : i64, scratch_operands = 1 : i64, tpu.core_type = #tpu.core_type<tc>, window_params = [{transform_indices = @transform_0, window_bounds = array<i64: 256, 512>}, {pipeline_mode = #tpu.pipeline_mode<synchronous>, transform_indices = @transform_1, window_bounds = array<i64: 512, 128>}, {pipeline_mode = #tpu.pipeline_mode<synchronous>, transform_indices = @transform_2, window_bounds = array<i64: 128, 128>}, {pipeline_mode = #tpu.pipeline_mode<synchronous>, transform_indices = @transform_3, window_bounds = array<i64: 1, 128>}, {transform_indices = @transform_4, window_bounds = array<i64: 256, 128>}]} {
    %c0_i32 = arith.constant 0 : i32
    %0 = arith.cmpi eq, %arg1, %c0_i32 : i32
    %1 = arith.extui %0 : i1 to i32
    %c0_i32_0 = arith.constant 0 : i32
    %2 = arith.cmpi ne, %1, %c0_i32_0 : i32
    scf.if %2 {
      %cst_9 = arith.constant 0.000000e+00 : f32
      %15 = vector.broadcast %cst_9 : f32 to vector<256x128xf32>
      %c0_10 = arith.constant 0 : index
      %c0_11 = arith.constant 0 : index
      %16 = vector.load %arg7[%c0_10, %c0_11] : memref<256x128xf32, #tpu.memory_space<vmem>>, vector<256x128xf32>
      tpu.vector_store %arg7[%c0_10, %c0_11], %15 {strides = array<i32>} : memref<256x128xf32, #tpu.memory_space<vmem>>, vector<256x128xf32>,
    } else {
    }
    %c512_i32 = arith.constant 512 : i32
    %3 = arith.muli %arg1, %c512_i32 : i32
    %4 = tpu.assume_multiple %3, 512 : i32
    %c0 = arith.constant 0 : index
    %c0_1 = arith.constant 0 : index
    %5 = vector.load %arg7[%c0, %c0_1] : memref<256x128xf32, #tpu.memory_space<vmem>>, vector<256x128xf32>
    %c0_2 = arith.constant 0 : index
    %c0_3 = arith.constant 0 : index
    %6 = vector.load %arg2[%c0_2, %c0_3] : memref<256x512xbf16, #tpu.memory_space<vmem>>, vector<256x512xbf16>
    %7 = arith.index_cast %4 : i32 to index
    %c0_4 = arith.constant 0 : index
    %8 = vector.load %arg3[%7, %c0_4] : memref<512x128xbf16, #tpu.memory_space<vmem>>, vector<512x128xbf16>
    %cst = arith.constant dense<0.000000e+00> : vector<256x128xf32>
    %9 = tpu.matmul %6, %8, %cst {dimension_numbers = #tpu.dot_dimension_numbers<[1], [0], [0], [1], [0, 0, 1, 1], [], []>} : vector<256x512xbf16>, vector<512x128xbf16>, vector<256x128xf32> -> vector<256x128xf32>
    %10 = arith.addf %5, %9 : vector<256x128xf32>
    %c0_5 = arith.constant 0 : index
    %c0_6 = arith.constant 0 : index
    %11 = vector.load %arg7[%c0_5, %c0_6] : memref<256x128xf32, #tpu.memory_space<vmem>>, vector<256x128xf32>
    tpu.vector_store %arg7[%c0_5, %c0_6], %10 {strides = array<i32>} : memref<256x128xf32, #tpu.memory_space<vmem>>, vector<256x128xf32>,
    %c0_i32_7 = arith.constant 0 : i32
    %12 = arith.cmpi eq, %arg1, %c0_i32_7 : i32
    %13 = arith.extui %12 : i1 to i32
    %c0_i32_8 = arith.constant 0 : i32
    %14 = arith.cmpi ne, %13, %c0_i32_8 : i32
    scf.if %14 {
      %c0_9 = arith.constant 0 : index
      %c0_10 = arith.constant 0 : index
      %15 = vector.load %arg7[%c0_9, %c0_10] : memref<256x128xf32, #tpu.memory_space<vmem>>, vector<256x128xf32>
      %16 = arith.truncf %15 : vector<256x128xf32> to vector<256x128xbf16>
      %c0_11 = arith.constant 0 : index
      %c0_12 = arith.constant 0 : index
      %17 = vector.load %arg4[%c0_11, %c0_12] : memref<128x128xbf16, #tpu.memory_space<vmem>>, vector<128x128xbf16>
      %cst_13 = arith.constant dense<0.000000e+00> : vector<256x128xf32>
      %18 = tpu.matmul %16, %17, %cst_13 {dimension_numbers = #tpu.dot_dimension_numbers<[1], [0], [0], [1], [0, 0, 1, 1], [], []>} : vector<256x128xbf16>, vector<128x128xbf16>, vector<256x128xf32> -> vector<256x128xf32>
      %c0_14 = arith.constant 0 : index
      %c0_15 = arith.constant 0 : index
      %19 = vector.load %arg5[%c0_14, %c0_15] : memref<1x128xf32, #tpu.memory_space<vmem>>, vector<1x128xf32>
      %20 = vector.broadcast %19 : vector<1x128xf32> to vector<256x128xf32>
      %21 = arith.addf %18, %20 : vector<256x128xf32>
      %cst_16 = arith.constant 0.000000e+00 : f32
      %22 = vector.broadcast %cst_16 : f32 to vector<256x128xf32>
      %23 = arith.maximumf %21, %22 : vector<256x128xf32>
      %24 = arith.truncf %23 : vector<256x128xf32> to vector<256x128xbf16>
      %c0_17 = arith.constant 0 : index
      %c0_18 = arith.constant 0 : index
      %25 = vector.load %arg6[%c0_17, %c0_18] : memref<256x128xbf16, #tpu.memory_space<vmem>>, vector<256x128xbf16>
      tpu.vector_store %arg6[%c0_17, %c0_18], %24 {strides = array<i32>} : memref<256x128xbf16, #tpu.memory_space<vmem>>, vector<256x128xbf16>,
    } else {
    }
    return
  }
  func.func @transform_0(%arg0: i32, %arg1: i32) -> (i32, i32) {
    %c0_i32 = arith.constant 0 : i32
    return %arg0, %arg1 : i32, i32
  }
  func.func @transform_1(%arg0: i32, %arg1: i32) -> (i32, i32) {
    %c0_i32 = arith.constant 0 : i32
    %c0_i32_0 = arith.constant 0 : i32
    %c0_i32_1 = arith.constant 0 : i32
    return %c0_i32, %c0_i32_0 : i32, i32
  }
  func.func @transform_2(%arg0: i32, %arg1: i32) -> (i32, i32) {
    %c0_i32 = arith.constant 0 : i32
    %c0_i32_0 = arith.constant 0 : i32
    %c0_i32_1 = arith.constant 0 : i32
    return %c0_i32, %c0_i32_0 : i32, i32
  }
  func.func @transform_3(%arg0: i32, %arg1: i32) -> (i32, i32) {
    %c0_i32 = arith.constant 0 : i32
    %c0_i32_0 = arith.constant 0 : i32
    %c0_i32_1 = arith.constant 0 : i32
    return %c0_i32, %c0_i32_0 : i32, i32
  }
  func.func @transform_4(%arg0: i32, %arg1: i32) -> (i32, i32) {
    %c0_i32 = arith.constant 0 : i32
    %c0_i32_0 = arith.constant 0 : i32
    return %arg0, %c0_i32 : i32, i32
  }
}

module attributes {stable_mosaic.version = 11 : i64} {
  func.func @_gcn_layer_kernel(%arg0: i32, %arg1: i32, %arg2: memref<256x512xbf16, #tpu.memory_space<vmem>>, %arg3: memref<512x128xbf16, #tpu.memory_space<vmem>>, %arg4: memref<128x128xbf16, #tpu.memory_space<vmem>>, %arg5: memref<1x128xf32, #tpu.memory_space<vmem>>, %arg6: memref<256x128xbf16, #tpu.memory_space<vmem>>, %arg7: memref<256x128xf32, #tpu.memory_space<vmem>>) attributes {dimension_semantics = [#tpu.dimension_semantics<parallel>, #tpu.dimension_semantics<arbitrary>], iteration_bounds = array<i64: 2, 1>, scalar_prefetch = 0 : i64, scratch_operands = 1 : i64, tpu.core_type = #tpu.core_type<tc>, window_params = [{transform_indices = @transform_0, window_bounds = array<i64: 256, 512>}, {pipeline_mode = #tpu.pipeline_mode<synchronous>, transform_indices = @transform_1, window_bounds = array<i64: 512, 128>}, {pipeline_mode = #tpu.pipeline_mode<synchronous>, transform_indices = @transform_2, window_bounds = array<i64: 128, 128>}, {pipeline_mode = #tpu.pipeline_mode<synchronous>, transform_indices = @transform_3, window_bounds = array<i64: 1, 128>}, {transform_indices = @transform_4, window_bounds = array<i64: 256, 128>}]} {
    %c0_i32 = arith.constant 0 : i32
    %0 = arith.cmpi eq, %arg1, %c0_i32 : i32
    %1 = arith.extui %0 : i1 to i32
    %c0_i32_0 = arith.constant 0 : i32
    %2 = arith.cmpi ne, %1, %c0_i32_0 : i32
    scf.if %2 {
      %cst_9 = arith.constant 0.000000e+00 : f32
      %15 = vector.broadcast %cst_9 : f32 to vector<256x128xf32>
      %c0_10 = arith.constant 0 : index
      %c0_11 = arith.constant 0 : index
      %16 = vector.load %arg7[%c0_10, %c0_11] : memref<256x128xf32, #tpu.memory_space<vmem>>, vector<256x128xf32>
      tpu.vector_store %arg7[%c0_10, %c0_11], %15 {strides = array<i32>} : memref<256x128xf32, #tpu.memory_space<vmem>>, vector<256x128xf32>,
    } else {
    }
    %c512_i32 = arith.constant 512 : i32
    %3 = arith.muli %arg1, %c512_i32 : i32
    %4 = tpu.assume_multiple %3, 512 : i32
    %c0 = arith.constant 0 : index
    %c0_1 = arith.constant 0 : index
    %5 = vector.load %arg7[%c0, %c0_1] : memref<256x128xf32, #tpu.memory_space<vmem>>, vector<256x128xf32>
    %c0_2 = arith.constant 0 : index
    %c0_3 = arith.constant 0 : index
    %6 = vector.load %arg2[%c0_2, %c0_3] : memref<256x512xbf16, #tpu.memory_space<vmem>>, vector<256x512xbf16>
    %7 = arith.index_cast %4 : i32 to index
    %c0_4 = arith.constant 0 : index
    %8 = vector.load %arg3[%7, %c0_4] : memref<512x128xbf16, #tpu.memory_space<vmem>>, vector<512x128xbf16>
    %cst = arith.constant dense<0.000000e+00> : vector<256x128xf32>
    %9 = tpu.matmul %6, %8, %cst {dimension_numbers = #tpu.dot_dimension_numbers<[1], [0], [0], [1], [0, 0, 1, 1], [], []>} : vector<256x512xbf16>, vector<512x128xbf16>, vector<256x128xf32> -> vector<256x128xf32>
    %10 = arith.addf %5, %9 : vector<256x128xf32>
    %c0_5 = arith.constant 0 : index
    %c0_6 = arith.constant 0 : index
    %11 = vector.load %arg7[%c0_5, %c0_6] : memref<256x128xf32, #tpu.memory_space<vmem>>, vector<256x128xf32>
    tpu.vector_store %arg7[%c0_5, %c0_6], %10 {strides = array<i32>} : memref<256x128xf32, #tpu.memory_space<vmem>>, vector<256x128xf32>,
    %c0_i32_7 = arith.constant 0 : i32
    %12 = arith.cmpi eq, %arg1, %c0_i32_7 : i32
    %13 = arith.extui %12 : i1 to i32
    %c0_i32_8 = arith.constant 0 : i32
    %14 = arith.cmpi ne, %13, %c0_i32_8 : i32
    scf.if %14 {
      %c0_9 = arith.constant 0 : index
      %c0_10 = arith.constant 0 : index
      %15 = vector.load %arg7[%c0_9, %c0_10] : memref<256x128xf32, #tpu.memory_space<vmem>>, vector<256x128xf32>
      %16 = arith.truncf %15 : vector<256x128xf32> to vector<256x128xbf16>
      %c0_11 = arith.constant 0 : index
      %c0_12 = arith.constant 0 : index
      %17 = vector.load %arg4[%c0_11, %c0_12] : memref<128x128xbf16, #tpu.memory_space<vmem>>, vector<128x128xbf16>
      %cst_13 = arith.constant dense<0.000000e+00> : vector<256x128xf32>
      %18 = tpu.matmul %16, %17, %cst_13 {dimension_numbers = #tpu.dot_dimension_numbers<[1], [0], [0], [1], [0, 0, 1, 1], [], []>} : vector<256x128xbf16>, vector<128x128xbf16>, vector<256x128xf32> -> vector<256x128xf32>
      %c0_14 = arith.constant 0 : index
      %c0_15 = arith.constant 0 : index
      %19 = vector.load %arg5[%c0_14, %c0_15] : memref<1x128xf32, #tpu.memory_space<vmem>>, vector<1x128xf32>
      %20 = vector.broadcast %19 : vector<1x128xf32> to vector<256x128xf32>
      %21 = arith.addf %18, %20 : vector<256x128xf32>
      %22 = arith.truncf %21 : vector<256x128xf32> to vector<256x128xbf16>
      %c0_16 = arith.constant 0 : index
      %c0_17 = arith.constant 0 : index
      %23 = vector.load %arg6[%c0_16, %c0_17] : memref<256x128xbf16, #tpu.memory_space<vmem>>, vector<256x128xbf16>
      tpu.vector_store %arg6[%c0_16, %c0_17], %22 {strides = array<i32>} : memref<256x128xbf16, #tpu.memory_space<vmem>>, vector<256x128xbf16>,
    } else {
    }
    return
  }
  func.func @transform_0(%arg0: i32, %arg1: i32) -> (i32, i32) {
    %c0_i32 = arith.constant 0 : i32
    return %arg0, %arg1 : i32, i32
  }
  func.func @transform_1(%arg0: i32, %arg1: i32) -> (i32, i32) {
    %c0_i32 = arith.constant 0 : i32
    %c0_i32_0 = arith.constant 0 : i32
    %c0_i32_1 = arith.constant 0 : i32
    return %c0_i32, %c0_i32_0 : i32, i32
  }
  func.func @transform_2(%arg0: i32, %arg1: i32) -> (i32, i32) {
    %c0_i32 = arith.constant 0 : i32
    %c0_i32_0 = arith.constant 0 : i32
    %c0_i32_1 = arith.constant 0 : i32
    return %c0_i32, %c0_i32_0 : i32, i32
  }
  func.func @transform_3(%arg0: i32, %arg1: i32) -> (i32, i32) {
    %c0_i32 = arith.constant 0 : i32
    %c0_i32_0 = arith.constant 0 : i32
    %c0_i32_1 = arith.constant 0 : i32
    return %c0_i32, %c0_i32_0 : i32, i32
  }
  func.func @transform_4(%arg0: i32, %arg1: i32) -> (i32, i32) {
    %c0_i32 = arith.constant 0 : i32
    %c0_i32_0 = arith.constant 0 : i32
    return %arg0, %c0_i32 : i32, i32
  }
}

module attributes {stable_mosaic.version = 11 : i64} {
  func.func @_gcn_dual_kernel(%arg0: i32, %arg1: i32, %arg2: memref<256x512xbf16, #tpu.memory_space<vmem>>, %arg3: memref<512x128xbf16, #tpu.memory_space<vmem>>, %arg4: memref<128x256xbf16, #tpu.memory_space<vmem>>, %arg5: memref<1x256xf32, #tpu.memory_space<vmem>>, %arg6: memref<256x128xbf16, #tpu.memory_space<vmem>>, %arg7: memref<256x128xbf16, #tpu.memory_space<vmem>>, %arg8: memref<256x128xf32, #tpu.memory_space<vmem>>) attributes {dimension_semantics = [#tpu.dimension_semantics<parallel>, #tpu.dimension_semantics<arbitrary>], iteration_bounds = array<i64: 2, 1>, scalar_prefetch = 0 : i64, scratch_operands = 1 : i64, tpu.core_type = #tpu.core_type<tc>, window_params = [{transform_indices = @transform_0, window_bounds = array<i64: 256, 512>}, {pipeline_mode = #tpu.pipeline_mode<synchronous>, transform_indices = @transform_1, window_bounds = array<i64: 512, 128>}, {pipeline_mode = #tpu.pipeline_mode<synchronous>, transform_indices = @transform_2, window_bounds = array<i64: 128, 256>}, {pipeline_mode = #tpu.pipeline_mode<synchronous>, transform_indices = @transform_3, window_bounds = array<i64: 1, 256>}, {transform_indices = @transform_4, window_bounds = array<i64: 256, 128>}, {transform_indices = @transform_5, window_bounds = array<i64: 256, 128>}]} {
    %c0_i32 = arith.constant 0 : i32
    %0 = arith.cmpi eq, %arg1, %c0_i32 : i32
    %1 = arith.extui %0 : i1 to i32
    %c0_i32_0 = arith.constant 0 : i32
    %2 = arith.cmpi ne, %1, %c0_i32_0 : i32
    scf.if %2 {
      %cst_9 = arith.constant 0.000000e+00 : f32
      %15 = vector.broadcast %cst_9 : f32 to vector<256x128xf32>
      %c0_10 = arith.constant 0 : index
      %c0_11 = arith.constant 0 : index
      %16 = vector.load %arg8[%c0_10, %c0_11] : memref<256x128xf32, #tpu.memory_space<vmem>>, vector<256x128xf32>
      tpu.vector_store %arg8[%c0_10, %c0_11], %15 {strides = array<i32>} : memref<256x128xf32, #tpu.memory_space<vmem>>, vector<256x128xf32>,
    } else {
    }
    %c512_i32 = arith.constant 512 : i32
    %3 = arith.muli %arg1, %c512_i32 : i32
    %4 = tpu.assume_multiple %3, 512 : i32
    %c0 = arith.constant 0 : index
    %c0_1 = arith.constant 0 : index
    %5 = vector.load %arg8[%c0, %c0_1] : memref<256x128xf32, #tpu.memory_space<vmem>>, vector<256x128xf32>
    %c0_2 = arith.constant 0 : index
    %c0_3 = arith.constant 0 : index
    %6 = vector.load %arg2[%c0_2, %c0_3] : memref<256x512xbf16, #tpu.memory_space<vmem>>, vector<256x512xbf16>
    %7 = arith.index_cast %4 : i32 to index
    %c0_4 = arith.constant 0 : index
    %8 = vector.load %arg3[%7, %c0_4] : memref<512x128xbf16, #tpu.memory_space<vmem>>, vector<512x128xbf16>
    %cst = arith.constant dense<0.000000e+00> : vector<256x128xf32>
    %9 = tpu.matmul %6, %8, %cst {dimension_numbers = #tpu.dot_dimension_numbers<[1], [0], [0], [1], [0, 0, 1, 1], [], []>} : vector<256x512xbf16>, vector<512x128xbf16>, vector<256x128xf32> -> vector<256x128xf32>
    %10 = arith.addf %5, %9 : vector<256x128xf32>
    %c0_5 = arith.constant 0 : index
    %c0_6 = arith.constant 0 : index
    %11 = vector.load %arg8[%c0_5, %c0_6] : memref<256x128xf32, #tpu.memory_space<vmem>>, vector<256x128xf32>
    tpu.vector_store %arg8[%c0_5, %c0_6], %10 {strides = array<i32>} : memref<256x128xf32, #tpu.memory_space<vmem>>, vector<256x128xf32>,
    %c0_i32_7 = arith.constant 0 : i32
    %12 = arith.cmpi eq, %arg1, %c0_i32_7 : i32
    %13 = arith.extui %12 : i1 to i32
    %c0_i32_8 = arith.constant 0 : i32
    %14 = arith.cmpi ne, %13, %c0_i32_8 : i32
    scf.if %14 {
      %c0_9 = arith.constant 0 : index
      %c0_10 = arith.constant 0 : index
      %15 = vector.load %arg8[%c0_9, %c0_10] : memref<256x128xf32, #tpu.memory_space<vmem>>, vector<256x128xf32>
      %16 = arith.truncf %15 : vector<256x128xf32> to vector<256x128xbf16>
      %c0_11 = arith.constant 0 : index
      %c0_12 = arith.constant 0 : index
      %17 = vector.load %arg4[%c0_11, %c0_12] : memref<128x256xbf16, #tpu.memory_space<vmem>>, vector<128x256xbf16>
      %cst_13 = arith.constant dense<0.000000e+00> : vector<256x256xf32>
      %18 = tpu.matmul %16, %17, %cst_13 {dimension_numbers = #tpu.dot_dimension_numbers<[1], [0], [0], [1], [0, 0, 1, 1], [], []>} : vector<256x128xbf16>, vector<128x256xbf16>, vector<256x256xf32> -> vector<256x256xf32>
      %c0_14 = arith.constant 0 : index
      %c0_15 = arith.constant 0 : index
      %19 = vector.load %arg5[%c0_14, %c0_15] : memref<1x256xf32, #tpu.memory_space<vmem>>, vector<1x256xf32>
      %20 = vector.broadcast %19 : vector<1x256xf32> to vector<256x256xf32>
      %21 = arith.addf %18, %20 : vector<256x256xf32>
      %22 = vector.extract_strided_slice %21 {offsets = [0, 0], sizes = [256, 128], strides = [1, 1]} : vector<256x256xf32> to vector<256x128xf32>
      %cst_16 = arith.constant 0.000000e+00 : f32
      %23 = vector.broadcast %cst_16 : f32 to vector<256x128xf32>
      %24 = arith.maximumf %22, %23 : vector<256x128xf32>
      %25 = arith.truncf %24 : vector<256x128xf32> to vector<256x128xbf16>
      %c0_17 = arith.constant 0 : index
      %c0_18 = arith.constant 0 : index
      %26 = vector.load %arg6[%c0_17, %c0_18] : memref<256x128xbf16, #tpu.memory_space<vmem>>, vector<256x128xbf16>
      tpu.vector_store %arg6[%c0_17, %c0_18], %25 {strides = array<i32>} : memref<256x128xbf16, #tpu.memory_space<vmem>>, vector<256x128xbf16>,
      %27 = vector.extract_strided_slice %21 {offsets = [0, 128], sizes = [256, 128], strides = [1, 1]} : vector<256x256xf32> to vector<256x128xf32>
      %28 = arith.truncf %27 : vector<256x128xf32> to vector<256x128xbf16>
      %c0_19 = arith.constant 0 : index
      %c0_20 = arith.constant 0 : index
      %29 = vector.load %arg7[%c0_19, %c0_20] : memref<256x128xbf16, #tpu.memory_space<vmem>>, vector<256x128xbf16>
      tpu.vector_store %arg7[%c0_19, %c0_20], %28 {strides = array<i32>} : memref<256x128xbf16, #tpu.memory_space<vmem>>, vector<256x128xbf16>,
    } else {
    }
    return
  }
  func.func @transform_0(%arg0: i32, %arg1: i32) -> (i32, i32) {
    %c0_i32 = arith.constant 0 : i32
    return %arg0, %arg1 : i32, i32
  }
  func.func @transform_1(%arg0: i32, %arg1: i32) -> (i32, i32) {
    %c0_i32 = arith.constant 0 : i32
    %c0_i32_0 = arith.constant 0 : i32
    %c0_i32_1 = arith.constant 0 : i32
    return %c0_i32, %c0_i32_0 : i32, i32
  }
  func.func @transform_2(%arg0: i32, %arg1: i32) -> (i32, i32) {
    %c0_i32 = arith.constant 0 : i32
    %c0_i32_0 = arith.constant 0 : i32
    %c0_i32_1 = arith.constant 0 : i32
    return %c0_i32, %c0_i32_0 : i32, i32
  }
  func.func @transform_3(%arg0: i32, %arg1: i32) -> (i32, i32) {
    %c0_i32 = arith.constant 0 : i32
    %c0_i32_0 = arith.constant 0 : i32
    %c0_i32_1 = arith.constant 0 : i32
    return %c0_i32, %c0_i32_0 : i32, i32
  }
  func.func @transform_4(%arg0: i32, %arg1: i32) -> (i32, i32) {
    %c0_i32 = arith.constant 0 : i32
    %c0_i32_0 = arith.constant 0 : i32
    return %arg0, %c0_i32 : i32, i32
  }
  func.func @transform_5(%arg0: i32, %arg1: i32) -> (i32, i32) {
    %c0_i32 = arith.constant 0 : i32
    %c0_i32_0 = arith.constant 0 : i32
    return %arg0, %c0_i32 : i32, i32
  }
}

module attributes {stable_mosaic.version = 11 : i64} {
  func.func @_gcn_layer_kernel(%arg0: i32, %arg1: i32, %arg2: memref<256x512xbf16, #tpu.memory_space<vmem>>, %arg3: memref<512x128xbf16, #tpu.memory_space<vmem>>, %arg4: memref<128x128xbf16, #tpu.memory_space<vmem>>, %arg5: memref<1x128xf32, #tpu.memory_space<vmem>>, %arg6: memref<256x128xf32, #tpu.memory_space<vmem>>, %arg7: memref<256x128xf32, #tpu.memory_space<vmem>>) attributes {dimension_semantics = [#tpu.dimension_semantics<parallel>, #tpu.dimension_semantics<arbitrary>], iteration_bounds = array<i64: 2, 1>, scalar_prefetch = 0 : i64, scratch_operands = 1 : i64, tpu.core_type = #tpu.core_type<tc>, window_params = [{transform_indices = @transform_0, window_bounds = array<i64: 256, 512>}, {pipeline_mode = #tpu.pipeline_mode<synchronous>, transform_indices = @transform_1, window_bounds = array<i64: 512, 128>}, {pipeline_mode = #tpu.pipeline_mode<synchronous>, transform_indices = @transform_2, window_bounds = array<i64: 128, 128>}, {pipeline_mode = #tpu.pipeline_mode<synchronous>, transform_indices = @transform_3, window_bounds = array<i64: 1, 128>}, {transform_indices = @transform_4, window_bounds = array<i64: 256, 128>}]} {
    %c0_i32 = arith.constant 0 : i32
    %0 = arith.cmpi eq, %arg1, %c0_i32 : i32
    %1 = arith.extui %0 : i1 to i32
    %c0_i32_0 = arith.constant 0 : i32
    %2 = arith.cmpi ne, %1, %c0_i32_0 : i32
    scf.if %2 {
      %cst_9 = arith.constant 0.000000e+00 : f32
      %15 = vector.broadcast %cst_9 : f32 to vector<256x128xf32>
      %c0_10 = arith.constant 0 : index
      %c0_11 = arith.constant 0 : index
      %16 = vector.load %arg7[%c0_10, %c0_11] : memref<256x128xf32, #tpu.memory_space<vmem>>, vector<256x128xf32>
      tpu.vector_store %arg7[%c0_10, %c0_11], %15 {strides = array<i32>} : memref<256x128xf32, #tpu.memory_space<vmem>>, vector<256x128xf32>,
    } else {
    }
    %c512_i32 = arith.constant 512 : i32
    %3 = arith.muli %arg1, %c512_i32 : i32
    %4 = tpu.assume_multiple %3, 512 : i32
    %c0 = arith.constant 0 : index
    %c0_1 = arith.constant 0 : index
    %5 = vector.load %arg7[%c0, %c0_1] : memref<256x128xf32, #tpu.memory_space<vmem>>, vector<256x128xf32>
    %c0_2 = arith.constant 0 : index
    %c0_3 = arith.constant 0 : index
    %6 = vector.load %arg2[%c0_2, %c0_3] : memref<256x512xbf16, #tpu.memory_space<vmem>>, vector<256x512xbf16>
    %7 = arith.index_cast %4 : i32 to index
    %c0_4 = arith.constant 0 : index
    %8 = vector.load %arg3[%7, %c0_4] : memref<512x128xbf16, #tpu.memory_space<vmem>>, vector<512x128xbf16>
    %cst = arith.constant dense<0.000000e+00> : vector<256x128xf32>
    %9 = tpu.matmul %6, %8, %cst {dimension_numbers = #tpu.dot_dimension_numbers<[1], [0], [0], [1], [0, 0, 1, 1], [], []>} : vector<256x512xbf16>, vector<512x128xbf16>, vector<256x128xf32> -> vector<256x128xf32>
    %10 = arith.addf %5, %9 : vector<256x128xf32>
    %c0_5 = arith.constant 0 : index
    %c0_6 = arith.constant 0 : index
    %11 = vector.load %arg7[%c0_5, %c0_6] : memref<256x128xf32, #tpu.memory_space<vmem>>, vector<256x128xf32>
    tpu.vector_store %arg7[%c0_5, %c0_6], %10 {strides = array<i32>} : memref<256x128xf32, #tpu.memory_space<vmem>>, vector<256x128xf32>,
    %c0_i32_7 = arith.constant 0 : i32
    %12 = arith.cmpi eq, %arg1, %c0_i32_7 : i32
    %13 = arith.extui %12 : i1 to i32
    %c0_i32_8 = arith.constant 0 : i32
    %14 = arith.cmpi ne, %13, %c0_i32_8 : i32
    scf.if %14 {
      %c0_9 = arith.constant 0 : index
      %c0_10 = arith.constant 0 : index
      %15 = vector.load %arg7[%c0_9, %c0_10] : memref<256x128xf32, #tpu.memory_space<vmem>>, vector<256x128xf32>
      %16 = arith.truncf %15 : vector<256x128xf32> to vector<256x128xbf16>
      %c0_11 = arith.constant 0 : index
      %c0_12 = arith.constant 0 : index
      %17 = vector.load %arg4[%c0_11, %c0_12] : memref<128x128xbf16, #tpu.memory_space<vmem>>, vector<128x128xbf16>
      %cst_13 = arith.constant dense<0.000000e+00> : vector<256x128xf32>
      %18 = tpu.matmul %16, %17, %cst_13 {dimension_numbers = #tpu.dot_dimension_numbers<[1], [0], [0], [1], [0, 0, 1, 1], [], []>} : vector<256x128xbf16>, vector<128x128xbf16>, vector<256x128xf32> -> vector<256x128xf32>
      %c0_14 = arith.constant 0 : index
      %c0_15 = arith.constant 0 : index
      %19 = vector.load %arg5[%c0_14, %c0_15] : memref<1x128xf32, #tpu.memory_space<vmem>>, vector<1x128xf32>
      %20 = vector.broadcast %19 : vector<1x128xf32> to vector<256x128xf32>
      %21 = arith.addf %18, %20 : vector<256x128xf32>
      %c0_16 = arith.constant 0 : index
      %c0_17 = arith.constant 0 : index
      %22 = vector.load %arg6[%c0_16, %c0_17] : memref<256x128xf32, #tpu.memory_space<vmem>>, vector<256x128xf32>
      tpu.vector_store %arg6[%c0_16, %c0_17], %21 {strides = array<i32>} : memref<256x128xf32, #tpu.memory_space<vmem>>, vector<256x128xf32>,
    } else {
    }
    return
  }
  func.func @transform_0(%arg0: i32, %arg1: i32) -> (i32, i32) {
    %c0_i32 = arith.constant 0 : i32
    return %arg0, %arg1 : i32, i32
  }
  func.func @transform_1(%arg0: i32, %arg1: i32) -> (i32, i32) {
    %c0_i32 = arith.constant 0 : i32
    %c0_i32_0 = arith.constant 0 : i32
    %c0_i32_1 = arith.constant 0 : i32
    return %c0_i32, %c0_i32_0 : i32, i32
  }
  func.func @transform_2(%arg0: i32, %arg1: i32) -> (i32, i32) {
    %c0_i32 = arith.constant 0 : i32
    %c0_i32_0 = arith.constant 0 : i32
    %c0_i32_1 = arith.constant 0 : i32
    return %c0_i32, %c0_i32_0 : i32, i32
  }
  func.func @transform_3(%arg0: i32, %arg1: i32) -> (i32, i32) {
    %c0_i32 = arith.constant 0 : i32
    %c0_i32_0 = arith.constant 0 : i32
    %c0_i32_1 = arith.constant 0 : i32
    return %c0_i32, %c0_i32_0 : i32, i32
  }
  func.func @transform_4(%arg0: i32, %arg1: i32) -> (i32, i32) {
    %c0_i32 = arith.constant 0 : i32
    %c0_i32_0 = arith.constant 0 : i32
    return %arg0, %c0_i32 : i32, i32
  }
}

module attributes {stable_mosaic.version = 11 : i64} {
  func.func @_gram_kernel(%arg0: i32, %arg1: i32, %arg2: memref<256x128xbf16, #tpu.memory_space<vmem>>, %arg3: memref<256x128xbf16, #tpu.memory_space<vmem>>, %arg4: memref<256x256xf32, #tpu.memory_space<vmem>>) attributes {dimension_semantics = [#tpu.dimension_semantics<parallel>, #tpu.dimension_semantics<parallel>], iteration_bounds = array<i64: 2, 2>, scalar_prefetch = 0 : i64, scratch_operands = 0 : i64, tpu.core_type = #tpu.core_type<tc>, window_params = [{transform_indices = @transform_0, window_bounds = array<i64: 256, 128>}, {transform_indices = @transform_1, window_bounds = array<i64: 256, 128>}, {transform_indices = @transform_2, window_bounds = array<i64: 256, 256>}]} {
    %c0 = arith.constant 0 : index
    %c0_0 = arith.constant 0 : index
    %0 = vector.load %arg2[%c0, %c0_0] : memref<256x128xbf16, #tpu.memory_space<vmem>>, vector<256x128xbf16>
    %c0_1 = arith.constant 0 : index
    %c0_2 = arith.constant 0 : index
    %1 = vector.load %arg3[%c0_1, %c0_2] : memref<256x128xbf16, #tpu.memory_space<vmem>>, vector<256x128xbf16>
    %cst = arith.constant dense<0.000000e+00> : vector<256x256xf32>
    %2 = tpu.matmul %0, %1, %cst {dimension_numbers = #tpu.dot_dimension_numbers<[1], [1], [0], [0], [0, 0, 1, 0], [], []>} : vector<256x128xbf16>, vector<256x128xbf16>, vector<256x256xf32> -> vector<256x256xf32>
    %c0_3 = arith.constant 0 : index
    %c0_4 = arith.constant 0 : index
    %3 = vector.load %arg4[%c0_3, %c0_4] : memref<256x256xf32, #tpu.memory_space<vmem>>, vector<256x256xf32>
    tpu.vector_store %arg4[%c0_3, %c0_4], %2 {strides = array<i32>} : memref<256x256xf32, #tpu.memory_space<vmem>>, vector<256x256xf32>,
    return
  }
  func.func @transform_0(%arg0: i32, %arg1: i32) -> (i32, i32) {
    %c0_i32 = arith.constant 0 : i32
    %c0_i32_0 = arith.constant 0 : i32
    return %arg0, %c0_i32 : i32, i32
  }
  func.func @transform_1(%arg0: i32, %arg1: i32) -> (i32, i32) {
    %c0_i32 = arith.constant 0 : i32
    %c0_i32_0 = arith.constant 0 : i32
    return %arg1, %c0_i32 : i32, i32
  }
  func.func @transform_2(%arg0: i32, %arg1: i32) -> (i32, i32) {
    %c0_i32 = arith.constant 0 : i32
    return %arg0, %arg1 : i32, i32
  }
}

</mosaic_0001>

<llo_original>
// kernel: conad_forward.6
$region0: #{conad_forward.6}
  #allocation0 [shape = 'u32[]', space=smem, size = 0x4, offset = 0x4, fixed_abs, tag = 'smem constant byte address 0x4 - core index']
  #allocation1 [shape = 'u32[144,128]{1,0:T(1,128)}', space=vmem, size = 0x12000, scoped, tag = 'internal scratch']
  #allocation2 [shape = 'f32[256,128]{1,0:T(8,128)}', space=vmem, size = 0x20000, scoped, tag = 'scratch operand']
  %s0 = inlined_call_operand.vmem [shape: bf16[512,512], index: 0, kind: input, shape index: {}]
  %s1 = inlined_call_operand.vmem [shape: bf16[512,128], index: 1, kind: input, shape index: {}]
  %s2 = inlined_call_operand.vmem [shape: bf16[128,128], index: 2, kind: input, shape index: {}]
  %s3 = inlined_call_operand.vmem [shape: f32[1,128], index: 3, kind: input, shape index: {}]
  %s4 = inlined_call_operand.vmem [shape: bf16[512,128], index: 4, kind: output, shape index: {}]
  %s5 = sld [smem:[#allocation0]]
  $region57: #{conad_forward.6} parent=0
    _
  %s7 = ssub.s32 1, %s5
  %s8 = scalar_select 0, %s7, %s5
  loop: start=0, step=1, limit=4
  $region2: #{conad_forward.6} parent=0 // loop_pre_header
    _
  $region3: #{conad_forward.6} parent=0 // loop_header
    %s10 = sphi 0, %s14
    %p11 = scmp.ge.s32.totalorder %s10, 4
    %s17 = sphi 0, %s29
    %s18 = sphi 0, %s25
    %s19 = sphi 0, %s17
    %s20 = sphi 0, %s18
    %s21 = sphi 0, %s19
    %s22 = sphi 0, %s20
    %s34 = sphi 0, %s36
    %s37 = sphi 0, %s34
    %s38 = sphi 0, %s37
    %s54 = sphi 0, %s38
    %s58 = sphi 0, %s58
    %s60 = sphi 0, %s58
    %s61 = sphi 0, %s60
    %s75 = sphi 0, %s61
    %s79 = sphi 0, %s79
    %s81 = sphi 0, %s79
    %s82 = sphi 0, %s81
    %s96 = sphi 0, %s82
    %s100 = sphi 0, %s100
    %s102 = sphi 0, %s100
    %s103 = sphi 0, %s102
    %s117 = sphi 0, %s103
    %s123 = sphi 0, %s125
    %s126 = sphi 0, %s123
    %s127 = sphi 0, %s126
    %s143 = sphi 0, %s127
  $region4: #{conad_forward.6} parent=0 // loop_header_branch
    %13 = sbr.rel (%p11) target = $region8
  $region5: #{conad_forward.6} parent=0 // loop_body
    %s15 = ssub.s32 %s10, 1
    %s16 = ssub.s32 %s10, 2
    %s23 = sadd.s32 1, %s18
    %p24 = scmp.ge.s32.totalorder %s23, 1
    %s25 = scalar_select %p24, 0, %s23
    %s26 = sadd.s32 1, %s17
    %s27 = scalar_select %p24, %s26, %s17
    %p28 = scmp.ge.s32.totalorder %s27, 2
    %s29 = scalar_select %p28, 0, %s27
    %s30 = ssub.s32 %s17, %s29
    %s31 = ssub.s32 %s18, %s25
    %s32 = sor.u32 %s30, %s31
    %p33 = scmp.eq.s32.totalorder %s32, 0
    %s35 = sadd.s32 %s34, 1
    %s36 = scalar_select %p33, %s34, %s35
    %p39 = pneg %p33
    %p40 = scmp.eq.s32.totalorder %s10, 1
    %p41 = por %p39, %p40
    %p42 = scmp.ne.s32.totalorder %s34, %s37
    %p43 = scmp.eq.s32.totalorder %s10, 0
    %p44 = por %p42, %p43
    %p45 = scmp.ne.s32.totalorder %s34, %s37
    %p46 = scmp.eq.s32.totalorder %s15, 1
    %p47 = por %p45, %p46
    %p48 = scmp.ne.s32.totalorder %s37, %s38
    %p49 = scmp.eq.s32.totalorder %s15, 0
    %p50 = por %p48, %p49
    %p51 = scmp.ne.s32.totalorder %s37, %s38
    %p52 = scmp.eq.s32.totalorder %s16, 1
    %p53 = por %p51, %p52
    %p55 = scmp.ne.s32.totalorder %s38, %s54
    %p56 = scmp.eq.s32.totalorder %s16, 0
    %p57 = por %p55, %p56
    %s59 = sadd.s32 %s58, 1
    %p62 = scmp.eq.s32.totalorder %s10, 1
    %p63 = scmp.ne.s32.totalorder %s58, %s60
    %p64 = scmp.eq.s32.totalorder %s10, 0
    %p65 = por %p63, %p64
    %p66 = scmp.ne.s32.totalorder %s58, %s60
    %p67 = scmp.eq.s32.totalorder %s15, 1
    %p68 = por %p66, %p67
    %p69 = scmp.ne.s32.totalorder %s60, %s61
    %p70 = scmp.eq.s32.totalorder %s15, 0
    %p71 = por %p69, %p70
    %p72 = scmp.ne.s32.totalorder %s60, %s61
    %p73 = scmp.eq.s32.totalorder %s16, 1
    %p74 = por %p72, %p73
    %p76 = scmp.ne.s32.totalorder %s61, %s75
    %p77 = scmp.eq.s32.totalorder %s16, 0
    %p78 = por %p76, %p77
    %s80 = sadd.s32 %s79, 1
    %p83 = scmp.eq.s32.totalorder %s10, 1
    %p84 = scmp.ne.s32.totalorder %s79, %s81
    %p85 = scmp.eq.s32.totalorder %s10, 0
    %p86 = por %p84, %p85
    %p87 = scmp.ne.s32.totalorder %s79, %s81
    %p88 = scmp.eq.s32.totalorder %s15, 1
    %p89 = por %p87, %p88
    %p90 = scmp.ne.s32.totalorder %s81, %s82
    %p91 = scmp.eq.s32.totalorder %s15, 0
    %p92 = por %p90, %p91
    %p93 = scmp.ne.s32.totalorder %s81, %s82
    %p94 = scmp.eq.s32.totalorder %s16, 1
    %p95 = por %p93, %p94
    %p97 = scmp.ne.s32.totalorder %s82, %s96
    %p98 = scmp.eq.s32.totalorder %s16, 0
    %p99 = por %p97, %p98
    %s101 = sadd.s32 %s100, 1
    %p104 = scmp.eq.s32.totalorder %s10, 1
    %p105 = scmp.ne.s32.totalorder %s100, %s102
    %p106 = scmp.eq.s32.totalorder %s10, 0
    %p107 = por %p105, %p106
    %p108 = scmp.ne.s32.totalorder %s100, %s102
    %p109 = scmp.eq.s32.totalorder %s15, 1
    %p110 = por %p108, %p109
    %p111 = scmp.ne.s32.totalorder %s102, %s103
    %p112 = scmp.eq.s32.totalorder %s15, 0
    %p113 = por %p111, %p112
    %p114 = scmp.ne.s32.totalorder %s102, %s103
    %p115 = scmp.eq.s32.totalorder %s16, 1
    %p116 = por %p114, %p115
    %p118 = scmp.ne.s32.totalorder %s103, %s117
    %p119 = scmp.eq.s32.totalorder %s16, 0
    %p120 = por %p118, %p119
    %s121 = ssub.s32 %s17, %s29
    %p122 = scmp.eq.s32.totalorder %s121, 0
    %s124 = sadd.s32 %s123, 1
    %s125 = scalar_select %p122, %s123, %s124
    %p128 = pneg %p122
    %p129 = scmp.eq.s32.totalorder %s10, 1
    %p130 = por %p128, %p129
    %p131 = scmp.ne.s32.totalorder %s123, %s126
    %p132 = scmp.eq.s32.totalorder %s10, 0
    %p133 = por %p131, %p132
    %p134 = scmp.ne.s32.totalorder %s123, %s126
    %p135 = scmp.eq.s32.totalorder %s15, 1
    %p136 = por %p134, %p135
    %p137 = scmp.ne.s32.totalorder %s126, %s127
    %p138 = scmp.eq.s32.totalorder %s15, 0
    %p139 = por %p137, %p138
    %p140 = scmp.ne.s32.totalorder %s126, %s127
    %p141 = scmp.eq.s32.totalorder %s16, 1
    %p142 = por %p140, %p141
    %p144 = scmp.ne.s32.totalorder %s127, %s143
    %p145 = scmp.eq.s32.totalorder %s16, 0
    %p146 = por %p144, %p145
    %p147 = scmp.le.s32.totalorder 1, %s10
    %p148 = scmp.lt.s32.totalorder %s10, 3
    %p149 = pnand %p147, %p148
    %p150 = pneg %p149
    // Predicated region
    $region9: #{conad_forward.6} parent=5 // pred_check
      _
    $region10: #{conad_forward.6} parent=5 // pred_check_branch
      %152 = sbr.rel (%p149) target = $region12
    $region11: #{conad_forward.6} parent=5 // pred_region
      %s153 = ssub.s32 %s10, 1
      // Predicated region
      $region13: #{conad_forward.6} parent=11 // pred_check
        %p154 = pneg %p71
      $region14: #{conad_forward.6} parent=11 // pred_check_branch
        %156 = sbr.rel (%p154) target = $region16
      $region15: #{conad_forward.6} parent=11 // pred_region
        _
      $region16: #{conad_forward.6} parent=11 // pred_fallthru
        _
      // Predicated region
      $region17: #{conad_forward.6} parent=11 // pred_check
        %p157 = pneg %p92
      $region18: #{conad_forward.6} parent=11 // pred_check_branch
        %159 = sbr.rel (%p157) target = $region20
      $region19: #{conad_forward.6} parent=11 // pred_region
        _
      $region20: #{conad_forward.6} parent=11 // pred_fallthru
        _
      // Predicated region
      $region21: #{conad_forward.6} parent=11 // pred_check
        %p160 = pneg %p113
      $region22: #{conad_forward.6} parent=11 // pred_check_branch
        %162 = sbr.rel (%p160) target = $region24
      $region23: #{conad_forward.6} parent=11 // pred_region
        _
      $region24: #{conad_forward.6} parent=11 // pred_fallthru
        _
    $region12: #{conad_forward.6} parent=5 // pred_fallthru
      _
    %p163 = scmp.lt.s32.totalorder %s10, 2
    // Predicated region
    $region25: #{conad_forward.6} parent=5 // pred_check
      %p164 = pneg %p163
    $region26: #{conad_forward.6} parent=5 // pred_check_branch
      %166 = sbr.rel (%p164) target = $region28
    $region27: #{conad_forward.6} parent=5 // pred_region
      // Predicated region
      $region29: #{conad_forward.6} parent=27 // pred_check
        %p167 = pneg %p44
      $region30: #{conad_forward.6} parent=27 // pred_check_branch
        %169 = sbr.rel (%p167) target = $region32
      $region31: #{conad_forward.6} parent=27 // pred_region
        %s170 = smul.u32 32, %s17
        %s171 = smul.u32 4, %s18
        %p172 = scmp.lt.s32.totalorder %s170, 63
        %s173 = scalar_select %p172, %s170, 63
        %p174 = scmp.lt.s32.totalorder %s171, 3
        %s175 = scalar_select %p174, %s171, 3
        %s176 = smul.addr %s173, 4
        %s177 = sadd.s32 %s175, %s176
        %s178 = smul.addr %s177, 4
        %s179 = scalar_lea.vmem %s0, %s178
        %s180 = smul.u32 32, %s17
        %s181 = smul.u32 4, %s18
      $region32: #{conad_forward.6} parent=27 // pred_fallthru
        _
    $region28: #{conad_forward.6} parent=5 // pred_fallthru
      _
    %p182 = scmp.le.s32.totalorder 1, %s10
    %p183 = scmp.lt.s32.totalorder %s10, 3
    %p184 = pnand %p182, %p183
    %p185 = pneg %p184
    // Predicated region
    $region33: #{conad_forward.6} parent=5 // pred_check
      _
    $region34: #{conad_forward.6} parent=5 // pred_check_branch
      %187 = sbr.rel (%p184) target = $region36
    $region35: #{conad_forward.6} parent=5 // pred_region
      %s188 = ssub.s32 %s10, 1
      %s189 = smul.u32 32, %s19
      %s190 = smul.u32 4, %s20
      %p191 = scmp.lt.s32.totalorder %s189, 63
      %s192 = scalar_select %p191, %s189, 63
      %p193 = scmp.lt.s32.totalorder %s190, 3
      %s194 = scalar_select %p193, %s190, 3
      %s195 = smul.addr %s192, 4
      %s196 = sadd.s32 %s194, %s195
      %s197 = smul.addr %s196, 4
      %s198 = scalar_lea.vmem %s0, %s197
      %p199 = pneg %p50
      %p200 = pneg %p47
      %p201 = pneg %p71
      %p202 = pneg %p68
      %p203 = pneg %p92
      %p204 = pneg %p89
      %p205 = pneg %p113
      %p206 = pneg %p110
      %p207 = pneg %p139
      %p208 = pneg %p136
      %s209 = smul.u32 32, %s19
      %p210 = scmp.lt.s32.totalorder %s209, 63
      %s211 = scalar_select %p210, %s209, 63
      %s212 = smul.addr %s211, 4
      %s213 = scalar_lea.vmem %s4, %s212
      %s214 = smul.u32 32, %s19
      %s215 = smul.u32 4, %s20
      %p216 = scmp.lt.s32.totalorder %s214, 63
      %s217 = scalar_select %p216, %s214, 63
      %p218 = scmp.lt.s32.totalorder %s215, 3
      %s219 = scalar_select %p218, %s215, 3
      %s220 = smul.addr %s217, 4
      %s221 = sadd.s32 %s219, %s220
      %s222 = smul.addr %s221, 4
      %s223 = scalar_lea.vmem %s0, %s222
      %s224 = smul.u32 32, %s19
      %s225 = smul.u32 4, %s20
      %s226 = smul.u32 32, %s19
      %p227 = scmp.lt.s32.totalorder %s226, 63
      %s228 = scalar_select %p227, %s226, 63
      %s229 = smul.addr %s228, 4
      %s230 = scalar_lea.vmem %s4, %s229
      %s231 = smul.u32 32, %s19
      %p233 = scmp.eq.s32.totalorder %s20, 0
      // Predicated region
      $region37: #{conad_forward.6} parent=35 // pred_check
        %p234 = pneg %p233
      $region38: #{conad_forward.6} parent=35 // pred_check_branch
        %236 = sbr.rel (%p234) target = $region40
      $region39: #{conad_forward.6} parent=35 // pred_region
        %237 = vst [vmem:[#allocation2] sm:$0xff] 0.0
        %238 = vst [vmem:[#allocation2 + $0x8] sm:$0xff] 0.0
        %239 = vst [vmem:[#allocation2 + $0x10] sm:$0xff] 0.0
        %240 = vst [vmem:[#allocation2 + $0x18] sm:$0xff] 0.0
        %241 = vst [vmem:[#allocation2 + $0x20] sm:$0xff] 0.0
        %242 = vst [vmem:[#allocation2 + $0x28] sm:$0xff] 0.0
        %243 = vst [vmem:[#allocation2 + $0x30] sm:$0xff] 0.0
        %244 = vst [vmem:[#allocation2 + $0x38] sm:$0xff] 0.0
        %245 = vst [vmem:[#allocation2 + $0x40] sm:$0xff] 0.0
        %246 = vst [vmem:[#allocation2 + $0x48] sm:$0xff] 0.0
        %247 = vst [vmem:[#allocation2 + $0x50] sm:$0xff] 0.0
        %248 = vst [vmem:[#allocation2 + $0x58] sm:$0xff] 0.0
        %249 = vst [vmem:[#allocation2 + $0x60] sm:$0xff] 0.0
        %250 = vst [vmem:[#allocation2 + $0x68] sm:$0xff] 0.0
        %251 = vst [vmem:[#allocation2 + $0x70] sm:$0xff] 0.0
        %252 = vst [vmem:[#allocation2 + $0x78] sm:$0xff] 0.0
        %253 = vst [vmem:[#allocation2 + $0x80] sm:$0xff] 0.0
        %254 = vst [vmem:[#allocation2 + $0x88] sm:$0xff] 0.0
        %255 = vst [vmem:[#allocation2 + $0x90] sm:$0xff] 0.0
        %256 = vst [vmem:[#allocation2 + $0x98] sm:$0xff] 0.0
        %257 = vst [vmem:[#allocation2 + $0xa0] sm:$0xff] 0.0
        %258 = vst [vmem:[#allocation2 + $0xa8] sm:$0xff] 0.0
        %259 = vst [vmem:[#allocation2 + $0xb0] sm:$0xff] 0.0
        %260 = vst [vmem:[#allocation2 + $0xb8] sm:$0xff] 0.0
        %261 = vst [vmem:[#allocation2 + $0xc0] sm:$0xff] 0.0
        %262 = vst [vmem:[#allocation2 + $0xc8] sm:$0xff] 0.0
        %263 = vst [vmem:[#allocation2 + $0xd0] sm:$0xff] 0.0
        %264 = vst [vmem:[#allocation2 + $0xd8] sm:$0xff] 0.0
        %265 = vst [vmem:[#allocation2 + $0xe0] sm:$0xff] 0.0
        %266 = vst [vmem:[#allocation2 + $0xe8] sm:$0xff] 0.0
        %267 = vst [vmem:[#allocation2 + $0xf0] sm:$0xff] 0.0
        %268 = vst [vmem:[#allocation2 + $0xf8] sm:$0xff] 0.0
      $region40: #{conad_forward.6} parent=35 // pred_fallthru
        _
      %s269 = smul.u32 %s20, 512
      %v270 = vld [vmem:[#allocation2] sm:$0xff]
      %v271 = vld [vmem:[#allocation2 + $0x8] sm:$0xff]
      %v272 = vld [vmem:[#allocation2 + $0x10] sm:$0xff]
      %v273 = vld [vmem:[#allocation2 + $0x18] sm:$0xff]
      %v274 = vld [vmem:[#allocation2 + $0x20] sm:$0xff]
      %v275 = vld [vmem:[#allocation2 + $0x28] sm:$0xff]
      %v276 = vld [vmem:[#allocation2 + $0x30] sm:$0xff]
      %v277 = vld [vmem:[#allocation2 + $0x38] sm:$0xff]
      %v278 = vld [vmem:[#allocation2 + $0x40] sm:$0xff]
      %v279 = vld [vmem:[#allocation2 + $0x48] sm:$0xff]
      %v280 = vld [vmem:[#allocation2 + $0x50] sm:$0xff]
      %v281 = vld [vmem:[#allocation2 + $0x58] sm:$0xff]
      %v282 = vld [vmem:[#allocation2 + $0x60] sm:$0xff]
      %v283 = vld [vmem:[#allocation2 + $0x68] sm:$0xff]
      %v284 = vld [vmem:[#allocation2 + $0x70] sm:$0xff]
      %v285 = vld [vmem:[#allocation2 + $0x78] sm:$0xff]
      %v286 = vld [vmem:[#allocation2 + $0x80] sm:$0xff]
      %v287 = vld [vmem:[#allocation2 + $0x88] sm:$0xff]
      %v288 = vld [vmem:[#allocation2 + $0x90] sm:$0xff]
      %v289 = vld [vmem:[#allocation2 + $0x98] sm:$0xff]
      %v290 = vld [vmem:[#allocation2 + $0xa0] sm:$0xff]
      %v291 = vld [vmem:[#allocation2 + $0xa8] sm:$0xff]
      %v292 = vld [vmem:[#allocation2 + $0xb0] sm:$0xff]
      %v293 = vld [vmem:[#allocation2 + $0xb8] sm:$0xff]
      %v294 = vld [vmem:[#allocation2 + $0xc0] sm:$0xff]
      %v295 = vld [vmem:[#allocation2 + $0xc8] sm:$0xff]
      %v296 = vld [vmem:[#allocation2 + $0xd0] sm:$0xff]
      %v297 = vld [vmem:[#allocation2 + $0xd8] sm:$0xff]
      %v298 = vld [vmem:[#allocation2 + $0xe0] sm:$0xff]
      %v299 = vld [vmem:[#allocation2 + $0xe8] sm:$0xff]
      %v300 = vld [vmem:[#allocation2 + $0xf0] sm:$0xff]
      %v301 = vld [vmem:[#allocation2 + $0xf8] sm:$0xff]
      %v302 = vld [vmem:[%s223] sm:$0xff]
      %v303 = vld [vmem:[%s223 + $0x8] sm:$0xff]
      %v304 = vld [vmem:[%s223 + $0x10] sm:$0xff]
      %v305 = vld [vmem:[%s223 + $0x18] sm:$0xff]
      %v306 = vld [vmem:[%s223 + $0x20] sm:$0xff]
      %v307 = vld [vmem:[%s223 + $0x28] sm:$0xff]
      %v308 = vld [vmem:[%s223 + $0x30] sm:$0xff]
      %v309 = vld [vmem:[%s223 + $0x38] sm:$0xff]
      %v310 = vld [vmem:[%s223 + $0x40] sm:$0xff]
      %v311 = vld [vmem:[%s223 + $0x48] sm:$0xff]
      %v312 = vld [vmem:[%s223 + $0x50] sm:$0xff]
      %v313 = vld [vmem:[%s223 + $0x58] sm:$0xff]
      %v314 = vld [vmem:[%s223 + $0x60] sm:$0xff]
      %v315 = vld [vmem:[%s223 + $0x68] sm:$0xff]
      %v316 = vld [vmem:[%s223 + $0x70] sm:$0xff]
      %v317 = vld [vmem:[%s223 + $0x78] sm:$0xff]
      %v318 = vld [vmem:[%s223 + $0x80] sm:$0xff]
      %v319 = vld [vmem:[%s223 + $0x88] sm:$0xff]
      %v320 = vld [vmem:[%s223 + $0x90] sm:$0xff]
      %v321 = vld [vmem:[%s223 + $0x98] sm:$0xff]
      %v322 = vld [vmem:[%s223 + $0xa0] sm:$0xff]
      %v323 = vld [vmem:[%s223 + $0xa8] sm:$0xff]
      %v324 = vld [vmem:[%s223 + $0xb0] sm:$0xff]
      %v325 = vld [vmem:[%s223 + $0xb8] sm:$0xff]
      %v326 = vld [vmem:[%s223 + $0xc0] sm:$0xff]
      %v327 = vld [vmem:[%s223 + $0xc8] sm:$0xff]
      %v328 = vld [vmem:[%s223 + $0xd0] sm:$0xff]
      %v329 = vld [vmem:[%s223 + $0xd8] sm:$0xff]
      %v330 = vld [vmem:[%s223 + $0xe0] sm:$0xff]
      %v331 = vld [vmem:[%s223 + $0xe8] sm:$0xff]
      %v332 = vld [vmem:[%s223 + $0xf0] sm:$0xff]
      %v333 = vld [vmem:[%s223 + $0xf8] sm:$0xff]
      %v334 = vld [vmem:[%s223 + $0x100] sm:$0xff]
      %v335 = vld [vmem:[%s223 + $0x108] sm:$0xff]
      %v336 = vld [vmem:[%s223 + $0x110] sm:$0xff]
      %v337 = vld [vmem:[%s223 + $0x118] sm:$0xff]
      %v338 = vld [vmem:[%s223 + $0x120] sm:$0xff]
      %v339 = vld [vmem:[%s223 + $0x128] sm:$0xff]
      %v340 = vld [vmem:[%s223 + $0x130] sm:$0xff]
      %v341 = vld [vmem:[%s223 + $0x138] sm:$0xff]
      %v342 = vld [vmem:[%s223 + $0x140] sm:$0xff]
      %v343 = vld [vmem:[%s223 + $0x148] sm:$0xff]
      %v344 = vld [vmem:[%s223 + $0x150] sm:$0xff]
      %v345 = vld [vmem:[%s223 + $0x158] sm:$0xff]
      %v346 = vld [vmem:[%s223 + $0x160] sm:$0xff]
      %v347 = vld [vmem:[%s223 + $0x168] sm:$0xff]
      %v348 = vld [vmem:[%s223 + $0x170] sm:$0xff]
      %v349 = vld [vmem:[%s223 + $0x178] sm:$0xff]
      %v350 = vld [vmem:[%s223 + $0x180] sm:$0xff]
      %v351 = vld [vmem:[%s223 + $0x188] sm:$0xff]
      %v352 = vld [vmem:[%s223 + $0x190] sm:$0xff]
      %v353 = vld [vmem:[%s223 + $0x198] sm:$0xff]
      %v354 = vld [vmem:[%s223 + $0x1a0] sm:$0xff]
      %v355 = vld [vmem:[%s223 + $0x1a8] sm:$0xff]
      %v356 = vld [vmem:[%s223 + $0x1b0] sm:$0xff]
      %v357 = vld [vmem:[%s223 + $0x1b8] sm:$0xff]
      %v358 = vld [vmem:[%s223 + $0x1c0] sm:$0xff]
      %v359 = vld [vmem:[%s223 + $0x1c8] sm:$0xff]
      %v360 = vld [vmem:[%s223 + $0x1d0] sm:$0xff]
      %v361 = vld [vmem:[%s223 + $0x1d8] sm:$0xff]
      %v362 = vld [vmem:[%s223 + $0x1e0] sm:$0xff]
      %v363 = vld [vmem:[%s223 + $0x1e8] sm:$0xff]
      %v364 = vld [vmem:[%s223 + $0x1f0] sm:$0xff]
      %v365 = vld [vmem:[%s223 + $0x1f8] sm:$0xff]
      %s366 = sshra.s32 %s269, 3
      %s367 = sand.u32 %s269, 7
      %s368 = smul.addr %s366, 4
      %s369 = scalar_lea.vmem %s1, %s368
      %v370 = vld [vmem:[%s369] sm:$0xf]
      %v371 = vld [vmem:[%s369 + $0x4] sm:$0xf]
      %v372 = vld [vmem:[%s369 + $0x8] sm:$0xf]
      %v373 = vld [vmem:[%s369 + $0xc] sm:$0xf]
      %v374 = vld [vmem:[%s369 + $0x10] sm:$0xf]
      %v375 = vld [vmem:[%s369 + $0x14] sm:$0xf]
      %v376 = vld [vmem:[%s369 + $0x18] sm:$0xf]
      %v377 = vld [vmem:[%s369 + $0x1c] sm:$0xf]
      %v378 = vld [vmem:[%s369 + $0x20] sm:$0xf]
      %v379 = vld [vmem:[%s369 + $0x24] sm:$0xf]
      %v380 = vld [vmem:[%s369 + $0x28] sm:$0xf]
      %v381 = vld [vmem:[%s369 + $0x2c] sm:$0xf]
      %v382 = vld [vmem:[%s369 + $0x30] sm:$0xf]
      %v383 = vld [vmem:[%s369 + $0x34] sm:$0xf]
      %v384 = vld [vmem:[%s369 + $0x38] sm:$0xf]
      %v385 = vld [vmem:[%s369 + $0x3c] sm:$0xf]
      %v386 = vld [vmem:[%s369 + $0x40] sm:$0xf]
      %v387 = vld [vmem:[%s369 + $0x44] sm:$0xf]
      %v388 = vld [vmem:[%s369 + $0x48] sm:$0xf]
      %v389 = vld [vmem:[%s369 + $0x4c] sm:$0xf]
      %v390 = vld [vmem:[%s369 + $0x50] sm:$0xf]
      %v391 = vld [vmem:[%s369 + $0x54] sm:$0xf]
      %v392 = vld [vmem:[%s369 + $0x58] sm:$0xf]
      %v393 = vld [vmem:[%s369 + $0x5c] sm:$0xf]
      %v394 = vld [vmem:[%s369 + $0x60] sm:$0xf]
      %v395 = vld [vmem:[%s369 + $0x64] sm:$0xf]
      %v396 = vld [vmem:[%s369 + $0x68] sm:$0xf]
      %v397 = vld [vmem:[%s369 + $0x6c] sm:$0xf]
      %v398 = vld [vmem:[%s369 + $0x70] sm:$0xf]
      %v399 = vld [vmem:[%s369 + $0x74] sm:$0xf]
      %v400 = vld [vmem:[%s369 + $0x78] sm:$0xf]
      %v401 = vld [vmem:[%s369 + $0x7c] sm:$0xf]
      %v402 = vld [vmem:[%s369 + $0x80] sm:$0xf]
      %v403 = vld [vmem:[%s369 + $0x84] sm:$0xf]
      %v404 = vld [vmem:[%s369 + $0x88] sm:$0xf]
      %v405 = vld [vmem:[%s369 + $0x8c] sm:$0xf]
      %v406 = vld [vmem:[%s369 + $0x90] sm:$0xf]
      %v407 = vld [vmem:[%s369 + $0x94] sm:$0xf]
      %v408 = vld [vmem:[%s369 + $0x98] sm:$0xf]
      %v409 = vld [vmem:[%s369 + $0x9c] sm:$0xf]
      %v410 = vld [vmem:[%s369 + $0xa0] sm:$0xf]
      %v411 = vld [vmem:[%s369 + $0xa4] sm:$0xf]
      %v412 = vld [vmem:[%s369 + $0xa8] sm:$0xf]
      %v413 = vld [vmem:[%s369 + $0xac] sm:$0xf]
      %v414 = vld [vmem:[%s369 + $0xb0] sm:$0xf]
      %v415 = vld [vmem:[%s369 + $0xb4] sm:$0xf]
      %v416 = vld [vmem:[%s369 + $0xb8] sm:$0xf]
      %v417 = vld [vmem:[%s369 + $0xbc] sm:$0xf]
      %v418 = vld [vmem:[%s369 + $0xc0] sm:$0xf]
      %v419 = vld [vmem:[%s369 + $0xc4] sm:$0xf]
      %v420 = vld [vmem:[%s369 + $0xc8] sm:$0xf]
      %v421 = vld [vmem:[%s369 + $0xcc] sm:$0xf]
      %v422 = vld [vmem:[%s369 + $0xd0] sm:$0xf]
      %v423 = vld [vmem:[%s369 + $0xd4] sm:$0xf]
      %v424 = vld [vmem:[%s369 + $0xd8] sm:$0xf]
      %v425 = vld [vmem:[%s369 + $0xdc] sm:$0xf]
      %v426 = vld [vmem:[%s369 + $0xe0] sm:$0xf]
      %v427 = vld [vmem:[%s369 + $0xe4] sm:$0xf]
      %v428 = vld [vmem:[%s369 + $0xe8] sm:$0xf]
      %v429 = vld [vmem:[%s369 + $0xec] sm:$0xf]
      %v430 = vld [vmem:[%s369 + $0xf0] sm:$0xf]
      %v431 = vld [vmem:[%s369 + $0xf4] sm:$0xf]
      %v432 = vld [vmem:[%s369 + $0xf8] sm:$0xf]
      %v433 = vld [vmem:[%s369 + $0xfc] sm:$0xf]
      %v498 = vunpack.c.l.b16 %v302
      %v499 = vunpack.c.h.b16 %v302
      %v500 = vunpack.c.l.b16 %v303
      %v501 = vunpack.c.h.b16 %v303
      %v502 = vunpack.c.l.b16 %v304
      %v503 = vunpack.c.h.b16 %v304
      %v504 = vunpack.c.l.b16 %v305
      %v505 = vunpack.c.h.b16 %v305
      %v506 = vunpack.c.l.b16 %v306
      %v507 = vunpack.c.h.b16 %v306
      %v508 = vunpack.c.l.b16 %v307
      %v509 = vunpack.c.h.b16 %v307
      %v510 = vunpack.c.l.b16 %v308
      %v511 = vunpack.c.h.b16 %v308
      %v512 = vunpack.c.l.b16 %v309
      %v513 = vunpack.c.h.b16 %v309
      %v514 = vunpack.c.l.b16 %v310
      %v515 = vunpack.c.h.b16 %v310
      %v516 = vunpack.c.l.b16 %v311
      %v517 = vunpack.c.h.b16 %v311
      %v518 = vunpack.c.l.b16 %v312
      %v519 = vunpack.c.h.b16 %v312
      %v520 = vunpack.c.l.b16 %v313
      %v521 = vunpack.c.h.b16 %v313
      %v522 = vunpack.c.l.b16 %v314
      %v523 = vunpack.c.h.b16 %v314
      %v524 = vunpack.c.l.b16 %v315
      %v525 = vunpack.c.h.b16 %v315
      %v526 = vunpack.c.l.b16 %v316
      %v527 = vunpack.c.h.b16 %v316
      %v528 = vunpack.c.l.b16 %v317
      %v529 = vunpack.c.h.b16 %v317
      %v530 = vunpack.c.l.b16 %v318
      %v531 = vunpack.c.h.b16 %v318
      %v532 = vunpack.c.l.b16 %v319
      %v533 = vunpack.c.h.b16 %v319
      %v534 = vunpack.c.l.b16 %v320
      %v535 = vunpack.c.h.b16 %v320
      %v536 = vunpack.c.l.b16 %v321
      %v537 = vunpack.c.h.b16 %v321
      %v538 = vunpack.c.l.b16 %v322
      %v539 = vunpack.c.h.b16 %v322
      %v540 = vunpack.c.l.b16 %v323
      %v541 = vunpack.c.h.b16 %v323
      %v542 = vunpack.c.l.b16 %v324
      %v543 = vunpack.c.h.b16 %v324
      %v544 = vunpack.c.l.b16 %v325
      %v545 = vunpack.c.h.b16 %v325
      %v546 = vunpack.c.l.b16 %v326
      %v547 = vunpack.c.h.b16 %v326
      %v548 = vunpack.c.l.b16 %v327
      %v549 = vunpack.c.h.b16 %v327
      %v550 = vunpack.c.l.b16 %v328
      %v551 = vunpack.c.h.b16 %v328
      %v552 = vunpack.c.l.b16 %v329
      %v553 = vunpack.c.h.b16 %v329
      %v554 = vunpack.c.l.b16 %v330
      %v555 = vunpack.c.h.b16 %v330
      %v556 = vunpack.c.l.b16 %v331
      %v557 = vunpack.c.h.b16 %v331
      %v558 = vunpack.c.l.b16 %v332
      %v559 = vunpack.c.h.b16 %v332
      %v560 = vunpack.c.l.b16 %v333
      %v561 = vunpack.c.h.b16 %v333
      %v562 = vunpack.c.l.b16 %v334
      %v563 = vunpack.c.h.b16 %v334
      %v564 = vunpack.c.l.b16 %v335
      %v565 = vunpack.c.h.b16 %v335
      %v566 = vunpack.c.l.b16 %v336
      %v567 = vunpack.c.h.b16 %v336
      %v568 = vunpack.c.l.b16 %v337
      %v569 = vunpack.c.h.b16 %v337
      %v570 = vunpack.c.l.b16 %v338
      %v571 = vunpack.c.h.b16 %v338
      %v572 = vunpack.c.l.b16 %v339
      %v573 = vunpack.c.h.b16 %v339
      %v574 = vunpack.c.l.b16 %v340
      %v575 = vunpack.c.h.b16 %v340
      %v576 = vunpack.c.l.b16 %v341
      %v577 = vunpack.c.h.b16 %v341
      %v578 = vunpack.c.l.b16 %v342
      %v579 = vunpack.c.h.b16 %v342
      %v580 = vunpack.c.l.b16 %v343
      %v581 = vunpack.c.h.b16 %v343
      %v582 = vunpack.c.l.b16 %v344
      %v583 = vunpack.c.h.b16 %v344
      %v584 = vunpack.c.l.b16 %v345
      %v585 = vunpack.c.h.b16 %v345
      %v586 = vunpack.c.l.b16 %v346
      %v587 = vunpack.c.h.b16 %v346
      %v588 = vunpack.c.l.b16 %v347
      %v589 = vunpack.c.h.b16 %v347
      %v590 = vunpack.c.l.b16 %v348
      %v591 = vunpack.c.h.b16 %v348
      %v592 = vunpack.c.l.b16 %v349
      %v593 = vunpack.c.h.b16 %v349
      %v594 = vunpack.c.l.b16 %v350
      %v595 = vunpack.c.h.b16 %v350
      %v596 = vunpack.c.l.b16 %v351
      %v597 = vunpack.c.h.b16 %v351
      %v598 = vunpack.c.l.b16 %v352
      %v599 = vunpack.c.h.b16 %v352
      %v600 = vunpack.c.l.b16 %v353
      %v601 = vunpack.c.h.b16 %v353
      %v602 = vunpack.c.l.b16 %v354
      %v603 = vunpack.c.h.b16 %v354
      %v604 = vunpack.c.l.b16 %v355
      %v605 = vunpack.c.h.b16 %v355
      %v606 = vunpack.c.l.b16 %v356
      %v607 = vunpack.c.h.b16 %v356
      %v608 = vunpack.c.l.b16 %v357
      %v609 = vunpack.c.h.b16 %v357
      %v610 = vunpack.c.l.b16 %v358
      %v611 = vunpack.c.h.b16 %v358
      %v612 = vunpack.c.l.b16 %v359
      %v613 = vunpack.c.h.b16 %v359
      %v614 = vunpack.c.l.b16 %v360
      %v615 = vunpack.c.h.b16 %v360
      %v616 = vunpack.c.l.b16 %v361
      %v617 = vunpack.c.h.b16 %v361
      %v618 = vunpack.c.l.b16 %v362
      %v619 = vunpack.c.h.b16 %v362
      %v620 = vunpack.c.l.b16 %v363
      %v621 = vunpack.c.h.b16 %v363
      %v622 = vunpack.c.l.b16 %v364
      %v623 = vunpack.c.h.b16 %v364
      %v624 = vunpack.c.l.b16 %v365
      %v625 = vunpack.c.h.b16 %v365
      %v626 = vpack.c.b16 %v502, %v498
      %v627 = vpack.c.b16 %v503, %v499
      %v628 = vpack.c.b16 %v504, %v500
      %v629 = vpack.c.b16 %v505, %v501
      %v630 = vpack.c.b16 %v510, %v506
      %v631 = vpack.c.b16 %v511, %v507
      %v632 = vpack.c.b16 %v512, %v508
      %v633 = vpack.c.b16 %v513, %v509
      %v634 = vpack.c.b16 %v518, %v514
      %v635 = vpack.c.b16 %v519, %v515
      %v636 = vpack.c.b16 %v520, %v516
      %v637 = vpack.c.b16 %v521, %v517
      %v638 = vpack.c.b16 %v526, %v522
      %v639 = vpack.c.b16 %v527, %v523
      %v640 = vpack.c.b16 %v528, %v524
      %v641 = vpack.c.b16 %v529, %v525
      %v642 = vpack.c.b16 %v534, %v530
      %v643 = vpack.c.b16 %v535, %v531
      %v644 = vpack.c.b16 %v536, %v532
      %v645 = vpack.c.b16 %v537, %v533
      %v646 = vpack.c.b16 %v542, %v538
      %v647 = vpack.c.b16 %v543, %v539
      %v648 = vpack.c.b16 %v544, %v540
      %v649 = vpack.c.b16 %v545, %v541
      %v650 = vpack.c.b16 %v550, %v546
      %v651 = vpack.c.b16 %v551, %v547
      %v652 = vpack.c.b16 %v552, %v548
      %v653 = vpack.c.b16 %v553, %v549
      %v654 = vpack.c.b16 %v558, %v554
      %v655 = vpack.c.b16 %v559, %v555
      %v656 = vpack.c.b16 %v560, %v556
      %v657 = vpack.c.b16 %v561, %v557
      %v658 = vpack.c.b16 %v566, %v562
      %v659 = vpack.c.b16 %v567, %v563
      %v660 = vpack.c.b16 %v568, %v564
      %v661 = vpack.c.b16 %v569, %v565
      %v662 = vpack.c.b16 %v574, %v570
      %v663 = vpack.c.b16 %v575, %v571
      %v664 = vpack.c.b16 %v576, %v572
      %v665 = vpack.c.b16 %v577, %v573
      %v666 = vpack.c.b16 %v582, %v578
      %v667 = vpack.c.b16 %v583, %v579
      %v668 = vpack.c.b16 %v584, %v580
      %v669 = vpack.c.b16 %v585, %v581
      %v670 = vpack.c.b16 %v590, %v586
      %v671 = vpack.c.b16 %v591, %v587
      %v672 = vpack.c.b16 %v592, %v588
      %v673 = vpack.c.b16 %v593, %v589
      %v674 = vpack.c.b16 %v598, %v594
      %v675 = vpack.c.b16 %v599, %v595
      %v676 = vpack.c.b16 %v600, %v596
      %v677 = vpack.c.b16 %v601, %v597
      %v678 = vpack.c.b16 %v606, %v602
      %v679 = vpack.c.b16 %v607, %v603
      %v680 = vpack.c.b16 %v608, %v604
      %v681 = vpack.c.b16 %v609, %v605
      %v682 = vpack.c.b16 %v614, %v610
      %v683 = vpack.c.b16 %v615, %v611
      %v684 = vpack.c.b16 %v616, %v612
      %v685 = vpack.c.b16 %v617, %v613
      %v686 = vpack.c.b16 %v622, %v618
      %v687 = vpack.c.b16 %v623, %v619
      %v688 = vpack.c.b16 %v624, %v620
      %v689 = vpack.c.b16 %v625, %v621
      %v818 = vunpack.c.l.b16 %v370
      %v819 = vunpack.c.l.b16 %v371
      %v820 = vunpack.c.l.b16 %v372
      %v821 = vunpack.c.l.b16 %v373
      %v822 = vunpack.c.l.b16 %v374
      %v823 = vunpack.c.l.b16 %v375
      %v824 = vunpack.c.l.b16 %v376
      %v825 = vunpack.c.l.b16 %v377
      %v826 = vunpack.c.l.b16 %v378
      %v827 = vunpack.c.l.b16 %v379
      %v828 = vunpack.c.l.b16 %v380
      %v829 = vunpack.c.l.b16 %v381
      %v830 = vunpack.c.l.b16 %v382
      %v831 = vunpack.c.l.b16 %v383
      %v832 = vunpack.c.l.b16 %v384
      %v833 = vunpack.c.l.b16 %v385
      %v834 = vunpack.c.l.b16 %v386
      %v835 = vunpack.c.l.b16 %v387
      %v836 = vunpack.c.l.b16 %v388
      %v837 = vunpack.c.l.b16 %v389
      %v838 = vunpack.c.l.b16 %v390
      %v839 = vunpack.c.l.b16 %v391
      %v840 = vunpack.c.l.b16 %v392
      %v841 = vunpack.c.l.b16 %v393
      %v842 = vunpack.c.l.b16 %v394
      %v843 = vunpack.c.l.b16 %v395
      %v844 = vunpack.c.l.b16 %v396
      %v845 = vunpack.c.l.b16 %v397
      %v846 = vunpack.c.l.b16 %v398
      %v847 = vunpack.c.l.b16 %v399
      %v848 = vunpack.c.l.b16 %v400
      %v849 = vunpack.c.l.b16 %v401
      %v850 = vunpack.c.l.b16 %v402
      %v851 = vunpack.c.l.b16 %v403
      %v852 = vunpack.c.l.b16 %v404
      %v853 = vunpack.c.l.b16 %v405
      %v854 = vunpack.c.l.b16 %v406
      %v855 = vunpack.c.l.b16 %v407
      %v856 = vunpack.c.l.b16 %v408
      %v857 = vunpack.c.l.b16 %v409
      %v858 = vunpack.c.l.b16 %v410
      %v859 = vunpack.c.l.b16 %v411
      %v860 = vunpack.c.l.b16 %v412
      %v861 = vunpack.c.l.b16 %v413
      %v862 = vunpack.c.l.b16 %v414
      %v863 = vunpack.c.l.b16 %v415
      %v864 = vunpack.c.l.b16 %v416
      %v865 = vunpack.c.l.b16 %v417
      %v866 = vunpack.c.l.b16 %v418
      %v867 = vunpack.c.l.b16 %v419
      %v868 = vunpack.c.l.b16 %v420
      %v869 = vunpack.c.l.b16 %v421
      %v870 = vunpack.c.l.b16 %v422
      %v871 = vunpack.c.l.b16 %v423
      %v872 = vunpack.c.l.b16 %v424
      %v873 = vunpack.c.l.b16 %v425
      %v874 = vunpack.c.l.b16 %v426
      %v875 = vunpack.c.l.b16 %v427
      %v876 = vunpack.c.l.b16 %v428
      %v877 = vunpack.c.l.b16 %v429
      %v878 = vunpack.c.l.b16 %v430
      %v879 = vunpack.c.l.b16 %v431
      %v880 = vunpack.c.l.b16 %v432
      %v881 = vunpack.c.l.b16 %v433
      %v882 = vpack.c.b16 %v819, %v818
      %v883 = vpack.c.b16 %v821, %v820
      %v884 = vpack.c.b16 %v823, %v822
      %v885 = vpack.c.b16 %v825, %v824
      %v886 = vpack.c.b16 %v827, %v826
      %v887 = vpack.c.b16 %v829, %v828
      %v888 = vpack.c.b16 %v831, %v830
      %v889 = vpack.c.b16 %v833, %v832
      %v890 = vpack.c.b16 %v835, %v834
      %v891 = vpack.c.b16 %v837, %v836
      %v892 = vpack.c.b16 %v839, %v838
      %v893 = vpack.c.b16 %v841, %v840
      %v894 = vpack.c.b16 %v843, %v842
      %v895 = vpack.c.b16 %v845, %v844
      %v896 = vpack.c.b16 %v847, %v846
      %v897 = vpack.c.b16 %v849, %v848
      %v898 = vpack.c.b16 %v851, %v850
      %v899 = vpack.c.b16 %v853, %v852
      %v900 = vpack.c.b16 %v855, %v854
      %v901 = vpack.c.b16 %v857, %v856
      %v902 = vpack.c.b16 %v859, %v858
      %v903 = vpack.c.b16 %v861, %v860
      %v904 = vpack.c.b16 %v863, %v862
      %v905 = vpack.c.b16 %v865, %v864
      %v906 = vpack.c.b16 %v867, %v866
      %v907 = vpack.c.b16 %v869, %v868
      %v908 = vpack.c.b16 %v871, %v870
      %v909 = vpack.c.b16 %v873, %v872
      %v910 = vpack.c.b16 %v875, %v874
      %v911 = vpack.c.b16 %v877, %v876
      %v912 = vpack.c.b16 %v879, %v878
      %v913 = vpack.c.b16 %v881, %v880
      %946 = vmatprep.subr.bf16.mxu0 0
      %947 = vmatpush1.bf16.msra.mxu0 %v882
      %948 = vmatprep.subr.bf16.mxu0 0
      %949 = vmatpush1.bf16.msra.mxu0 %v883
      %950 = vmatprep.subr.bf16.mxu0 0
      %951 = vmatpush1.bf16.msra.mxu0 %v884
      %952 = vmatprep.subr.bf16.mxu0 0
      %953 = vmatpush1.bf16.msra.mxu0 %v885
      %954 = vmatprep.subr.bf16.mxu0 0
      %955 = vmatpush1.bf16.msra.mxu0 %v886
      %956 = vmatprep.subr.bf16.mxu0 0
      %957 = vmatpush1.bf16.msra.mxu0 %v887
      %958 = vmatprep.subr.bf16.mxu0 0
      %959 = vmatpush1.bf16.msra.mxu0 %v888
      %960 = vmatprep.subr.bf16.mxu0 0
      %961 = vmatpush1.bf16.msra.mxu0 %v889
      %962 = vmatprep.subr.bf16.mxu0 0
      %963 = vmatpush1.bf16.msra.mxu0 %v890
      %964 = vmatprep.subr.bf16.mxu0 0
      %965 = vmatpush1.bf16.msra.mxu0 %v891
      %966 = vmatprep.subr.bf16.mxu0 0
      %967 = vmatpush1.bf16.msra.mxu0 %v892
      %968 = vmatprep.subr.bf16.mxu0 0
      %969 = vmatpush1.bf16.msra.mxu0 %v893
      %970 = vmatprep.subr.bf16.mxu0 0
      %971 = vmatpush1.bf16.msra.mxu0 %v894
      %972 = vmatprep.subr.bf16.mxu0 0
      %973 = vmatpush1.bf16.msra.mxu0 %v895
      %974 = vmatprep.subr.bf16.mxu0 0
      %975 = vmatpush1.bf16.msra.mxu0 %v896
      %976 = vmatprep.subr.bf16.mxu0 0
      %977 = vmatpush1.bf16.msra.mxu0 %v897
      %978 = vmatprep.mubr.bf16.mxu0 %v627
      %979 = vmatmul.mubr.bf16.gmra.mrb[0].mxu0 %v626
      %v980 = vpop.f32.mrb[0].mxu0
      %v981 = vadd.f32 0.0, %v980
      %v982 = vpop.f32.mrb[0].mxu0
      %v983 = vpop.f32.mrb[0].mxu0
      %v984 = vadd.f32 0.0, %v983
      %v985 = vpop.f32.mrb[0].mxu0
      %986 = vmatprep.mubr.bf16.mxu0 %v631
      %987 = vmatmul.mubr.bf16.gmra.mrb[0].mxu0 %v630
      %v988 = vpop.f32.mrb[0].mxu0
      %v989 = vadd.f32 0.0, %v988
      %v990 = vpop.f32.mrb[0].mxu0
      %v991 = vpop.f32.mrb[0].mxu0
      %v992 = vadd.f32 0.0, %v991
      %v993 = vpop.f32.mrb[0].mxu0
      %994 = vmatprep.mubr.bf16.mxu0 %v635
      %995 = vmatmul.mubr.bf16.gmra.mrb[0].mxu0 %v634
      %v996 = vpop.f32.mrb[0].mxu0
      %v997 = vadd.f32 0.0, %v996
      %v998 = vpop.f32.mrb[0].mxu0
      %v999 = vpop.f32.mrb[0].mxu0
      %v1000 = vadd.f32 0.0, %v999
      %v1001 = vpop.f32.mrb[0].mxu0
      %1002 = vmatprep.mubr.bf16.mxu0 %v639
      %1003 = vmatmul.mubr.bf16.gmra.mrb[0].mxu0 %v638
      %v1004 = vpop.f32.mrb[0].mxu0
      %v1005 = vadd.f32 0.0, %v1004
      %v1006 = vpop.f32.mrb[0].mxu0
      %v1007 = vpop.f32.mrb[0].mxu0
      %v1008 = vadd.f32 0.0, %v1007
      %v1009 = vpop.f32.mrb[0].mxu0
      %1010 = vmatprep.mubr.bf16.mxu0 %v643
      %1011 = vmatmul.mubr.bf16.gmra.mrb[0].mxu0 %v642
      %v1012 = vpop.f32.mrb[0].mxu0
      %v1013 = vadd.f32 0.0, %v1012
      %v1014 = vpop.f32.mrb[0].mxu0
      %v1015 = vpop.f32.mrb[0].mxu0
      %v1016 = vadd.f32 0.0, %v1015
      %v1017 = vpop.f32.mrb[0].mxu0
      %1018 = vmatprep.mubr.bf16.mxu0 %v647
      %1019 = vmatmul.mubr.bf16.gmra.mrb[0].mxu0 %v646
      %v1020 = vpop.f32.mrb[0].mxu0
      %v1021 = vadd.f32 0.0, %v1020
      %v1022 = vpop.f32.mrb[0].mxu0
      %v1023 = vpop.f32.mrb[0].mxu0
      %v1024 = vadd.f32 0.0, %v1023
      %v1025 = vpop.f32.mrb[0].mxu0
      %1026 = vmatprep.mubr.bf16.mxu0 %v651
      %1027 = vmatmul.mubr.bf16.gmra.mrb[0].mxu0 %v650
      %v1028 = vpop.f32.mrb[0].mxu0
      %v1029 = vadd.f32 0.0, %v1028
      %v1030 = vpop.f32.mrb[0].mxu0
      %v1031 = vpop.f32.mrb[0].mxu0
      %v1032 = vadd.f32 0.0, %v1031
      %v1033 = vpop.f32.mrb[0].mxu0
      %1034 = vmatprep.mubr.bf16.mxu0 %v655
      %1035 = vmatmul.mubr.bf16.gmra.mrb[0].mxu0 %v654
      %v1036 = vpop.f32.mrb[0].mxu0
      %v1037 = vadd.f32 0.0, %v1036
      %v1038 = vpop.f32.mrb[0].mxu0
      %v1039 = vpop.f32.mrb[0].mxu0
      %v1040 = vadd.f32 0.0, %v1039
      %v1041 = vpop.f32.mrb[0].mxu0
      %1042 = vmatprep.mubr.bf16.mxu0 %v659
      %1043 = vmatmul.mubr.bf16.gmra.mrb[0].mxu0 %v658
      %v1044 = vpop.f32.mrb[0].mxu0
      %v1045 = vadd.f32 0.0, %v1044
      %v1046 = vpop.f32.mrb[0].mxu0
      %v1047 = vpop.f32.mrb[0].mxu0
      %v1048 = vadd.f32 0.0, %v1047
      %v1049 = vpop.f32.mrb[0].mxu0
      %1050 = vmatprep.mubr.bf16.mxu0 %v663
      %1051 = vmatmul.mubr.bf16.gmra.mrb[0].mxu0 %v662
      %v1052 = vpop.f32.mrb[0].mxu0
      %v1053 = vadd.f32 0.0, %v1052
      %v1054 = vpop.f32.mrb[0].mxu0
      %v1055 = vpop.f32.mrb[0].mxu0
      %v1056 = vadd.f32 0.0, %v1055
      %v1057 = vpop.f32.mrb[0].mxu0
      %1058 = vmatprep.mubr.bf16.mxu0 %v667
      %1059 = vmatmul.mubr.bf16.gmra.mrb[0].mxu0 %v666
      %v1060 = vpop.f32.mrb[0].mxu0
      %v1061 = vadd.f32 0.0, %v1060
      %v1062 = vpop.f32.mrb[0].mxu0
      %v1063 = vpop.f32.mrb[0].mxu0
      %v1064 = vadd.f32 0.0, %v1063
      %v1065 = vpop.f32.mrb[0].mxu0
      %1066 = vmatprep.mubr.bf16.mxu0 %v671
      %1067 = vmatmul.mubr.bf16.gmra.mrb[0].mxu0 %v670
      %v1068 = vpop.f32.mrb[0].mxu0
      %v1069 = vadd.f32 0.0, %v1068
      %v1070 = vpop.f32.mrb[0].mxu0
      %v1071 = vpop.f32.mrb[0].mxu0
      %v1072 = vadd.f32 0.0, %v1071
      %v1073 = vpop.f32.mrb[0].mxu0
      %1074 = vmatprep.mubr.bf16.mxu0 %v675
      %1075 = vmatmul.mubr.bf16.gmra.mrb[0].mxu0 %v674
      %v1076 = vpop.f32.mrb[0].mxu0
      %v1077 = vadd.f32 0.0, %v1076
      %v1078 = vpop.f32.mrb[0].mxu0
      %v1079 = vpop.f32.mrb[0].mxu0
      %v1080 = vadd.f32 0.0, %v1079
      %v1081 = vpop.f32.mrb[0].mxu0
      %1082 = vmatprep.mubr.bf16.mxu0 %v679
      %1083 = vmatmul.mubr.bf16.gmra.mrb[0].mxu0 %v678
      %v1084 = vpop.f32.mrb[0].mxu0
      %v1085 = vadd.f32 0.0, %v1084
      %v1086 = vpop.f32.mrb[0].mxu0
      %v1087 = vpop.f32.mrb[0].mxu0
      %v1088 = vadd.f32 0.0, %v1087
      %v1089 = vpop.f32.mrb[0].mxu0
      %1090 = vmatprep.mubr.bf16.mxu0 %v683
      %1091 = vmatmul.mubr.bf16.gmra.mrb[0].mxu0 %v682
      %v1092 = vpop.f32.mrb[0].mxu0
      %v1093 = vadd.f32 0.0, %v1092
      %v1094 = vpop.f32.mrb[0].mxu0
      %v1095 = vpop.f32.mrb[0].mxu0
      %v1096 = vadd.f32 0.0, %v1095
      %v1097 = vpop.f32.mrb[0].mxu0
      %1098 = vmatprep.mubr.bf16.mxu0 %v687
      %1099 = vmatmul.mubr.bf16.gmra.mrb[0].mxu0 %v686
      %v1100 = vpop.f32.mrb[0].mxu0
      %v1101 = vadd.f32 0.0, %v1100
      %v1102 = vpop.f32.mrb[0].mxu0
      %v1103 = vpop.f32.mrb[0].mxu0
      %v1104 = vadd.f32 0.0, %v1103
      %v1105 = vpop.f32.mrb[0].mxu0
      %1106 = vdwg.mxu0
      %1107 = vmatprep.subr.bf16.mxu0 0
      %1108 = vmatpush1.bf16.msra.mxu0 %v898
      %1109 = vmatprep.subr.bf16.mxu0 0
      %1110 = vmatpush1.bf16.msra.mxu0 %v899
      %1111 = vmatprep.subr.bf16.mxu0 0
      %1112 = vmatpush1.bf16.msra.mxu0 %v900
      %1113 = vmatprep.subr.bf16.mxu0 0
      %1114 = vmatpush1.bf16.msra.mxu0 %v901
      %1115 = vmatprep.subr.bf16.mxu0 0
      %1116 = vmatpush1.bf16.msra.mxu0 %v902
      %1117 = vmatprep.subr.bf16.mxu0 0
      %1118 = vmatpush1.bf16.msra.mxu0 %v903
      %1119 = vmatprep.subr.bf16.mxu0 0
      %1120 = vmatpush1.bf16.msra.mxu0 %v904
      %1121 = vmatprep.subr.bf16.mxu0 0
      %1122 = vmatpush1.bf16.msra.mxu0 %v905
      %1123 = vmatprep.subr.bf16.mxu0 0
      %1124 = vmatpush1.bf16.msra.mxu0 %v906
      %1125 = vmatprep.subr.bf16.mxu0 0
      %1126 = vmatpush1.bf16.msra.mxu0 %v907
      %1127 = vmatprep.subr.bf16.mxu0 0
      %1128 = vmatpush1.bf16.msra.mxu0 %v908
      %1129 = vmatprep.subr.bf16.mxu0 0
      %1130 = vmatpush1.bf16.msra.mxu0 %v909
      %1131 = vmatprep.subr.bf16.mxu0 0
      %1132 = vmatpush1.bf16.msra.mxu0 %v910
      %1133 = vmatprep.subr.bf16.mxu0 0
      %1134 = vmatpush1.bf16.msra.mxu0 %v911
      %1135 = vmatprep.subr.bf16.mxu0 0
      %1136 = vmatpush1.bf16.msra.mxu0 %v912
      %1137 = vmatprep.subr.bf16.mxu0 0
      %1138 = vmatpush1.bf16.msra.mxu0 %v913
      %1139 = vmatprep.mubr.bf16.mxu0 %v629
      %1140 = vmatmul.mubr.bf16.gmra.mrb[0].mxu0 %v628
      %v1141 = vpop.f32.mrb[0].mxu0
      %v1142 = vadd.f32 %v981, %v1141
      %v1143 = vpop.f32.mrb[0].mxu0
      %v1144 = vpop.f32.mrb[0].mxu0
      %v1145 = vadd.f32 %v984, %v1144
      %v1146 = vpop.f32.mrb[0].mxu0
      %1147 = vmatprep.mubr.bf16.mxu0 %v633
      %1148 = vmatmul.mubr.bf16.gmra.mrb[0].mxu0 %v632
      %v1149 = vpop.f32.mrb[0].mxu0
      %v1150 = vadd.f32 %v989, %v1149
      %v1151 = vpop.f32.mrb[0].mxu0
      %v1152 = vpop.f32.mrb[0].mxu0
      %v1153 = vadd.f32 %v992, %v1152
      %v1154 = vpop.f32.mrb[0].mxu0
      %1155 = vmatprep.mubr.bf16.mxu0 %v637
      %1156 = vmatmul.mubr.bf16.gmra.mrb[0].mxu0 %v636
      %v1157 = vpop.f32.mrb[0].mxu0
      %v1158 = vadd.f32 %v997, %v1157
      %v1159 = vpop.f32.mrb[0].mxu0
      %v1160 = vpop.f32.mrb[0].mxu0
      %v1161 = vadd.f32 %v1000, %v1160
      %v1162 = vpop.f32.mrb[0].mxu0
      %1163 = vmatprep.mubr.bf16.mxu0 %v641
      %1164 = vmatmul.mubr.bf16.gmra.mrb[0].mxu0 %v640
      %v1165 = vpop.f32.mrb[0].mxu0
      %v1166 = vadd.f32 %v1005, %v1165
      %v1167 = vpop.f32.mrb[0].mxu0
      %v1168 = vpop.f32.mrb[0].mxu0
      %v1169 = vadd.f32 %v1008, %v1168
      %v1170 = vpop.f32.mrb[0].mxu0
      %1171 = vmatprep.mubr.bf16.mxu0 %v645
      %1172 = vmatmul.mubr.bf16.gmra.mrb[0].mxu0 %v644
      %v1173 = vpop.f32.mrb[0].mxu0
      %v1174 = vadd.f32 %v1013, %v1173
      %v1175 = vpop.f32.mrb[0].mxu0
      %v1176 = vpop.f32.mrb[0].mxu0
      %v1177 = vadd.f32 %v1016, %v1176
      %v1178 = vpop.f32.mrb[0].mxu0
      %1179 = vmatprep.mubr.bf16.mxu0 %v649
      %1180 = vmatmul.mubr.bf16.gmra.mrb[0].mxu0 %v648
      %v1181 = vpop.f32.mrb[0].mxu0
      %v1182 = vadd.f32 %v1021, %v1181
      %v1183 = vpop.f32.mrb[0].mxu0
      %v1184 = vpop.f32.mrb[0].mxu0
      %v1185 = vadd.f32 %v1024, %v1184
      %v1186 = vpop.f32.mrb[0].mxu0
      %1187 = vmatprep.mubr.bf16.mxu0 %v653
      %1188 = vmatmul.mubr.bf16.gmra.mrb[0].mxu0 %v652
      %v1189 = vpop.f32.mrb[0].mxu0
      %v1190 = vadd.f32 %v1029, %v1189
      %v1191 = vpop.f32.mrb[0].mxu0
      %v1192 = vpop.f32.mrb[0].mxu0
      %v1193 = vadd.f32 %v1032, %v1192
      %v1194 = vpop.f32.mrb[0].mxu0
      %1195 = vmatprep.mubr.bf16.mxu0 %v657
      %1196 = vmatmul.mubr.bf16.gmra.mrb[0].mxu0 %v656
      %v1197 = vpop.f32.mrb[0].mxu0
      %v1198 = vadd.f32 %v1037, %v1197
      %v1199 = vpop.f32.mrb[0].mxu0
      %v1200 = vpop.f32.mrb[0].mxu0
      %v1201 = vadd.f32 %v1040, %v1200
      %v1202 = vpop.f32.mrb[0].mxu0
      %1203 = vmatprep.mubr.bf16.mxu0 %v661
      %1204 = vmatmul.mubr.bf16.gmra.mrb[0].mxu0 %v660
      %v1205 = vpop.f32.mrb[0].mxu0
      %v1206 = vadd.f32 %v1045, %v1205
      %v1207 = vpop.f32.mrb[0].mxu0
      %v1208 = vpop.f32.mrb[0].mxu0
      %v1209 = vadd.f32 %v1048, %v1208
      %v1210 = vpop.f32.mrb[0].mxu0
      %1211 = vmatprep.mubr.bf16.mxu0 %v665
      %1212 = vmatmul.mubr.bf16.gmra.mrb[0].mxu0 %v664
      %v1213 = vpop.f32.mrb[0].mxu0
      %v1214 = vadd.f32 %v1053, %v1213
      %v1215 = vpop.f32.mrb[0].mxu0
      %v1216 = vpop.f32.mrb[0].mxu0
      %v1217 = vadd.f32 %v1056, %v1216
      %v1218 = vpop.f32.mrb[0].mxu0
      %1219 = vmatprep.mubr.bf16.mxu0 %v669
      %1220 = vmatmul.mubr.bf16.gmra.mrb[0].mxu0 %v668
      %v1221 = vpop.f32.mrb[0].mxu0
      %v1222 = vadd.f32 %v1061, %v1221
      %v1223 = vpop.f32.mrb[0].mxu0
      %v1224 = vpop.f32.mrb[0].mxu0
      %v1225 = vadd.f32 %v1064, %v1224
      %v1226 = vpop.f32.mrb[0].mxu0
      %1227 = vmatprep.mubr.bf16.mxu0 %v673
      %1228 = vmatmul.mubr.bf16.gmra.mrb[0].mxu0 %v672
      %v1229 = vpop.f32.mrb[0].mxu0
      %v1230 = vadd.f32 %v1069, %v1229
      %v1231 = vpop.f32.mrb[0].mxu0
      %v1232 = vpop.f32.mrb[0].mxu0
      %v1233 = vadd.f32 %v1072, %v1232
      %v1234 = vpop.f32.mrb[0].mxu0
      %1235 = vmatprep.mubr.bf16.mxu0 %v677
      %1236 = vmatmul.mubr.bf16.gmra.mrb[0].mxu0 %v676
      %v1237 = vpop.f32.mrb[0].mxu0
      %v1238 = vadd.f32 %v1077, %v1237
      %v1239 = vpop.f32.mrb[0].mxu0
      %v1240 = vpop.f32.mrb[0].mxu0
      %v1241 = vadd.f32 %v1080, %v1240
      %v1242 = vpop.f32.mrb[0].mxu0
      %1243 = vmatprep.mubr.bf16.mxu0 %v681
      %1244 = vmatmul.mubr.bf16.gmra.mrb[0].mxu0 %v680
      %v1245 = vpop.f32.mrb[0].mxu0
      %v1246 = vadd.f32 %v1085, %v1245
      %v1247 = vpop.f32.mrb[0].mxu0
      %v1248 = vpop.f32.mrb[0].mxu0
      %v1249 = vadd.f32 %v1088, %v1248
      %v1250 = vpop.f32.mrb[0].mxu0
      %1251 = vmatprep.mubr.bf16.mxu0 %v685
      %1252 = vmatmul.mubr.bf16.gmra.mrb[0].mxu0 %v684
      %v1253 = vpop.f32.mrb[0].mxu0
      %v1254 = vadd.f32 %v1093, %v1253
      %v1255 = vpop.f32.mrb[0].mxu0
      %v1256 = vpop.f32.mrb[0].mxu0
      %v1257 = vadd.f32 %v1096, %v1256
      %v1258 = vpop.f32.mrb[0].mxu0
      %1259 = vmatprep.mubr.bf16.mxu0 %v689
      %1260 = vmatmul.mubr.bf16.gmra.mrb[0].mxu0 %v688
      %v1261 = vpop.f32.mrb[0].mxu0
      %v1262 = vadd.f32 %v1101, %v1261
      %v1263 = vpop.f32.mrb[0].mxu0
      %v1264 = vpop.f32.mrb[0].mxu0
      %v1265 = vadd.f32 %v1104, %v1264
      %v1266 = vpop.f32.mrb[0].mxu0
      %1267 = vdwg.mxu0
      %v1268 = vadd.f32 %v270, %v1142
      %v1269 = vadd.f32 %v271, %v1145
      %v1270 = vadd.f32 %v272, %v1150
      %v1271 = vadd.f32 %v273, %v1153
      %v1272 = vadd.f32 %v274, %v1158
      %v1273 = vadd.f32 %v275, %v1161
      %v1274 = vadd.f32 %v276, %v1166
      %v1275 = vadd.f32 %v277, %v1169
      %v1276 = vadd.f32 %v278, %v1174
      %v1277 = vadd.f32 %v279, %v1177
      %v1278 = vadd.f32 %v280, %v1182
      %v1279 = vadd.f32 %v281, %v1185
      %v1280 = vadd.f32 %v282, %v1190
      %v1281 = vadd.f32 %v283, %v1193
      %v1282 = vadd.f32 %v284, %v1198
      %v1283 = vadd.f32 %v285, %v1201
      %v1284 = vadd.f32 %v286, %v1206
      %v1285 = vadd.f32 %v287, %v1209
      %v1286 = vadd.f32 %v288, %v1214
      %v1287 = vadd.f32 %v289, %v1217
      %v1288 = vadd.f32 %v290, %v1222
      %v1289 = vadd.f32 %v291, %v1225
      %v1290 = vadd.f32 %v292, %v1230
      %v1291 = vadd.f32 %v293, %v1233
      %v1292 = vadd.f32 %v294, %v1238
      %v1293 = vadd.f32 %v295, %v1241
      %v1294 = vadd.f32 %v296, %v1246
      %v1295 = vadd.f32 %v297, %v1249
      %v1296 = vadd.f32 %v298, %v1254
      %v1297 = vadd.f32 %v299, %v1257
      %v1298 = vadd.f32 %v300, %v1262
      %v1299 = vadd.f32 %v301, %v1265
      %1300 = vst [vmem:[#allocation2] sm:$0xff] %v1268
      %1301 = vst [vmem:[#allocation2 + $0x8] sm:$0xff] %v1269
      %1302 = vst [vmem:[#allocation2 + $0x10] sm:$0xff] %v1270
      %1303 = vst [vmem:[#allocation2 + $0x18] sm:$0xff] %v1271
      %1304 = vst [vmem:[#allocation2 + $0x20] sm:$0xff] %v1272
      %1305 = vst [vmem:[#allocation2 + $0x28] sm:$0xff] %v1273
      %1306 = vst [vmem:[#allocation2 + $0x30] sm:$0xff] %v1274
      %1307 = vst [vmem:[#allocation2 + $0x38] sm:$0xff] %v1275
      %1308 = vst [vmem:[#allocation2 + $0x40] sm:$0xff] %v1276
      %1309 = vst [vmem:[#allocation2 + $0x48] sm:$0xff] %v1277
      %1310 = vst [vmem:[#allocation2 + $0x50] sm:$0xff] %v1278
      %1311 = vst [vmem:[#allocation2 + $0x58] sm:$0xff] %v1279
      %1312 = vst [vmem:[#allocation2 + $0x60] sm:$0xff] %v1280
      %1313 = vst [vmem:[#allocation2 + $0x68] sm:$0xff] %v1281
      %1314 = vst [vmem:[#allocation2 + $0x70] sm:$0xff] %v1282
      %1315 = vst [vmem:[#allocation2 + $0x78] sm:$0xff] %v1283
      %1316 = vst [vmem:[#allocation2 + $0x80] sm:$0xff] %v1284
      %1317 = vst [vmem:[#allocation2 + $0x88] sm:$0xff] %v1285
      %1318 = vst [vmem:[#allocation2 + $0x90] sm:$0xff] %v1286
      %1319 = vst [vmem:[#allocation2 + $0x98] sm:$0xff] %v1287
      %1320 = vst [vmem:[#allocation2 + $0xa0] sm:$0xff] %v1288
      %1321 = vst [vmem:[#allocation2 + $0xa8] sm:$0xff] %v1289
      %1322 = vst [vmem:[#allocation2 + $0xb0] sm:$0xff] %v1290
      %1323 = vst [vmem:[#allocation2 + $0xb8] sm:$0xff] %v1291
      %1324 = vst [vmem:[#allocation2 + $0xc0] sm:$0xff] %v1292
      %1325 = vst [vmem:[#allocation2 + $0xc8] sm:$0xff] %v1293
      %1326 = vst [vmem:[#allocation2 + $0xd0] sm:$0xff] %v1294
      %1327 = vst [vmem:[#allocation2 + $0xd8] sm:$0xff] %v1295
      %1328 = vst [vmem:[#allocation2 + $0xe0] sm:$0xff] %v1296
      %1329 = vst [vmem:[#allocation2 + $0xe8] sm:$0xff] %v1297
      %1330 = vst [vmem:[#allocation2 + $0xf0] sm:$0xff] %v1298
      %1331 = vst [vmem:[#allocation2 + $0xf8] sm:$0xff] %v1299
      // Predicated region
      $region41: #{conad_forward.6} parent=35 // pred_check
        %p1332 = pneg %p233
      $region42: #{conad_forward.6} parent=35 // pred_check_branch
        %1334 = sbr.rel (%p1332) target = $region44
      $region43: #{conad_forward.6} parent=35 // pred_region
        %v1335 = vld [vmem:[#allocation2] sm:$0xff]
        %v1336 = vld [vmem:[#allocation2 + $0x8] sm:$0xff]
        %v1337 = vld [vmem:[#allocation2 + $0x10] sm:$0xff]
        %v1338 = vld [vmem:[#allocation2 + $0x18] sm:$0xff]
        %v1339 = vld [vmem:[#allocation2 + $0x20] sm:$0xff]
        %v1340 = vld [vmem:[#allocation2 + $0x28] sm:$0xff]
        %v1341 = vld [vmem:[#allocation2 + $0x30] sm:$0xff]
        %v1342 = vld [vmem:[#allocation2 + $0x38] sm:$0xff]
        %v1343 = vld [vmem:[#allocation2 + $0x40] sm:$0xff]
        %v1344 = vld [vmem:[#allocation2 + $0x48] sm:$0xff]
        %v1345 = vld [vmem:[#allocation2 + $0x50] sm:$0xff]
        %v1346 = vld [vmem:[#allocation2 + $0x58] sm:$0xff]
        %v1347 = vld [vmem:[#allocation2 + $0x60] sm:$0xff]
        %v1348 = vld [vmem:[#allocation2 + $0x68] sm:$0xff]
        %v1349 = vld [vmem:[#allocation2 + $0x70] sm:$0xff]
        %v1350 = vld [vmem:[#allocation2 + $0x78] sm:$0xff]
        %v1351 = vld [vmem:[#allocation2 + $0x80] sm:$0xff]
        %v1352 = vld [vmem:[#allocation2 + $0x88] sm:$0xff]
        %v1353 = vld [vmem:[#allocation2 + $0x90] sm:$0xff]
        %v1354 = vld [vmem:[#allocation2 + $0x98] sm:$0xff]
        %v1355 = vld [vmem:[#allocation2 + $0xa0] sm:$0xff]
        %v1356 = vld [vmem:[#allocation2 + $0xa8] sm:$0xff]
        %v1357 = vld [vmem:[#allocation2 + $0xb0] sm:$0xff]
        %v1358 = vld [vmem:[#allocation2 + $0xb8] sm:$0xff]
        %v1359 = vld [vmem:[#allocation2 + $0xc0] sm:$0xff]
        %v1360 = vld [vmem:[#allocation2 + $0xc8] sm:$0xff]
        %v1361 = vld [vmem:[#allocation2 + $0xd0] sm:$0xff]
        %v1362 = vld [vmem:[#allocation2 + $0xd8] sm:$0xff]
        %v1363 = vld [vmem:[#allocation2 + $0xe0] sm:$0xff]
        %v1364 = vld [vmem:[#allocation2 + $0xe8] sm:$0xff]
        %v1365 = vld [vmem:[#allocation2 + $0xf0] sm:$0xff]
        %v1366 = vld [vmem:[#allocation2 + $0xf8] sm:$0xff]
        %v1367 = vpack.c.bf16 %v1336, %v1335
        %v1368 = vpack.c.bf16 %v1338, %v1337
        %v1369 = vpack.c.bf16 %v1340, %v1339
        %v1370 = vpack.c.bf16 %v1342, %v1341
        %v1371 = vpack.c.bf16 %v1344, %v1343
        %v1372 = vpack.c.bf16 %v1346, %v1345
        %v1373 = vpack.c.bf16 %v1348, %v1347
        %v1374 = vpack.c.bf16 %v1350, %v1349
        %v1375 = vpack.c.bf16 %v1352, %v1351
        %v1376 = vpack.c.bf16 %v1354, %v1353
        %v1377 = vpack.c.bf16 %v1356, %v1355
        %v1378 = vpack.c.bf16 %v1358, %v1357
        %v1379 = vpack.c.bf16 %v1360, %v1359
        %v1380 = vpack.c.bf16 %v1362, %v1361
        %v1381 = vpack.c.bf16 %v1364, %v1363
        %v1382 = vpack.c.bf16 %v1366, %v1365
        %v1383 = vld [vmem:[%s2] sm:$0xf]
        %v1384 = vld [vmem:[%s2 + $0x4] sm:$0xf]
        %v1385 = vld [vmem:[%s2 + $0x8] sm:$0xf]
        %v1386 = vld [vmem:[%s2 + $0xc] sm:$0xf]
        %v1387 = vld [vmem:[%s2 + $0x10] sm:$0xf]
        %v1388 = vld [vmem:[%s2 + $0x14] sm:$0xf]
        %v1389 = vld [vmem:[%s2 + $0x18] sm:$0xf]
        %v1390 = vld [vmem:[%s2 + $0x1c] sm:$0xf]
        %v1391 = vld [vmem:[%s2 + $0x20] sm:$0xf]
        %v1392 = vld [vmem:[%s2 + $0x24] sm:$0xf]
        %v1393 = vld [vmem:[%s2 + $0x28] sm:$0xf]
        %v1394 = vld [vmem:[%s2 + $0x2c] sm:$0xf]
        %v1395 = vld [vmem:[%s2 + $0x30] sm:$0xf]
        %v1396 = vld [vmem:[%s2 + $0x34] sm:$0xf]
        %v1397 = vld [vmem:[%s2 + $0x38] sm:$0xf]
        %v1398 = vld [vmem:[%s2 + $0x3c] sm:$0xf]
        %v1399 = vld [vmem:[%s3] sm:$0x1]
        %v1401 = vlaneseq
        %v1402 = vshrl.u32 %v1401, 7
        %v1403 = vsub.s32 0, %v1402
        %v1404 = vrot.slane %v1399, %v1403
        %v1422 = vunpack.c.l.b16 %v1383
        %v1423 = vunpack.c.l.b16 %v1384
        %v1424 = vunpack.c.l.b16 %v1385
        %v1425 = vunpack.c.l.b16 %v1386
        %v1426 = vunpack.c.l.b16 %v1387
        %v1427 = vunpack.c.l.b16 %v1388
        %v1428 = vunpack.c.l.b16 %v1389
        %v1429 = vunpack.c.l.b16 %v1390
        %v1430 = vunpack.c.l.b16 %v1391
        %v1431 = vunpack.c.l.b16 %v1392
        %v1432 = vunpack.c.l.b16 %v1393
        %v1433 = vunpack.c.l.b16 %v1394
        %v1434 = vunpack.c.l.b16 %v1395
        %v1435 = vunpack.c.l.b16 %v1396
        %v1436 = vunpack.c.l.b16 %v1397
        %v1437 = vunpack.c.l.b16 %v1398
        %v1438 = vpack.c.b16 %v1423, %v1422
        %v1439 = vpack.c.b16 %v1425, %v1424
        %v1440 = vpack.c.b16 %v1427, %v1426
        %v1441 = vpack.c.b16 %v1429, %v1428
        %v1442 = vpack.c.b16 %v1431, %v1430
        %v1443 = vpack.c.b16 %v1433, %v1432
        %v1444 = vpack.c.b16 %v1435, %v1434
        %v1445 = vpack.c.b16 %v1437, %v1436
        %1454 = vmatprep.subr.bf16.mxu0 0
        %1455 = vmatpush1.bf16.msra.mxu0 %v1438
        %1456 = vmatprep.subr.bf16.mxu0 0
        %1457 = vmatpush1.bf16.msra.mxu0 %v1439
        %1458 = vmatprep.subr.bf16.mxu0 0
        %1459 = vmatpush1.bf16.msra.mxu0 %v1440
        %1460 = vmatprep.subr.bf16.mxu0 0
        %1461 = vmatpush1.bf16.msra.mxu0 %v1441
        %1462 = vmatprep.subr.bf16.mxu0 0
        %1463 = vmatpush1.bf16.msra.mxu0 %v1442
        %1464 = vmatprep.subr.bf16.mxu0 0
        %1465 = vmatpush1.bf16.msra.mxu0 %v1443
        %1466 = vmatprep.subr.bf16.mxu0 0
        %1467 = vmatpush1.bf16.msra.mxu0 %v1444
        %1468 = vmatprep.subr.bf16.mxu0 0
        %1469 = vmatpush1.bf16.msra.mxu0 %v1445
        %1470 = vmatprep.subr.bf16.mxu0 0
        %1471 = vmatpush1.bf16.msra.mxu0 0
        %1472 = vmatprep.subr.bf16.mxu0 0
        %1473 = vmatpush1.bf16.msra.mxu0 0
        %1474 = vmatprep.subr.bf16.mxu0 0
        %1475 = vmatpush1.bf16.msra.mxu0 0
        %1476 = vmatprep.subr.bf16.mxu0 0
        %1477 = vmatpush1.bf16.msra.mxu0 0
        %1478 = vmatprep.subr.bf16.mxu0 0
        %1479 = vmatpush1.bf16.msra.mxu0 0
        %1480 = vmatprep.subr.bf16.mxu0 0
        %1481 = vmatpush1.bf16.msra.mxu0 0
        %1482 = vmatprep.subr.bf16.mxu0 0
        %1483 = vmatpush1.bf16.msra.mxu0 0
        %1484 = vmatprep.subr.bf16.mxu0 0
        %1485 = vmatpush1.bf16.msra.mxu0 0
        %1486 = vmatprep.mubr.bf16.mxu0 0
        %1487 = vmatmul.mubr.bf16.gmra.mrb[0].mxu0 %v1367
        %v1488 = vpop.f32.mrb[0].mxu0
        %v1489 = vadd.f32 %v1404, %v1488
        %v1490 = vpop.f32.mrb[0].mxu0
        %v1491 = vpop.f32.mrb[0].mxu0
        %v1492 = vadd.f32 %v1404, %v1491
        %v1493 = vpop.f32.mrb[0].mxu0
        %1494 = vmatprep.mubr.bf16.mxu0 0
        %1495 = vmatmul.mubr.bf16.gmra.mrb[0].mxu0 %v1368
        %v1496 = vpop.f32.mrb[0].mxu0
        %v1497 = vadd.f32 %v1404, %v1496
        %v1498 = vpop.f32.mrb[0].mxu0
        %v1499 = vpop.f32.mrb[0].mxu0
        %v1500 = vadd.f32 %v1404, %v1499
        %v1501 = vpop.f32.mrb[0].mxu0
        %1502 = vmatprep.mubr.bf16.mxu0 0
        %1503 = vmatmul.mubr.bf16.gmra.mrb[0].mxu0 %v1369
        %v1504 = vpop.f32.mrb[0].mxu0
        %v1505 = vadd.f32 %v1404, %v1504
        %v1506 = vpop.f32.mrb[0].mxu0
        %v1507 = vpop.f32.mrb[0].mxu0
        %v1508 = vadd.f32 %v1404, %v1507
        %v1509 = vpop.f32.mrb[0].mxu0
        %1510 = vmatprep.mubr.bf16.mxu0 0
        %1511 = vmatmul.mubr.bf16.gmra.mrb[0].mxu0 %v1370
        %v1512 = vpop.f32.mrb[0].mxu0
        %v1513 = vadd.f32 %v1404, %v1512
        %v1514 = vpop.f32.mrb[0].mxu0
        %v1515 = vpop.f32.mrb[0].mxu0
        %v1516 = vadd.f32 %v1404, %v1515
        %v1517 = vpop.f32.mrb[0].mxu0
        %1518 = vmatprep.mubr.bf16.mxu0 0
        %1519 = vmatmul.mubr.bf16.gmra.mrb[0].mxu0 %v1371
        %v1520 = vpop.f32.mrb[0].mxu0
        %v1521 = vadd.f32 %v1404, %v1520
        %v1522 = vpop.f32.mrb[0].mxu0
        %v1523 = vpop.f32.mrb[0].mxu0
        %v1524 = vadd.f32 %v1404, %v1523
        %v1525 = vpop.f32.mrb[0].mxu0
        %1526 = vmatprep.mubr.bf16.mxu0 0
        %1527 = vmatmul.mubr.bf16.gmra.mrb[0].mxu0 %v1372
        %v1528 = vpop.f32.mrb[0].mxu0
        %v1529 = vadd.f32 %v1404, %v1528
        %v1530 = vpop.f32.mrb[0].mxu0
        %v1531 = vpop.f32.mrb[0].mxu0
        %v1532 = vadd.f32 %v1404, %v1531
        %v1533 = vpop.f32.mrb[0].mxu0
        %1534 = vmatprep.mubr.bf16.mxu0 0
        %1535 = vmatmul.mubr.bf16.gmra.mrb[0].mxu0 %v1373
        %v1536 = vpop.f32.mrb[0].mxu0
        %v1537 = vadd.f32 %v1404, %v1536
        %v1538 = vpop.f32.mrb[0].mxu0
        %v1539 = vpop.f32.mrb[0].mxu0
        %v1540 = vadd.f32 %v1404, %v1539
        %v1541 = vpop.f32.mrb[0].mxu0
        %1542 = vmatprep.mubr.bf16.mxu0 0
        %1543 = vmatmul.mubr.bf16.gmra.mrb[0].mxu0 %v1374
        %v1544 = vpop.f32.mrb[0].mxu0
        %v1545 = vadd.f32 %v1404, %v1544
        %v1546 = vpop.f32.mrb[0].mxu0
        %v1547 = vpop.f32.mrb[0].mxu0
        %v1548 = vadd.f32 %v1404, %v1547
        %v1549 = vpop.f32.mrb[0].mxu0
        %1550 = vmatprep.mubr.bf16.mxu0 0
        %1551 = vmatmul.mubr.bf16.gmra.mrb[0].mxu0 %v1375
        %v1552 = vpop.f32.mrb[0].mxu0
        %v1553 = vadd.f32 %v1404, %v1552
        %v1554 = vpop.f32.mrb[0].mxu0
        %v1555 = vpop.f32.mrb[0].mxu0
        %v1556 = vadd.f32 %v1404, %v1555
        %v1557 = vpop.f32.mrb[0].mxu0
        %1558 = vmatprep.mubr.bf16.mxu0 0
        %1559 = vmatmul.mubr.bf16.gmra.mrb[0].mxu0 %v1376
        %v1560 = vpop.f32.mrb[0].mxu0
        %v1561 = vadd.f32 %v1404, %v1560
        %v1562 = vpop.f32.mrb[0].mxu0
        %v1563 = vpop.f32.mrb[0].mxu0
        %v1564 = vadd.f32 %v1404, %v1563
        %v1565 = vpop.f32.mrb[0].mxu0
        %1566 = vmatprep.mubr.bf16.mxu0 0
        %1567 = vmatmul.mubr.bf16.gmra.mrb[0].mxu0 %v1377
        %v1568 = vpop.f32.mrb[0].mxu0
        %v1569 = vadd.f32 %v1404, %v1568
        %v1570 = vpop.f32.mrb[0].mxu0
        %v1571 = vpop.f32.mrb[0].mxu0
        %v1572 = vadd.f32 %v1404, %v1571
        %v1573 = vpop.f32.mrb[0].mxu0
        %1574 = vmatprep.mubr.bf16.mxu0 0
        %1575 = vmatmul.mubr.bf16.gmra.mrb[0].mxu0 %v1378
        %v1576 = vpop.f32.mrb[0].mxu0
        %v1577 = vadd.f32 %v1404, %v1576
        %v1578 = vpop.f32.mrb[0].mxu0
        %v1579 = vpop.f32.mrb[0].mxu0
        %v1580 = vadd.f32 %v1404, %v1579
        %v1581 = vpop.f32.mrb[0].mxu0
        %1582 = vmatprep.mubr.bf16.mxu0 0
        %1583 = vmatmul.mubr.bf16.gmra.mrb[0].mxu0 %v1379
        %v1584 = vpop.f32.mrb[0].mxu0
        %v1585 = vadd.f32 %v1404, %v1584
        %v1586 = vpop.f32.mrb[0].mxu0
        %v1587 = vpop.f32.mrb[0].mxu0
        %v1588 = vadd.f32 %v1404, %v1587
        %v1589 = vpop.f32.mrb[0].mxu0
        %1590 = vmatprep.mubr.bf16.mxu0 0
        %1591 = vmatmul.mubr.bf16.gmra.mrb[0].mxu0 %v1380
        %v1592 = vpop.f32.mrb[0].mxu0
        %v1593 = vadd.f32 %v1404, %v1592
        %v1594 = vpop.f32.mrb[0].mxu0
        %v1595 = vpop.f32.mrb[0].mxu0
        %v1596 = vadd.f32 %v1404, %v1595
        %v1597 = vpop.f32.mrb[0].mxu0
        %1598 = vmatprep.mubr.bf16.mxu0 0
        %1599 = vmatmul.mubr.bf16.gmra.mrb[0].mxu0 %v1381
        %v1600 = vpop.f32.mrb[0].mxu0
        %v1601 = vadd.f32 %v1404, %v1600
        %v1602 = vpop.f32.mrb[0].mxu0
        %v1603 = vpop.f32.mrb[0].mxu0
        %v1604 = vadd.f32 %v1404, %v1603
        %v1605 = vpop.f32.mrb[0].mxu0
        %1606 = vmatprep.mubr.bf16.mxu0 0
        %1607 = vmatmul.mubr.bf16.gmra.mrb[0].mxu0 %v1382
        %v1608 = vpop.f32.mrb[0].mxu0
        %v1609 = vadd.f32 %v1404, %v1608
        %v1610 = vpop.f32.mrb[0].mxu0
        %v1611 = vpop.f32.mrb[0].mxu0
        %v1612 = vadd.f32 %v1404, %v1611
        %v1613 = vpop.f32.mrb[0].mxu0
        %1614 = vdwg.mxu0
        %v1615 = vpack.c.bf16 %v1492, %v1489
        %v1616 = vpack.c.bf16 %v1500, %v1497
        %v1617 = vpack.c.bf16 %v1508, %v1505
        %v1618 = vpack.c.bf16 %v1516, %v1513
        %v1619 = vpack.c.bf16 %v1524, %v1521
        %v1620 = vpack.c.bf16 %v1532, %v1529
        %v1621 = vpack.c.bf16 %v1540, %v1537
        %v1622 = vpack.c.bf16 %v1548, %v1545
        %v1623 = vpack.c.bf16 %v1556, %v1553
        %v1624 = vpack.c.bf16 %v1564, %v1561
        %v1625 = vpack.c.bf16 %v1572, %v1569
        %v1626 = vpack.c.bf16 %v1580, %v1577
        %v1627 = vpack.c.bf16 %v1588, %v1585
        %v1628 = vpack.c.bf16 %v1596, %v1593
        %v1629 = vpack.c.bf16 %v1604, %v1601
        %v1630 = vpack.c.bf16 %v1612, %v1609
        %v1647 = vunpack.c.l.b16 %v1615
        %v1648 = vunpack.c.h.b16 %v1615
        %v1649 = vunpack.c.l.b16 %v1616
        %v1650 = vunpack.c.h.b16 %v1616
        %v1651 = vunpack.c.l.b16 %v1617
        %v1652 = vunpack.c.h.b16 %v1617
        %v1653 = vunpack.c.l.b16 %v1618
        %v1654 = vunpack.c.h.b16 %v1618
        %v1655 = vunpack.c.l.b16 %v1619
        %v1656 = vunpack.c.h.b16 %v1619
        %v1657 = vunpack.c.l.b16 %v1620
        %v1658 = vunpack.c.h.b16 %v1620
        %v1659 = vunpack.c.l.b16 %v1621
        %v1660 = vunpack.c.h.b16 %v1621
        %v1661 = vunpack.c.l.b16 %v1622
        %v1662 = vunpack.c.h.b16 %v1622
        %v1663 = vunpack.c.l.b16 %v1623
        %v1664 = vunpack.c.h.b16 %v1623
        %v1665 = vunpack.c.l.b16 %v1624
        %v1666 = vunpack.c.h.b16 %v1624
        %v1667 = vunpack.c.l.b16 %v1625
        %v1668 = vunpack.c.h.b16 %v1625
        %v1669 = vunpack.c.l.b16 %v1626
        %v1670 = vunpack.c.h.b16 %v1626
        %v1671 = vunpack.c.l.b16 %v1627
        %v1672 = vunpack.c.h.b16 %v1627
        %v1673 = vunpack.c.l.b16 %v1628
        %v1674 = vunpack.c.h.b16 %v1628
        %v1675 = vunpack.c.l.b16 %v1629
        %v1676 = vunpack.c.h.b16 %v1629
        %v1677 = vunpack.c.l.b16 %v1630
        %v1678 = vunpack.c.h.b16 %v1630
        %v1679 = vpack.c.b16 %v1647, %v1647
        %v1680 = vpack.c.b16 %v1648, %v1648
        %v1681 = vpack.c.b16 %v1649, %v1649
        %v1682 = vpack.c.b16 %v1650, %v1650
        %v1683 = vpack.c.b16 %v1651, %v1651
        %v1684 = vpack.c.b16 %v1652, %v1652
        %v1685 = vpack.c.b16 %v1653, %v1653
        %v1686 = vpack.c.b16 %v1654, %v1654
        %v1687 = vpack.c.b16 %v1655, %v1655
        %v1688 = vpack.c.b16 %v1656, %v1656
        %v1689 = vpack.c.b16 %v1657, %v1657
        %v1690 = vpack.c.b16 %v1658, %v1658
        %v1691 = vpack.c.b16 %v1659, %v1659
        %v1692 = vpack.c.b16 %v1660, %v1660
        %v1693 = vpack.c.b16 %v1661, %v1661
        %v1694 = vpack.c.b16 %v1662, %v1662
        %v1695 = vpack.c.b16 %v1663, %v1663
        %v1696 = vpack.c.b16 %v1664, %v1664
        %v1697 = vpack.c.b16 %v1665, %v1665
        %v1698 = vpack.c.b16 %v1666, %v1666
        %v1699 = vpack.c.b16 %v1667, %v1667
        %v1700 = vpack.c.b16 %v1668, %v1668
        %v1701 = vpack.c.b16 %v1669, %v1669
        %v1702 = vpack.c.b16 %v1670, %v1670
        %v1703 = vpack.c.b16 %v1671, %v1671
        %v1704 = vpack.c.b16 %v1672, %v1672
        %v1705 = vpack.c.b16 %v1673, %v1673
        %v1706 = vpack.c.b16 %v1674, %v1674
        %v1707 = vpack.c.b16 %v1675, %v1675
        %v1708 = vpack.c.b16 %v1676, %v1676
        %v1709 = vpack.c.b16 %v1677, %v1677
        %v1710 = vpack.c.b16 %v1678, %v1678
        %1743 = vst [vmem:[%s230] sm:$0xf] %v1679
        %1744 = vst [vmem:[%s230 + $0x4] sm:$0xf] %v1680
        %1745 = vst [vmem:[%s230 + $0x8] sm:$0xf] %v1681
        %1746 = vst [vmem:[%s230 + $0xc] sm:$0xf] %v1682
        %1747 = vst [vmem:[%s230 + $0x10] sm:$0xf] %v1683
        %1748 = vst [vmem:[%s230 + $0x14] sm:$0xf] %v1684
        %1749 = vst [vmem:[%s230 + $0x18] sm:$0xf] %v1685
        %1750 = vst [vmem:[%s230 + $0x1c] sm:$0xf] %v1686
        %1751 = vst [vmem:[%s230 + $0x20] sm:$0xf] %v1687
        %1752 = vst [vmem:[%s230 + $0x24] sm:$0xf] %v1688
        %1753 = vst [vmem:[%s230 + $0x28] sm:$0xf] %v1689
        %1754 = vst [vmem:[%s230 + $0x2c] sm:$0xf] %v1690
        %1755 = vst [vmem:[%s230 + $0x30] sm:$0xf] %v1691
        %1756 = vst [vmem:[%s230 + $0x34] sm:$0xf] %v1692
        %1757 = vst [vmem:[%s230 + $0x38] sm:$0xf] %v1693
        %1758 = vst [vmem:[%s230 + $0x3c] sm:$0xf] %v1694
        %1759 = vst [vmem:[%s230 + $0x40] sm:$0xf] %v1695
        %1760 = vst [vmem:[%s230 + $0x44] sm:$0xf] %v1696
        %1761 = vst [vmem:[%s230 + $0x48] sm:$0xf] %v1697
        %1762 = vst [vmem:[%s230 + $0x4c] sm:$0xf] %v1698
        %1763 = vst [vmem:[%s230 + $0x50] sm:$0xf] %v1699
        %1764 = vst [vmem:[%s230 + $0x54] sm:$0xf] %v1700
        %1765 = vst [vmem:[%s230 + $0x58] sm:$0xf] %v1701
        %1766 = vst [vmem:[%s230 + $0x5c] sm:$0xf] %v1702
        %1767 = vst [vmem:[%s230 + $0x60] sm:$0xf] %v1703
        %1768 = vst [vmem:[%s230 + $0x64] sm:$0xf] %v1704
        %1769 = vst [vmem:[%s230 + $0x68] sm:$0xf] %v1705
        %1770 = vst [vmem:[%s230 + $0x6c] sm:$0xf] %v1706
        %1771 = vst [vmem:[%s230 + $0x70] sm:$0xf] %v1707
        %1772 = vst [vmem:[%s230 + $0x74] sm:$0xf] %v1708
        %1773 = vst [vmem:[%s230 + $0x78] sm:$0xf] %v1709
        %1774 = vst [vmem:[%s230 + $0x7c] sm:$0xf] %v1710
      $region44: #{conad_forward.6} parent=35 // pred_fallthru
        _
      %s1775 = smul.u32 32, %s19
      %p1776 = scmp.lt.s32.totalorder %s1775, 63
      %s1777 = scalar_select %p1776, %s1775, 63
      %s1778 = smul.addr %s1777, 4
      %s1779 = scalar_lea.vmem %s4, %s1778
      // Predicated region
      $region45: #{conad_forward.6} parent=35 // pred_check
        %p1780 = pneg %p136
      $region46: #{conad_forward.6} parent=35 // pred_check_branch
        %1782 = sbr.rel (%p1780) target = $region48
      $region47: #{conad_forward.6} parent=35 // pred_region
        %s1783 = smul.u32 32, %s19
      $region48: #{conad_forward.6} parent=35 // pred_fallthru
        _
    $region36: #{conad_forward.6} parent=5 // pred_fallthru
      _
    %p1784 = scmp.le.s32.totalorder 2, %s10
    // Predicated region
    $region49: #{conad_forward.6} parent=5 // pred_check
      %p1785 = pneg %p1784
    $region50: #{conad_forward.6} parent=5 // pred_check_branch
      %1787 = sbr.rel (%p1785) target = $region52
    $region51: #{conad_forward.6} parent=5 // pred_region
      %s1788 = ssub.s32 %s10, 2
      // Predicated region
      $region53: #{conad_forward.6} parent=51 // pred_check
        %p1789 = pneg %p142
      $region54: #{conad_forward.6} parent=51 // pred_check_branch
        %1791 = sbr.rel (%p1789) target = $region56
      $region55: #{conad_forward.6} parent=51 // pred_region
        %s1792 = smul.u32 32, %s21
        %p1793 = scmp.lt.s32.totalorder %s1792, 63
        %s1794 = scalar_select %p1793, %s1792, 63
        %s1795 = smul.addr %s1794, 4
        %s1796 = scalar_lea.vmem %s4, %s1795
      $region56: #{conad_forward.6} parent=51 // pred_fallthru
        _
    $region52: #{conad_forward.6} parent=5 // pred_fallthru
      _
  $region6: #{conad_forward.6} parent=0 // loop_footer
    %s14 = sadd.s32 1, %s10
  $region7: #{conad_forward.6} parent=0 // loop_footer_branch
    %9 = sbr.rel target = $region3
  $region8: #{conad_forward.6} parent=0 // loop_exit
    _

// kernel: conad_forward.5
$region0: #{conad_forward.5}
  #allocation0 [shape = 'u32[]', space=smem, size = 0x4, offset = 0x4, fixed_abs, tag = 'smem constant byte address 0x4 - core index']
  #allocation1 [shape = 'u32[144,128]{1,0:T(1,128)}', space=vmem, size = 0x12000, scoped, tag = 'internal scratch']
  #allocation2 [shape = 'f32[256,128]{1,0:T(8,128)}', space=vmem, size = 0x20000, scoped, tag = 'scratch operand']
  %s0 = inlined_call_operand.vmem [shape: bf16[512,512], index: 0, kind: input, shape index: {}]
  %s1 = inlined_call_operand.vmem [shape: bf16[512,128], index: 1, kind: input, shape index: {}]
  %s2 = inlined_call_operand.vmem [shape: bf16[128,128], index: 2, kind: input, shape index: {}]
  %s3 = inlined_call_operand.vmem [shape: f32[1,128], index: 3, kind: input, shape index: {}]
  %s4 = inlined_call_operand.vmem [shape: bf16[512,128], index: 4, kind: output, shape index: {}]
  %s5 = sld [smem:[#allocation0]]
  $region57: #{conad_forward.5} parent=0
    _
  %s7 = ssub.s32 1, %s5
  %s8 = scalar_select 0, %s7, %s5
  loop: start=0, step=1, limit=4
  $region2: #{conad_forward.5} parent=0 // loop_pre_header
    _
  $region3: #{conad_forward.5} parent=0 // loop_header
    %s10 = sphi 0, %s14
    %p11 = scmp.ge.s32.totalorder %s10, 4
    %s17 = sphi 0, %s29
    %s18 = sphi 0, %s25
    %s19 = sphi 0, %s17
    %s20 = sphi 0, %s18
    %s21 = sphi 0, %s19
    %s22 = sphi 0, %s20
    %s34 = sphi 0, %s36
    %s37 = sphi 0, %s34
    %s38 = sphi 0, %s37
    %s54 = sphi 0, %s38
    %s58 = sphi 0, %s58
    %s60 = sphi 0, %s58
    %s61 = sphi 0, %s60
    %s75 = sphi 0, %s61
    %s79 = sphi 0, %s79
    %s81 = sphi 0, %s79
    %s82 = sphi 0, %s81
    %s96 = sphi 0, %s82
    %s100 = sphi 0, %s100
    %s102 = sphi 0, %s100
    %s103 = sphi 0, %s102
    %s117 = sphi 0, %s103
    %s123 = sphi 0, %s125
    %s126 = sphi 0, %s123
    %s127 = sphi 0, %s126
    %s143 = sphi 0, %s127
  $region4: #{conad_forward.5} parent=0 // loop_header_branch
    %13 = sbr.rel (%p11) target = $region8
  $region5: #{conad_forward.5} parent=0 // loop_body
    %s15 = ssub.s32 %s10, 1
    %s16 = ssub.s32 %s10, 2
    %s23 = sadd.s32 1, %s18
    %p24 = scmp.ge.s32.totalorder %s23, 1
    %s25 = scalar_select %p24, 0, %s23
    %s26 = sadd.s32 1, %s17
    %s27 = scalar_select %p24, %s26, %s17
    %p28 = scmp.ge.s32.totalorder %s27, 2
    %s29 = scalar_select %p28, 0, %s27
    %s30 = ssub.s32 %s17, %s29
    %s31 = ssub.s32 %s18, %s25
    %s32 = sor.u32 %s30, %s31
    %p33 = scmp.eq.s32.totalorder %s32, 0
    %s35 = sadd.s32 %s34, 1
    %s36 = scalar_select %p33, %s34, %s35
    %p39 = pneg %p33
    %p40 = scmp.eq.s32.totalorder %s10, 1
    %p41 = por %p39, %p40
    %p42 = scmp.ne.s32.totalorder %s34, %s37
    %p43 = scmp.eq.s32.totalorder %s10, 0
    %p44 = por %p42, %p43
    %p45 = scmp.ne.s32.totalorder %s34, %s37
    %p46 = scmp.eq.s32.totalorder %s15, 1
    %p47 = por %p45, %p46
    %p48 = scmp.ne.s32.totalorder %s37, %s38
    %p49 = scmp.eq.s32.totalorder %s15, 0
    %p50 = por %p48, %p49
    %p51 = scmp.ne.s32.totalorder %s37, %s38
    %p52 = scmp.eq.s32.totalorder %s16, 1
    %p53 = por %p51, %p52
    %p55 = scmp.ne.s32.totalorder %s38, %s54
    %p56 = scmp.eq.s32.totalorder %s16, 0
    %p57 = por %p55, %p56
    %s59 = sadd.s32 %s58, 1
    %p62 = scmp.eq.s32.totalorder %s10, 1
    %p63 = scmp.ne.s32.totalorder %s58, %s60
    %p64 = scmp.eq.s32.totalorder %s10, 0
    %p65 = por %p63, %p64
    %p66 = scmp.ne.s32.totalorder %s58, %s60
    %p67 = scmp.eq.s32.totalorder %s15, 1
    %p68 = por %p66, %p67
    %p69 = scmp.ne.s32.totalorder %s60, %s61
    %p70 = scmp.eq.s32.totalorder %s15, 0
    %p71 = por %p69, %p70
    %p72 = scmp.ne.s32.totalorder %s60, %s61
    %p73 = scmp.eq.s32.totalorder %s16, 1
    %p74 = por %p72, %p73
    %p76 = scmp.ne.s32.totalorder %s61, %s75
    %p77 = scmp.eq.s32.totalorder %s16, 0
    %p78 = por %p76, %p77
    %s80 = sadd.s32 %s79, 1
    %p83 = scmp.eq.s32.totalorder %s10, 1
    %p84 = scmp.ne.s32.totalorder %s79, %s81
    %p85 = scmp.eq.s32.totalorder %s10, 0
    %p86 = por %p84, %p85
    %p87 = scmp.ne.s32.totalorder %s79, %s81
    %p88 = scmp.eq.s32.totalorder %s15, 1
    %p89 = por %p87, %p88
    %p90 = scmp.ne.s32.totalorder %s81, %s82
    %p91 = scmp.eq.s32.totalorder %s15, 0
    %p92 = por %p90, %p91
    %p93 = scmp.ne.s32.totalorder %s81, %s82
    %p94 = scmp.eq.s32.totalorder %s16, 1
    %p95 = por %p93, %p94
    %p97 = scmp.ne.s32.totalorder %s82, %s96
    %p98 = scmp.eq.s32.totalorder %s16, 0
    %p99 = por %p97, %p98
    %s101 = sadd.s32 %s100, 1
    %p104 = scmp.eq.s32.totalorder %s10, 1
    %p105 = scmp.ne.s32.totalorder %s100, %s102
    %p106 = scmp.eq.s32.totalorder %s10, 0
    %p107 = por %p105, %p106
    %p108 = scmp.ne.s32.totalorder %s100, %s102
    %p109 = scmp.eq.s32.totalorder %s15, 1
    %p110 = por %p108, %p109
    %p111 = scmp.ne.s32.totalorder %s102, %s103
    %p112 = scmp.eq.s32.totalorder %s15, 0
    %p113 = por %p111, %p112
    %p114 = scmp.ne.s32.totalorder %s102, %s103
    %p115 = scmp.eq.s32.totalorder %s16, 1
    %p116 = por %p114, %p115
    %p118 = scmp.ne.s32.totalorder %s103, %s117
    %p119 = scmp.eq.s32.totalorder %s16, 0
    %p120 = por %p118, %p119
    %s121 = ssub.s32 %s17, %s29
    %p122 = scmp.eq.s32.totalorder %s121, 0
    %s124 = sadd.s32 %s123, 1
    %s125 = scalar_select %p122, %s123, %s124
    %p128 = pneg %p122
    %p129 = scmp.eq.s32.totalorder %s10, 1
    %p130 = por %p128, %p129
    %p131 = scmp.ne.s32.totalorder %s123, %s126
    %p132 = scmp.eq.s32.totalorder %s10, 0
    %p133 = por %p131, %p132
    %p134 = scmp.ne.s32.totalorder %s123, %s126
    %p135 = scmp.eq.s32.totalorder %s15, 1
    %p136 = por %p134, %p135
    %p137 = scmp.ne.s32.totalorder %s126, %s127
    %p138 = scmp.eq.s32.totalorder %s15, 0
    %p139 = por %p137, %p138
    %p140 = scmp.ne.s32.totalorder %s126, %s127
    %p141 = scmp.eq.s32.totalorder %s16, 1
    %p142 = por %p140, %p141
    %p144 = scmp.ne.s32.totalorder %s127, %s143
    %p145 = scmp.eq.s32.totalorder %s16, 0
    %p146 = por %p144, %p145
    %p147 = scmp.le.s32.totalorder 1, %s10
    %p148 = scmp.lt.s32.totalorder %s10, 3
    %p149 = pnand %p147, %p148
    %p150 = pneg %p149
    // Predicated region
    $region9: #{conad_forward.5} parent=5 // pred_check
      _
    $region10: #{conad_forward.5} parent=5 // pred_check_branch
      %152 = sbr.rel (%p149) target = $region12
    $region11: #{conad_forward.5} parent=5 // pred_region
      %s153 = ssub.s32 %s10, 1
      // Predicated region
      $region13: #{conad_forward.5} parent=11 // pred_check
        %p154 = pneg %p71
      $region14: #{conad_forward.5} parent=11 // pred_check_branch
        %156 = sbr.rel (%p154) target = $region16
      $region15: #{conad_forward.5} parent=11 // pred_region
        _
      $region16: #{conad_forward.5} parent=11 // pred_fallthru
        _
      // Predicated region
      $region17: #{conad_forward.5} parent=11 // pred_check
        %p157 = pneg %p92
      $region18: #{conad_forward.5} parent=11 // pred_check_branch
        %159 = sbr.rel (%p157) target = $region20
      $region19: #{conad_forward.5} parent=11 // pred_region
        _
      $region20: #{conad_forward.5} parent=11 // pred_fallthru
        _
      // Predicated region
      $region21: #{conad_forward.5} parent=11 // pred_check
        %p160 = pneg %p113
      $region22: #{conad_forward.5} parent=11 // pred_check_branch
        %162 = sbr.rel (%p160) target = $region24
      $region23: #{conad_forward.5} parent=11 // pred_region
        _
      $region24: #{conad_forward.5} parent=11 // pred_fallthru
        _
    $region12: #{conad_forward.5} parent=5 // pred_fallthru
      _
    %p163 = scmp.lt.s32.totalorder %s10, 2
    // Predicated region
    $region25: #{conad_forward.5} parent=5 // pred_check
      %p164 = pneg %p163
    $region26: #{conad_forward.5} parent=5 // pred_check_branch
      %166 = sbr.rel (%p164) target = $region28
    $region27: #{conad_forward.5} parent=5 // pred_region
      // Predicated region
      $region29: #{conad_forward.5} parent=27 // pred_check
        %p167 = pneg %p44
      $region30: #{conad_forward.5} parent=27 // pred_check_branch
        %169 = sbr.rel (%p167) target = $region32
      $region31: #{conad_forward.5} parent=27 // pred_region
        %s170 = smul.u32 32, %s17
        %s171 = smul.u32 4, %s18
        %p172 = scmp.lt.s32.totalorder %s170, 63
        %s173 = scalar_select %p172, %s170, 63
        %p174 = scmp.lt.s32.totalorder %s171, 3
        %s175 = scalar_select %p174, %s171, 3
        %s176 = smul.addr %s173, 4
        %s177 = sadd.s32 %s175, %s176
        %s178 = smul.addr %s177, 4
        %s179 = scalar_lea.vmem %s0, %s178
        %s180 = smul.u32 32, %s17
        %s181 = smul.u32 4, %s18
      $region32: #{conad_forward.5} parent=27 // pred_fallthru
        _
    $region28: #{conad_forward.5} parent=5 // pred_fallthru
      _
    %p182 = scmp.le.s32.totalorder 1, %s10
    %p183 = scmp.lt.s32.totalorder %s10, 3
    %p184 = pnand %p182, %p183
    %p185 = pneg %p184
    // Predicated region
    $region33: #{conad_forward.5} parent=5 // pred_check
      _
    $region34: #{conad_forward.5} parent=5 // pred_check_branch
      %187 = sbr.rel (%p184) target = $region36
    $region35: #{conad_forward.5} parent=5 // pred_region
      %s188 = ssub.s32 %s10, 1
      %s189 = smul.u32 32, %s19
      %s190 = smul.u32 4, %s20
      %p191 = scmp.lt.s32.totalorder %s189, 63
      %s192 = scalar_select %p191, %s189, 63
      %p193 = scmp.lt.s32.totalorder %s190, 3
      %s194 = scalar_select %p193, %s190, 3
      %s195 = smul.addr %s192, 4
      %s196 = sadd.s32 %s194, %s195
      %s197 = smul.addr %s196, 4
      %s198 = scalar_lea.vmem %s0, %s197
      %p199 = pneg %p50
      %p200 = pneg %p47
      %p201 = pneg %p71
      %p202 = pneg %p68
      %p203 = pneg %p92
      %p204 = pneg %p89
      %p205 = pneg %p113
      %p206 = pneg %p110
      %p207 = pneg %p139
      %p208 = pneg %p136
      %s209 = smul.u32 32, %s19
      %p210 = scmp.lt.s32.totalorder %s209, 63
      %s211 = scalar_select %p210, %s209, 63
      %s212 = smul.addr %s211, 4
      %s213 = scalar_lea.vmem %s4, %s212
      %s214 = smul.u32 32, %s19
      %s215 = smul.u32 4, %s20
      %p216 = scmp.lt.s32.totalorder %s214, 63
      %s217 = scalar_select %p216, %s214, 63
      %p218 = scmp.lt.s32.totalorder %s215, 3
      %s219 = scalar_select %p218, %s215, 3
      %s220 = smul.addr %s217, 4
      %s221 = sadd.s32 %s219, %s220
      %s222 = smul.addr %s221, 4
      %s223 = scalar_lea.vmem %s0, %s222
      %s224 = smul.u32 32, %s19
      %s225 = smul.u32 4, %s20
      %s226 = smul.u32 32, %s19
      %p227 = scmp.lt.s32.totalorder %s226, 63
      %s228 = scalar_select %p227, %s226, 63
      %s229 = smul.addr %s228, 4
      %s230 = scalar_lea.vmem %s4, %s229
      %s231 = smul.u32 32, %s19
      %p233 = scmp.eq.s32.totalorder %s20, 0
      // Predicated region
      $region37: #{conad_forward.5} parent=35 // pred_check
        %p234 = pneg %p233
      $region38: #{conad_forward.5} parent=35 // pred_check_branch
        %236 = sbr.rel (%p234) target = $region40
      $region39: #{conad_forward.5} parent=35 // pred_region
        %237 = vst [vmem:[#allocation2] sm:$0xff] 0.0
        %238 = vst [vmem:[#allocation2 + $0x8] sm:$0xff] 0.0
        %239 = vst [vmem:[#allocation2 + $0x10] sm:$0xff] 0.0
        %240 = vst [vmem:[#allocation2 + $0x18] sm:$0xff] 0.0
        %241 = vst [vmem:[#allocation2 + $0x20] sm:$0xff] 0.0
        %242 = vst [vmem:[#allocation2 + $0x28] sm:$0xff] 0.0
        %243 = vst [vmem:[#allocation2 + $0x30] sm:$0xff] 0.0
        %244 = vst [vmem:[#allocation2 + $0x38] sm:$0xff] 0.0
        %245 = vst [vmem:[#allocation2 + $0x40] sm:$0xff] 0.0
        %246 = vst [vmem:[#allocation2 + $0x48] sm:$0xff] 0.0
        %247 = vst [vmem:[#allocation2 + $0x50] sm:$0xff] 0.0
        %248 = vst [vmem:[#allocation2 + $0x58] sm:$0xff] 0.0
        %249 = vst [vmem:[#allocation2 + $0x60] sm:$0xff] 0.0
        %250 = vst [vmem:[#allocation2 + $0x68] sm:$0xff] 0.0
        %251 = vst [vmem:[#allocation2 + $0x70] sm:$0xff] 0.0
        %252 = vst [vmem:[#allocation2 + $0x78] sm:$0xff] 0.0
        %253 = vst [vmem:[#allocation2 + $0x80] sm:$0xff] 0.0
        %254 = vst [vmem:[#allocation2 + $0x88] sm:$0xff] 0.0
        %255 = vst [vmem:[#allocation2 + $0x90] sm:$0xff] 0.0
        %256 = vst [vmem:[#allocation2 + $0x98] sm:$0xff] 0.0
        %257 = vst [vmem:[#allocation2 + $0xa0] sm:$0xff] 0.0
        %258 = vst [vmem:[#allocation2 + $0xa8] sm:$0xff] 0.0
        %259 = vst [vmem:[#allocation2 + $0xb0] sm:$0xff] 0.0
        %260 = vst [vmem:[#allocation2 + $0xb8] sm:$0xff] 0.0
        %261 = vst [vmem:[#allocation2 + $0xc0] sm:$0xff] 0.0
        %262 = vst [vmem:[#allocation2 + $0xc8] sm:$0xff] 0.0
        %263 = vst [vmem:[#allocation2 + $0xd0] sm:$0xff] 0.0
        %264 = vst [vmem:[#allocation2 + $0xd8] sm:$0xff] 0.0
        %265 = vst [vmem:[#allocation2 + $0xe0] sm:$0xff] 0.0
        %266 = vst [vmem:[#allocation2 + $0xe8] sm:$0xff] 0.0
        %267 = vst [vmem:[#allocation2 + $0xf0] sm:$0xff] 0.0
        %268 = vst [vmem:[#allocation2 + $0xf8] sm:$0xff] 0.0
      $region40: #{conad_forward.5} parent=35 // pred_fallthru
        _
      %s269 = smul.u32 %s20, 512
      %v270 = vld [vmem:[#allocation2] sm:$0xff]
      %v271 = vld [vmem:[#allocation2 + $0x8] sm:$0xff]
      %v272 = vld [vmem:[#allocation2 + $0x10] sm:$0xff]
      %v273 = vld [vmem:[#allocation2 + $0x18] sm:$0xff]
      %v274 = vld [vmem:[#allocation2 + $0x20] sm:$0xff]
      %v275 = vld [vmem:[#allocation2 + $0x28] sm:$0xff]
      %v276 = vld [vmem:[#allocation2 + $0x30] sm:$0xff]
      %v277 = vld [vmem:[#allocation2 + $0x38] sm:$0xff]
      %v278 = vld [vmem:[#allocation2 + $0x40] sm:$0xff]
      %v279 = vld [vmem:[#allocation2 + $0x48] sm:$0xff]
      %v280 = vld [vmem:[#allocation2 + $0x50] sm:$0xff]
      %v281 = vld [vmem:[#allocation2 + $0x58] sm:$0xff]
      %v282 = vld [vmem:[#allocation2 + $0x60] sm:$0xff]
      %v283 = vld [vmem:[#allocation2 + $0x68] sm:$0xff]
      %v284 = vld [vmem:[#allocation2 + $0x70] sm:$0xff]
      %v285 = vld [vmem:[#allocation2 + $0x78] sm:$0xff]
      %v286 = vld [vmem:[#allocation2 + $0x80] sm:$0xff]
      %v287 = vld [vmem:[#allocation2 + $0x88] sm:$0xff]
      %v288 = vld [vmem:[#allocation2 + $0x90] sm:$0xff]
      %v289 = vld [vmem:[#allocation2 + $0x98] sm:$0xff]
      %v290 = vld [vmem:[#allocation2 + $0xa0] sm:$0xff]
      %v291 = vld [vmem:[#allocation2 + $0xa8] sm:$0xff]
      %v292 = vld [vmem:[#allocation2 + $0xb0] sm:$0xff]
      %v293 = vld [vmem:[#allocation2 + $0xb8] sm:$0xff]
      %v294 = vld [vmem:[#allocation2 + $0xc0] sm:$0xff]
      %v295 = vld [vmem:[#allocation2 + $0xc8] sm:$0xff]
      %v296 = vld [vmem:[#allocation2 + $0xd0] sm:$0xff]
      %v297 = vld [vmem:[#allocation2 + $0xd8] sm:$0xff]
      %v298 = vld [vmem:[#allocation2 + $0xe0] sm:$0xff]
      %v299 = vld [vmem:[#allocation2 + $0xe8] sm:$0xff]
      %v300 = vld [vmem:[#allocation2 + $0xf0] sm:$0xff]
      %v301 = vld [vmem:[#allocation2 + $0xf8] sm:$0xff]
      %v302 = vld [vmem:[%s223] sm:$0xff]
      %v303 = vld [vmem:[%s223 + $0x8] sm:$0xff]
      %v304 = vld [vmem:[%s223 + $0x10] sm:$0xff]
      %v305 = vld [vmem:[%s223 + $0x18] sm:$0xff]
      %v306 = vld [vmem:[%s223 + $0x20] sm:$0xff]
      %v307 = vld [vmem:[%s223 + $0x28] sm:$0xff]
      %v308 = vld [vmem:[%s223 + $0x30] sm:$0xff]
      %v309 = vld [vmem:[%s223 + $0x38] sm:$0xff]
      %v310 = vld [vmem:[%s223 + $0x40] sm:$0xff]
      %v311 = vld [vmem:[%s223 + $0x48] sm:$0xff]
      %v312 = vld [vmem:[%s223 + $0x50] sm:$0xff]
      %v313 = vld [vmem:[%s223 + $0x58] sm:$0xff]
      %v314 = vld [vmem:[%s223 + $0x60] sm:$0xff]
      %v315 = vld [vmem:[%s223 + $0x68] sm:$0xff]
      %v316 = vld [vmem:[%s223 + $0x70] sm:$0xff]
      %v317 = vld [vmem:[%s223 + $0x78] sm:$0xff]
      %v318 = vld [vmem:[%s223 + $0x80] sm:$0xff]
      %v319 = vld [vmem:[%s223 + $0x88] sm:$0xff]
      %v320 = vld [vmem:[%s223 + $0x90] sm:$0xff]
      %v321 = vld [vmem:[%s223 + $0x98] sm:$0xff]
      %v322 = vld [vmem:[%s223 + $0xa0] sm:$0xff]
      %v323 = vld [vmem:[%s223 + $0xa8] sm:$0xff]
      %v324 = vld [vmem:[%s223 + $0xb0] sm:$0xff]
      %v325 = vld [vmem:[%s223 + $0xb8] sm:$0xff]
      %v326 = vld [vmem:[%s223 + $0xc0] sm:$0xff]
      %v327 = vld [vmem:[%s223 + $0xc8] sm:$0xff]
      %v328 = vld [vmem:[%s223 + $0xd0] sm:$0xff]
      %v329 = vld [vmem:[%s223 + $0xd8] sm:$0xff]
      %v330 = vld [vmem:[%s223 + $0xe0] sm:$0xff]
      %v331 = vld [vmem:[%s223 + $0xe8] sm:$0xff]
      %v332 = vld [vmem:[%s223 + $0xf0] sm:$0xff]
      %v333 = vld [vmem:[%s223 + $0xf8] sm:$0xff]
      %v334 = vld [vmem:[%s223 + $0x100] sm:$0xff]
      %v335 = vld [vmem:[%s223 + $0x108] sm:$0xff]
      %v336 = vld [vmem:[%s223 + $0x110] sm:$0xff]
      %v337 = vld [vmem:[%s223 + $0x118] sm:$0xff]
      %v338 = vld [vmem:[%s223 + $0x120] sm:$0xff]
      %v339 = vld [vmem:[%s223 + $0x128] sm:$0xff]
      %v340 = vld [vmem:[%s223 + $0x130] sm:$0xff]
      %v341 = vld [vmem:[%s223 + $0x138] sm:$0xff]
      %v342 = vld [vmem:[%s223 + $0x140] sm:$0xff]
      %v343 = vld [vmem:[%s223 + $0x148] sm:$0xff]
      %v344 = vld [vmem:[%s223 + $0x150] sm:$0xff]
      %v345 = vld [vmem:[%s223 + $0x158] sm:$0xff]
      %v346 = vld [vmem:[%s223 + $0x160] sm:$0xff]
      %v347 = vld [vmem:[%s223 + $0x168] sm:$0xff]
      %v348 = vld [vmem:[%s223 + $0x170] sm:$0xff]
      %v349 = vld [vmem:[%s223 + $0x178] sm:$0xff]
      %v350 = vld [vmem:[%s223 + $0x180] sm:$0xff]
      %v351 = vld [vmem:[%s223 + $0x188] sm:$0xff]
      %v352 = vld [vmem:[%s223 + $0x190] sm:$0xff]
      %v353 = vld [vmem:[%s223 + $0x198] sm:$0xff]
      %v354 = vld [vmem:[%s223 + $0x1a0] sm:$0xff]
      %v355 = vld [vmem:[%s223 + $0x1a8] sm:$0xff]
      %v356 = vld [vmem:[%s223 + $0x1b0] sm:$0xff]
      %v357 = vld [vmem:[%s223 + $0x1b8] sm:$0xff]
      %v358 = vld [vmem:[%s223 + $0x1c0] sm:$0xff]
      %v359 = vld [vmem:[%s223 + $0x1c8] sm:$0xff]
      %v360 = vld [vmem:[%s223 + $0x1d0] sm:$0xff]
      %v361 = vld [vmem:[%s223 + $0x1d8] sm:$0xff]
      %v362 = vld [vmem:[%s223 + $0x1e0] sm:$0xff]
      %v363 = vld [vmem:[%s223 + $0x1e8] sm:$0xff]
      %v364 = vld [vmem:[%s223 + $0x1f0] sm:$0xff]
      %v365 = vld [vmem:[%s223 + $0x1f8] sm:$0xff]
      %s366 = sshra.s32 %s269, 3
      %s367 = sand.u32 %s269, 7
      %s368 = smul.addr %s366, 4
      %s369 = scalar_lea.vmem %s1, %s368
      %v370 = vld [vmem:[%s369] sm:$0xf]
      %v371 = vld [vmem:[%s369 + $0x4] sm:$0xf]
      %v372 = vld [vmem:[%s369 + $0x8] sm:$0xf]
      %v373 = vld [vmem:[%s369 + $0xc] sm:$0xf]
      %v374 = vld [vmem:[%s369 + $0x10] sm:$0xf]
      %v375 = vld [vmem:[%s369 + $0x14] sm:$0xf]
      %v376 = vld [vmem:[%s369 + $0x18] sm:$0xf]
      %v377 = vld [vmem:[%s369 + $0x1c] sm:$0xf]
      %v378 = vld [vmem:[%s369 + $0x20] sm:$0xf]
      %v379 = vld [vmem:[%s369 + $0x24] sm:$0xf]
      %v380 = vld [vmem:[%s369 + $0x28] sm:$0xf]
      %v381 = vld [vmem:[%s369 + $0x2c] sm:$0xf]
      %v382 = vld [vmem:[%s369 + $0x30] sm:$0xf]
      %v383 = vld [vmem:[%s369 + $0x34] sm:$0xf]
      %v384 = vld [vmem:[%s369 + $0x38] sm:$0xf]
      %v385 = vld [vmem:[%s369 + $0x3c] sm:$0xf]
      %v386 = vld [vmem:[%s369 + $0x40] sm:$0xf]
      %v387 = vld [vmem:[%s369 + $0x44] sm:$0xf]
      %v388 = vld [vmem:[%s369 + $0x48] sm:$0xf]
      %v389 = vld [vmem:[%s369 + $0x4c] sm:$0xf]
      %v390 = vld [vmem:[%s369 + $0x50] sm:$0xf]
      %v391 = vld [vmem:[%s369 + $0x54] sm:$0xf]
      %v392 = vld [vmem:[%s369 + $0x58] sm:$0xf]
      %v393 = vld [vmem:[%s369 + $0x5c] sm:$0xf]
      %v394 = vld [vmem:[%s369 + $0x60] sm:$0xf]
      %v395 = vld [vmem:[%s369 + $0x64] sm:$0xf]
      %v396 = vld [vmem:[%s369 + $0x68] sm:$0xf]
      %v397 = vld [vmem:[%s369 + $0x6c] sm:$0xf]
      %v398 = vld [vmem:[%s369 + $0x70] sm:$0xf]
      %v399 = vld [vmem:[%s369 + $0x74] sm:$0xf]
      %v400 = vld [vmem:[%s369 + $0x78] sm:$0xf]
      %v401 = vld [vmem:[%s369 + $0x7c] sm:$0xf]
      %v402 = vld [vmem:[%s369 + $0x80] sm:$0xf]
      %v403 = vld [vmem:[%s369 + $0x84] sm:$0xf]
      %v404 = vld [vmem:[%s369 + $0x88] sm:$0xf]
      %v405 = vld [vmem:[%s369 + $0x8c] sm:$0xf]
      %v406 = vld [vmem:[%s369 + $0x90] sm:$0xf]
      %v407 = vld [vmem:[%s369 + $0x94] sm:$0xf]
      %v408 = vld [vmem:[%s369 + $0x98] sm:$0xf]
      %v409 = vld [vmem:[%s369 + $0x9c] sm:$0xf]
      %v410 = vld [vmem:[%s369 + $0xa0] sm:$0xf]
      %v411 = vld [vmem:[%s369 + $0xa4] sm:$0xf]
      %v412 = vld [vmem:[%s369 + $0xa8] sm:$0xf]
      %v413 = vld [vmem:[%s369 + $0xac] sm:$0xf]
      %v414 = vld [vmem:[%s369 + $0xb0] sm:$0xf]
      %v415 = vld [vmem:[%s369 + $0xb4] sm:$0xf]
      %v416 = vld [vmem:[%s369 + $0xb8] sm:$0xf]
      %v417 = vld [vmem:[%s369 + $0xbc] sm:$0xf]
      %v418 = vld [vmem:[%s369 + $0xc0] sm:$0xf]
      %v419 = vld [vmem:[%s369 + $0xc4] sm:$0xf]
      %v420 = vld [vmem:[%s369 + $0xc8] sm:$0xf]
      %v421 = vld [vmem:[%s369 + $0xcc] sm:$0xf]
      %v422 = vld [vmem:[%s369 + $0xd0] sm:$0xf]
      %v423 = vld [vmem:[%s369 + $0xd4] sm:$0xf]
      %v424 = vld [vmem:[%s369 + $0xd8] sm:$0xf]
      %v425 = vld [vmem:[%s369 + $0xdc] sm:$0xf]
      %v426 = vld [vmem:[%s369 + $0xe0] sm:$0xf]
      %v427 = vld [vmem:[%s369 + $0xe4] sm:$0xf]
      %v428 = vld [vmem:[%s369 + $0xe8] sm:$0xf]
      %v429 = vld [vmem:[%s369 + $0xec] sm:$0xf]
      %v430 = vld [vmem:[%s369 + $0xf0] sm:$0xf]
      %v431 = vld [vmem:[%s369 + $0xf4] sm:$0xf]
      %v432 = vld [vmem:[%s369 + $0xf8] sm:$0xf]
      %v433 = vld [vmem:[%s369 + $0xfc] sm:$0xf]
      %v498 = vunpack.c.l.b16 %v302
      %v499 = vunpack.c.h.b16 %v302
      %v500 = vunpack.c.l.b16 %v303
      %v501 = vunpack.c.h.b16 %v303
      %v502 = vunpack.c.l.b16 %v304
      %v503 = vunpack.c.h.b16 %v304
      %v504 = vunpack.c.l.b16 %v305
      %v505 = vunpack.c.h.b16 %v305
      %v506 = vunpack.c.l.b16 %v306
      %v507 = vunpack.c.h.b16 %v306
      %v508 = vunpack.c.l.b16 %v307
      %v509 = vunpack.c.h.b16 %v307
      %v510 = vunpack.c.l.b16 %v308
      %v511 = vunpack.c.h.b16 %v308
      %v512 = vunpack.c.l.b16 %v309
      %v513 = vunpack.c.h.b16 %v309
      %v514 = vunpack.c.l.b16 %v310
      %v515 = vunpack.c.h.b16 %v310
      %v516 = vunpack.c.l.b16 %v311
      %v517 = vunpack.c.h.b16 %v311
      %v518 = vunpack.c.l.b16 %v312
      %v519 = vunpack.c.h.b16 %v312
      %v520 = vunpack.c.l.b16 %v313
      %v521 = vunpack.c.h.b16 %v313
      %v522 = vunpack.c.l.b16 %v314
      %v523 = vunpack.c.h.b16 %v314
      %v524 = vunpack.c.l.b16 %v315
      %v525 = vunpack.c.h.b16 %v315
      %v526 = vunpack.c.l.b16 %v316
      %v527 = vunpack.c.h.b16 %v316
      %v528 = vunpack.c.l.b16 %v317
      %v529 = vunpack.c.h.b16 %v317
      %v530 = vunpack.c.l.b16 %v318
      %v531 = vunpack.c.h.b16 %v318
      %v532 = vunpack.c.l.b16 %v319
      %v533 = vunpack.c.h.b16 %v319
      %v534 = vunpack.c.l.b16 %v320
      %v535 = vunpack.c.h.b16 %v320
      %v536 = vunpack.c.l.b16 %v321
      %v537 = vunpack.c.h.b16 %v321
      %v538 = vunpack.c.l.b16 %v322
      %v539 = vunpack.c.h.b16 %v322
      %v540 = vunpack.c.l.b16 %v323
      %v541 = vunpack.c.h.b16 %v323
      %v542 = vunpack.c.l.b16 %v324
      %v543 = vunpack.c.h.b16 %v324
      %v544 = vunpack.c.l.b16 %v325
      %v545 = vunpack.c.h.b16 %v325
      %v546 = vunpack.c.l.b16 %v326
      %v547 = vunpack.c.h.b16 %v326
      %v548 = vunpack.c.l.b16 %v327
      %v549 = vunpack.c.h.b16 %v327
      %v550 = vunpack.c.l.b16 %v328
      %v551 = vunpack.c.h.b16 %v328
      %v552 = vunpack.c.l.b16 %v329
      %v553 = vunpack.c.h.b16 %v329
      %v554 = vunpack.c.l.b16 %v330
      %v555 = vunpack.c.h.b16 %v330
      %v556 = vunpack.c.l.b16 %v331
      %v557 = vunpack.c.h.b16 %v331
      %v558 = vunpack.c.l.b16 %v332
      %v559 = vunpack.c.h.b16 %v332
      %v560 = vunpack.c.l.b16 %v333
      %v561 = vunpack.c.h.b16 %v333
      %v562 = vunpack.c.l.b16 %v334
      %v563 = vunpack.c.h.b16 %v334
      %v564 = vunpack.c.l.b16 %v335
      %v565 = vunpack.c.h.b16 %v335
      %v566 = vunpack.c.l.b16 %v336
      %v567 = vunpack.c.h.b16 %v336
      %v568 = vunpack.c.l.b16 %v337
      %v569 = vunpack.c.h.b16 %v337
      %v570 = vunpack.c.l.b16 %v338
      %v571 = vunpack.c.h.b16 %v338
      %v572 = vunpack.c.l.b16 %v339
      %v573 = vunpack.c.h.b16 %v339
      %v574 = vunpack.c.l.b16 %v340
      %v575 = vunpack.c.h.b16 %v340
      %v576 = vunpack.c.l.b16 %v341
      %v577 = vunpack.c.h.b16 %v341
      %v578 = vunpack.c.l.b16 %v342
      %v579 = vunpack.c.h.b16 %v342
      %v580 = vunpack.c.l.b16 %v343
      %v581 = vunpack.c.h.b16 %v343
      %v582 = vunpack.c.l.b16 %v344
      %v583 = vunpack.c.h.b16 %v344
      %v584 = vunpack.c.l.b16 %v345
      %v585 = vunpack.c.h.b16 %v345
      %v586 = vunpack.c.l.b16 %v346
      %v587 = vunpack.c.h.b16 %v346
      %v588 = vunpack.c.l.b16 %v347
      %v589 = vunpack.c.h.b16 %v347
      %v590 = vunpack.c.l.b16 %v348
      %v591 = vunpack.c.h.b16 %v348
      %v592 = vunpack.c.l.b16 %v349
      %v593 = vunpack.c.h.b16 %v349
      %v594 = vunpack.c.l.b16 %v350
      %v595 = vunpack.c.h.b16 %v350
      %v596 = vunpack.c.l.b16 %v351
      %v597 = vunpack.c.h.b16 %v351
      %v598 = vunpack.c.l.b16 %v352
      %v599 = vunpack.c.h.b16 %v352
      %v600 = vunpack.c.l.b16 %v353
      %v601 = vunpack.c.h.b16 %v353
      %v602 = vunpack.c.l.b16 %v354
      %v603 = vunpack.c.h.b16 %v354
      %v604 = vunpack.c.l.b16 %v355
      %v605 = vunpack.c.h.b16 %v355
      %v606 = vunpack.c.l.b16 %v356
      %v607 = vunpack.c.h.b16 %v356
      %v608 = vunpack.c.l.b16 %v357
      %v609 = vunpack.c.h.b16 %v357
      %v610 = vunpack.c.l.b16 %v358
      %v611 = vunpack.c.h.b16 %v358
      %v612 = vunpack.c.l.b16 %v359
      %v613 = vunpack.c.h.b16 %v359
      %v614 = vunpack.c.l.b16 %v360
      %v615 = vunpack.c.h.b16 %v360
      %v616 = vunpack.c.l.b16 %v361
      %v617 = vunpack.c.h.b16 %v361
      %v618 = vunpack.c.l.b16 %v362
      %v619 = vunpack.c.h.b16 %v362
      %v620 = vunpack.c.l.b16 %v363
      %v621 = vunpack.c.h.b16 %v363
      %v622 = vunpack.c.l.b16 %v364
      %v623 = vunpack.c.h.b16 %v364
      %v624 = vunpack.c.l.b16 %v365
      %v625 = vunpack.c.h.b16 %v365
      %v626 = vpack.c.b16 %v502, %v498
      %v627 = vpack.c.b16 %v503, %v499
      %v628 = vpack.c.b16 %v504, %v500
      %v629 = vpack.c.b16 %v505, %v501
      %v630 = vpack.c.b16 %v510, %v506
      %v631 = vpack.c.b16 %v511, %v507
      %v632 = vpack.c.b16 %v512, %v508
      %v633 = vpack.c.b16 %v513, %v509
      %v634 = vpack.c.b16 %v518, %v514
      %v635 = vpack.c.b16 %v519, %v515
      %v636 = vpack.c.b16 %v520, %v516
      %v637 = vpack.c.b16 %v521, %v517
      %v638 = vpack.c.b16 %v526, %v522
      %v639 = vpack.c.b16 %v527, %v523
      %v640 = vpack.c.b16 %v528, %v524
      %v641 = vpack.c.b16 %v529, %v525
      %v642 = vpack.c.b16 %v534, %v530
      %v643 = vpack.c.b16 %v535, %v531
      %v644 = vpack.c.b16 %v536, %v532
      %v645 = vpack.c.b16 %v537, %v533
      %v646 = vpack.c.b16 %v542, %v538
      %v647 = vpack.c.b16 %v543, %v539
      %v648 = vpack.c.b16 %v544, %v540
      %v649 = vpack.c.b16 %v545, %v541
      %v650 = vpack.c.b16 %v550, %v546
      %v651 = vpack.c.b16 %v551, %v547
      %v652 = vpack.c.b16 %v552, %v548
      %v653 = vpack.c.b16 %v553, %v549
      %v654 = vpack.c.b16 %v558, %v554
      %v655 = vpack.c.b16 %v559, %v555
      %v656 = vpack.c.b16 %v560, %v556
      %v657 = vpack.c.b16 %v561, %v557
      %v658 = vpack.c.b16 %v566, %v562
      %v659 = vpack.c.b16 %v567, %v563
      %v660 = vpack.c.b16 %v568, %v564
      %v661 = vpack.c.b16 %v569, %v565
      %v662 = vpack.c.b16 %v574, %v570
      %v663 = vpack.c.b16 %v575, %v571
      %v664 = vpack.c.b16 %v576, %v572
      %v665 = vpack.c.b16 %v577, %v573
      %v666 = vpack.c.b16 %v582, %v578
      %v667 = vpack.c.b16 %v583, %v579
      %v668 = vpack.c.b16 %v584, %v580
      %v669 = vpack.c.b16 %v585, %v581
      %v670 = vpack.c.b16 %v590, %v586
      %v671 = vpack.c.b16 %v591, %v587
      %v672 = vpack.c.b16 %v592, %v588
      %v673 = vpack.c.b16 %v593, %v589
      %v674 = vpack.c.b16 %v598, %v594
      %v675 = vpack.c.b16 %v599, %v595
      %v676 = vpack.c.b16 %v600, %v596
      %v677 = vpack.c.b16 %v601, %v597
      %v678 = vpack.c.b16 %v606, %v602
      %v679 = vpack.c.b16 %v607, %v603
      %v680 = vpack.c.b16 %v608, %v604
      %v681 = vpack.c.b16 %v609, %v605
      %v682 = vpack.c.b16 %v614, %v610
      %v683 = vpack.c.b16 %v615, %v611
      %v684 = vpack.c.b16 %v616, %v612
      %v685 = vpack.c.b16 %v617, %v613
      %v686 = vpack.c.b16 %v622, %v618
      %v687 = vpack.c.b16 %v623, %v619
      %v688 = vpack.c.b16 %v624, %v620
      %v689 = vpack.c.b16 %v625, %v621
      %v818 = vunpack.c.l.b16 %v370
      %v819 = vunpack.c.l.b16 %v371
      %v820 = vunpack.c.l.b16 %v372
      %v821 = vunpack.c.l.b16 %v373
      %v822 = vunpack.c.l.b16 %v374
      %v823 = vunpack.c.l.b16 %v375
      %v824 = vunpack.c.l.b16 %v376
      %v825 = vunpack.c.l.b16 %v377
      %v826 = vunpack.c.l.b16 %v378
      %v827 = vunpack.c.l.b16 %v379
      %v828 = vunpack.c.l.b16 %v380
      %v829 = vunpack.c.l.b16 %v381
      %v830 = vunpack.c.l.b16 %v382
      %v831 = vunpack.c.l.b16 %v383
      %v832 = vunpack.c.l.b16 %v384
      %v833 = vunpack.c.l.b16 %v385
      %v834 = vunpack.c.l.b16 %v386
      %v835 = vunpack.c.l.b16 %v387
      %v836 = vunpack.c.l.b16 %v388
      %v837 = vunpack.c.l.b16 %v389
      %v838 = vunpack.c.l.b16 %v390
      %v839 = vunpack.c.l.b16 %v391
      %v840 = vunpack.c.l.b16 %v392
      %v841 = vunpack.c.l.b16 %v393
      %v842 = vunpack.c.l.b16 %v394
      %v843 = vunpack.c.l.b16 %v395
      %v844 = vunpack.c.l.b16 %v396
      %v845 = vunpack.c.l.b16 %v397
      %v846 = vunpack.c.l.b16 %v398
      %v847 = vunpack.c.l.b16 %v399
      %v848 = vunpack.c.l.b16 %v400
      %v849 = vunpack.c.l.b16 %v401
      %v850 = vunpack.c.l.b16 %v402
      %v851 = vunpack.c.l.b16 %v403
      %v852 = vunpack.c.l.b16 %v404
      %v853 = vunpack.c.l.b16 %v405
      %v854 = vunpack.c.l.b16 %v406
      %v855 = vunpack.c.l.b16 %v407
      %v856 = vunpack.c.l.b16 %v408
      %v857 = vunpack.c.l.b16 %v409
      %v858 = vunpack.c.l.b16 %v410
      %v859 = vunpack.c.l.b16 %v411
      %v860 = vunpack.c.l.b16 %v412
      %v861 = vunpack.c.l.b16 %v413
      %v862 = vunpack.c.l.b16 %v414
      %v863 = vunpack.c.l.b16 %v415
      %v864 = vunpack.c.l.b16 %v416
      %v865 = vunpack.c.l.b16 %v417
      %v866 = vunpack.c.l.b16 %v418
      %v867 = vunpack.c.l.b16 %v419
      %v868 = vunpack.c.l.b16 %v420
      %v869 = vunpack.c.l.b16 %v421
      %v870 = vunpack.c.l.b16 %v422
      %v871 = vunpack.c.l.b16 %v423
      %v872 = vunpack.c.l.b16 %v424
      %v873 = vunpack.c.l.b16 %v425
      %v874 = vunpack.c.l.b16 %v426
      %v875 = vunpack.c.l.b16 %v427
      %v876 = vunpack.c.l.b16 %v428
      %v877 = vunpack.c.l.b16 %v429
      %v878 = vunpack.c.l.b16 %v430
      %v879 = vunpack.c.l.b16 %v431
      %v880 = vunpack.c.l.b16 %v432
      %v881 = vunpack.c.l.b16 %v433
      %v882 = vpack.c.b16 %v819, %v818
      %v883 = vpack.c.b16 %v821, %v820
      %v884 = vpack.c.b16 %v823, %v822
      %v885 = vpack.c.b16 %v825, %v824
      %v886 = vpack.c.b16 %v827, %v826
      %v887 = vpack.c.b16 %v829, %v828
      %v888 = vpack.c.b16 %v831, %v830
      %v889 = vpack.c.b16 %v833, %v832
      %v890 = vpack.c.b16 %v835, %v834
      %v891 = vpack.c.b16 %v837, %v836
      %v892 = vpack.c.b16 %v839, %v838
      %v893 = vpack.c.b16 %v841, %v840
      %v894 = vpack.c.b16 %v843, %v842
      %v895 = vpack.c.b16 %v845, %v844
      %v896 = vpack.c.b16 %v847, %v846
      %v897 = vpack.c.b16 %v849, %v848
      %v898 = vpack.c.b16 %v851, %v850
      %v899 = vpack.c.b16 %v853, %v852
      %v900 = vpack.c.b16 %v855, %v854
      %v901 = vpack.c.b16 %v857, %v856
      %v902 = vpack.c.b16 %v859, %v858
      %v903 = vpack.c.b16 %v861, %v860
      %v904 = vpack.c.b16 %v863, %v862
      %v905 = vpack.c.b16 %v865, %v864
      %v906 = vpack.c.b16 %v867, %v866
      %v907 = vpack.c.b16 %v869, %v868
      %v908 = vpack.c.b16 %v871, %v870
      %v909 = vpack.c.b16 %v873, %v872
      %v910 = vpack.c.b16 %v875, %v874
      %v911 = vpack.c.b16 %v877, %v876
      %v912 = vpack.c.b16 %v879, %v878
      %v913 = vpack.c.b16 %v881, %v880
      %946 = vmatprep.subr.bf16.mxu0 0
      %947 = vmatpush1.bf16.msra.mxu0 %v882
      %948 = vmatprep.subr.bf16.mxu0 0
      %949 = vmatpush1.bf16.msra.mxu0 %v883
      %950 = vmatprep.subr.bf16.mxu0 0
      %951 = vmatpush1.bf16.msra.mxu0 %v884
      %952 = vmatprep.subr.bf16.mxu0 0
      %953 = vmatpush1.bf16.msra.mxu0 %v885
      %954 = vmatprep.subr.bf16.mxu0 0
      %955 = vmatpush1.bf16.msra.mxu0 %v886
      %956 = vmatprep.subr.bf16.mxu0 0
      %957 = vmatpush1.bf16.msra.mxu0 %v887
      %958 = vmatprep.subr.bf16.mxu0 0
      %959 = vmatpush1.bf16.msra.mxu0 %v888
      %960 = vmatprep.subr.bf16.mxu0 0
      %961 = vmatpush1.bf16.msra.mxu0 %v889
      %962 = vmatprep.subr.bf16.mxu0 0
      %963 = vmatpush1.bf16.msra.mxu0 %v890
      %964 = vmatprep.subr.bf16.mxu0 0
      %965 = vmatpush1.bf16.msra.mxu0 %v891
      %966 = vmatprep.subr.bf16.mxu0 0
      %967 = vmatpush1.bf16.msra.mxu0 %v892
      %968 = vmatprep.subr.bf16.mxu0 0
      %969 = vmatpush1.bf16.msra.mxu0 %v893
      %970 = vmatprep.subr.bf16.mxu0 0
      %971 = vmatpush1.bf16.msra.mxu0 %v894
      %972 = vmatprep.subr.bf16.mxu0 0
      %973 = vmatpush1.bf16.msra.mxu0 %v895
      %974 = vmatprep.subr.bf16.mxu0 0
      %975 = vmatpush1.bf16.msra.mxu0 %v896
      %976 = vmatprep.subr.bf16.mxu0 0
      %977 = vmatpush1.bf16.msra.mxu0 %v897
      %978 = vmatprep.mubr.bf16.mxu0 %v627
      %979 = vmatmul.mubr.bf16.gmra.mrb[0].mxu0 %v626
      %v980 = vpop.f32.mrb[0].mxu0
      %v981 = vadd.f32 0.0, %v980
      %v982 = vpop.f32.mrb[0].mxu0
      %v983 = vpop.f32.mrb[0].mxu0
      %v984 = vadd.f32 0.0, %v983
      %v985 = vpop.f32.mrb[0].mxu0
      %986 = vmatprep.mubr.bf16.mxu0 %v631
      %987 = vmatmul.mubr.bf16.gmra.mrb[0].mxu0 %v630
      %v988 = vpop.f32.mrb[0].mxu0
      %v989 = vadd.f32 0.0, %v988
      %v990 = vpop.f32.mrb[0].mxu0
      %v991 = vpop.f32.mrb[0].mxu0
      %v992 = vadd.f32 0.0, %v991
      %v993 = vpop.f32.mrb[0].mxu0
      %994 = vmatprep.mubr.bf16.mxu0 %v635
      %995 = vmatmul.mubr.bf16.gmra.mrb[0].mxu0 %v634
      %v996 = vpop.f32.mrb[0].mxu0
      %v997 = vadd.f32 0.0, %v996
      %v998 = vpop.f32.mrb[0].mxu0
      %v999 = vpop.f32.mrb[0].mxu0
      %v1000 = vadd.f32 0.0, %v999
      %v1001 = vpop.f32.mrb[0].mxu0
      %1002 = vmatprep.mubr.bf16.mxu0 %v639
      %1003 = vmatmul.mubr.bf16.gmra.mrb[0].mxu0 %v638
      %v1004 = vpop.f32.mrb[0].mxu0
      %v1005 = vadd.f32 0.0, %v1004
      %v1006 = vpop.f32.mrb[0].mxu0
      %v1007 = vpop.f32.mrb[0].mxu0
      %v1008 = vadd.f32 0.0, %v1007
      %v1009 = vpop.f32.mrb[0].mxu0
      %1010 = vmatprep.mubr.bf16.mxu0 %v643
      %1011 = vmatmul.mubr.bf16.gmra.mrb[0].mxu0 %v642
      %v1012 = vpop.f32.mrb[0].mxu0
      %v1013 = vadd.f32 0.0, %v1012
      %v1014 = vpop.f32.mrb[0].mxu0
      %v1015 = vpop.f32.mrb[0].mxu0
      %v1016 = vadd.f32 0.0, %v1015
      %v1017 = vpop.f32.mrb[0].mxu0
      %1018 = vmatprep.mubr.bf16.mxu0 %v647
      %1019 = vmatmul.mubr.bf16.gmra.mrb[0].mxu0 %v646
      %v1020 = vpop.f32.mrb[0].mxu0
      %v1021 = vadd.f32 0.0, %v1020
      %v1022 = vpop.f32.mrb[0].mxu0
      %v1023 = vpop.f32.mrb[0].mxu0
      %v1024 = vadd.f32 0.0, %v1023
      %v1025 = vpop.f32.mrb[0].mxu0
      %1026 = vmatprep.mubr.bf16.mxu0 %v651
      %1027 = vmatmul.mubr.bf16.gmra.mrb[0].mxu0 %v650
      %v1028 = vpop.f32.mrb[0].mxu0
      %v1029 = vadd.f32 0.0, %v1028
      %v1030 = vpop.f32.mrb[0].mxu0
      %v1031 = vpop.f32.mrb[0].mxu0
      %v1032 = vadd.f32 0.0, %v1031
      %v1033 = vpop.f32.mrb[0].mxu0
      %1034 = vmatprep.mubr.bf16.mxu0 %v655
      %1035 = vmatmul.mubr.bf16.gmra.mrb[0].mxu0 %v654
      %v1036 = vpop.f32.mrb[0].mxu0
      %v1037 = vadd.f32 0.0, %v1036
      %v1038 = vpop.f32.mrb[0].mxu0
      %v1039 = vpop.f32.mrb[0].mxu0
      %v1040 = vadd.f32 0.0, %v1039
      %v1041 = vpop.f32.mrb[0].mxu0
      %1042 = vmatprep.mubr.bf16.mxu0 %v659
      %1043 = vmatmul.mubr.bf16.gmra.mrb[0].mxu0 %v658
      %v1044 = vpop.f32.mrb[0].mxu0
      %v1045 = vadd.f32 0.0, %v1044
      %v1046 = vpop.f32.mrb[0].mxu0
      %v1047 = vpop.f32.mrb[0].mxu0
      %v1048 = vadd.f32 0.0, %v1047
      %v1049 = vpop.f32.mrb[0].mxu0
      %1050 = vmatprep.mubr.bf16.mxu0 %v663
      %1051 = vmatmul.mubr.bf16.gmra.mrb[0].mxu0 %v662
      %v1052 = vpop.f32.mrb[0].mxu0
      %v1053 = vadd.f32 0.0, %v1052
      %v1054 = vpop.f32.mrb[0].mxu0
      %v1055 = vpop.f32.mrb[0].mxu0
      %v1056 = vadd.f32 0.0, %v1055
      %v1057 = vpop.f32.mrb[0].mxu0
      %1058 = vmatprep.mubr.bf16.mxu0 %v667
      %1059 = vmatmul.mubr.bf16.gmra.mrb[0].mxu0 %v666
      %v1060 = vpop.f32.mrb[0].mxu0
      %v1061 = vadd.f32 0.0, %v1060
      %v1062 = vpop.f32.mrb[0].mxu0
      %v1063 = vpop.f32.mrb[0].mxu0
      %v1064 = vadd.f32 0.0, %v1063
      %v1065 = vpop.f32.mrb[0].mxu0
      %1066 = vmatprep.mubr.bf16.mxu0 %v671
      %1067 = vmatmul.mubr.bf16.gmra.mrb[0].mxu0 %v670
      %v1068 = vpop.f32.mrb[0].mxu0
      %v1069 = vadd.f32 0.0, %v1068
      %v1070 = vpop.f32.mrb[0].mxu0
      %v1071 = vpop.f32.mrb[0].mxu0
      %v1072 = vadd.f32 0.0, %v1071
      %v1073 = vpop.f32.mrb[0].mxu0
      %1074 = vmatprep.mubr.bf16.mxu0 %v675
      %1075 = vmatmul.mubr.bf16.gmra.mrb[0].mxu0 %v674
      %v1076 = vpop.f32.mrb[0].mxu0
      %v1077 = vadd.f32 0.0, %v1076
      %v1078 = vpop.f32.mrb[0].mxu0
      %v1079 = vpop.f32.mrb[0].mxu0
      %v1080 = vadd.f32 0.0, %v1079
      %v1081 = vpop.f32.mrb[0].mxu0
      %1082 = vmatprep.mubr.bf16.mxu0 %v679
      %1083 = vmatmul.mubr.bf16.gmra.mrb[0].mxu0 %v678
      %v1084 = vpop.f32.mrb[0].mxu0
      %v1085 = vadd.f32 0.0, %v1084
      %v1086 = vpop.f32.mrb[0].mxu0
      %v1087 = vpop.f32.mrb[0].mxu0
      %v1088 = vadd.f32 0.0, %v1087
      %v1089 = vpop.f32.mrb[0].mxu0
      %1090 = vmatprep.mubr.bf16.mxu0 %v683
      %1091 = vmatmul.mubr.bf16.gmra.mrb[0].mxu0 %v682
      %v1092 = vpop.f32.mrb[0].mxu0
      %v1093 = vadd.f32 0.0, %v1092
      %v1094 = vpop.f32.mrb[0].mxu0
      %v1095 = vpop.f32.mrb[0].mxu0
      %v1096 = vadd.f32 0.0, %v1095
      %v1097 = vpop.f32.mrb[0].mxu0
      %1098 = vmatprep.mubr.bf16.mxu0 %v687
      %1099 = vmatmul.mubr.bf16.gmra.mrb[0].mxu0 %v686
      %v1100 = vpop.f32.mrb[0].mxu0
      %v1101 = vadd.f32 0.0, %v1100
      %v1102 = vpop.f32.mrb[0].mxu0
      %v1103 = vpop.f32.mrb[0].mxu0
      %v1104 = vadd.f32 0.0, %v1103
      %v1105 = vpop.f32.mrb[0].mxu0
      %1106 = vdwg.mxu0
      %1107 = vmatprep.subr.bf16.mxu0 0
      %1108 = vmatpush1.bf16.msra.mxu0 %v898
      %1109 = vmatprep.subr.bf16.mxu0 0
      %1110 = vmatpush1.bf16.msra.mxu0 %v899
      %1111 = vmatprep.subr.bf16.mxu0 0
      %1112 = vmatpush1.bf16.msra.mxu0 %v900
      %1113 = vmatprep.subr.bf16.mxu0 0
      %1114 = vmatpush1.bf16.msra.mxu0 %v901
      %1115 = vmatprep.subr.bf16.mxu0 0
      %1116 = vmatpush1.bf16.msra.mxu0 %v902
      %1117 = vmatprep.subr.bf16.mxu0 0
      %1118 = vmatpush1.bf16.msra.mxu0 %v903
      %1119 = vmatprep.subr.bf16.mxu0 0
      %1120 = vmatpush1.bf16.msra.mxu0 %v904
      %1121 = vmatprep.subr.bf16.mxu0 0
      %1122 = vmatpush1.bf16.msra.mxu0 %v905
      %1123 = vmatprep.subr.bf16.mxu0 0
      %1124 = vmatpush1.bf16.msra.mxu0 %v906
      %1125 = vmatprep.subr.bf16.mxu0 0
      %1126 = vmatpush1.bf16.msra.mxu0 %v907
      %1127 = vmatprep.subr.bf16.mxu0 0
      %1128 = vmatpush1.bf16.msra.mxu0 %v908
      %1129 = vmatprep.subr.bf16.mxu0 0
      %1130 = vmatpush1.bf16.msra.mxu0 %v909
      %1131 = vmatprep.subr.bf16.mxu0 0
      %1132 = vmatpush1.bf16.msra.mxu0 %v910
      %1133 = vmatprep.subr.bf16.mxu0 0
      %1134 = vmatpush1.bf16.msra.mxu0 %v911
      %1135 = vmatprep.subr.bf16.mxu0 0
      %1136 = vmatpush1.bf16.msra.mxu0 %v912
      %1137 = vmatprep.subr.bf16.mxu0 0
      %1138 = vmatpush1.bf16.msra.mxu0 %v913
      %1139 = vmatprep.mubr.bf16.mxu0 %v629
      %1140 = vmatmul.mubr.bf16.gmra.mrb[0].mxu0 %v628
      %v1141 = vpop.f32.mrb[0].mxu0
      %v1142 = vadd.f32 %v981, %v1141
      %v1143 = vpop.f32.mrb[0].mxu0
      %v1144 = vpop.f32.mrb[0].mxu0
      %v1145 = vadd.f32 %v984, %v1144
      %v1146 = vpop.f32.mrb[0].mxu0
      %1147 = vmatprep.mubr.bf16.mxu0 %v633
      %1148 = vmatmul.mubr.bf16.gmra.mrb[0].mxu0 %v632
      %v1149 = vpop.f32.mrb[0].mxu0
      %v1150 = vadd.f32 %v989, %v1149
      %v1151 = vpop.f32.mrb[0].mxu0
      %v1152 = vpop.f32.mrb[0].mxu0
      %v1153 = vadd.f32 %v992, %v1152
      %v1154 = vpop.f32.mrb[0].mxu0
      %1155 = vmatprep.mubr.bf16.mxu0 %v637
      %1156 = vmatmul.mubr.bf16.gmra.mrb[0].mxu0 %v636
      %v1157 = vpop.f32.mrb[0].mxu0
      %v1158 = vadd.f32 %v997, %v1157
      %v1159 = vpop.f32.mrb[0].mxu0
      %v1160 = vpop.f32.mrb[0].mxu0
      %v1161 = vadd.f32 %v1000, %v1160
      %v1162 = vpop.f32.mrb[0].mxu0
      %1163 = vmatprep.mubr.bf16.mxu0 %v641
      %1164 = vmatmul.mubr.bf16.gmra.mrb[0].mxu0 %v640
      %v1165 = vpop.f32.mrb[0].mxu0
      %v1166 = vadd.f32 %v1005, %v1165
      %v1167 = vpop.f32.mrb[0].mxu0
      %v1168 = vpop.f32.mrb[0].mxu0
      %v1169 = vadd.f32 %v1008, %v1168
      %v1170 = vpop.f32.mrb[0].mxu0
      %1171 = vmatprep.mubr.bf16.mxu0 %v645
      %1172 = vmatmul.mubr.bf16.gmra.mrb[0].mxu0 %v644
      %v1173 = vpop.f32.mrb[0].mxu0
      %v1174 = vadd.f32 %v1013, %v1173
      %v1175 = vpop.f32.mrb[0].mxu0
      %v1176 = vpop.f32.mrb[0].mxu0
      %v1177 = vadd.f32 %v1016, %v1176
      %v1178 = vpop.f32.mrb[0].mxu0
      %1179 = vmatprep.mubr.bf16.mxu0 %v649
      %1180 = vmatmul.mubr.bf16.gmra.mrb[0].mxu0 %v648
      %v1181 = vpop.f32.mrb[0].mxu0
      %v1182 = vadd.f32 %v1021, %v1181
      %v1183 = vpop.f32.mrb[0].mxu0
      %v1184 = vpop.f32.mrb[0].mxu0
      %v1185 = vadd.f32 %v1024, %v1184
      %v1186 = vpop.f32.mrb[0].mxu0
      %1187 = vmatprep.mubr.bf16.mxu0 %v653
      %1188 = vmatmul.mubr.bf16.gmra.mrb[0].mxu0 %v652
      %v1189 = vpop.f32.mrb[0].mxu0
      %v1190 = vadd.f32 %v1029, %v1189
      %v1191 = vpop.f32.mrb[0].mxu0
      %v1192 = vpop.f32.mrb[0].mxu0
      %v1193 = vadd.f32 %v1032, %v1192
      %v1194 = vpop.f32.mrb[0].mxu0
      %1195 = vmatprep.mubr.bf16.mxu0 %v657
      %1196 = vmatmul.mubr.bf16.gmra.mrb[0].mxu0 %v656
      %v1197 = vpop.f32.mrb[0].mxu0
      %v1198 = vadd.f32 %v1037, %v1197
      %v1199 = vpop.f32.mrb[0].mxu0
      %v1200 = vpop.f32.mrb[0].mxu0
      %v1201 = vadd.f32 %v1040, %v1200
      %v1202 = vpop.f32.mrb[0].mxu0
      %1203 = vmatprep.mubr.bf16.mxu0 %v661
      %1204 = vmatmul.mubr.bf16.gmra.mrb[0].mxu0 %v660
      %v1205 = vpop.f32.mrb[0].mxu0
      %v1206 = vadd.f32 %v1045, %v1205
      %v1207 = vpop.f32.mrb[0].mxu0
      %v1208 = vpop.f32.mrb[0].mxu0
      %v1209 = vadd.f32 %v1048, %v1208
      %v1210 = vpop.f32.mrb[0].mxu0
      %1211 = vmatprep.mubr.bf16.mxu0 %v665
      %1212 = vmatmul.mubr.bf16.gmra.mrb[0].mxu0 %v664
      %v1213 = vpop.f32.mrb[0].mxu0
      %v1214 = vadd.f32 %v1053, %v1213
      %v1215 = vpop.f32.mrb[0].mxu0
      %v1216 = vpop.f32.mrb[0].mxu0
      %v1217 = vadd.f32 %v1056, %v1216
      %v1218 = vpop.f32.mrb[0].mxu0
      %1219 = vmatprep.mubr.bf16.mxu0 %v669
      %1220 = vmatmul.mubr.bf16.gmra.mrb[0].mxu0 %v668
      %v1221 = vpop.f32.mrb[0].mxu0
      %v1222 = vadd.f32 %v1061, %v1221
      %v1223 = vpop.f32.mrb[0].mxu0
      %v1224 = vpop.f32.mrb[0].mxu0
      %v1225 = vadd.f32 %v1064, %v1224
      %v1226 = vpop.f32.mrb[0].mxu0
      %1227 = vmatprep.mubr.bf16.mxu0 %v673
      %1228 = vmatmul.mubr.bf16.gmra.mrb[0].mxu0 %v672
      %v1229 = vpop.f32.mrb[0].mxu0
      %v1230 = vadd.f32 %v1069, %v1229
      %v1231 = vpop.f32.mrb[0].mxu0
      %v1232 = vpop.f32.mrb[0].mxu0
      %v1233 = vadd.f32 %v1072, %v1232
      %v1234 = vpop.f32.mrb[0].mxu0
      %1235 = vmatprep.mubr.bf16.mxu0 %v677
      %1236 = vmatmul.mubr.bf16.gmra.mrb[0].mxu0 %v676
      %v1237 = vpop.f32.mrb[0].mxu0
      %v1238 = vadd.f32 %v1077, %v1237
      %v1239 = vpop.f32.mrb[0].mxu0
      %v1240 = vpop.f32.mrb[0].mxu0
      %v1241 = vadd.f32 %v1080, %v1240
      %v1242 = vpop.f32.mrb[0].mxu0
      %1243 = vmatprep.mubr.bf16.mxu0 %v681
      %1244 = vmatmul.mubr.bf16.gmra.mrb[0].mxu0 %v680
      %v1245 = vpop.f32.mrb[0].mxu0
      %v1246 = vadd.f32 %v1085, %v1245
      %v1247 = vpop.f32.mrb[0].mxu0
      %v1248 = vpop.f32.mrb[0].mxu0
      %v1249 = vadd.f32 %v1088, %v1248
      %v1250 = vpop.f32.mrb[0].mxu0
      %1251 = vmatprep.mubr.bf16.mxu0 %v685
      %1252 = vmatmul.mubr.bf16.gmra.mrb[0].mxu0 %v684
      %v1253 = vpop.f32.mrb[0].mxu0
      %v1254 = vadd.f32 %v1093, %v1253
      %v1255 = vpop.f32.mrb[0].mxu0
      %v1256 = vpop.f32.mrb[0].mxu0
      %v1257 = vadd.f32 %v1096, %v1256
      %v1258 = vpop.f32.mrb[0].mxu0
      %1259 = vmatprep.mubr.bf16.mxu0 %v689
      %1260 = vmatmul.mubr.bf16.gmra.mrb[0].mxu0 %v688
      %v1261 = vpop.f32.mrb[0].mxu0
      %v1262 = vadd.f32 %v1101, %v1261
      %v1263 = vpop.f32.mrb[0].mxu0
      %v1264 = vpop.f32.mrb[0].mxu0
      %v1265 = vadd.f32 %v1104, %v1264
      %v1266 = vpop.f32.mrb[0].mxu0
      %1267 = vdwg.mxu0
      %v1268 = vadd.f32 %v270, %v1142
      %v1269 = vadd.f32 %v271, %v1145
      %v1270 = vadd.f32 %v272, %v1150
      %v1271 = vadd.f32 %v273, %v1153
      %v1272 = vadd.f32 %v274, %v1158
      %v1273 = vadd.f32 %v275, %v1161
      %v1274 = vadd.f32 %v276, %v1166
      %v1275 = vadd.f32 %v277, %v1169
      %v1276 = vadd.f32 %v278, %v1174
      %v1277 = vadd.f32 %v279, %v1177
      %v1278 = vadd.f32 %v280, %v1182
      %v1279 = vadd.f32 %v281, %v1185
      %v1280 = vadd.f32 %v282, %v1190
      %v1281 = vadd.f32 %v283, %v1193
      %v1282 = vadd.f32 %v284, %v1198
      %v1283 = vadd.f32 %v285, %v1201
      %v1284 = vadd.f32 %v286, %v1206
      %v1285 = vadd.f32 %v287, %v1209
      %v1286 = vadd.f32 %v288, %v1214
      %v1287 = vadd.f32 %v289, %v1217
      %v1288 = vadd.f32 %v290, %v1222
      %v1289 = vadd.f32 %v291, %v1225
      %v1290 = vadd.f32 %v292, %v1230
      %v1291 = vadd.f32 %v293, %v1233
      %v1292 = vadd.f32 %v294, %v1238
      %v1293 = vadd.f32 %v295, %v1241
      %v1294 = vadd.f32 %v296, %v1246
      %v1295 = vadd.f32 %v297, %v1249
      %v1296 = vadd.f32 %v298, %v1254
      %v1297 = vadd.f32 %v299, %v1257
      %v1298 = vadd.f32 %v300, %v1262
      %v1299 = vadd.f32 %v301, %v1265
      %1300 = vst [vmem:[#allocation2] sm:$0xff] %v1268
      %1301 = vst [vmem:[#allocation2 + $0x8] sm:$0xff] %v1269
      %1302 = vst [vmem:[#allocation2 + $0x10] sm:$0xff] %v1270
      %1303 = vst [vmem:[#allocation2 + $0x18] sm:$0xff] %v1271
      %1304 = vst [vmem:[#allocation2 + $0x20] sm:$0xff] %v1272
      %1305 = vst [vmem:[#allocation2 + $0x28] sm:$0xff] %v1273
      %1306 = vst [vmem:[#allocation2 + $0x30] sm:$0xff] %v1274
      %1307 = vst [vmem:[#allocation2 + $0x38] sm:$0xff] %v1275
      %1308 = vst [vmem:[#allocation2 + $0x40] sm:$0xff] %v1276
      %1309 = vst [vmem:[#allocation2 + $0x48] sm:$0xff] %v1277
      %1310 = vst [vmem:[#allocation2 + $0x50] sm:$0xff] %v1278
      %1311 = vst [vmem:[#allocation2 + $0x58] sm:$0xff] %v1279
      %1312 = vst [vmem:[#allocation2 + $0x60] sm:$0xff] %v1280
      %1313 = vst [vmem:[#allocation2 + $0x68] sm:$0xff] %v1281
      %1314 = vst [vmem:[#allocation2 + $0x70] sm:$0xff] %v1282
      %1315 = vst [vmem:[#allocation2 + $0x78] sm:$0xff] %v1283
      %1316 = vst [vmem:[#allocation2 + $0x80] sm:$0xff] %v1284
      %1317 = vst [vmem:[#allocation2 + $0x88] sm:$0xff] %v1285
      %1318 = vst [vmem:[#allocation2 + $0x90] sm:$0xff] %v1286
      %1319 = vst [vmem:[#allocation2 + $0x98] sm:$0xff] %v1287
      %1320 = vst [vmem:[#allocation2 + $0xa0] sm:$0xff] %v1288
      %1321 = vst [vmem:[#allocation2 + $0xa8] sm:$0xff] %v1289
      %1322 = vst [vmem:[#allocation2 + $0xb0] sm:$0xff] %v1290
      %1323 = vst [vmem:[#allocation2 + $0xb8] sm:$0xff] %v1291
      %1324 = vst [vmem:[#allocation2 + $0xc0] sm:$0xff] %v1292
      %1325 = vst [vmem:[#allocation2 + $0xc8] sm:$0xff] %v1293
      %1326 = vst [vmem:[#allocation2 + $0xd0] sm:$0xff] %v1294
      %1327 = vst [vmem:[#allocation2 + $0xd8] sm:$0xff] %v1295
      %1328 = vst [vmem:[#allocation2 + $0xe0] sm:$0xff] %v1296
      %1329 = vst [vmem:[#allocation2 + $0xe8] sm:$0xff] %v1297
      %1330 = vst [vmem:[#allocation2 + $0xf0] sm:$0xff] %v1298
      %1331 = vst [vmem:[#allocation2 + $0xf8] sm:$0xff] %v1299
      // Predicated region
      $region41: #{conad_forward.5} parent=35 // pred_check
        %p1332 = pneg %p233
      $region42: #{conad_forward.5} parent=35 // pred_check_branch
        %1334 = sbr.rel (%p1332) target = $region44
      $region43: #{conad_forward.5} parent=35 // pred_region
        %v1335 = vld [vmem:[#allocation2] sm:$0xff]
        %v1336 = vld [vmem:[#allocation2 + $0x8] sm:$0xff]
        %v1337 = vld [vmem:[#allocation2 + $0x10] sm:$0xff]
        %v1338 = vld [vmem:[#allocation2 + $0x18] sm:$0xff]
        %v1339 = vld [vmem:[#allocation2 + $0x20] sm:$0xff]
        %v1340 = vld [vmem:[#allocation2 + $0x28] sm:$0xff]
        %v1341 = vld [vmem:[#allocation2 + $0x30] sm:$0xff]
        %v1342 = vld [vmem:[#allocation2 + $0x38] sm:$0xff]
        %v1343 = vld [vmem:[#allocation2 + $0x40] sm:$0xff]
        %v1344 = vld [vmem:[#allocation2 + $0x48] sm:$0xff]
        %v1345 = vld [vmem:[#allocation2 + $0x50] sm:$0xff]
        %v1346 = vld [vmem:[#allocation2 + $0x58] sm:$0xff]
        %v1347 = vld [vmem:[#allocation2 + $0x60] sm:$0xff]
        %v1348 = vld [vmem:[#allocation2 + $0x68] sm:$0xff]
        %v1349 = vld [vmem:[#allocation2 + $0x70] sm:$0xff]
        %v1350 = vld [vmem:[#allocation2 + $0x78] sm:$0xff]
        %v1351 = vld [vmem:[#allocation2 + $0x80] sm:$0xff]
        %v1352 = vld [vmem:[#allocation2 + $0x88] sm:$0xff]
        %v1353 = vld [vmem:[#allocation2 + $0x90] sm:$0xff]
        %v1354 = vld [vmem:[#allocation2 + $0x98] sm:$0xff]
        %v1355 = vld [vmem:[#allocation2 + $0xa0] sm:$0xff]
        %v1356 = vld [vmem:[#allocation2 + $0xa8] sm:$0xff]
        %v1357 = vld [vmem:[#allocation2 + $0xb0] sm:$0xff]
        %v1358 = vld [vmem:[#allocation2 + $0xb8] sm:$0xff]
        %v1359 = vld [vmem:[#allocation2 + $0xc0] sm:$0xff]
        %v1360 = vld [vmem:[#allocation2 + $0xc8] sm:$0xff]
        %v1361 = vld [vmem:[#allocation2 + $0xd0] sm:$0xff]
        %v1362 = vld [vmem:[#allocation2 + $0xd8] sm:$0xff]
        %v1363 = vld [vmem:[#allocation2 + $0xe0] sm:$0xff]
        %v1364 = vld [vmem:[#allocation2 + $0xe8] sm:$0xff]
        %v1365 = vld [vmem:[#allocation2 + $0xf0] sm:$0xff]
        %v1366 = vld [vmem:[#allocation2 + $0xf8] sm:$0xff]
        %v1367 = vpack.c.bf16 %v1336, %v1335
        %v1368 = vpack.c.bf16 %v1338, %v1337
        %v1369 = vpack.c.bf16 %v1340, %v1339
        %v1370 = vpack.c.bf16 %v1342, %v1341
        %v1371 = vpack.c.bf16 %v1344, %v1343
        %v1372 = vpack.c.bf16 %v1346, %v1345
        %v1373 = vpack.c.bf16 %v1348, %v1347
        %v1374 = vpack.c.bf16 %v1350, %v1349
        %v1375 = vpack.c.bf16 %v1352, %v1351
        %v1376 = vpack.c.bf16 %v1354, %v1353
        %v1377 = vpack.c.bf16 %v1356, %v1355
        %v1378 = vpack.c.bf16 %v1358, %v1357
        %v1379 = vpack.c.bf16 %v1360, %v1359
        %v1380 = vpack.c.bf16 %v1362, %v1361
        %v1381 = vpack.c.bf16 %v1364, %v1363
        %v1382 = vpack.c.bf16 %v1366, %v1365
        %v1383 = vld [vmem:[%s2] sm:$0xf]
        %v1384 = vld [vmem:[%s2 + $0x4] sm:$0xf]
        %v1385 = vld [vmem:[%s2 + $0x8] sm:$0xf]
        %v1386 = vld [vmem:[%s2 + $0xc] sm:$0xf]
        %v1387 = vld [vmem:[%s2 + $0x10] sm:$0xf]
        %v1388 = vld [vmem:[%s2 + $0x14] sm:$0xf]
        %v1389 = vld [vmem:[%s2 + $0x18] sm:$0xf]
        %v1390 = vld [vmem:[%s2 + $0x1c] sm:$0xf]
        %v1391 = vld [vmem:[%s2 + $0x20] sm:$0xf]
        %v1392 = vld [vmem:[%s2 + $0x24] sm:$0xf]
        %v1393 = vld [vmem:[%s2 + $0x28] sm:$0xf]
        %v1394 = vld [vmem:[%s2 + $0x2c] sm:$0xf]
        %v1395 = vld [vmem:[%s2 + $0x30] sm:$0xf]
        %v1396 = vld [vmem:[%s2 + $0x34] sm:$0xf]
        %v1397 = vld [vmem:[%s2 + $0x38] sm:$0xf]
        %v1398 = vld [vmem:[%s2 + $0x3c] sm:$0xf]
        %v1399 = vld [vmem:[%s3] sm:$0x1]
        %v1401 = vlaneseq
        %v1402 = vshrl.u32 %v1401, 7
        %v1403 = vsub.s32 0, %v1402
        %v1404 = vrot.slane %v1399, %v1403
        %v1422 = vunpack.c.l.b16 %v1383
        %v1423 = vunpack.c.l.b16 %v1384
        %v1424 = vunpack.c.l.b16 %v1385
        %v1425 = vunpack.c.l.b16 %v1386
        %v1426 = vunpack.c.l.b16 %v1387
        %v1427 = vunpack.c.l.b16 %v1388
        %v1428 = vunpack.c.l.b16 %v1389
        %v1429 = vunpack.c.l.b16 %v1390
        %v1430 = vunpack.c.l.b16 %v1391
        %v1431 = vunpack.c.l.b16 %v1392
        %v1432 = vunpack.c.l.b16 %v1393
        %v1433 = vunpack.c.l.b16 %v1394
        %v1434 = vunpack.c.l.b16 %v1395
        %v1435 = vunpack.c.l.b16 %v1396
        %v1436 = vunpack.c.l.b16 %v1397
        %v1437 = vunpack.c.l.b16 %v1398
        %v1438 = vpack.c.b16 %v1423, %v1422
        %v1439 = vpack.c.b16 %v1425, %v1424
        %v1440 = vpack.c.b16 %v1427, %v1426
        %v1441 = vpack.c.b16 %v1429, %v1428
        %v1442 = vpack.c.b16 %v1431, %v1430
        %v1443 = vpack.c.b16 %v1433, %v1432
        %v1444 = vpack.c.b16 %v1435, %v1434
        %v1445 = vpack.c.b16 %v1437, %v1436
        %1454 = vmatprep.subr.bf16.mxu0 0
        %1455 = vmatpush1.bf16.msra.mxu0 %v1438
        %1456 = vmatprep.subr.bf16.mxu0 0
        %1457 = vmatpush1.bf16.msra.mxu0 %v1439
        %1458 = vmatprep.subr.bf16.mxu0 0
        %1459 = vmatpush1.bf16.msra.mxu0 %v1440
        %1460 = vmatprep.subr.bf16.mxu0 0
        %1461 = vmatpush1.bf16.msra.mxu0 %v1441
        %1462 = vmatprep.subr.bf16.mxu0 0
        %1463 = vmatpush1.bf16.msra.mxu0 %v1442
        %1464 = vmatprep.subr.bf16.mxu0 0
        %1465 = vmatpush1.bf16.msra.mxu0 %v1443
        %1466 = vmatprep.subr.bf16.mxu0 0
        %1467 = vmatpush1.bf16.msra.mxu0 %v1444
        %1468 = vmatprep.subr.bf16.mxu0 0
        %1469 = vmatpush1.bf16.msra.mxu0 %v1445
        %1470 = vmatprep.subr.bf16.mxu0 0
        %1471 = vmatpush1.bf16.msra.mxu0 0
        %1472 = vmatprep.subr.bf16.mxu0 0
        %1473 = vmatpush1.bf16.msra.mxu0 0
        %1474 = vmatprep.subr.bf16.mxu0 0
        %1475 = vmatpush1.bf16.msra.mxu0 0
        %1476 = vmatprep.subr.bf16.mxu0 0
        %1477 = vmatpush1.bf16.msra.mxu0 0
        %1478 = vmatprep.subr.bf16.mxu0 0
        %1479 = vmatpush1.bf16.msra.mxu0 0
        %1480 = vmatprep.subr.bf16.mxu0 0
        %1481 = vmatpush1.bf16.msra.mxu0 0
        %1482 = vmatprep.subr.bf16.mxu0 0
        %1483 = vmatpush1.bf16.msra.mxu0 0
        %1484 = vmatprep.subr.bf16.mxu0 0
        %1485 = vmatpush1.bf16.msra.mxu0 0
        %1486 = vmatprep.mubr.bf16.mxu0 0
        %1487 = vmatmul.mubr.bf16.gmra.mrb[0].mxu0 %v1367
        %v1488 = vpop.f32.mrb[0].mxu0
        %v1489 = vadd.f32 %v1404, %v1488
        %v1490 = vpop.f32.mrb[0].mxu0
        %v1491 = vpop.f32.mrb[0].mxu0
        %v1492 = vadd.f32 %v1404, %v1491
        %v1493 = vpop.f32.mrb[0].mxu0
        %1494 = vmatprep.mubr.bf16.mxu0 0
        %1495 = vmatmul.mubr.bf16.gmra.mrb[0].mxu0 %v1368
        %v1496 = vpop.f32.mrb[0].mxu0
        %v1497 = vadd.f32 %v1404, %v1496
        %v1498 = vpop.f32.mrb[0].mxu0
        %v1499 = vpop.f32.mrb[0].mxu0
        %v1500 = vadd.f32 %v1404, %v1499
        %v1501 = vpop.f32.mrb[0].mxu0
        %1502 = vmatprep.mubr.bf16.mxu0 0
        %1503 = vmatmul.mubr.bf16.gmra.mrb[0].mxu0 %v1369
        %v1504 = vpop.f32.mrb[0].mxu0
        %v1505 = vadd.f32 %v1404, %v1504
        %v1506 = vpop.f32.mrb[0].mxu0
        %v1507 = vpop.f32.mrb[0].mxu0
        %v1508 = vadd.f32 %v1404, %v1507
        %v1509 = vpop.f32.mrb[0].mxu0
        %1510 = vmatprep.mubr.bf16.mxu0 0
        %1511 = vmatmul.mubr.bf16.gmra.mrb[0].mxu0 %v1370
        %v1512 = vpop.f32.mrb[0].mxu0
        %v1513 = vadd.f32 %v1404, %v1512
        %v1514 = vpop.f32.mrb[0].mxu0
        %v1515 = vpop.f32.mrb[0].mxu0
        %v1516 = vadd.f32 %v1404, %v1515
        %v1517 = vpop.f32.mrb[0].mxu0
        %1518 = vmatprep.mubr.bf16.mxu0 0
        %1519 = vmatmul.mubr.bf16.gmra.mrb[0].mxu0 %v1371
        %v1520 = vpop.f32.mrb[0].mxu0
        %v1521 = vadd.f32 %v1404, %v1520
        %v1522 = vpop.f32.mrb[0].mxu0
        %v1523 = vpop.f32.mrb[0].mxu0
        %v1524 = vadd.f32 %v1404, %v1523
        %v1525 = vpop.f32.mrb[0].mxu0
        %1526 = vmatprep.mubr.bf16.mxu0 0
        %1527 = vmatmul.mubr.bf16.gmra.mrb[0].mxu0 %v1372
        %v1528 = vpop.f32.mrb[0].mxu0
        %v1529 = vadd.f32 %v1404, %v1528
        %v1530 = vpop.f32.mrb[0].mxu0
        %v1531 = vpop.f32.mrb[0].mxu0
        %v1532 = vadd.f32 %v1404, %v1531
        %v1533 = vpop.f32.mrb[0].mxu0
        %1534 = vmatprep.mubr.bf16.mxu0 0
        %1535 = vmatmul.mubr.bf16.gmra.mrb[0].mxu0 %v1373
        %v1536 = vpop.f32.mrb[0].mxu0
        %v1537 = vadd.f32 %v1404, %v1536
        %v1538 = vpop.f32.mrb[0].mxu0
        %v1539 = vpop.f32.mrb[0].mxu0
        %v1540 = vadd.f32 %v1404, %v1539
        %v1541 = vpop.f32.mrb[0].mxu0
        %1542 = vmatprep.mubr.bf16.mxu0 0
        %1543 = vmatmul.mubr.bf16.gmra.mrb[0].mxu0 %v1374
        %v1544 = vpop.f32.mrb[0].mxu0
        %v1545 = vadd.f32 %v1404, %v1544
        %v1546 = vpop.f32.mrb[0].mxu0
        %v1547 = vpop.f32.mrb[0].mxu0
        %v1548 = vadd.f32 %v1404, %v1547
        %v1549 = vpop.f32.mrb[0].mxu0
        %1550 = vmatprep.mubr.bf16.mxu0 0
        %1551 = vmatmul.mubr.bf16.gmra.mrb[0].mxu0 %v1375
        %v1552 = vpop.f32.mrb[0].mxu0
        %v1553 = vadd.f32 %v1404, %v1552
        %v1554 = vpop.f32.mrb[0].mxu0
        %v1555 = vpop.f32.mrb[0].mxu0
        %v1556 = vadd.f32 %v1404, %v1555
        %v1557 = vpop.f32.mrb[0].mxu0
        %1558 = vmatprep.mubr.bf16.mxu0 0
        %1559 = vmatmul.mubr.bf16.gmra.mrb[0].mxu0 %v1376
        %v1560 = vpop.f32.mrb[0].mxu0
        %v1561 = vadd.f32 %v1404, %v1560
        %v1562 = vpop.f32.mrb[0].mxu0
        %v1563 = vpop.f32.mrb[0].mxu0
        %v1564 = vadd.f32 %v1404, %v1563
        %v1565 = vpop.f32.mrb[0].mxu0
        %1566 = vmatprep.mubr.bf16.mxu0 0
        %1567 = vmatmul.mubr.bf16.gmra.mrb[0].mxu0 %v1377
        %v1568 = vpop.f32.mrb[0].mxu0
        %v1569 = vadd.f32 %v1404, %v1568
        %v1570 = vpop.f32.mrb[0].mxu0
        %v1571 = vpop.f32.mrb[0].mxu0
        %v1572 = vadd.f32 %v1404, %v1571
        %v1573 = vpop.f32.mrb[0].mxu0
        %1574 = vmatprep.mubr.bf16.mxu0 0
        %1575 = vmatmul.mubr.bf16.gmra.mrb[0].mxu0 %v1378
        %v1576 = vpop.f32.mrb[0].mxu0
        %v1577 = vadd.f32 %v1404, %v1576
        %v1578 = vpop.f32.mrb[0].mxu0
        %v1579 = vpop.f32.mrb[0].mxu0
        %v1580 = vadd.f32 %v1404, %v1579
        %v1581 = vpop.f32.mrb[0].mxu0
        %1582 = vmatprep.mubr.bf16.mxu0 0
        %1583 = vmatmul.mubr.bf16.gmra.mrb[0].mxu0 %v1379
        %v1584 = vpop.f32.mrb[0].mxu0
        %v1585 = vadd.f32 %v1404, %v1584
        %v1586 = vpop.f32.mrb[0].mxu0
        %v1587 = vpop.f32.mrb[0].mxu0
        %v1588 = vadd.f32 %v1404, %v1587
        %v1589 = vpop.f32.mrb[0].mxu0
        %1590 = vmatprep.mubr.bf16.mxu0 0
        %1591 = vmatmul.mubr.bf16.gmra.mrb[0].mxu0 %v1380
        %v1592 = vpop.f32.mrb[0].mxu0
        %v1593 = vadd.f32 %v1404, %v1592
        %v1594 = vpop.f32.mrb[0].mxu0
        %v1595 = vpop.f32.mrb[0].mxu0
        %v1596 = vadd.f32 %v1404, %v1595
        %v1597 = vpop.f32.mrb[0].mxu0
        %1598 = vmatprep.mubr.bf16.mxu0 0
        %1599 = vmatmul.mubr.bf16.gmra.mrb[0].mxu0 %v1381
        %v1600 = vpop.f32.mrb[0].mxu0
        %v1601 = vadd.f32 %v1404, %v1600
        %v1602 = vpop.f32.mrb[0].mxu0
        %v1603 = vpop.f32.mrb[0].mxu0
        %v1604 = vadd.f32 %v1404, %v1603
        %v1605 = vpop.f32.mrb[0].mxu0
        %1606 = vmatprep.mubr.bf16.mxu0 0
        %1607 = vmatmul.mubr.bf16.gmra.mrb[0].mxu0 %v1382
        %v1608 = vpop.f32.mrb[0].mxu0
        %v1609 = vadd.f32 %v1404, %v1608
        %v1610 = vpop.f32.mrb[0].mxu0
        %v1611 = vpop.f32.mrb[0].mxu0
        %v1612 = vadd.f32 %v1404, %v1611
        %v1613 = vpop.f32.mrb[0].mxu0
        %1614 = vdwg.mxu0
        %v1615 = vmax.f32 %v1489, 0.0
        %v1616 = vmax.f32 %v1492, 0.0
        %v1617 = vmax.f32 %v1497, 0.0
        %v1618 = vmax.f32 %v1500, 0.0
        %v1619 = vmax.f32 %v1505, 0.0
        %v1620 = vmax.f32 %v1508, 0.0
        %v1621 = vmax.f32 %v1513, 0.0
        %v1622 = vmax.f32 %v1516, 0.0
        %v1623 = vmax.f32 %v1521, 0.0
        %v1624 = vmax.f32 %v1524, 0.0
        %v1625 = vmax.f32 %v1529, 0.0
        %v1626 = vmax.f32 %v1532, 0.0
        %v1627 = vmax.f32 %v1537, 0.0
        %v1628 = vmax.f32 %v1540, 0.0
        %v1629 = vmax.f32 %v1545, 0.0
        %v1630 = vmax.f32 %v1548, 0.0
        %v1631 = vmax.f32 %v1553, 0.0
        %v1632 = vmax.f32 %v1556, 0.0
        %v1633 = vmax.f32 %v1561, 0.0
        %v1634 = vmax.f32 %v1564, 0.0
        %v1635 = vmax.f32 %v1569, 0.0
        %v1636 = vmax.f32 %v1572, 0.0
        %v1637 = vmax.f32 %v1577, 0.0
        %v1638 = vmax.f32 %v1580, 0.0
        %v1639 = vmax.f32 %v1585, 0.0
        %v1640 = vmax.f32 %v1588, 0.0
        %v1641 = vmax.f32 %v1593, 0.0
        %v1642 = vmax.f32 %v1596, 0.0
        %v1643 = vmax.f32 %v1601, 0.0
        %v1644 = vmax.f32 %v1604, 0.0
        %v1645 = vmax.f32 %v1609, 0.0
        %v1646 = vmax.f32 %v1612, 0.0
        %v1647 = vpack.c.bf16 %v1616, %v1615
        %v1648 = vpack.c.bf16 %v1618, %v1617
        %v1649 = vpack.c.bf16 %v1620, %v1619
        %v1650 = vpack.c.bf16 %v1622, %v1621
        %v1651 = vpack.c.bf16 %v1624, %v1623
        %v1652 = vpack.c.bf16 %v1626, %v1625
        %v1653 = vpack.c.bf16 %v1628, %v1627
        %v1654 = vpack.c.bf16 %v1630, %v1629
        %v1655 = vpack.c.bf16 %v1632, %v1631
        %v1656 = vpack.c.bf16 %v1634, %v1633
        %v1657 = vpack.c.bf16 %v1636, %v1635
        %v1658 = vpack.c.bf16 %v1638, %v1637
        %v1659 = vpack.c.bf16 %v1640, %v1639
        %v1660 = vpack.c.bf16 %v1642, %v1641
        %v1661 = vpack.c.bf16 %v1644, %v1643
        %v1662 = vpack.c.bf16 %v1646, %v1645
        %v1679 = vunpack.c.l.b16 %v1647
        %v1680 = vunpack.c.h.b16 %v1647
        %v1681 = vunpack.c.l.b16 %v1648
        %v1682 = vunpack.c.h.b16 %v1648
        %v1683 = vunpack.c.l.b16 %v1649
        %v1684 = vunpack.c.h.b16 %v1649
        %v1685 = vunpack.c.l.b16 %v1650
        %v1686 = vunpack.c.h.b16 %v1650
        %v1687 = vunpack.c.l.b16 %v1651
        %v1688 = vunpack.c.h.b16 %v1651
        %v1689 = vunpack.c.l.b16 %v1652
        %v1690 = vunpack.c.h.b16 %v1652
        %v1691 = vunpack.c.l.b16 %v1653
        %v1692 = vunpack.c.h.b16 %v1653
        %v1693 = vunpack.c.l.b16 %v1654
        %v1694 = vunpack.c.h.b16 %v1654
        %v1695 = vunpack.c.l.b16 %v1655
        %v1696 = vunpack.c.h.b16 %v1655
        %v1697 = vunpack.c.l.b16 %v1656
        %v1698 = vunpack.c.h.b16 %v1656
        %v1699 = vunpack.c.l.b16 %v1657
        %v1700 = vunpack.c.h.b16 %v1657
        %v1701 = vunpack.c.l.b16 %v1658
        %v1702 = vunpack.c.h.b16 %v1658
        %v1703 = vunpack.c.l.b16 %v1659
        %v1704 = vunpack.c.h.b16 %v1659
        %v1705 = vunpack.c.l.b16 %v1660
        %v1706 = vunpack.c.h.b16 %v1660
        %v1707 = vunpack.c.l.b16 %v1661
        %v1708 = vunpack.c.h.b16 %v1661
        %v1709 = vunpack.c.l.b16 %v1662
        %v1710 = vunpack.c.h.b16 %v1662
        %v1711 = vpack.c.b16 %v1679, %v1679
        %v1712 = vpack.c.b16 %v1680, %v1680
        %v1713 = vpack.c.b16 %v1681, %v1681
        %v1714 = vpack.c.b16 %v1682, %v1682
        %v1715 = vpack.c.b16 %v1683, %v1683
        %v1716 = vpack.c.b16 %v1684, %v1684
        %v1717 = vpack.c.b16 %v1685, %v1685
        %v1718 = vpack.c.b16 %v1686, %v1686
        %v1719 = vpack.c.b16 %v1687, %v1687
        %v1720 = vpack.c.b16 %v1688, %v1688
        %v1721 = vpack.c.b16 %v1689, %v1689
        %v1722 = vpack.c.b16 %v1690, %v1690
        %v1723 = vpack.c.b16 %v1691, %v1691
        %v1724 = vpack.c.b16 %v1692, %v1692
        %v1725 = vpack.c.b16 %v1693, %v1693
        %v1726 = vpack.c.b16 %v1694, %v1694
        %v1727 = vpack.c.b16 %v1695, %v1695
        %v1728 = vpack.c.b16 %v1696, %v1696
        %v1729 = vpack.c.b16 %v1697, %v1697
        %v1730 = vpack.c.b16 %v1698, %v1698
        %v1731 = vpack.c.b16 %v1699, %v1699
        %v1732 = vpack.c.b16 %v1700, %v1700
        %v1733 = vpack.c.b16 %v1701, %v1701
        %v1734 = vpack.c.b16 %v1702, %v1702
        %v1735 = vpack.c.b16 %v1703, %v1703
        %v1736 = vpack.c.b16 %v1704, %v1704
        %v1737 = vpack.c.b16 %v1705, %v1705
        %v1738 = vpack.c.b16 %v1706, %v1706
        %v1739 = vpack.c.b16 %v1707, %v1707
        %v1740 = vpack.c.b16 %v1708, %v1708
        %v1741 = vpack.c.b16 %v1709, %v1709
        %v1742 = vpack.c.b16 %v1710, %v1710
        %1775 = vst [vmem:[%s230] sm:$0xf] %v1711
        %1776 = vst [vmem:[%s230 + $0x4] sm:$0xf] %v1712
        %1777 = vst [vmem:[%s230 + $0x8] sm:$0xf] %v1713
        %1778 = vst [vmem:[%s230 + $0xc] sm:$0xf] %v1714
        %1779 = vst [vmem:[%s230 + $0x10] sm:$0xf] %v1715
        %1780 = vst [vmem:[%s230 + $0x14] sm:$0xf] %v1716
        %1781 = vst [vmem:[%s230 + $0x18] sm:$0xf] %v1717
        %1782 = vst [vmem:[%s230 + $0x1c] sm:$0xf] %v1718
        %1783 = vst [vmem:[%s230 + $0x20] sm:$0xf] %v1719
        %1784 = vst [vmem:[%s230 + $0x24] sm:$0xf] %v1720
        %1785 = vst [vmem:[%s230 + $0x28] sm:$0xf] %v1721
        %1786 = vst [vmem:[%s230 + $0x2c] sm:$0xf] %v1722
        %1787 = vst [vmem:[%s230 + $0x30] sm:$0xf] %v1723
        %1788 = vst [vmem:[%s230 + $0x34] sm:$0xf] %v1724
        %1789 = vst [vmem:[%s230 + $0x38] sm:$0xf] %v1725
        %1790 = vst [vmem:[%s230 + $0x3c] sm:$0xf] %v1726
        %1791 = vst [vmem:[%s230 + $0x40] sm:$0xf] %v1727
        %1792 = vst [vmem:[%s230 + $0x44] sm:$0xf] %v1728
        %1793 = vst [vmem:[%s230 + $0x48] sm:$0xf] %v1729
        %1794 = vst [vmem:[%s230 + $0x4c] sm:$0xf] %v1730
        %1795 = vst [vmem:[%s230 + $0x50] sm:$0xf] %v1731
        %1796 = vst [vmem:[%s230 + $0x54] sm:$0xf] %v1732
        %1797 = vst [vmem:[%s230 + $0x58] sm:$0xf] %v1733
        %1798 = vst [vmem:[%s230 + $0x5c] sm:$0xf] %v1734
        %1799 = vst [vmem:[%s230 + $0x60] sm:$0xf] %v1735
        %1800 = vst [vmem:[%s230 + $0x64] sm:$0xf] %v1736
        %1801 = vst [vmem:[%s230 + $0x68] sm:$0xf] %v1737
        %1802 = vst [vmem:[%s230 + $0x6c] sm:$0xf] %v1738
        %1803 = vst [vmem:[%s230 + $0x70] sm:$0xf] %v1739
        %1804 = vst [vmem:[%s230 + $0x74] sm:$0xf] %v1740
        %1805 = vst [vmem:[%s230 + $0x78] sm:$0xf] %v1741
        %1806 = vst [vmem:[%s230 + $0x7c] sm:$0xf] %v1742
      $region44: #{conad_forward.5} parent=35 // pred_fallthru
        _
      %s1807 = smul.u32 32, %s19
      %p1808 = scmp.lt.s32.totalorder %s1807, 63
      %s1809 = scalar_select %p1808, %s1807, 63
      %s1810 = smul.addr %s1809, 4
      %s1811 = scalar_lea.vmem %s4, %s1810
      // Predicated region
      $region45: #{conad_forward.5} parent=35 // pred_check
        %p1812 = pneg %p136
      $region46: #{conad_forward.5} parent=35 // pred_check_branch
        %1814 = sbr.rel (%p1812) target = $region48
      $region47: #{conad_forward.5} parent=35 // pred_region
        %s1815 = smul.u32 32, %s19
      $region48: #{conad_forward.5} parent=35 // pred_fallthru
        _
    $region36: #{conad_forward.5} parent=5 // pred_fallthru
      _
    %p1816 = scmp.le.s32.totalorder 2, %s10
    // Predicated region
    $region49: #{conad_forward.5} parent=5 // pred_check
      %p1817 = pneg %p1816
    $region50: #{conad_forward.5} parent=5 // pred_check_branch
      %1819 = sbr.rel (%p1817) target = $region52
    $region51: #{conad_forward.5} parent=5 // pred_region
      %s1820 = ssub.s32 %s10, 2
      // Predicated region
      $region53: #{conad_forward.5} parent=51 // pred_check
        %p1821 = pneg %p142
      $region54: #{conad_forward.5} parent=51 // pred_check_branch
        %1823 = sbr.rel (%p1821) target = $region56
      $region55: #{conad_forward.5} parent=51 // pred_region
        %s1824 = smul.u32 32, %s21
        %p1825 = scmp.lt.s32.totalorder %s1824, 63
        %s1826 = scalar_select %p1825, %s1824, 63
        %s1827 = smul.addr %s1826, 4
        %s1828 = scalar_lea.vmem %s4, %s1827
      $region56: #{conad_forward.5} parent=51 // pred_fallthru
        _
    $region52: #{conad_forward.5} parent=5 // pred_fallthru
      _
  $region6: #{conad_forward.5} parent=0 // loop_footer
    %s14 = sadd.s32 1, %s10
  $region7: #{conad_forward.5} parent=0 // loop_footer_branch
    %9 = sbr.rel target = $region3
  $region8: #{conad_forward.5} parent=0 // loop_exit
    _

// kernel: conad_forward.8
$region0: #{conad_forward.8}
  #allocation0 [shape = 'u32[]', space=smem, size = 0x4, offset = 0x4, fixed_abs, tag = 'smem constant byte address 0x4 - core index']
  #allocation1 [shape = 'u32[144,128]{1,0:T(1,128)}', space=vmem, size = 0x12000, scoped, tag = 'internal scratch']
  #allocation2 [shape = 'f32[256,128]{1,0:T(8,128)}', space=vmem, size = 0x20000, scoped, tag = 'scratch operand']
  %s0 = inlined_call_operand.vmem [shape: bf16[512,512], index: 0, kind: input, shape index: {}]
  %s1 = inlined_call_operand.vmem [shape: bf16[512,128], index: 1, kind: input, shape index: {}]
  %s2 = inlined_call_operand.vmem [shape: bf16[128,128], index: 2, kind: input, shape index: {}]
  %s3 = inlined_call_operand.vmem [shape: f32[1,128], index: 3, kind: input, shape index: {}]
  %s4 = inlined_call_operand.vmem [shape: f32[512,128], index: 4, kind: output, shape index: {}]
  %s5 = sld [smem:[#allocation0]]
  $region57: #{conad_forward.8} parent=0
    _
  %s7 = ssub.s32 1, %s5
  %s8 = scalar_select 0, %s7, %s5
  loop: start=0, step=1, limit=4
  $region2: #{conad_forward.8} parent=0 // loop_pre_header
    _
  $region3: #{conad_forward.8} parent=0 // loop_header
    %s10 = sphi 0, %s14
    %p11 = scmp.ge.s32.totalorder %s10, 4
    %s17 = sphi 0, %s29
    %s18 = sphi 0, %s25
    %s19 = sphi 0, %s17
    %s20 = sphi 0, %s18
    %s21 = sphi 0, %s19
    %s22 = sphi 0, %s20
    %s34 = sphi 0, %s36
    %s37 = sphi 0, %s34
    %s38 = sphi 0, %s37
    %s54 = sphi 0, %s38
    %s58 = sphi 0, %s58
    %s60 = sphi 0, %s58
    %s61 = sphi 0, %s60
    %s75 = sphi 0, %s61
    %s79 = sphi 0, %s79
    %s81 = sphi 0, %s79
    %s82 = sphi 0, %s81
    %s96 = sphi 0, %s82
    %s100 = sphi 0, %s100
    %s102 = sphi 0, %s100
    %s103 = sphi 0, %s102
    %s117 = sphi 0, %s103
    %s123 = sphi 0, %s125
    %s126 = sphi 0, %s123
    %s127 = sphi 0, %s126
    %s143 = sphi 0, %s127
  $region4: #{conad_forward.8} parent=0 // loop_header_branch
    %13 = sbr.rel (%p11) target = $region8
  $region5: #{conad_forward.8} parent=0 // loop_body
    %s15 = ssub.s32 %s10, 1
    %s16 = ssub.s32 %s10, 2
    %s23 = sadd.s32 1, %s18
    %p24 = scmp.ge.s32.totalorder %s23, 1
    %s25 = scalar_select %p24, 0, %s23
    %s26 = sadd.s32 1, %s17
    %s27 = scalar_select %p24, %s26, %s17
    %p28 = scmp.ge.s32.totalorder %s27, 2
    %s29 = scalar_select %p28, 0, %s27
    %s30 = ssub.s32 %s17, %s29
    %s31 = ssub.s32 %s18, %s25
    %s32 = sor.u32 %s30, %s31
    %p33 = scmp.eq.s32.totalorder %s32, 0
    %s35 = sadd.s32 %s34, 1
    %s36 = scalar_select %p33, %s34, %s35
    %p39 = pneg %p33
    %p40 = scmp.eq.s32.totalorder %s10, 1
    %p41 = por %p39, %p40
    %p42 = scmp.ne.s32.totalorder %s34, %s37
    %p43 = scmp.eq.s32.totalorder %s10, 0
    %p44 = por %p42, %p43
    %p45 = scmp.ne.s32.totalorder %s34, %s37
    %p46 = scmp.eq.s32.totalorder %s15, 1
    %p47 = por %p45, %p46
    %p48 = scmp.ne.s32.totalorder %s37, %s38
    %p49 = scmp.eq.s32.totalorder %s15, 0
    %p50 = por %p48, %p49
    %p51 = scmp.ne.s32.totalorder %s37, %s38
    %p52 = scmp.eq.s32.totalorder %s16, 1
    %p53 = por %p51, %p52
    %p55 = scmp.ne.s32.totalorder %s38, %s54
    %p56 = scmp.eq.s32.totalorder %s16, 0
    %p57 = por %p55, %p56
    %s59 = sadd.s32 %s58, 1
    %p62 = scmp.eq.s32.totalorder %s10, 1
    %p63 = scmp.ne.s32.totalorder %s58, %s60
    %p64 = scmp.eq.s32.totalorder %s10, 0
    %p65 = por %p63, %p64
    %p66 = scmp.ne.s32.totalorder %s58, %s60
    %p67 = scmp.eq.s32.totalorder %s15, 1
    %p68 = por %p66, %p67
    %p69 = scmp.ne.s32.totalorder %s60, %s61
    %p70 = scmp.eq.s32.totalorder %s15, 0
    %p71 = por %p69, %p70
    %p72 = scmp.ne.s32.totalorder %s60, %s61
    %p73 = scmp.eq.s32.totalorder %s16, 1
    %p74 = por %p72, %p73
    %p76 = scmp.ne.s32.totalorder %s61, %s75
    %p77 = scmp.eq.s32.totalorder %s16, 0
    %p78 = por %p76, %p77
    %s80 = sadd.s32 %s79, 1
    %p83 = scmp.eq.s32.totalorder %s10, 1
    %p84 = scmp.ne.s32.totalorder %s79, %s81
    %p85 = scmp.eq.s32.totalorder %s10, 0
    %p86 = por %p84, %p85
    %p87 = scmp.ne.s32.totalorder %s79, %s81
    %p88 = scmp.eq.s32.totalorder %s15, 1
    %p89 = por %p87, %p88
    %p90 = scmp.ne.s32.totalorder %s81, %s82
    %p91 = scmp.eq.s32.totalorder %s15, 0
    %p92 = por %p90, %p91
    %p93 = scmp.ne.s32.totalorder %s81, %s82
    %p94 = scmp.eq.s32.totalorder %s16, 1
    %p95 = por %p93, %p94
    %p97 = scmp.ne.s32.totalorder %s82, %s96
    %p98 = scmp.eq.s32.totalorder %s16, 0
    %p99 = por %p97, %p98
    %s101 = sadd.s32 %s100, 1
    %p104 = scmp.eq.s32.totalorder %s10, 1
    %p105 = scmp.ne.s32.totalorder %s100, %s102
    %p106 = scmp.eq.s32.totalorder %s10, 0
    %p107 = por %p105, %p106
    %p108 = scmp.ne.s32.totalorder %s100, %s102
    %p109 = scmp.eq.s32.totalorder %s15, 1
    %p110 = por %p108, %p109
    %p111 = scmp.ne.s32.totalorder %s102, %s103
    %p112 = scmp.eq.s32.totalorder %s15, 0
    %p113 = por %p111, %p112
    %p114 = scmp.ne.s32.totalorder %s102, %s103
    %p115 = scmp.eq.s32.totalorder %s16, 1
    %p116 = por %p114, %p115
    %p118 = scmp.ne.s32.totalorder %s103, %s117
    %p119 = scmp.eq.s32.totalorder %s16, 0
    %p120 = por %p118, %p119
    %s121 = ssub.s32 %s17, %s29
    %p122 = scmp.eq.s32.totalorder %s121, 0
    %s124 = sadd.s32 %s123, 1
    %s125 = scalar_select %p122, %s123, %s124
    %p128 = pneg %p122
    %p129 = scmp.eq.s32.totalorder %s10, 1
    %p130 = por %p128, %p129
    %p131 = scmp.ne.s32.totalorder %s123, %s126
    %p132 = scmp.eq.s32.totalorder %s10, 0
    %p133 = por %p131, %p132
    %p134 = scmp.ne.s32.totalorder %s123, %s126
    %p135 = scmp.eq.s32.totalorder %s15, 1
    %p136 = por %p134, %p135
    %p137 = scmp.ne.s32.totalorder %s126, %s127
    %p138 = scmp.eq.s32.totalorder %s15, 0
    %p139 = por %p137, %p138
    %p140 = scmp.ne.s32.totalorder %s126, %s127
    %p141 = scmp.eq.s32.totalorder %s16, 1
    %p142 = por %p140, %p141
    %p144 = scmp.ne.s32.totalorder %s127, %s143
    %p145 = scmp.eq.s32.totalorder %s16, 0
    %p146 = por %p144, %p145
    %p147 = scmp.le.s32.totalorder 1, %s10
    %p148 = scmp.lt.s32.totalorder %s10, 3
    %p149 = pnand %p147, %p148
    %p150 = pneg %p149
    // Predicated region
    $region9: #{conad_forward.8} parent=5 // pred_check
      _
    $region10: #{conad_forward.8} parent=5 // pred_check_branch
      %152 = sbr.rel (%p149) target = $region12
    $region11: #{conad_forward.8} parent=5 // pred_region
      %s153 = ssub.s32 %s10, 1
      // Predicated region
      $region13: #{conad_forward.8} parent=11 // pred_check
        %p154 = pneg %p71
      $region14: #{conad_forward.8} parent=11 // pred_check_branch
        %156 = sbr.rel (%p154) target = $region16
      $region15: #{conad_forward.8} parent=11 // pred_region
        _
      $region16: #{conad_forward.8} parent=11 // pred_fallthru
        _
      // Predicated region
      $region17: #{conad_forward.8} parent=11 // pred_check
        %p157 = pneg %p92
      $region18: #{conad_forward.8} parent=11 // pred_check_branch
        %159 = sbr.rel (%p157) target = $region20
      $region19: #{conad_forward.8} parent=11 // pred_region
        _
      $region20: #{conad_forward.8} parent=11 // pred_fallthru
        _
      // Predicated region
      $region21: #{conad_forward.8} parent=11 // pred_check
        %p160 = pneg %p113
      $region22: #{conad_forward.8} parent=11 // pred_check_branch
        %162 = sbr.rel (%p160) target = $region24
      $region23: #{conad_forward.8} parent=11 // pred_region
        _
      $region24: #{conad_forward.8} parent=11 // pred_fallthru
        _
    $region12: #{conad_forward.8} parent=5 // pred_fallthru
      _
    %p163 = scmp.lt.s32.totalorder %s10, 2
    // Predicated region
    $region25: #{conad_forward.8} parent=5 // pred_check
      %p164 = pneg %p163
    $region26: #{conad_forward.8} parent=5 // pred_check_branch
      %166 = sbr.rel (%p164) target = $region28
    $region27: #{conad_forward.8} parent=5 // pred_region
      // Predicated region
      $region29: #{conad_forward.8} parent=27 // pred_check
        %p167 = pneg %p44
      $region30: #{conad_forward.8} parent=27 // pred_check_branch
        %169 = sbr.rel (%p167) target = $region32
      $region31: #{conad_forward.8} parent=27 // pred_region
        %s170 = smul.u32 32, %s17
        %s171 = smul.u32 4, %s18
        %p172 = scmp.lt.s32.totalorder %s170, 63
        %s173 = scalar_select %p172, %s170, 63
        %p174 = scmp.lt.s32.totalorder %s171, 3
        %s175 = scalar_select %p174, %s171, 3
        %s176 = smul.addr %s173, 4
        %s177 = sadd.s32 %s175, %s176
        %s178 = smul.addr %s177, 4
        %s179 = scalar_lea.vmem %s0, %s178
        %s180 = smul.u32 32, %s17
        %s181 = smul.u32 4, %s18
      $region32: #{conad_forward.8} parent=27 // pred_fallthru
        _
    $region28: #{conad_forward.8} parent=5 // pred_fallthru
      _
    %p182 = scmp.le.s32.totalorder 1, %s10
    %p183 = scmp.lt.s32.totalorder %s10, 3
    %p184 = pnand %p182, %p183
    %p185 = pneg %p184
    // Predicated region
    $region33: #{conad_forward.8} parent=5 // pred_check
      _
    $region34: #{conad_forward.8} parent=5 // pred_check_branch
      %187 = sbr.rel (%p184) target = $region36
    $region35: #{conad_forward.8} parent=5 // pred_region
      %s188 = ssub.s32 %s10, 1
      %s189 = smul.u32 32, %s19
      %s190 = smul.u32 4, %s20
      %p191 = scmp.lt.s32.totalorder %s189, 63
      %s192 = scalar_select %p191, %s189, 63
      %p193 = scmp.lt.s32.totalorder %s190, 3
      %s194 = scalar_select %p193, %s190, 3
      %s195 = smul.addr %s192, 4
      %s196 = sadd.s32 %s194, %s195
      %s197 = smul.addr %s196, 4
      %s198 = scalar_lea.vmem %s0, %s197
      %p199 = pneg %p50
      %p200 = pneg %p47
      %p201 = pneg %p71
      %p202 = pneg %p68
      %p203 = pneg %p92
      %p204 = pneg %p89
      %p205 = pneg %p113
      %p206 = pneg %p110
      %p207 = pneg %p139
      %p208 = pneg %p136
      %s209 = smul.u32 32, %s19
      %p210 = scmp.lt.s32.totalorder %s209, 63
      %s211 = scalar_select %p210, %s209, 63
      %s212 = smul.addr %s211, 8
      %s213 = scalar_lea.vmem %s4, %s212
      %s214 = smul.u32 32, %s19
      %s215 = smul.u32 4, %s20
      %p216 = scmp.lt.s32.totalorder %s214, 63
      %s217 = scalar_select %p216, %s214, 63
      %p218 = scmp.lt.s32.totalorder %s215, 3
      %s219 = scalar_select %p218, %s215, 3
      %s220 = smul.addr %s217, 4
      %s221 = sadd.s32 %s219, %s220
      %s222 = smul.addr %s221, 4
      %s223 = scalar_lea.vmem %s0, %s222
      %s224 = smul.u32 32, %s19
      %s225 = smul.u32 4, %s20
      %s226 = smul.u32 32, %s19
      %p227 = scmp.lt.s32.totalorder %s226, 63
      %s228 = scalar_select %p227, %s226, 63
      %s229 = smul.addr %s228, 8
      %s230 = scalar_lea.vmem %s4, %s229
      %s231 = smul.u32 32, %s19
      %p233 = scmp.eq.s32.totalorder %s20, 0
      // Predicated region
      $region37: #{conad_forward.8} parent=35 // pred_check
        %p234 = pneg %p233
      $region38: #{conad_forward.8} parent=35 // pred_check_branch
        %236 = sbr.rel (%p234) target = $region40
      $region39: #{conad_forward.8} parent=35 // pred_region
        %237 = vst [vmem:[#allocation2] sm:$0xff] 0.0
        %238 = vst [vmem:[#allocation2 + $0x8] sm:$0xff] 0.0
        %239 = vst [vmem:[#allocation2 + $0x10] sm:$0xff] 0.0
        %240 = vst [vmem:[#allocation2 + $0x18] sm:$0xff] 0.0
        %241 = vst [vmem:[#allocation2 + $0x20] sm:$0xff] 0.0
        %242 = vst [vmem:[#allocation2 + $0x28] sm:$0xff] 0.0
        %243 = vst [vmem:[#allocation2 + $0x30] sm:$0xff] 0.0
        %244 = vst [vmem:[#allocation2 + $0x38] sm:$0xff] 0.0
        %245 = vst [vmem:[#allocation2 + $0x40] sm:$0xff] 0.0
        %246 = vst [vmem:[#allocation2 + $0x48] sm:$0xff] 0.0
        %247 = vst [vmem:[#allocation2 + $0x50] sm:$0xff] 0.0
        %248 = vst [vmem:[#allocation2 + $0x58] sm:$0xff] 0.0
        %249 = vst [vmem:[#allocation2 + $0x60] sm:$0xff] 0.0
        %250 = vst [vmem:[#allocation2 + $0x68] sm:$0xff] 0.0
        %251 = vst [vmem:[#allocation2 + $0x70] sm:$0xff] 0.0
        %252 = vst [vmem:[#allocation2 + $0x78] sm:$0xff] 0.0
        %253 = vst [vmem:[#allocation2 + $0x80] sm:$0xff] 0.0
        %254 = vst [vmem:[#allocation2 + $0x88] sm:$0xff] 0.0
        %255 = vst [vmem:[#allocation2 + $0x90] sm:$0xff] 0.0
        %256 = vst [vmem:[#allocation2 + $0x98] sm:$0xff] 0.0
        %257 = vst [vmem:[#allocation2 + $0xa0] sm:$0xff] 0.0
        %258 = vst [vmem:[#allocation2 + $0xa8] sm:$0xff] 0.0
        %259 = vst [vmem:[#allocation2 + $0xb0] sm:$0xff] 0.0
        %260 = vst [vmem:[#allocation2 + $0xb8] sm:$0xff] 0.0
        %261 = vst [vmem:[#allocation2 + $0xc0] sm:$0xff] 0.0
        %262 = vst [vmem:[#allocation2 + $0xc8] sm:$0xff] 0.0
        %263 = vst [vmem:[#allocation2 + $0xd0] sm:$0xff] 0.0
        %264 = vst [vmem:[#allocation2 + $0xd8] sm:$0xff] 0.0
        %265 = vst [vmem:[#allocation2 + $0xe0] sm:$0xff] 0.0
        %266 = vst [vmem:[#allocation2 + $0xe8] sm:$0xff] 0.0
        %267 = vst [vmem:[#allocation2 + $0xf0] sm:$0xff] 0.0
        %268 = vst [vmem:[#allocation2 + $0xf8] sm:$0xff] 0.0
      $region40: #{conad_forward.8} parent=35 // pred_fallthru
        _
      %s269 = smul.u32 %s20, 512
      %v270 = vld [vmem:[#allocation2] sm:$0xff]
      %v271 = vld [vmem:[#allocation2 + $0x8] sm:$0xff]
      %v272 = vld [vmem:[#allocation2 + $0x10] sm:$0xff]
      %v273 = vld [vmem:[#allocation2 + $0x18] sm:$0xff]
      %v274 = vld [vmem:[#allocation2 + $0x20] sm:$0xff]
      %v275 = vld [vmem:[#allocation2 + $0x28] sm:$0xff]
      %v276 = vld [vmem:[#allocation2 + $0x30] sm:$0xff]
      %v277 = vld [vmem:[#allocation2 + $0x38] sm:$0xff]
      %v278 = vld [vmem:[#allocation2 + $0x40] sm:$0xff]
      %v279 = vld [vmem:[#allocation2 + $0x48] sm:$0xff]
      %v280 = vld [vmem:[#allocation2 + $0x50] sm:$0xff]
      %v281 = vld [vmem:[#allocation2 + $0x58] sm:$0xff]
      %v282 = vld [vmem:[#allocation2 + $0x60] sm:$0xff]
      %v283 = vld [vmem:[#allocation2 + $0x68] sm:$0xff]
      %v284 = vld [vmem:[#allocation2 + $0x70] sm:$0xff]
      %v285 = vld [vmem:[#allocation2 + $0x78] sm:$0xff]
      %v286 = vld [vmem:[#allocation2 + $0x80] sm:$0xff]
      %v287 = vld [vmem:[#allocation2 + $0x88] sm:$0xff]
      %v288 = vld [vmem:[#allocation2 + $0x90] sm:$0xff]
      %v289 = vld [vmem:[#allocation2 + $0x98] sm:$0xff]
      %v290 = vld [vmem:[#allocation2 + $0xa0] sm:$0xff]
      %v291 = vld [vmem:[#allocation2 + $0xa8] sm:$0xff]
      %v292 = vld [vmem:[#allocation2 + $0xb0] sm:$0xff]
      %v293 = vld [vmem:[#allocation2 + $0xb8] sm:$0xff]
      %v294 = vld [vmem:[#allocation2 + $0xc0] sm:$0xff]
      %v295 = vld [vmem:[#allocation2 + $0xc8] sm:$0xff]
      %v296 = vld [vmem:[#allocation2 + $0xd0] sm:$0xff]
      %v297 = vld [vmem:[#allocation2 + $0xd8] sm:$0xff]
      %v298 = vld [vmem:[#allocation2 + $0xe0] sm:$0xff]
      %v299 = vld [vmem:[#allocation2 + $0xe8] sm:$0xff]
      %v300 = vld [vmem:[#allocation2 + $0xf0] sm:$0xff]
      %v301 = vld [vmem:[#allocation2 + $0xf8] sm:$0xff]
      %v302 = vld [vmem:[%s223] sm:$0xff]
      %v303 = vld [vmem:[%s223 + $0x8] sm:$0xff]
      %v304 = vld [vmem:[%s223 + $0x10] sm:$0xff]
      %v305 = vld [vmem:[%s223 + $0x18] sm:$0xff]
      %v306 = vld [vmem:[%s223 + $0x20] sm:$0xff]
      %v307 = vld [vmem:[%s223 + $0x28] sm:$0xff]
      %v308 = vld [vmem:[%s223 + $0x30] sm:$0xff]
      %v309 = vld [vmem:[%s223 + $0x38] sm:$0xff]
      %v310 = vld [vmem:[%s223 + $0x40] sm:$0xff]
      %v311 = vld [vmem:[%s223 + $0x48] sm:$0xff]
      %v312 = vld [vmem:[%s223 + $0x50] sm:$0xff]
      %v313 = vld [vmem:[%s223 + $0x58] sm:$0xff]
      %v314 = vld [vmem:[%s223 + $0x60] sm:$0xff]
      %v315 = vld [vmem:[%s223 + $0x68] sm:$0xff]
      %v316 = vld [vmem:[%s223 + $0x70] sm:$0xff]
      %v317 = vld [vmem:[%s223 + $0x78] sm:$0xff]
      %v318 = vld [vmem:[%s223 + $0x80] sm:$0xff]
      %v319 = vld [vmem:[%s223 + $0x88] sm:$0xff]
      %v320 = vld [vmem:[%s223 + $0x90] sm:$0xff]
      %v321 = vld [vmem:[%s223 + $0x98] sm:$0xff]
      %v322 = vld [vmem:[%s223 + $0xa0] sm:$0xff]
      %v323 = vld [vmem:[%s223 + $0xa8] sm:$0xff]
      %v324 = vld [vmem:[%s223 + $0xb0] sm:$0xff]
      %v325 = vld [vmem:[%s223 + $0xb8] sm:$0xff]
      %v326 = vld [vmem:[%s223 + $0xc0] sm:$0xff]
      %v327 = vld [vmem:[%s223 + $0xc8] sm:$0xff]
      %v328 = vld [vmem:[%s223 + $0xd0] sm:$0xff]
      %v329 = vld [vmem:[%s223 + $0xd8] sm:$0xff]
      %v330 = vld [vmem:[%s223 + $0xe0] sm:$0xff]
      %v331 = vld [vmem:[%s223 + $0xe8] sm:$0xff]
      %v332 = vld [vmem:[%s223 + $0xf0] sm:$0xff]
      %v333 = vld [vmem:[%s223 + $0xf8] sm:$0xff]
      %v334 = vld [vmem:[%s223 + $0x100] sm:$0xff]
      %v335 = vld [vmem:[%s223 + $0x108] sm:$0xff]
      %v336 = vld [vmem:[%s223 + $0x110] sm:$0xff]
      %v337 = vld [vmem:[%s223 + $0x118] sm:$0xff]
      %v338 = vld [vmem:[%s223 + $0x120] sm:$0xff]
      %v339 = vld [vmem:[%s223 + $0x128] sm:$0xff]
      %v340 = vld [vmem:[%s223 + $0x130] sm:$0xff]
      %v341 = vld [vmem:[%s223 + $0x138] sm:$0xff]
      %v342 = vld [vmem:[%s223 + $0x140] sm:$0xff]
      %v343 = vld [vmem:[%s223 + $0x148] sm:$0xff]
      %v344 = vld [vmem:[%s223 + $0x150] sm:$0xff]
      %v345 = vld [vmem:[%s223 + $0x158] sm:$0xff]
      %v346 = vld [vmem:[%s223 + $0x160] sm:$0xff]
      %v347 = vld [vmem:[%s223 + $0x168] sm:$0xff]
      %v348 = vld [vmem:[%s223 + $0x170] sm:$0xff]
      %v349 = vld [vmem:[%s223 + $0x178] sm:$0xff]
      %v350 = vld [vmem:[%s223 + $0x180] sm:$0xff]
      %v351 = vld [vmem:[%s223 + $0x188] sm:$0xff]
      %v352 = vld [vmem:[%s223 + $0x190] sm:$0xff]
      %v353 = vld [vmem:[%s223 + $0x198] sm:$0xff]
      %v354 = vld [vmem:[%s223 + $0x1a0] sm:$0xff]
      %v355 = vld [vmem:[%s223 + $0x1a8] sm:$0xff]
      %v356 = vld [vmem:[%s223 + $0x1b0] sm:$0xff]
      %v357 = vld [vmem:[%s223 + $0x1b8] sm:$0xff]
      %v358 = vld [vmem:[%s223 + $0x1c0] sm:$0xff]
      %v359 = vld [vmem:[%s223 + $0x1c8] sm:$0xff]
      %v360 = vld [vmem:[%s223 + $0x1d0] sm:$0xff]
      %v361 = vld [vmem:[%s223 + $0x1d8] sm:$0xff]
      %v362 = vld [vmem:[%s223 + $0x1e0] sm:$0xff]
      %v363 = vld [vmem:[%s223 + $0x1e8] sm:$0xff]
      %v364 = vld [vmem:[%s223 + $0x1f0] sm:$0xff]
      %v365 = vld [vmem:[%s223 + $0x1f8] sm:$0xff]
      %s366 = sshra.s32 %s269, 3
      %s367 = sand.u32 %s269, 7
      %s368 = smul.addr %s366, 4
      %s369 = scalar_lea.vmem %s1, %s368
      %v370 = vld [vmem:[%s369] sm:$0xf]
      %v371 = vld [vmem:[%s369 + $0x4] sm:$0xf]
      %v372 = vld [vmem:[%s369 + $0x8] sm:$0xf]
      %v373 = vld [vmem:[%s369 + $0xc] sm:$0xf]
      %v374 = vld [vmem:[%s369 + $0x10] sm:$0xf]
      %v375 = vld [vmem:[%s369 + $0x14] sm:$0xf]
      %v376 = vld [vmem:[%s369 + $0x18] sm:$0xf]
      %v377 = vld [vmem:[%s369 + $0x1c] sm:$0xf]
      %v378 = vld [vmem:[%s369 + $0x20] sm:$0xf]
      %v379 = vld [vmem:[%s369 + $0x24] sm:$0xf]
      %v380 = vld [vmem:[%s369 + $0x28] sm:$0xf]
      %v381 = vld [vmem:[%s369 + $0x2c] sm:$0xf]
      %v382 = vld [vmem:[%s369 + $0x30] sm:$0xf]
      %v383 = vld [vmem:[%s369 + $0x34] sm:$0xf]
      %v384 = vld [vmem:[%s369 + $0x38] sm:$0xf]
      %v385 = vld [vmem:[%s369 + $0x3c] sm:$0xf]
      %v386 = vld [vmem:[%s369 + $0x40] sm:$0xf]
      %v387 = vld [vmem:[%s369 + $0x44] sm:$0xf]
      %v388 = vld [vmem:[%s369 + $0x48] sm:$0xf]
      %v389 = vld [vmem:[%s369 + $0x4c] sm:$0xf]
      %v390 = vld [vmem:[%s369 + $0x50] sm:$0xf]
      %v391 = vld [vmem:[%s369 + $0x54] sm:$0xf]
      %v392 = vld [vmem:[%s369 + $0x58] sm:$0xf]
      %v393 = vld [vmem:[%s369 + $0x5c] sm:$0xf]
      %v394 = vld [vmem:[%s369 + $0x60] sm:$0xf]
      %v395 = vld [vmem:[%s369 + $0x64] sm:$0xf]
      %v396 = vld [vmem:[%s369 + $0x68] sm:$0xf]
      %v397 = vld [vmem:[%s369 + $0x6c] sm:$0xf]
      %v398 = vld [vmem:[%s369 + $0x70] sm:$0xf]
      %v399 = vld [vmem:[%s369 + $0x74] sm:$0xf]
      %v400 = vld [vmem:[%s369 + $0x78] sm:$0xf]
      %v401 = vld [vmem:[%s369 + $0x7c] sm:$0xf]
      %v402 = vld [vmem:[%s369 + $0x80] sm:$0xf]
      %v403 = vld [vmem:[%s369 + $0x84] sm:$0xf]
      %v404 = vld [vmem:[%s369 + $0x88] sm:$0xf]
      %v405 = vld [vmem:[%s369 + $0x8c] sm:$0xf]
      %v406 = vld [vmem:[%s369 + $0x90] sm:$0xf]
      %v407 = vld [vmem:[%s369 + $0x94] sm:$0xf]
      %v408 = vld [vmem:[%s369 + $0x98] sm:$0xf]
      %v409 = vld [vmem:[%s369 + $0x9c] sm:$0xf]
      %v410 = vld [vmem:[%s369 + $0xa0] sm:$0xf]
      %v411 = vld [vmem:[%s369 + $0xa4] sm:$0xf]
      %v412 = vld [vmem:[%s369 + $0xa8] sm:$0xf]
      %v413 = vld [vmem:[%s369 + $0xac] sm:$0xf]
      %v414 = vld [vmem:[%s369 + $0xb0] sm:$0xf]
      %v415 = vld [vmem:[%s369 + $0xb4] sm:$0xf]
      %v416 = vld [vmem:[%s369 + $0xb8] sm:$0xf]
      %v417 = vld [vmem:[%s369 + $0xbc] sm:$0xf]
      %v418 = vld [vmem:[%s369 + $0xc0] sm:$0xf]
      %v419 = vld [vmem:[%s369 + $0xc4] sm:$0xf]
      %v420 = vld [vmem:[%s369 + $0xc8] sm:$0xf]
      %v421 = vld [vmem:[%s369 + $0xcc] sm:$0xf]
      %v422 = vld [vmem:[%s369 + $0xd0] sm:$0xf]
      %v423 = vld [vmem:[%s369 + $0xd4] sm:$0xf]
      %v424 = vld [vmem:[%s369 + $0xd8] sm:$0xf]
      %v425 = vld [vmem:[%s369 + $0xdc] sm:$0xf]
      %v426 = vld [vmem:[%s369 + $0xe0] sm:$0xf]
      %v427 = vld [vmem:[%s369 + $0xe4] sm:$0xf]
      %v428 = vld [vmem:[%s369 + $0xe8] sm:$0xf]
      %v429 = vld [vmem:[%s369 + $0xec] sm:$0xf]
      %v430 = vld [vmem:[%s369 + $0xf0] sm:$0xf]
      %v431 = vld [vmem:[%s369 + $0xf4] sm:$0xf]
      %v432 = vld [vmem:[%s369 + $0xf8] sm:$0xf]
      %v433 = vld [vmem:[%s369 + $0xfc] sm:$0xf]
      %v498 = vunpack.c.l.b16 %v302
      %v499 = vunpack.c.h.b16 %v302
      %v500 = vunpack.c.l.b16 %v303
      %v501 = vunpack.c.h.b16 %v303
      %v502 = vunpack.c.l.b16 %v304
      %v503 = vunpack.c.h.b16 %v304
      %v504 = vunpack.c.l.b16 %v305
      %v505 = vunpack.c.h.b16 %v305
      %v506 = vunpack.c.l.b16 %v306
      %v507 = vunpack.c.h.b16 %v306
      %v508 = vunpack.c.l.b16 %v307
      %v509 = vunpack.c.h.b16 %v307
      %v510 = vunpack.c.l.b16 %v308
      %v511 = vunpack.c.h.b16 %v308
      %v512 = vunpack.c.l.b16 %v309
      %v513 = vunpack.c.h.b16 %v309
      %v514 = vunpack.c.l.b16 %v310
      %v515 = vunpack.c.h.b16 %v310
      %v516 = vunpack.c.l.b16 %v311
      %v517 = vunpack.c.h.b16 %v311
      %v518 = vunpack.c.l.b16 %v312
      %v519 = vunpack.c.h.b16 %v312
      %v520 = vunpack.c.l.b16 %v313
      %v521 = vunpack.c.h.b16 %v313
      %v522 = vunpack.c.l.b16 %v314
      %v523 = vunpack.c.h.b16 %v314
      %v524 = vunpack.c.l.b16 %v315
      %v525 = vunpack.c.h.b16 %v315
      %v526 = vunpack.c.l.b16 %v316
      %v527 = vunpack.c.h.b16 %v316
      %v528 = vunpack.c.l.b16 %v317
      %v529 = vunpack.c.h.b16 %v317
      %v530 = vunpack.c.l.b16 %v318
      %v531 = vunpack.c.h.b16 %v318
      %v532 = vunpack.c.l.b16 %v319
      %v533 = vunpack.c.h.b16 %v319
      %v534 = vunpack.c.l.b16 %v320
      %v535 = vunpack.c.h.b16 %v320
      %v536 = vunpack.c.l.b16 %v321
      %v537 = vunpack.c.h.b16 %v321
      %v538 = vunpack.c.l.b16 %v322
      %v539 = vunpack.c.h.b16 %v322
      %v540 = vunpack.c.l.b16 %v323
      %v541 = vunpack.c.h.b16 %v323
      %v542 = vunpack.c.l.b16 %v324
      %v543 = vunpack.c.h.b16 %v324
      %v544 = vunpack.c.l.b16 %v325
      %v545 = vunpack.c.h.b16 %v325
      %v546 = vunpack.c.l.b16 %v326
      %v547 = vunpack.c.h.b16 %v326
      %v548 = vunpack.c.l.b16 %v327
      %v549 = vunpack.c.h.b16 %v327
      %v550 = vunpack.c.l.b16 %v328
      %v551 = vunpack.c.h.b16 %v328
      %v552 = vunpack.c.l.b16 %v329
      %v553 = vunpack.c.h.b16 %v329
      %v554 = vunpack.c.l.b16 %v330
      %v555 = vunpack.c.h.b16 %v330
      %v556 = vunpack.c.l.b16 %v331
      %v557 = vunpack.c.h.b16 %v331
      %v558 = vunpack.c.l.b16 %v332
      %v559 = vunpack.c.h.b16 %v332
      %v560 = vunpack.c.l.b16 %v333
      %v561 = vunpack.c.h.b16 %v333
      %v562 = vunpack.c.l.b16 %v334
      %v563 = vunpack.c.h.b16 %v334
      %v564 = vunpack.c.l.b16 %v335
      %v565 = vunpack.c.h.b16 %v335
      %v566 = vunpack.c.l.b16 %v336
      %v567 = vunpack.c.h.b16 %v336
      %v568 = vunpack.c.l.b16 %v337
      %v569 = vunpack.c.h.b16 %v337
      %v570 = vunpack.c.l.b16 %v338
      %v571 = vunpack.c.h.b16 %v338
      %v572 = vunpack.c.l.b16 %v339
      %v573 = vunpack.c.h.b16 %v339
      %v574 = vunpack.c.l.b16 %v340
      %v575 = vunpack.c.h.b16 %v340
      %v576 = vunpack.c.l.b16 %v341
      %v577 = vunpack.c.h.b16 %v341
      %v578 = vunpack.c.l.b16 %v342
      %v579 = vunpack.c.h.b16 %v342
      %v580 = vunpack.c.l.b16 %v343
      %v581 = vunpack.c.h.b16 %v343
      %v582 = vunpack.c.l.b16 %v344
      %v583 = vunpack.c.h.b16 %v344
      %v584 = vunpack.c.l.b16 %v345
      %v585 = vunpack.c.h.b16 %v345
      %v586 = vunpack.c.l.b16 %v346
      %v587 = vunpack.c.h.b16 %v346
      %v588 = vunpack.c.l.b16 %v347
      %v589 = vunpack.c.h.b16 %v347
      %v590 = vunpack.c.l.b16 %v348
      %v591 = vunpack.c.h.b16 %v348
      %v592 = vunpack.c.l.b16 %v349
      %v593 = vunpack.c.h.b16 %v349
      %v594 = vunpack.c.l.b16 %v350
      %v595 = vunpack.c.h.b16 %v350
      %v596 = vunpack.c.l.b16 %v351
      %v597 = vunpack.c.h.b16 %v351
      %v598 = vunpack.c.l.b16 %v352
      %v599 = vunpack.c.h.b16 %v352
      %v600 = vunpack.c.l.b16 %v353
      %v601 = vunpack.c.h.b16 %v353
      %v602 = vunpack.c.l.b16 %v354
      %v603 = vunpack.c.h.b16 %v354
      %v604 = vunpack.c.l.b16 %v355
      %v605 = vunpack.c.h.b16 %v355
      %v606 = vunpack.c.l.b16 %v356
      %v607 = vunpack.c.h.b16 %v356
      %v608 = vunpack.c.l.b16 %v357
      %v609 = vunpack.c.h.b16 %v357
      %v610 = vunpack.c.l.b16 %v358
      %v611 = vunpack.c.h.b16 %v358
      %v612 = vunpack.c.l.b16 %v359
      %v613 = vunpack.c.h.b16 %v359
      %v614 = vunpack.c.l.b16 %v360
      %v615 = vunpack.c.h.b16 %v360
      %v616 = vunpack.c.l.b16 %v361
      %v617 = vunpack.c.h.b16 %v361
      %v618 = vunpack.c.l.b16 %v362
      %v619 = vunpack.c.h.b16 %v362
      %v620 = vunpack.c.l.b16 %v363
      %v621 = vunpack.c.h.b16 %v363
      %v622 = vunpack.c.l.b16 %v364
      %v623 = vunpack.c.h.b16 %v364
      %v624 = vunpack.c.l.b16 %v365
      %v625 = vunpack.c.h.b16 %v365
      %v626 = vpack.c.b16 %v502, %v498
      %v627 = vpack.c.b16 %v503, %v499
      %v628 = vpack.c.b16 %v504, %v500
      %v629 = vpack.c.b16 %v505, %v501
      %v630 = vpack.c.b16 %v510, %v506
      %v631 = vpack.c.b16 %v511, %v507
      %v632 = vpack.c.b16 %v512, %v508
      %v633 = vpack.c.b16 %v513, %v509
      %v634 = vpack.c.b16 %v518, %v514
      %v635 = vpack.c.b16 %v519, %v515
      %v636 = vpack.c.b16 %v520, %v516
      %v637 = vpack.c.b16 %v521, %v517
      %v638 = vpack.c.b16 %v526, %v522
      %v639 = vpack.c.b16 %v527, %v523
      %v640 = vpack.c.b16 %v528, %v524
      %v641 = vpack.c.b16 %v529, %v525
      %v642 = vpack.c.b16 %v534, %v530
      %v643 = vpack.c.b16 %v535, %v531
      %v644 = vpack.c.b16 %v536, %v532
      %v645 = vpack.c.b16 %v537, %v533
      %v646 = vpack.c.b16 %v542, %v538
      %v647 = vpack.c.b16 %v543, %v539
      %v648 = vpack.c.b16 %v544, %v540
      %v649 = vpack.c.b16 %v545, %v541
      %v650 = vpack.c.b16 %v550, %v546
      %v651 = vpack.c.b16 %v551, %v547
      %v652 = vpack.c.b16 %v552, %v548
      %v653 = vpack.c.b16 %v553, %v549
      %v654 = vpack.c.b16 %v558, %v554
      %v655 = vpack.c.b16 %v559, %v555
      %v656 = vpack.c.b16 %v560, %v556
      %v657 = vpack.c.b16 %v561, %v557
      %v658 = vpack.c.b16 %v566, %v562
      %v659 = vpack.c.b16 %v567, %v563
      %v660 = vpack.c.b16 %v568, %v564
      %v661 = vpack.c.b16 %v569, %v565
      %v662 = vpack.c.b16 %v574, %v570
      %v663 = vpack.c.b16 %v575, %v571
      %v664 = vpack.c.b16 %v576, %v572
      %v665 = vpack.c.b16 %v577, %v573
      %v666 = vpack.c.b16 %v582, %v578
      %v667 = vpack.c.b16 %v583, %v579
      %v668 = vpack.c.b16 %v584, %v580
      %v669 = vpack.c.b16 %v585, %v581
      %v670 = vpack.c.b16 %v590, %v586
      %v671 = vpack.c.b16 %v591, %v587
      %v672 = vpack.c.b16 %v592, %v588
      %v673 = vpack.c.b16 %v593, %v589
      %v674 = vpack.c.b16 %v598, %v594
      %v675 = vpack.c.b16 %v599, %v595
      %v676 = vpack.c.b16 %v600, %v596
      %v677 = vpack.c.b16 %v601, %v597
      %v678 = vpack.c.b16 %v606, %v602
      %v679 = vpack.c.b16 %v607, %v603
      %v680 = vpack.c.b16 %v608, %v604
      %v681 = vpack.c.b16 %v609, %v605
      %v682 = vpack.c.b16 %v614, %v610
      %v683 = vpack.c.b16 %v615, %v611
      %v684 = vpack.c.b16 %v616, %v612
      %v685 = vpack.c.b16 %v617, %v613
      %v686 = vpack.c.b16 %v622, %v618
      %v687 = vpack.c.b16 %v623, %v619
      %v688 = vpack.c.b16 %v624, %v620
      %v689 = vpack.c.b16 %v625, %v621
      %v818 = vunpack.c.l.b16 %v370
      %v819 = vunpack.c.l.b16 %v371
      %v820 = vunpack.c.l.b16 %v372
      %v821 = vunpack.c.l.b16 %v373
      %v822 = vunpack.c.l.b16 %v374
      %v823 = vunpack.c.l.b16 %v375
      %v824 = vunpack.c.l.b16 %v376
      %v825 = vunpack.c.l.b16 %v377
      %v826 = vunpack.c.l.b16 %v378
      %v827 = vunpack.c.l.b16 %v379
      %v828 = vunpack.c.l.b16 %v380
      %v829 = vunpack.c.l.b16 %v381
      %v830 = vunpack.c.l.b16 %v382
      %v831 = vunpack.c.l.b16 %v383
      %v832 = vunpack.c.l.b16 %v384
      %v833 = vunpack.c.l.b16 %v385
      %v834 = vunpack.c.l.b16 %v386
      %v835 = vunpack.c.l.b16 %v387
      %v836 = vunpack.c.l.b16 %v388
      %v837 = vunpack.c.l.b16 %v389
      %v838 = vunpack.c.l.b16 %v390
      %v839 = vunpack.c.l.b16 %v391
      %v840 = vunpack.c.l.b16 %v392
      %v841 = vunpack.c.l.b16 %v393
      %v842 = vunpack.c.l.b16 %v394
      %v843 = vunpack.c.l.b16 %v395
      %v844 = vunpack.c.l.b16 %v396
      %v845 = vunpack.c.l.b16 %v397
      %v846 = vunpack.c.l.b16 %v398
      %v847 = vunpack.c.l.b16 %v399
      %v848 = vunpack.c.l.b16 %v400
      %v849 = vunpack.c.l.b16 %v401
      %v850 = vunpack.c.l.b16 %v402
      %v851 = vunpack.c.l.b16 %v403
      %v852 = vunpack.c.l.b16 %v404
      %v853 = vunpack.c.l.b16 %v405
      %v854 = vunpack.c.l.b16 %v406
      %v855 = vunpack.c.l.b16 %v407
      %v856 = vunpack.c.l.b16 %v408
      %v857 = vunpack.c.l.b16 %v409
      %v858 = vunpack.c.l.b16 %v410
      %v859 = vunpack.c.l.b16 %v411
      %v860 = vunpack.c.l.b16 %v412
      %v861 = vunpack.c.l.b16 %v413
      %v862 = vunpack.c.l.b16 %v414
      %v863 = vunpack.c.l.b16 %v415
      %v864 = vunpack.c.l.b16 %v416
      %v865 = vunpack.c.l.b16 %v417
      %v866 = vunpack.c.l.b16 %v418
      %v867 = vunpack.c.l.b16 %v419
      %v868 = vunpack.c.l.b16 %v420
      %v869 = vunpack.c.l.b16 %v421
      %v870 = vunpack.c.l.b16 %v422
      %v871 = vunpack.c.l.b16 %v423
      %v872 = vunpack.c.l.b16 %v424
      %v873 = vunpack.c.l.b16 %v425
      %v874 = vunpack.c.l.b16 %v426
      %v875 = vunpack.c.l.b16 %v427
      %v876 = vunpack.c.l.b16 %v428
      %v877 = vunpack.c.l.b16 %v429
      %v878 = vunpack.c.l.b16 %v430
      %v879 = vunpack.c.l.b16 %v431
      %v880 = vunpack.c.l.b16 %v432
      %v881 = vunpack.c.l.b16 %v433
      %v882 = vpack.c.b16 %v819, %v818
      %v883 = vpack.c.b16 %v821, %v820
      %v884 = vpack.c.b16 %v823, %v822
      %v885 = vpack.c.b16 %v825, %v824
      %v886 = vpack.c.b16 %v827, %v826
      %v887 = vpack.c.b16 %v829, %v828
      %v888 = vpack.c.b16 %v831, %v830
      %v889 = vpack.c.b16 %v833, %v832
      %v890 = vpack.c.b16 %v835, %v834
      %v891 = vpack.c.b16 %v837, %v836
      %v892 = vpack.c.b16 %v839, %v838
      %v893 = vpack.c.b16 %v841, %v840
      %v894 = vpack.c.b16 %v843, %v842
      %v895 = vpack.c.b16 %v845, %v844
      %v896 = vpack.c.b16 %v847, %v846
      %v897 = vpack.c.b16 %v849, %v848
      %v898 = vpack.c.b16 %v851, %v850
      %v899 = vpack.c.b16 %v853, %v852
      %v900 = vpack.c.b16 %v855, %v854
      %v901 = vpack.c.b16 %v857, %v856
      %v902 = vpack.c.b16 %v859, %v858
      %v903 = vpack.c.b16 %v861, %v860
      %v904 = vpack.c.b16 %v863, %v862
      %v905 = vpack.c.b16 %v865, %v864
      %v906 = vpack.c.b16 %v867, %v866
      %v907 = vpack.c.b16 %v869, %v868
      %v908 = vpack.c.b16 %v871, %v870
      %v909 = vpack.c.b16 %v873, %v872
      %v910 = vpack.c.b16 %v875, %v874
      %v911 = vpack.c.b16 %v877, %v876
      %v912 = vpack.c.b16 %v879, %v878
      %v913 = vpack.c.b16 %v881, %v880
      %946 = vmatprep.subr.bf16.mxu0 0
      %947 = vmatpush1.bf16.msra.mxu0 %v882
      %948 = vmatprep.subr.bf16.mxu0 0
      %949 = vmatpush1.bf16.msra.mxu0 %v883
      %950 = vmatprep.subr.bf16.mxu0 0
      %951 = vmatpush1.bf16.msra.mxu0 %v884
      %952 = vmatprep.subr.bf16.mxu0 0
      %953 = vmatpush1.bf16.msra.mxu0 %v885
      %954 = vmatprep.subr.bf16.mxu0 0
      %955 = vmatpush1.bf16.msra.mxu0 %v886
      %956 = vmatprep.subr.bf16.mxu0 0
      %957 = vmatpush1.bf16.msra.mxu0 %v887
      %958 = vmatprep.subr.bf16.mxu0 0
      %959 = vmatpush1.bf16.msra.mxu0 %v888
      %960 = vmatprep.subr.bf16.mxu0 0
      %961 = vmatpush1.bf16.msra.mxu0 %v889
      %962 = vmatprep.subr.bf16.mxu0 0
      %963 = vmatpush1.bf16.msra.mxu0 %v890
      %964 = vmatprep.subr.bf16.mxu0 0
      %965 = vmatpush1.bf16.msra.mxu0 %v891
      %966 = vmatprep.subr.bf16.mxu0 0
      %967 = vmatpush1.bf16.msra.mxu0 %v892
      %968 = vmatprep.subr.bf16.mxu0 0
      %969 = vmatpush1.bf16.msra.mxu0 %v893
      %970 = vmatprep.subr.bf16.mxu0 0
      %971 = vmatpush1.bf16.msra.mxu0 %v894
      %972 = vmatprep.subr.bf16.mxu0 0
      %973 = vmatpush1.bf16.msra.mxu0 %v895
      %974 = vmatprep.subr.bf16.mxu0 0
      %975 = vmatpush1.bf16.msra.mxu0 %v896
      %976 = vmatprep.subr.bf16.mxu0 0
      %977 = vmatpush1.bf16.msra.mxu0 %v897
      %978 = vmatprep.mubr.bf16.mxu0 %v627
      %979 = vmatmul.mubr.bf16.gmra.mrb[0].mxu0 %v626
      %v980 = vpop.f32.mrb[0].mxu0
      %v981 = vadd.f32 0.0, %v980
      %v982 = vpop.f32.mrb[0].mxu0
      %v983 = vpop.f32.mrb[0].mxu0
      %v984 = vadd.f32 0.0, %v983
      %v985 = vpop.f32.mrb[0].mxu0
      %986 = vmatprep.mubr.bf16.mxu0 %v631
      %987 = vmatmul.mubr.bf16.gmra.mrb[0].mxu0 %v630
      %v988 = vpop.f32.mrb[0].mxu0
      %v989 = vadd.f32 0.0, %v988
      %v990 = vpop.f32.mrb[0].mxu0
      %v991 = vpop.f32.mrb[0].mxu0
      %v992 = vadd.f32 0.0, %v991
      %v993 = vpop.f32.mrb[0].mxu0
      %994 = vmatprep.mubr.bf16.mxu0 %v635
      %995 = vmatmul.mubr.bf16.gmra.mrb[0].mxu0 %v634
      %v996 = vpop.f32.mrb[0].mxu0
      %v997 = vadd.f32 0.0, %v996
      %v998 = vpop.f32.mrb[0].mxu0
      %v999 = vpop.f32.mrb[0].mxu0
      %v1000 = vadd.f32 0.0, %v999
      %v1001 = vpop.f32.mrb[0].mxu0
      %1002 = vmatprep.mubr.bf16.mxu0 %v639
      %1003 = vmatmul.mubr.bf16.gmra.mrb[0].mxu0 %v638
      %v1004 = vpop.f32.mrb[0].mxu0
      %v1005 = vadd.f32 0.0, %v1004
      %v1006 = vpop.f32.mrb[0].mxu0
      %v1007 = vpop.f32.mrb[0].mxu0
      %v1008 = vadd.f32 0.0, %v1007
      %v1009 = vpop.f32.mrb[0].mxu0
      %1010 = vmatprep.mubr.bf16.mxu0 %v643
      %1011 = vmatmul.mubr.bf16.gmra.mrb[0].mxu0 %v642
      %v1012 = vpop.f32.mrb[0].mxu0
      %v1013 = vadd.f32 0.0, %v1012
      %v1014 = vpop.f32.mrb[0].mxu0
      %v1015 = vpop.f32.mrb[0].mxu0
      %v1016 = vadd.f32 0.0, %v1015
      %v1017 = vpop.f32.mrb[0].mxu0
      %1018 = vmatprep.mubr.bf16.mxu0 %v647
      %1019 = vmatmul.mubr.bf16.gmra.mrb[0].mxu0 %v646
      %v1020 = vpop.f32.mrb[0].mxu0
      %v1021 = vadd.f32 0.0, %v1020
      %v1022 = vpop.f32.mrb[0].mxu0
      %v1023 = vpop.f32.mrb[0].mxu0
      %v1024 = vadd.f32 0.0, %v1023
      %v1025 = vpop.f32.mrb[0].mxu0
      %1026 = vmatprep.mubr.bf16.mxu0 %v651
      %1027 = vmatmul.mubr.bf16.gmra.mrb[0].mxu0 %v650
      %v1028 = vpop.f32.mrb[0].mxu0
      %v1029 = vadd.f32 0.0, %v1028
      %v1030 = vpop.f32.mrb[0].mxu0
      %v1031 = vpop.f32.mrb[0].mxu0
      %v1032 = vadd.f32 0.0, %v1031
      %v1033 = vpop.f32.mrb[0].mxu0
      %1034 = vmatprep.mubr.bf16.mxu0 %v655
      %1035 = vmatmul.mubr.bf16.gmra.mrb[0].mxu0 %v654
      %v1036 = vpop.f32.mrb[0].mxu0
      %v1037 = vadd.f32 0.0, %v1036
      %v1038 = vpop.f32.mrb[0].mxu0
      %v1039 = vpop.f32.mrb[0].mxu0
      %v1040 = vadd.f32 0.0, %v1039
      %v1041 = vpop.f32.mrb[0].mxu0
      %1042 = vmatprep.mubr.bf16.mxu0 %v659
      %1043 = vmatmul.mubr.bf16.gmra.mrb[0].mxu0 %v658
      %v1044 = vpop.f32.mrb[0].mxu0
      %v1045 = vadd.f32 0.0, %v1044
      %v1046 = vpop.f32.mrb[0].mxu0
      %v1047 = vpop.f32.mrb[0].mxu0
      %v1048 = vadd.f32 0.0, %v1047
      %v1049 = vpop.f32.mrb[0].mxu0
      %1050 = vmatprep.mubr.bf16.mxu0 %v663
      %1051 = vmatmul.mubr.bf16.gmra.mrb[0].mxu0 %v662
      %v1052 = vpop.f32.mrb[0].mxu0
      %v1053 = vadd.f32 0.0, %v1052
      %v1054 = vpop.f32.mrb[0].mxu0
      %v1055 = vpop.f32.mrb[0].mxu0
      %v1056 = vadd.f32 0.0, %v1055
      %v1057 = vpop.f32.mrb[0].mxu0
      %1058 = vmatprep.mubr.bf16.mxu0 %v667
      %1059 = vmatmul.mubr.bf16.gmra.mrb[0].mxu0 %v666
      %v1060 = vpop.f32.mrb[0].mxu0
      %v1061 = vadd.f32 0.0, %v1060
      %v1062 = vpop.f32.mrb[0].mxu0
      %v1063 = vpop.f32.mrb[0].mxu0
      %v1064 = vadd.f32 0.0, %v1063
      %v1065 = vpop.f32.mrb[0].mxu0
      %1066 = vmatprep.mubr.bf16.mxu0 %v671
      %1067 = vmatmul.mubr.bf16.gmra.mrb[0].mxu0 %v670
      %v1068 = vpop.f32.mrb[0].mxu0
      %v1069 = vadd.f32 0.0, %v1068
      %v1070 = vpop.f32.mrb[0].mxu0
      %v1071 = vpop.f32.mrb[0].mxu0
      %v1072 = vadd.f32 0.0, %v1071
      %v1073 = vpop.f32.mrb[0].mxu0
      %1074 = vmatprep.mubr.bf16.mxu0 %v675
      %1075 = vmatmul.mubr.bf16.gmra.mrb[0].mxu0 %v674
      %v1076 = vpop.f32.mrb[0].mxu0
      %v1077 = vadd.f32 0.0, %v1076
      %v1078 = vpop.f32.mrb[0].mxu0
      %v1079 = vpop.f32.mrb[0].mxu0
      %v1080 = vadd.f32 0.0, %v1079
      %v1081 = vpop.f32.mrb[0].mxu0
      %1082 = vmatprep.mubr.bf16.mxu0 %v679
      %1083 = vmatmul.mubr.bf16.gmra.mrb[0].mxu0 %v678
      %v1084 = vpop.f32.mrb[0].mxu0
      %v1085 = vadd.f32 0.0, %v1084
      %v1086 = vpop.f32.mrb[0].mxu0
      %v1087 = vpop.f32.mrb[0].mxu0
      %v1088 = vadd.f32 0.0, %v1087
      %v1089 = vpop.f32.mrb[0].mxu0
      %1090 = vmatprep.mubr.bf16.mxu0 %v683
      %1091 = vmatmul.mubr.bf16.gmra.mrb[0].mxu0 %v682
      %v1092 = vpop.f32.mrb[0].mxu0
      %v1093 = vadd.f32 0.0, %v1092
      %v1094 = vpop.f32.mrb[0].mxu0
      %v1095 = vpop.f32.mrb[0].mxu0
      %v1096 = vadd.f32 0.0, %v1095
      %v1097 = vpop.f32.mrb[0].mxu0
      %1098 = vmatprep.mubr.bf16.mxu0 %v687
      %1099 = vmatmul.mubr.bf16.gmra.mrb[0].mxu0 %v686
      %v1100 = vpop.f32.mrb[0].mxu0
      %v1101 = vadd.f32 0.0, %v1100
      %v1102 = vpop.f32.mrb[0].mxu0
      %v1103 = vpop.f32.mrb[0].mxu0
      %v1104 = vadd.f32 0.0, %v1103
      %v1105 = vpop.f32.mrb[0].mxu0
      %1106 = vdwg.mxu0
      %1107 = vmatprep.subr.bf16.mxu0 0
      %1108 = vmatpush1.bf16.msra.mxu0 %v898
      %1109 = vmatprep.subr.bf16.mxu0 0
      %1110 = vmatpush1.bf16.msra.mxu0 %v899
      %1111 = vmatprep.subr.bf16.mxu0 0
      %1112 = vmatpush1.bf16.msra.mxu0 %v900
      %1113 = vmatprep.subr.bf16.mxu0 0
      %1114 = vmatpush1.bf16.msra.mxu0 %v901
      %1115 = vmatprep.subr.bf16.mxu0 0
      %1116 = vmatpush1.bf16.msra.mxu0 %v902
      %1117 = vmatprep.subr.bf16.mxu0 0
      %1118 = vmatpush1.bf16.msra.mxu0 %v903
      %1119 = vmatprep.subr.bf16.mxu0 0
      %1120 = vmatpush1.bf16.msra.mxu0 %v904
      %1121 = vmatprep.subr.bf16.mxu0 0
      %1122 = vmatpush1.bf16.msra.mxu0 %v905
      %1123 = vmatprep.subr.bf16.mxu0 0
      %1124 = vmatpush1.bf16.msra.mxu0 %v906
      %1125 = vmatprep.subr.bf16.mxu0 0
      %1126 = vmatpush1.bf16.msra.mxu0 %v907
      %1127 = vmatprep.subr.bf16.mxu0 0
      %1128 = vmatpush1.bf16.msra.mxu0 %v908
      %1129 = vmatprep.subr.bf16.mxu0 0
      %1130 = vmatpush1.bf16.msra.mxu0 %v909
      %1131 = vmatprep.subr.bf16.mxu0 0
      %1132 = vmatpush1.bf16.msra.mxu0 %v910
      %1133 = vmatprep.subr.bf16.mxu0 0
      %1134 = vmatpush1.bf16.msra.mxu0 %v911
      %1135 = vmatprep.subr.bf16.mxu0 0
      %1136 = vmatpush1.bf16.msra.mxu0 %v912
      %1137 = vmatprep.subr.bf16.mxu0 0
      %1138 = vmatpush1.bf16.msra.mxu0 %v913
      %1139 = vmatprep.mubr.bf16.mxu0 %v629
      %1140 = vmatmul.mubr.bf16.gmra.mrb[0].mxu0 %v628
      %v1141 = vpop.f32.mrb[0].mxu0
      %v1142 = vadd.f32 %v981, %v1141
      %v1143 = vpop.f32.mrb[0].mxu0
      %v1144 = vpop.f32.mrb[0].mxu0
      %v1145 = vadd.f32 %v984, %v1144
      %v1146 = vpop.f32.mrb[0].mxu0
      %1147 = vmatprep.mubr.bf16.mxu0 %v633
      %1148 = vmatmul.mubr.bf16.gmra.mrb[0].mxu0 %v632
      %v1149 = vpop.f32.mrb[0].mxu0
      %v1150 = vadd.f32 %v989, %v1149
      %v1151 = vpop.f32.mrb[0].mxu0
      %v1152 = vpop.f32.mrb[0].mxu0
      %v1153 = vadd.f32 %v992, %v1152
      %v1154 = vpop.f32.mrb[0].mxu0
      %1155 = vmatprep.mubr.bf16.mxu0 %v637
      %1156 = vmatmul.mubr.bf16.gmra.mrb[0].mxu0 %v636
      %v1157 = vpop.f32.mrb[0].mxu0
      %v1158 = vadd.f32 %v997, %v1157
      %v1159 = vpop.f32.mrb[0].mxu0
      %v1160 = vpop.f32.mrb[0].mxu0
      %v1161 = vadd.f32 %v1000, %v1160
      %v1162 = vpop.f32.mrb[0].mxu0
      %1163 = vmatprep.mubr.bf16.mxu0 %v641
      %1164 = vmatmul.mubr.bf16.gmra.mrb[0].mxu0 %v640
      %v1165 = vpop.f32.mrb[0].mxu0
      %v1166 = vadd.f32 %v1005, %v1165
      %v1167 = vpop.f32.mrb[0].mxu0
      %v1168 = vpop.f32.mrb[0].mxu0
      %v1169 = vadd.f32 %v1008, %v1168
      %v1170 = vpop.f32.mrb[0].mxu0
      %1171 = vmatprep.mubr.bf16.mxu0 %v645
      %1172 = vmatmul.mubr.bf16.gmra.mrb[0].mxu0 %v644
      %v1173 = vpop.f32.mrb[0].mxu0
      %v1174 = vadd.f32 %v1013, %v1173
      %v1175 = vpop.f32.mrb[0].mxu0
      %v1176 = vpop.f32.mrb[0].mxu0
      %v1177 = vadd.f32 %v1016, %v1176
      %v1178 = vpop.f32.mrb[0].mxu0
      %1179 = vmatprep.mubr.bf16.mxu0 %v649
      %1180 = vmatmul.mubr.bf16.gmra.mrb[0].mxu0 %v648
      %v1181 = vpop.f32.mrb[0].mxu0
      %v1182 = vadd.f32 %v1021, %v1181
      %v1183 = vpop.f32.mrb[0].mxu0
      %v1184 = vpop.f32.mrb[0].mxu0
      %v1185 = vadd.f32 %v1024, %v1184
      %v1186 = vpop.f32.mrb[0].mxu0
      %1187 = vmatprep.mubr.bf16.mxu0 %v653
      %1188 = vmatmul.mubr.bf16.gmra.mrb[0].mxu0 %v652
      %v1189 = vpop.f32.mrb[0].mxu0
      %v1190 = vadd.f32 %v1029, %v1189
      %v1191 = vpop.f32.mrb[0].mxu0
      %v1192 = vpop.f32.mrb[0].mxu0
      %v1193 = vadd.f32 %v1032, %v1192
      %v1194 = vpop.f32.mrb[0].mxu0
      %1195 = vmatprep.mubr.bf16.mxu0 %v657
      %1196 = vmatmul.mubr.bf16.gmra.mrb[0].mxu0 %v656
      %v1197 = vpop.f32.mrb[0].mxu0
      %v1198 = vadd.f32 %v1037, %v1197
      %v1199 = vpop.f32.mrb[0].mxu0
      %v1200 = vpop.f32.mrb[0].mxu0
      %v1201 = vadd.f32 %v1040, %v1200
      %v1202 = vpop.f32.mrb[0].mxu0
      %1203 = vmatprep.mubr.bf16.mxu0 %v661
      %1204 = vmatmul.mubr.bf16.gmra.mrb[0].mxu0 %v660
      %v1205 = vpop.f32.mrb[0].mxu0
      %v1206 = vadd.f32 %v1045, %v1205
      %v1207 = vpop.f32.mrb[0].mxu0
      %v1208 = vpop.f32.mrb[0].mxu0
      %v1209 = vadd.f32 %v1048, %v1208
      %v1210 = vpop.f32.mrb[0].mxu0
      %1211 = vmatprep.mubr.bf16.mxu0 %v665
      %1212 = vmatmul.mubr.bf16.gmra.mrb[0].mxu0 %v664
      %v1213 = vpop.f32.mrb[0].mxu0
      %v1214 = vadd.f32 %v1053, %v1213
      %v1215 = vpop.f32.mrb[0].mxu0
      %v1216 = vpop.f32.mrb[0].mxu0
      %v1217 = vadd.f32 %v1056, %v1216
      %v1218 = vpop.f32.mrb[0].mxu0
      %1219 = vmatprep.mubr.bf16.mxu0 %v669
      %1220 = vmatmul.mubr.bf16.gmra.mrb[0].mxu0 %v668
      %v1221 = vpop.f32.mrb[0].mxu0
      %v1222 = vadd.f32 %v1061, %v1221
      %v1223 = vpop.f32.mrb[0].mxu0
      %v1224 = vpop.f32.mrb[0].mxu0
      %v1225 = vadd.f32 %v1064, %v1224
      %v1226 = vpop.f32.mrb[0].mxu0
      %1227 = vmatprep.mubr.bf16.mxu0 %v673
      %1228 = vmatmul.mubr.bf16.gmra.mrb[0].mxu0 %v672
      %v1229 = vpop.f32.mrb[0].mxu0
      %v1230 = vadd.f32 %v1069, %v1229
      %v1231 = vpop.f32.mrb[0].mxu0
      %v1232 = vpop.f32.mrb[0].mxu0
      %v1233 = vadd.f32 %v1072, %v1232
      %v1234 = vpop.f32.mrb[0].mxu0
      %1235 = vmatprep.mubr.bf16.mxu0 %v677
      %1236 = vmatmul.mubr.bf16.gmra.mrb[0].mxu0 %v676
      %v1237 = vpop.f32.mrb[0].mxu0
      %v1238 = vadd.f32 %v1077, %v1237
      %v1239 = vpop.f32.mrb[0].mxu0
      %v1240 = vpop.f32.mrb[0].mxu0
      %v1241 = vadd.f32 %v1080, %v1240
      %v1242 = vpop.f32.mrb[0].mxu0
      %1243 = vmatprep.mubr.bf16.mxu0 %v681
      %1244 = vmatmul.mubr.bf16.gmra.mrb[0].mxu0 %v680
      %v1245 = vpop.f32.mrb[0].mxu0
      %v1246 = vadd.f32 %v1085, %v1245
      %v1247 = vpop.f32.mrb[0].mxu0
      %v1248 = vpop.f32.mrb[0].mxu0
      %v1249 = vadd.f32 %v1088, %v1248
      %v1250 = vpop.f32.mrb[0].mxu0
      %1251 = vmatprep.mubr.bf16.mxu0 %v685
      %1252 = vmatmul.mubr.bf16.gmra.mrb[0].mxu0 %v684
      %v1253 = vpop.f32.mrb[0].mxu0
      %v1254 = vadd.f32 %v1093, %v1253
      %v1255 = vpop.f32.mrb[0].mxu0
      %v1256 = vpop.f32.mrb[0].mxu0
      %v1257 = vadd.f32 %v1096, %v1256
      %v1258 = vpop.f32.mrb[0].mxu0
      %1259 = vmatprep.mubr.bf16.mxu0 %v689
      %1260 = vmatmul.mubr.bf16.gmra.mrb[0].mxu0 %v688
      %v1261 = vpop.f32.mrb[0].mxu0
      %v1262 = vadd.f32 %v1101, %v1261
      %v1263 = vpop.f32.mrb[0].mxu0
      %v1264 = vpop.f32.mrb[0].mxu0
      %v1265 = vadd.f32 %v1104, %v1264
      %v1266 = vpop.f32.mrb[0].mxu0
      %1267 = vdwg.mxu0
      %v1268 = vadd.f32 %v270, %v1142
      %v1269 = vadd.f32 %v271, %v1145
      %v1270 = vadd.f32 %v272, %v1150
      %v1271 = vadd.f32 %v273, %v1153
      %v1272 = vadd.f32 %v274, %v1158
      %v1273 = vadd.f32 %v275, %v1161
      %v1274 = vadd.f32 %v276, %v1166
      %v1275 = vadd.f32 %v277, %v1169
      %v1276 = vadd.f32 %v278, %v1174
      %v1277 = vadd.f32 %v279, %v1177
      %v1278 = vadd.f32 %v280, %v1182
      %v1279 = vadd.f32 %v281, %v1185
      %v1280 = vadd.f32 %v282, %v1190
      %v1281 = vadd.f32 %v283, %v1193
      %v1282 = vadd.f32 %v284, %v1198
      %v1283 = vadd.f32 %v285, %v1201
      %v1284 = vadd.f32 %v286, %v1206
      %v1285 = vadd.f32 %v287, %v1209
      %v1286 = vadd.f32 %v288, %v1214
      %v1287 = vadd.f32 %v289, %v1217
      %v1288 = vadd.f32 %v290, %v1222
      %v1289 = vadd.f32 %v291, %v1225
      %v1290 = vadd.f32 %v292, %v1230
      %v1291 = vadd.f32 %v293, %v1233
      %v1292 = vadd.f32 %v294, %v1238
      %v1293 = vadd.f32 %v295, %v1241
      %v1294 = vadd.f32 %v296, %v1246
      %v1295 = vadd.f32 %v297, %v1249
      %v1296 = vadd.f32 %v298, %v1254
      %v1297 = vadd.f32 %v299, %v1257
      %v1298 = vadd.f32 %v300, %v1262
      %v1299 = vadd.f32 %v301, %v1265
      %1300 = vst [vmem:[#allocation2] sm:$0xff] %v1268
      %1301 = vst [vmem:[#allocation2 + $0x8] sm:$0xff] %v1269
      %1302 = vst [vmem:[#allocation2 + $0x10] sm:$0xff] %v1270
      %1303 = vst [vmem:[#allocation2 + $0x18] sm:$0xff] %v1271
      %1304 = vst [vmem:[#allocation2 + $0x20] sm:$0xff] %v1272
      %1305 = vst [vmem:[#allocation2 + $0x28] sm:$0xff] %v1273
      %1306 = vst [vmem:[#allocation2 + $0x30] sm:$0xff] %v1274
      %1307 = vst [vmem:[#allocation2 + $0x38] sm:$0xff] %v1275
      %1308 = vst [vmem:[#allocation2 + $0x40] sm:$0xff] %v1276
      %1309 = vst [vmem:[#allocation2 + $0x48] sm:$0xff] %v1277
      %1310 = vst [vmem:[#allocation2 + $0x50] sm:$0xff] %v1278
      %1311 = vst [vmem:[#allocation2 + $0x58] sm:$0xff] %v1279
      %1312 = vst [vmem:[#allocation2 + $0x60] sm:$0xff] %v1280
      %1313 = vst [vmem:[#allocation2 + $0x68] sm:$0xff] %v1281
      %1314 = vst [vmem:[#allocation2 + $0x70] sm:$0xff] %v1282
      %1315 = vst [vmem:[#allocation2 + $0x78] sm:$0xff] %v1283
      %1316 = vst [vmem:[#allocation2 + $0x80] sm:$0xff] %v1284
      %1317 = vst [vmem:[#allocation2 + $0x88] sm:$0xff] %v1285
      %1318 = vst [vmem:[#allocation2 + $0x90] sm:$0xff] %v1286
      %1319 = vst [vmem:[#allocation2 + $0x98] sm:$0xff] %v1287
      %1320 = vst [vmem:[#allocation2 + $0xa0] sm:$0xff] %v1288
      %1321 = vst [vmem:[#allocation2 + $0xa8] sm:$0xff] %v1289
      %1322 = vst [vmem:[#allocation2 + $0xb0] sm:$0xff] %v1290
      %1323 = vst [vmem:[#allocation2 + $0xb8] sm:$0xff] %v1291
      %1324 = vst [vmem:[#allocation2 + $0xc0] sm:$0xff] %v1292
      %1325 = vst [vmem:[#allocation2 + $0xc8] sm:$0xff] %v1293
      %1326 = vst [vmem:[#allocation2 + $0xd0] sm:$0xff] %v1294
      %1327 = vst [vmem:[#allocation2 + $0xd8] sm:$0xff] %v1295
      %1328 = vst [vmem:[#allocation2 + $0xe0] sm:$0xff] %v1296
      %1329 = vst [vmem:[#allocation2 + $0xe8] sm:$0xff] %v1297
      %1330 = vst [vmem:[#allocation2 + $0xf0] sm:$0xff] %v1298
      %1331 = vst [vmem:[#allocation2 + $0xf8] sm:$0xff] %v1299
      // Predicated region
      $region41: #{conad_forward.8} parent=35 // pred_check
        %p1332 = pneg %p233
      $region42: #{conad_forward.8} parent=35 // pred_check_branch
        %1334 = sbr.rel (%p1332) target = $region44
      $region43: #{conad_forward.8} parent=35 // pred_region
        %v1335 = vld [vmem:[#allocation2] sm:$0xff]
        %v1336 = vld [vmem:[#allocation2 + $0x8] sm:$0xff]
        %v1337 = vld [vmem:[#allocation2 + $0x10] sm:$0xff]
        %v1338 = vld [vmem:[#allocation2 + $0x18] sm:$0xff]
        %v1339 = vld [vmem:[#allocation2 + $0x20] sm:$0xff]
        %v1340 = vld [vmem:[#allocation2 + $0x28] sm:$0xff]
        %v1341 = vld [vmem:[#allocation2 + $0x30] sm:$0xff]
        %v1342 = vld [vmem:[#allocation2 + $0x38] sm:$0xff]
        %v1343 = vld [vmem:[#allocation2 + $0x40] sm:$0xff]
        %v1344 = vld [vmem:[#allocation2 + $0x48] sm:$0xff]
        %v1345 = vld [vmem:[#allocation2 + $0x50] sm:$0xff]
        %v1346 = vld [vmem:[#allocation2 + $0x58] sm:$0xff]
        %v1347 = vld [vmem:[#allocation2 + $0x60] sm:$0xff]
        %v1348 = vld [vmem:[#allocation2 + $0x68] sm:$0xff]
        %v1349 = vld [vmem:[#allocation2 + $0x70] sm:$0xff]
        %v1350 = vld [vmem:[#allocation2 + $0x78] sm:$0xff]
        %v1351 = vld [vmem:[#allocation2 + $0x80] sm:$0xff]
        %v1352 = vld [vmem:[#allocation2 + $0x88] sm:$0xff]
        %v1353 = vld [vmem:[#allocation2 + $0x90] sm:$0xff]
        %v1354 = vld [vmem:[#allocation2 + $0x98] sm:$0xff]
        %v1355 = vld [vmem:[#allocation2 + $0xa0] sm:$0xff]
        %v1356 = vld [vmem:[#allocation2 + $0xa8] sm:$0xff]
        %v1357 = vld [vmem:[#allocation2 + $0xb0] sm:$0xff]
        %v1358 = vld [vmem:[#allocation2 + $0xb8] sm:$0xff]
        %v1359 = vld [vmem:[#allocation2 + $0xc0] sm:$0xff]
        %v1360 = vld [vmem:[#allocation2 + $0xc8] sm:$0xff]
        %v1361 = vld [vmem:[#allocation2 + $0xd0] sm:$0xff]
        %v1362 = vld [vmem:[#allocation2 + $0xd8] sm:$0xff]
        %v1363 = vld [vmem:[#allocation2 + $0xe0] sm:$0xff]
        %v1364 = vld [vmem:[#allocation2 + $0xe8] sm:$0xff]
        %v1365 = vld [vmem:[#allocation2 + $0xf0] sm:$0xff]
        %v1366 = vld [vmem:[#allocation2 + $0xf8] sm:$0xff]
        %v1367 = vpack.c.bf16 %v1336, %v1335
        %v1368 = vpack.c.bf16 %v1338, %v1337
        %v1369 = vpack.c.bf16 %v1340, %v1339
        %v1370 = vpack.c.bf16 %v1342, %v1341
        %v1371 = vpack.c.bf16 %v1344, %v1343
        %v1372 = vpack.c.bf16 %v1346, %v1345
        %v1373 = vpack.c.bf16 %v1348, %v1347
        %v1374 = vpack.c.bf16 %v1350, %v1349
        %v1375 = vpack.c.bf16 %v1352, %v1351
        %v1376 = vpack.c.bf16 %v1354, %v1353
        %v1377 = vpack.c.bf16 %v1356, %v1355
        %v1378 = vpack.c.bf16 %v1358, %v1357
        %v1379 = vpack.c.bf16 %v1360, %v1359
        %v1380 = vpack.c.bf16 %v1362, %v1361
        %v1381 = vpack.c.bf16 %v1364, %v1363
        %v1382 = vpack.c.bf16 %v1366, %v1365
        %v1383 = vld [vmem:[%s2] sm:$0xf]
        %v1384 = vld [vmem:[%s2 + $0x4] sm:$0xf]
        %v1385 = vld [vmem:[%s2 + $0x8] sm:$0xf]
        %v1386 = vld [vmem:[%s2 + $0xc] sm:$0xf]
        %v1387 = vld [vmem:[%s2 + $0x10] sm:$0xf]
        %v1388 = vld [vmem:[%s2 + $0x14] sm:$0xf]
        %v1389 = vld [vmem:[%s2 + $0x18] sm:$0xf]
        %v1390 = vld [vmem:[%s2 + $0x1c] sm:$0xf]
        %v1391 = vld [vmem:[%s2 + $0x20] sm:$0xf]
        %v1392 = vld [vmem:[%s2 + $0x24] sm:$0xf]
        %v1393 = vld [vmem:[%s2 + $0x28] sm:$0xf]
        %v1394 = vld [vmem:[%s2 + $0x2c] sm:$0xf]
        %v1395 = vld [vmem:[%s2 + $0x30] sm:$0xf]
        %v1396 = vld [vmem:[%s2 + $0x34] sm:$0xf]
        %v1397 = vld [vmem:[%s2 + $0x38] sm:$0xf]
        %v1398 = vld [vmem:[%s2 + $0x3c] sm:$0xf]
        %v1399 = vld [vmem:[%s3] sm:$0x1]
        %v1401 = vlaneseq
        %v1402 = vshrl.u32 %v1401, 7
        %v1403 = vsub.s32 0, %v1402
        %v1404 = vrot.slane %v1399, %v1403
        %v1422 = vunpack.c.l.b16 %v1383
        %v1423 = vunpack.c.l.b16 %v1384
        %v1424 = vunpack.c.l.b16 %v1385
        %v1425 = vunpack.c.l.b16 %v1386
        %v1426 = vunpack.c.l.b16 %v1387
        %v1427 = vunpack.c.l.b16 %v1388
        %v1428 = vunpack.c.l.b16 %v1389
        %v1429 = vunpack.c.l.b16 %v1390
        %v1430 = vunpack.c.l.b16 %v1391
        %v1431 = vunpack.c.l.b16 %v1392
        %v1432 = vunpack.c.l.b16 %v1393
        %v1433 = vunpack.c.l.b16 %v1394
        %v1434 = vunpack.c.l.b16 %v1395
        %v1435 = vunpack.c.l.b16 %v1396
        %v1436 = vunpack.c.l.b16 %v1397
        %v1437 = vunpack.c.l.b16 %v1398
        %v1438 = vpack.c.b16 %v1423, %v1422
        %v1439 = vpack.c.b16 %v1425, %v1424
        %v1440 = vpack.c.b16 %v1427, %v1426
        %v1441 = vpack.c.b16 %v1429, %v1428
        %v1442 = vpack.c.b16 %v1431, %v1430
        %v1443 = vpack.c.b16 %v1433, %v1432
        %v1444 = vpack.c.b16 %v1435, %v1434
        %v1445 = vpack.c.b16 %v1437, %v1436
        %1454 = vmatprep.subr.bf16.mxu0 0
        %1455 = vmatpush1.bf16.msra.mxu0 %v1438
        %1456 = vmatprep.subr.bf16.mxu0 0
        %1457 = vmatpush1.bf16.msra.mxu0 %v1439
        %1458 = vmatprep.subr.bf16.mxu0 0
        %1459 = vmatpush1.bf16.msra.mxu0 %v1440
        %1460 = vmatprep.subr.bf16.mxu0 0
        %1461 = vmatpush1.bf16.msra.mxu0 %v1441
        %1462 = vmatprep.subr.bf16.mxu0 0
        %1463 = vmatpush1.bf16.msra.mxu0 %v1442
        %1464 = vmatprep.subr.bf16.mxu0 0
        %1465 = vmatpush1.bf16.msra.mxu0 %v1443
        %1466 = vmatprep.subr.bf16.mxu0 0
        %1467 = vmatpush1.bf16.msra.mxu0 %v1444
        %1468 = vmatprep.subr.bf16.mxu0 0
        %1469 = vmatpush1.bf16.msra.mxu0 %v1445
        %1470 = vmatprep.subr.bf16.mxu0 0
        %1471 = vmatpush1.bf16.msra.mxu0 0
        %1472 = vmatprep.subr.bf16.mxu0 0
        %1473 = vmatpush1.bf16.msra.mxu0 0
        %1474 = vmatprep.subr.bf16.mxu0 0
        %1475 = vmatpush1.bf16.msra.mxu0 0
        %1476 = vmatprep.subr.bf16.mxu0 0
        %1477 = vmatpush1.bf16.msra.mxu0 0
        %1478 = vmatprep.subr.bf16.mxu0 0
        %1479 = vmatpush1.bf16.msra.mxu0 0
        %1480 = vmatprep.subr.bf16.mxu0 0
        %1481 = vmatpush1.bf16.msra.mxu0 0
        %1482 = vmatprep.subr.bf16.mxu0 0
        %1483 = vmatpush1.bf16.msra.mxu0 0
        %1484 = vmatprep.subr.bf16.mxu0 0
        %1485 = vmatpush1.bf16.msra.mxu0 0
        %1486 = vmatprep.mubr.bf16.mxu0 0
        %1487 = vmatmul.mubr.bf16.gmra.mrb[0].mxu0 %v1367
        %v1488 = vpop.f32.mrb[0].mxu0
        %v1489 = vadd.f32 %v1404, %v1488
        %v1490 = vpop.f32.mrb[0].mxu0
        %v1491 = vpop.f32.mrb[0].mxu0
        %v1492 = vadd.f32 %v1404, %v1491
        %v1493 = vpop.f32.mrb[0].mxu0
        %1494 = vmatprep.mubr.bf16.mxu0 0
        %1495 = vmatmul.mubr.bf16.gmra.mrb[0].mxu0 %v1368
        %v1496 = vpop.f32.mrb[0].mxu0
        %v1497 = vadd.f32 %v1404, %v1496
        %v1498 = vpop.f32.mrb[0].mxu0
        %v1499 = vpop.f32.mrb[0].mxu0
        %v1500 = vadd.f32 %v1404, %v1499
        %v1501 = vpop.f32.mrb[0].mxu0
        %1502 = vmatprep.mubr.bf16.mxu0 0
        %1503 = vmatmul.mubr.bf16.gmra.mrb[0].mxu0 %v1369
        %v1504 = vpop.f32.mrb[0].mxu0
        %v1505 = vadd.f32 %v1404, %v1504
        %v1506 = vpop.f32.mrb[0].mxu0
        %v1507 = vpop.f32.mrb[0].mxu0
        %v1508 = vadd.f32 %v1404, %v1507
        %v1509 = vpop.f32.mrb[0].mxu0
        %1510 = vmatprep.mubr.bf16.mxu0 0
        %1511 = vmatmul.mubr.bf16.gmra.mrb[0].mxu0 %v1370
        %v1512 = vpop.f32.mrb[0].mxu0
        %v1513 = vadd.f32 %v1404, %v1512
        %v1514 = vpop.f32.mrb[0].mxu0
        %v1515 = vpop.f32.mrb[0].mxu0
        %v1516 = vadd.f32 %v1404, %v1515
        %v1517 = vpop.f32.mrb[0].mxu0
        %1518 = vmatprep.mubr.bf16.mxu0 0
        %1519 = vmatmul.mubr.bf16.gmra.mrb[0].mxu0 %v1371
        %v1520 = vpop.f32.mrb[0].mxu0
        %v1521 = vadd.f32 %v1404, %v1520
        %v1522 = vpop.f32.mrb[0].mxu0
        %v1523 = vpop.f32.mrb[0].mxu0
        %v1524 = vadd.f32 %v1404, %v1523
        %v1525 = vpop.f32.mrb[0].mxu0
        %1526 = vmatprep.mubr.bf16.mxu0 0
        %1527 = vmatmul.mubr.bf16.gmra.mrb[0].mxu0 %v1372
        %v1528 = vpop.f32.mrb[0].mxu0
        %v1529 = vadd.f32 %v1404, %v1528
        %v1530 = vpop.f32.mrb[0].mxu0
        %v1531 = vpop.f32.mrb[0].mxu0
        %v1532 = vadd.f32 %v1404, %v1531
        %v1533 = vpop.f32.mrb[0].mxu0
        %1534 = vmatprep.mubr.bf16.mxu0 0
        %1535 = vmatmul.mubr.bf16.gmra.mrb[0].mxu0 %v1373
        %v1536 = vpop.f32.mrb[0].mxu0
        %v1537 = vadd.f32 %v1404, %v1536
        %v1538 = vpop.f32.mrb[0].mxu0
        %v1539 = vpop.f32.mrb[0].mxu0
        %v1540 = vadd.f32 %v1404, %v1539
        %v1541 = vpop.f32.mrb[0].mxu0
        %1542 = vmatprep.mubr.bf16.mxu0 0
        %1543 = vmatmul.mubr.bf16.gmra.mrb[0].mxu0 %v1374
        %v1544 = vpop.f32.mrb[0].mxu0
        %v1545 = vadd.f32 %v1404, %v1544
        %v1546 = vpop.f32.mrb[0].mxu0
        %v1547 = vpop.f32.mrb[0].mxu0
        %v1548 = vadd.f32 %v1404, %v1547
        %v1549 = vpop.f32.mrb[0].mxu0
        %1550 = vmatprep.mubr.bf16.mxu0 0
        %1551 = vmatmul.mubr.bf16.gmra.mrb[0].mxu0 %v1375
        %v1552 = vpop.f32.mrb[0].mxu0
        %v1553 = vadd.f32 %v1404, %v1552
        %v1554 = vpop.f32.mrb[0].mxu0
        %v1555 = vpop.f32.mrb[0].mxu0
        %v1556 = vadd.f32 %v1404, %v1555
        %v1557 = vpop.f32.mrb[0].mxu0
        %1558 = vmatprep.mubr.bf16.mxu0 0
        %1559 = vmatmul.mubr.bf16.gmra.mrb[0].mxu0 %v1376
        %v1560 = vpop.f32.mrb[0].mxu0
        %v1561 = vadd.f32 %v1404, %v1560
        %v1562 = vpop.f32.mrb[0].mxu0
        %v1563 = vpop.f32.mrb[0].mxu0
        %v1564 = vadd.f32 %v1404, %v1563
        %v1565 = vpop.f32.mrb[0].mxu0
        %1566 = vmatprep.mubr.bf16.mxu0 0
        %1567 = vmatmul.mubr.bf16.gmra.mrb[0].mxu0 %v1377
        %v1568 = vpop.f32.mrb[0].mxu0
        %v1569 = vadd.f32 %v1404, %v1568
        %v1570 = vpop.f32.mrb[0].mxu0
        %v1571 = vpop.f32.mrb[0].mxu0
        %v1572 = vadd.f32 %v1404, %v1571
        %v1573 = vpop.f32.mrb[0].mxu0
        %1574 = vmatprep.mubr.bf16.mxu0 0
        %1575 = vmatmul.mubr.bf16.gmra.mrb[0].mxu0 %v1378
        %v1576 = vpop.f32.mrb[0].mxu0
        %v1577 = vadd.f32 %v1404, %v1576
        %v1578 = vpop.f32.mrb[0].mxu0
        %v1579 = vpop.f32.mrb[0].mxu0
        %v1580 = vadd.f32 %v1404, %v1579
        %v1581 = vpop.f32.mrb[0].mxu0
        %1582 = vmatprep.mubr.bf16.mxu0 0
        %1583 = vmatmul.mubr.bf16.gmra.mrb[0].mxu0 %v1379
        %v1584 = vpop.f32.mrb[0].mxu0
        %v1585 = vadd.f32 %v1404, %v1584
        %v1586 = vpop.f32.mrb[0].mxu0
        %v1587 = vpop.f32.mrb[0].mxu0
        %v1588 = vadd.f32 %v1404, %v1587
        %v1589 = vpop.f32.mrb[0].mxu0
        %1590 = vmatprep.mubr.bf16.mxu0 0
        %1591 = vmatmul.mubr.bf16.gmra.mrb[0].mxu0 %v1380
        %v1592 = vpop.f32.mrb[0].mxu0
        %v1593 = vadd.f32 %v1404, %v1592
        %v1594 = vpop.f32.mrb[0].mxu0
        %v1595 = vpop.f32.mrb[0].mxu0
        %v1596 = vadd.f32 %v1404, %v1595
        %v1597 = vpop.f32.mrb[0].mxu0
        %1598 = vmatprep.mubr.bf16.mxu0 0
        %1599 = vmatmul.mubr.bf16.gmra.mrb[0].mxu0 %v1381
        %v1600 = vpop.f32.mrb[0].mxu0
        %v1601 = vadd.f32 %v1404, %v1600
        %v1602 = vpop.f32.mrb[0].mxu0
        %v1603 = vpop.f32.mrb[0].mxu0
        %v1604 = vadd.f32 %v1404, %v1603
        %v1605 = vpop.f32.mrb[0].mxu0
        %1606 = vmatprep.mubr.bf16.mxu0 0
        %1607 = vmatmul.mubr.bf16.gmra.mrb[0].mxu0 %v1382
        %v1608 = vpop.f32.mrb[0].mxu0
        %v1609 = vadd.f32 %v1404, %v1608
        %v1610 = vpop.f32.mrb[0].mxu0
        %v1611 = vpop.f32.mrb[0].mxu0
        %v1612 = vadd.f32 %v1404, %v1611
        %v1613 = vpop.f32.mrb[0].mxu0
        %1614 = vdwg.mxu0
        %1615 = vst [vmem:[%s230] sm:$0xff] %v1489
        %1616 = vst [vmem:[%s230 + $0x8] sm:$0xff] %v1492
        %1617 = vst [vmem:[%s230 + $0x10] sm:$0xff] %v1497
        %1618 = vst [vmem:[%s230 + $0x18] sm:$0xff] %v1500
        %1619 = vst [vmem:[%s230 + $0x20] sm:$0xff] %v1505
        %1620 = vst [vmem:[%s230 + $0x28] sm:$0xff] %v1508
        %1621 = vst [vmem:[%s230 + $0x30] sm:$0xff] %v1513
        %1622 = vst [vmem:[%s230 + $0x38] sm:$0xff] %v1516
        %1623 = vst [vmem:[%s230 + $0x40] sm:$0xff] %v1521
        %1624 = vst [vmem:[%s230 + $0x48] sm:$0xff] %v1524
        %1625 = vst [vmem:[%s230 + $0x50] sm:$0xff] %v1529
        %1626 = vst [vmem:[%s230 + $0x58] sm:$0xff] %v1532
        %1627 = vst [vmem:[%s230 + $0x60] sm:$0xff] %v1537
        %1628 = vst [vmem:[%s230 + $0x68] sm:$0xff] %v1540
        %1629 = vst [vmem:[%s230 + $0x70] sm:$0xff] %v1545
        %1630 = vst [vmem:[%s230 + $0x78] sm:$0xff] %v1548
        %1631 = vst [vmem:[%s230 + $0x80] sm:$0xff] %v1553
        %1632 = vst [vmem:[%s230 + $0x88] sm:$0xff] %v1556
        %1633 = vst [vmem:[%s230 + $0x90] sm:$0xff] %v1561
        %1634 = vst [vmem:[%s230 + $0x98] sm:$0xff] %v1564
        %1635 = vst [vmem:[%s230 + $0xa0] sm:$0xff] %v1569
        %1636 = vst [vmem:[%s230 + $0xa8] sm:$0xff] %v1572
        %1637 = vst [vmem:[%s230 + $0xb0] sm:$0xff] %v1577
        %1638 = vst [vmem:[%s230 + $0xb8] sm:$0xff] %v1580
        %1639 = vst [vmem:[%s230 + $0xc0] sm:$0xff] %v1585
        %1640 = vst [vmem:[%s230 + $0xc8] sm:$0xff] %v1588
        %1641 = vst [vmem:[%s230 + $0xd0] sm:$0xff] %v1593
        %1642 = vst [vmem:[%s230 + $0xd8] sm:$0xff] %v1596
        %1643 = vst [vmem:[%s230 + $0xe0] sm:$0xff] %v1601
        %1644 = vst [vmem:[%s230 + $0xe8] sm:$0xff] %v1604
        %1645 = vst [vmem:[%s230 + $0xf0] sm:$0xff] %v1609
        %1646 = vst [vmem:[%s230 + $0xf8] sm:$0xff] %v1612
      $region44: #{conad_forward.8} parent=35 // pred_fallthru
        _
      %s1647 = smul.u32 32, %s19
      %p1648 = scmp.lt.s32.totalorder %s1647, 63
      %s1649 = scalar_select %p1648, %s1647, 63
      %s1650 = smul.addr %s1649, 8
      %s1651 = scalar_lea.vmem %s4, %s1650
      // Predicated region
      $region45: #{conad_forward.8} parent=35 // pred_check
        %p1652 = pneg %p136
      $region46: #{conad_forward.8} parent=35 // pred_check_branch
        %1654 = sbr.rel (%p1652) target = $region48
      $region47: #{conad_forward.8} parent=35 // pred_region
        %s1655 = smul.u32 32, %s19
      $region48: #{conad_forward.8} parent=35 // pred_fallthru
        _
    $region36: #{conad_forward.8} parent=5 // pred_fallthru
      _
    %p1656 = scmp.le.s32.totalorder 2, %s10
    // Predicated region
    $region49: #{conad_forward.8} parent=5 // pred_check
      %p1657 = pneg %p1656
    $region50: #{conad_forward.8} parent=5 // pred_check_branch
      %1659 = sbr.rel (%p1657) target = $region52
    $region51: #{conad_forward.8} parent=5 // pred_region
      %s1660 = ssub.s32 %s10, 2
      // Predicated region
      $region53: #{conad_forward.8} parent=51 // pred_check
        %p1661 = pneg %p142
      $region54: #{conad_forward.8} parent=51 // pred_check_branch
        %1663 = sbr.rel (%p1661) target = $region56
      $region55: #{conad_forward.8} parent=51 // pred_region
        %s1664 = smul.u32 32, %s21
        %p1665 = scmp.lt.s32.totalorder %s1664, 63
        %s1666 = scalar_select %p1665, %s1664, 63
        %s1667 = smul.addr %s1666, 8
        %s1668 = scalar_lea.vmem %s4, %s1667
      $region56: #{conad_forward.8} parent=51 // pred_fallthru
        _
    $region52: #{conad_forward.8} parent=5 // pred_fallthru
      _
  $region6: #{conad_forward.8} parent=0 // loop_footer
    %s14 = sadd.s32 1, %s10
  $region7: #{conad_forward.8} parent=0 // loop_footer_branch
    %9 = sbr.rel target = $region3
  $region8: #{conad_forward.8} parent=0 // loop_exit
    _

// kernel: conad_forward.7
$region0: #{conad_forward.7}
  #allocation0 [shape = 'u32[]', space=smem, size = 0x4, offset = 0x4, fixed_abs, tag = 'smem constant byte address 0x4 - core index']
  #allocation1 [shape = 'u32[144,128]{1,0:T(1,128)}', space=vmem, size = 0x12000, scoped, tag = 'internal scratch']
  #allocation2 [shape = 'f32[256,128]{1,0:T(8,128)}', space=vmem, size = 0x20000, scoped, tag = 'scratch operand']
  %s0 = inlined_call_operand.vmem [shape: bf16[512,512], index: 0, kind: input, shape index: {}]
  %s1 = inlined_call_operand.vmem [shape: bf16[512,128], index: 1, kind: input, shape index: {}]
  %s2 = inlined_call_operand.vmem [shape: bf16[128,256], index: 2, kind: input, shape index: {}]
  %s3 = inlined_call_operand.vmem [shape: f32[1,256], index: 3, kind: input, shape index: {}]
  %s4 = inlined_call_operand.vmem [shape: bf16[512,128], index: 4, kind: output, shape index: {0}]
  %s5 = inlined_call_operand.vmem [shape: bf16[512,128], index: 5, kind: output, shape index: {1}]
  %6 = xla_tuple %s4, %s5
  %s7 = sld [smem:[#allocation0]]
  $region65: #{conad_forward.7} parent=0
    _
  %s9 = ssub.s32 1, %s7
  %s10 = scalar_select 0, %s9, %s7
  loop: start=0, step=1, limit=4
  $region2: #{conad_forward.7} parent=0 // loop_pre_header
    _
  $region3: #{conad_forward.7} parent=0 // loop_header
    %s12 = sphi 0, %s16
    %p13 = scmp.ge.s32.totalorder %s12, 4
    %s19 = sphi 0, %s31
    %s20 = sphi 0, %s27
    %s21 = sphi 0, %s19
    %s22 = sphi 0, %s20
    %s23 = sphi 0, %s21
    %s24 = sphi 0, %s22
    %s36 = sphi 0, %s38
    %s39 = sphi 0, %s36
    %s40 = sphi 0, %s39
    %s56 = sphi 0, %s40
    %s60 = sphi 0, %s60
    %s62 = sphi 0, %s60
    %s63 = sphi 0, %s62
    %s77 = sphi 0, %s63
    %s81 = sphi 0, %s81
    %s83 = sphi 0, %s81
    %s84 = sphi 0, %s83
    %s98 = sphi 0, %s84
    %s102 = sphi 0, %s102
    %s104 = sphi 0, %s102
    %s105 = sphi 0, %s104
    %s119 = sphi 0, %s105
    %s125 = sphi 0, %s127
    %s128 = sphi 0, %s125
    %s129 = sphi 0, %s128
    %s145 = sphi 0, %s129
    %s151 = sphi 0, %s153
    %s154 = sphi 0, %s151
    %s155 = sphi 0, %s154
    %s171 = sphi 0, %s155
  $region4: #{conad_forward.7} parent=0 // loop_header_branch
    %15 = sbr.rel (%p13) target = $region8
  $region5: #{conad_forward.7} parent=0 // loop_body
    %s17 = ssub.s32 %s12, 1
    %s18 = ssub.s32 %s12, 2
    %s25 = sadd.s32 1, %s20
    %p26 = scmp.ge.s32.totalorder %s25, 1
    %s27 = scalar_select %p26, 0, %s25
    %s28 = sadd.s32 1, %s19
    %s29 = scalar_select %p26, %s28, %s19
    %p30 = scmp.ge.s32.totalorder %s29, 2
    %s31 = scalar_select %p30, 0, %s29
    %s32 = ssub.s32 %s19, %s31
    %s33 = ssub.s32 %s20, %s27
    %s34 = sor.u32 %s32, %s33
    %p35 = scmp.eq.s32.totalorder %s34, 0
    %s37 = sadd.s32 %s36, 1
    %s38 = scalar_select %p35, %s36, %s37
    %p41 = pneg %p35
    %p42 = scmp.eq.s32.totalorder %s12, 1
    %p43 = por %p41, %p42
    %p44 = scmp.ne.s32.totalorder %s36, %s39
    %p45 = scmp.eq.s32.totalorder %s12, 0
    %p46 = por %p44, %p45
    %p47 = scmp.ne.s32.totalorder %s36, %s39
    %p48 = scmp.eq.s32.totalorder %s17, 1
    %p49 = por %p47, %p48
    %p50 = scmp.ne.s32.totalorder %s39, %s40
    %p51 = scmp.eq.s32.totalorder %s17, 0
    %p52 = por %p50, %p51
    %p53 = scmp.ne.s32.totalorder %s39, %s40
    %p54 = scmp.eq.s32.totalorder %s18, 1
    %p55 = por %p53, %p54
    %p57 = scmp.ne.s32.totalorder %s40, %s56
    %p58 = scmp.eq.s32.totalorder %s18, 0
    %p59 = por %p57, %p58
    %s61 = sadd.s32 %s60, 1
    %p64 = scmp.eq.s32.totalorder %s12, 1
    %p65 = scmp.ne.s32.totalorder %s60, %s62
    %p66 = scmp.eq.s32.totalorder %s12, 0
    %p67 = por %p65, %p66
    %p68 = scmp.ne.s32.totalorder %s60, %s62
    %p69 = scmp.eq.s32.totalorder %s17, 1
    %p70 = por %p68, %p69
    %p71 = scmp.ne.s32.totalorder %s62, %s63
    %p72 = scmp.eq.s32.totalorder %s17, 0
    %p73 = por %p71, %p72
    %p74 = scmp.ne.s32.totalorder %s62, %s63
    %p75 = scmp.eq.s32.totalorder %s18, 1
    %p76 = por %p74, %p75
    %p78 = scmp.ne.s32.totalorder %s63, %s77
    %p79 = scmp.eq.s32.totalorder %s18, 0
    %p80 = por %p78, %p79
    %s82 = sadd.s32 %s81, 1
    %p85 = scmp.eq.s32.totalorder %s12, 1
    %p86 = scmp.ne.s32.totalorder %s81, %s83
    %p87 = scmp.eq.s32.totalorder %s12, 0
    %p88 = por %p86, %p87
    %p89 = scmp.ne.s32.totalorder %s81, %s83
    %p90 = scmp.eq.s32.totalorder %s17, 1
    %p91 = por %p89, %p90
    %p92 = scmp.ne.s32.totalorder %s83, %s84
    %p93 = scmp.eq.s32.totalorder %s17, 0
    %p94 = por %p92, %p93
    %p95 = scmp.ne.s32.totalorder %s83, %s84
    %p96 = scmp.eq.s32.totalorder %s18, 1
    %p97 = por %p95, %p96
    %p99 = scmp.ne.s32.totalorder %s84, %s98
    %p100 = scmp.eq.s32.totalorder %s18, 0
    %p101 = por %p99, %p100
    %s103 = sadd.s32 %s102, 1
    %p106 = scmp.eq.s32.totalorder %s12, 1
    %p107 = scmp.ne.s32.totalorder %s102, %s104
    %p108 = scmp.eq.s32.totalorder %s12, 0
    %p109 = por %p107, %p108
    %p110 = scmp.ne.s32.totalorder %s102, %s104
    %p111 = scmp.eq.s32.totalorder %s17, 1
    %p112 = por %p110, %p111
    %p113 = scmp.ne.s32.totalorder %s104, %s105
    %p114 = scmp.eq.s32.totalorder %s17, 0
    %p115 = por %p113, %p114
    %p116 = scmp.ne.s32.totalorder %s104, %s105
    %p117 = scmp.eq.s32.totalorder %s18, 1
    %p118 = por %p116, %p117
    %p120 = scmp.ne.s32.totalorder %s105, %s119
    %p121 = scmp.eq.s32.totalorder %s18, 0
    %p122 = por %p120, %p121
    %s123 = ssub.s32 %s19, %s31
    %p124 = scmp.eq.s32.totalorder %s123, 0
    %s126 = sadd.s32 %s125, 1
    %s127 = scalar_select %p124, %s125, %s126
    %p130 = pneg %p124
    %p131 = scmp.eq.s32.totalorder %s12, 1
    %p132 = por %p130, %p131
    %p133 = scmp.ne.s32.totalorder %s125, %s128
    %p134 = scmp.eq.s32.totalorder %s12, 0
    %p135 = por %p133, %p134
    %p136 = scmp.ne.s32.totalorder %s125, %s128
    %p137 = scmp.eq.s32.totalorder %s17, 1
    %p138 = por %p136, %p137
    %p139 = scmp.ne.s32.totalorder %s128, %s129
    %p140 = scmp.eq.s32.totalorder %s17, 0
    %p141 = por %p139, %p140
    %p142 = scmp.ne.s32.totalorder %s128, %s129
    %p143 = scmp.eq.s32.totalorder %s18, 1
    %p144 = por %p142, %p143
    %p146 = scmp.ne.s32.totalorder %s129, %s145
    %p147 = scmp.eq.s32.totalorder %s18, 0
    %p148 = por %p146, %p147
    %s149 = ssub.s32 %s19, %s31
    %p150 = scmp.eq.s32.totalorder %s149, 0
    %s152 = sadd.s32 %s151, 1
    %s153 = scalar_select %p150, %s151, %s152
    %p156 = pneg %p150
    %p157 = scmp.eq.s32.totalorder %s12, 1
    %p158 = por %p156, %p157
    %p159 = scmp.ne.s32.totalorder %s151, %s154
    %p160 = scmp.eq.s32.totalorder %s12, 0
    %p161 = por %p159, %p160
    %p162 = scmp.ne.s32.totalorder %s151, %s154
    %p163 = scmp.eq.s32.totalorder %s17, 1
    %p164 = por %p162, %p163
    %p165 = scmp.ne.s32.totalorder %s154, %s155
    %p166 = scmp.eq.s32.totalorder %s17, 0
    %p167 = por %p165, %p166
    %p168 = scmp.ne.s32.totalorder %s154, %s155
    %p169 = scmp.eq.s32.totalorder %s18, 1
    %p170 = por %p168, %p169
    %p172 = scmp.ne.s32.totalorder %s155, %s171
    %p173 = scmp.eq.s32.totalorder %s18, 0
    %p174 = por %p172, %p173
    %p175 = scmp.le.s32.totalorder 1, %s12
    %p176 = scmp.lt.s32.totalorder %s12, 3
    %p177 = pnand %p175, %p176
    %p178 = pneg %p177
    // Predicated region
    $region9: #{conad_forward.7} parent=5 // pred_check
      _
    $region10: #{conad_forward.7} parent=5 // pred_check_branch
      %180 = sbr.rel (%p177) target = $region12
    $region11: #{conad_forward.7} parent=5 // pred_region
      %s181 = ssub.s32 %s12, 1
      // Predicated region
      $region13: #{conad_forward.7} parent=11 // pred_check
        %p182 = pneg %p73
      $region14: #{conad_forward.7} parent=11 // pred_check_branch
        %184 = sbr.rel (%p182) target = $region16
      $region15: #{conad_forward.7} parent=11 // pred_region
        _
      $region16: #{conad_forward.7} parent=11 // pred_fallthru
        _
      // Predicated region
      $region17: #{conad_forward.7} parent=11 // pred_check
        %p185 = pneg %p94
      $region18: #{conad_forward.7} parent=11 // pred_check_branch
        %187 = sbr.rel (%p185) target = $region20
      $region19: #{conad_forward.7} parent=11 // pred_region
        _
      $region20: #{conad_forward.7} parent=11 // pred_fallthru
        _
      // Predicated region
      $region21: #{conad_forward.7} parent=11 // pred_check
        %p188 = pneg %p115
      $region22: #{conad_forward.7} parent=11 // pred_check_branch
        %190 = sbr.rel (%p188) target = $region24
      $region23: #{conad_forward.7} parent=11 // pred_region
        _
      $region24: #{conad_forward.7} parent=11 // pred_fallthru
        _
    $region12: #{conad_forward.7} parent=5 // pred_fallthru
      _
    %p191 = scmp.lt.s32.totalorder %s12, 2
    // Predicated region
    $region25: #{conad_forward.7} parent=5 // pred_check
      %p192 = pneg %p191
    $region26: #{conad_forward.7} parent=5 // pred_check_branch
      %194 = sbr.rel (%p192) target = $region28
    $region27: #{conad_forward.7} parent=5 // pred_region
      // Predicated region
      $region29: #{conad_forward.7} parent=27 // pred_check
        %p195 = pneg %p46
      $region30: #{conad_forward.7} parent=27 // pred_check_branch
        %197 = sbr.rel (%p195) target = $region32
      $region31: #{conad_forward.7} parent=27 // pred_region
        %s198 = smul.u32 32, %s19
        %s199 = smul.u32 4, %s20
        %p200 = scmp.lt.s32.totalorder %s198, 63
        %s201 = scalar_select %p200, %s198, 63
        %p202 = scmp.lt.s32.totalorder %s199, 3
        %s203 = scalar_select %p202, %s199, 3
        %s204 = smul.addr %s201, 4
        %s205 = sadd.s32 %s203, %s204
        %s206 = smul.addr %s205, 4
        %s207 = scalar_lea.vmem %s0, %s206
        %s208 = smul.u32 32, %s19
        %s209 = smul.u32 4, %s20
      $region32: #{conad_forward.7} parent=27 // pred_fallthru
        _
    $region28: #{conad_forward.7} parent=5 // pred_fallthru
      _
    %p210 = scmp.le.s32.totalorder 1, %s12
    %p211 = scmp.lt.s32.totalorder %s12, 3
    %p212 = pnand %p210, %p211
    %p213 = pneg %p212
    // Predicated region
    $region33: #{conad_forward.7} parent=5 // pred_check
      _
    $region34: #{conad_forward.7} parent=5 // pred_check_branch
      %215 = sbr.rel (%p212) target = $region36
    $region35: #{conad_forward.7} parent=5 // pred_region
      %s216 = ssub.s32 %s12, 1
      %s217 = smul.u32 32, %s21
      %s218 = smul.u32 4, %s22
      %p219 = scmp.lt.s32.totalorder %s217, 63
      %s220 = scalar_select %p219, %s217, 63
      %p221 = scmp.lt.s32.totalorder %s218, 3
      %s222 = scalar_select %p221, %s218, 3
      %s223 = smul.addr %s220, 4
      %s224 = sadd.s32 %s222, %s223
      %s225 = smul.addr %s224, 4
      %s226 = scalar_lea.vmem %s0, %s225
      %p227 = pneg %p52
      %p228 = pneg %p49
      %p229 = pneg %p73
      %p230 = pneg %p70
      %p231 = pneg %p94
      %p232 = pneg %p91
      %p233 = pneg %p115
      %p234 = pneg %p112
      %p235 = pneg %p141
      %p236 = pneg %p138
      %s237 = smul.u32 32, %s21
      %p238 = scmp.lt.s32.totalorder %s237, 63
      %s239 = scalar_select %p238, %s237, 63
      %s240 = smul.addr %s239, 4
      %s241 = scalar_lea.vmem %s4, %s240
      %p242 = pneg %p167
      %p243 = pneg %p164
      %s244 = smul.u32 32, %s21
      %p245 = scmp.lt.s32.totalorder %s244, 63
      %s246 = scalar_select %p245, %s244, 63
      %s247 = smul.addr %s246, 4
      %s248 = scalar_lea.vmem %s5, %s247
      %s249 = smul.u32 32, %s21
      %s250 = smul.u32 4, %s22
      %p251 = scmp.lt.s32.totalorder %s249, 63
      %s252 = scalar_select %p251, %s249, 63
      %p253 = scmp.lt.s32.totalorder %s250, 3
      %s254 = scalar_select %p253, %s250, 3
      %s255 = smul.addr %s252, 4
      %s256 = sadd.s32 %s254, %s255
      %s257 = smul.addr %s256, 4
      %s258 = scalar_lea.vmem %s0, %s257
      %s259 = smul.u32 32, %s21
      %s260 = smul.u32 4, %s22
      %s261 = smul.u32 32, %s21
      %p262 = scmp.lt.s32.totalorder %s261, 63
      %s263 = scalar_select %p262, %s261, 63
      %s264 = smul.addr %s263, 4
      %s265 = scalar_lea.vmem %s4, %s264
      %s266 = smul.u32 32, %s21
      %s267 = smul.u32 32, %s21
      %p268 = scmp.lt.s32.totalorder %s267, 63
      %s269 = scalar_select %p268, %s267, 63
      %s270 = smul.addr %s269, 4
      %s271 = scalar_lea.vmem %s5, %s270
      %s272 = smul.u32 32, %s21
      %p274 = scmp.eq.s32.totalorder %s22, 0
      // Predicated region
      $region37: #{conad_forward.7} parent=35 // pred_check
        %p275 = pneg %p274
      $region38: #{conad_forward.7} parent=35 // pred_check_branch
        %277 = sbr.rel (%p275) target = $region40
      $region39: #{conad_forward.7} parent=35 // pred_region
        %278 = vst [vmem:[#allocation2] sm:$0xff] 0.0
        %279 = vst [vmem:[#allocation2 + $0x8] sm:$0xff] 0.0
        %280 = vst [vmem:[#allocation2 + $0x10] sm:$0xff] 0.0
        %281 = vst [vmem:[#allocation2 + $0x18] sm:$0xff] 0.0
        %282 = vst [vmem:[#allocation2 + $0x20] sm:$0xff] 0.0
        %283 = vst [vmem:[#allocation2 + $0x28] sm:$0xff] 0.0
        %284 = vst [vmem:[#allocation2 + $0x30] sm:$0xff] 0.0
        %285 = vst [vmem:[#allocation2 + $0x38] sm:$0xff] 0.0
        %286 = vst [vmem:[#allocation2 + $0x40] sm:$0xff] 0.0
        %287 = vst [vmem:[#allocation2 + $0x48] sm:$0xff] 0.0
        %288 = vst [vmem:[#allocation2 + $0x50] sm:$0xff] 0.0
        %289 = vst [vmem:[#allocation2 + $0x58] sm:$0xff] 0.0
        %290 = vst [vmem:[#allocation2 + $0x60] sm:$0xff] 0.0
        %291 = vst [vmem:[#allocation2 + $0x68] sm:$0xff] 0.0
        %292 = vst [vmem:[#allocation2 + $0x70] sm:$0xff] 0.0
        %293 = vst [vmem:[#allocation2 + $0x78] sm:$0xff] 0.0
        %294 = vst [vmem:[#allocation2 + $0x80] sm:$0xff] 0.0
        %295 = vst [vmem:[#allocation2 + $0x88] sm:$0xff] 0.0
        %296 = vst [vmem:[#allocation2 + $0x90] sm:$0xff] 0.0
        %297 = vst [vmem:[#allocation2 + $0x98] sm:$0xff] 0.0
        %298 = vst [vmem:[#allocation2 + $0xa0] sm:$0xff] 0.0
        %299 = vst [vmem:[#allocation2 + $0xa8] sm:$0xff] 0.0
        %300 = vst [vmem:[#allocation2 + $0xb0] sm:$0xff] 0.0
        %301 = vst [vmem:[#allocation2 + $0xb8] sm:$0xff] 0.0
        %302 = vst [vmem:[#allocation2 + $0xc0] sm:$0xff] 0.0
        %303 = vst [vmem:[#allocation2 + $0xc8] sm:$0xff] 0.0
        %304 = vst [vmem:[#allocation2 + $0xd0] sm:$0xff] 0.0
        %305 = vst [vmem:[#allocation2 + $0xd8] sm:$0xff] 0.0
        %306 = vst [vmem:[#allocation2 + $0xe0] sm:$0xff] 0.0
        %307 = vst [vmem:[#allocation2 + $0xe8] sm:$0xff] 0.0
        %308 = vst [vmem:[#allocation2 + $0xf0] sm:$0xff] 0.0
        %309 = vst [vmem:[#allocation2 + $0xf8] sm:$0xff] 0.0
      $region40: #{conad_forward.7} parent=35 // pred_fallthru
        _
      %s310 = smul.u32 %s22, 512
      %v311 = vld [vmem:[#allocation2] sm:$0xff]
      %v312 = vld [vmem:[#allocation2 + $0x8] sm:$0xff]
      %v313 = vld [vmem:[#allocation2 + $0x10] sm:$0xff]
      %v314 = vld [vmem:[#allocation2 + $0x18] sm:$0xff]
      %v315 = vld [vmem:[#allocation2 + $0x20] sm:$0xff]
      %v316 = vld [vmem:[#allocation2 + $0x28] sm:$0xff]
      %v317 = vld [vmem:[#allocation2 + $0x30] sm:$0xff]
      %v318 = vld [vmem:[#allocation2 + $0x38] sm:$0xff]
      %v319 = vld [vmem:[#allocation2 + $0x40] sm:$0xff]
      %v320 = vld [vmem:[#allocation2 + $0x48] sm:$0xff]
      %v321 = vld [vmem:[#allocation2 + $0x50] sm:$0xff]
      %v322 = vld [vmem:[#allocation2 + $0x58] sm:$0xff]
      %v323 = vld [vmem:[#allocation2 + $0x60] sm:$0xff]
      %v324 = vld [vmem:[#allocation2 + $0x68] sm:$0xff]
      %v325 = vld [vmem:[#allocation2 + $0x70] sm:$0xff]
      %v326 = vld [vmem:[#allocation2 + $0x78] sm:$0xff]
      %v327 = vld [vmem:[#allocation2 + $0x80] sm:$0xff]
      %v328 = vld [vmem:[#allocation2 + $0x88] sm:$0xff]
      %v329 = vld [vmem:[#allocation2 + $0x90] sm:$0xff]
      %v330 = vld [vmem:[#allocation2 + $0x98] sm:$0xff]
      %v331 = vld [vmem:[#allocation2 + $0xa0] sm:$0xff]
      %v332 = vld [vmem:[#allocation2 + $0xa8] sm:$0xff]
      %v333 = vld [vmem:[#allocation2 + $0xb0] sm:$0xff]
      %v334 = vld [vmem:[#allocation2 + $0xb8] sm:$0xff]
      %v335 = vld [vmem:[#allocation2 + $0xc0] sm:$0xff]
      %v336 = vld [vmem:[#allocation2 + $0xc8] sm:$0xff]
      %v337 = vld [vmem:[#allocation2 + $0xd0] sm:$0xff]
      %v338 = vld [vmem:[#allocation2 + $0xd8] sm:$0xff]
      %v339 = vld [vmem:[#allocation2 + $0xe0] sm:$0xff]
      %v340 = vld [vmem:[#allocation2 + $0xe8] sm:$0xff]
      %v341 = vld [vmem:[#allocation2 + $0xf0] sm:$0xff]
      %v342 = vld [vmem:[#allocation2 + $0xf8] sm:$0xff]
      %v343 = vld [vmem:[%s258] sm:$0xff]
      %v344 = vld [vmem:[%s258 + $0x8] sm:$0xff]
      %v345 = vld [vmem:[%s258 + $0x10] sm:$0xff]
      %v346 = vld [vmem:[%s258 + $0x18] sm:$0xff]
      %v347 = vld [vmem:[%s258 + $0x20] sm:$0xff]
      %v348 = vld [vmem:[%s258 + $0x28] sm:$0xff]
      %v349 = vld [vmem:[%s258 + $0x30] sm:$0xff]
      %v350 = vld [vmem:[%s258 + $0x38] sm:$0xff]
      %v351 = vld [vmem:[%s258 + $0x40] sm:$0xff]
      %v352 = vld [vmem:[%s258 + $0x48] sm:$0xff]
      %v353 = vld [vmem:[%s258 + $0x50] sm:$0xff]
      %v354 = vld [vmem:[%s258 + $0x58] sm:$0xff]
      %v355 = vld [vmem:[%s258 + $0x60] sm:$0xff]
      %v356 = vld [vmem:[%s258 + $0x68] sm:$0xff]
      %v357 = vld [vmem:[%s258 + $0x70] sm:$0xff]
      %v358 = vld [vmem:[%s258 + $0x78] sm:$0xff]
      %v359 = vld [vmem:[%s258 + $0x80] sm:$0xff]
      %v360 = vld [vmem:[%s258 + $0x88] sm:$0xff]
      %v361 = vld [vmem:[%s258 + $0x90] sm:$0xff]
      %v362 = vld [vmem:[%s258 + $0x98] sm:$0xff]
      %v363 = vld [vmem:[%s258 + $0xa0] sm:$0xff]
      %v364 = vld [vmem:[%s258 + $0xa8] sm:$0xff]
      %v365 = vld [vmem:[%s258 + $0xb0] sm:$0xff]
      %v366 = vld [vmem:[%s258 + $0xb8] sm:$0xff]
      %v367 = vld [vmem:[%s258 + $0xc0] sm:$0xff]
      %v368 = vld [vmem:[%s258 + $0xc8] sm:$0xff]
      %v369 = vld [vmem:[%s258 + $0xd0] sm:$0xff]
      %v370 = vld [vmem:[%s258 + $0xd8] sm:$0xff]
      %v371 = vld [vmem:[%s258 + $0xe0] sm:$0xff]
      %v372 = vld [vmem:[%s258 + $0xe8] sm:$0xff]
      %v373 = vld [vmem:[%s258 + $0xf0] sm:$0xff]
      %v374 = vld [vmem:[%s258 + $0xf8] sm:$0xff]
      %v375 = vld [vmem:[%s258 + $0x100] sm:$0xff]
      %v376 = vld [vmem:[%s258 + $0x108] sm:$0xff]
      %v377 = vld [vmem:[%s258 + $0x110] sm:$0xff]
      %v378 = vld [vmem:[%s258 + $0x118] sm:$0xff]
      %v379 = vld [vmem:[%s258 + $0x120] sm:$0xff]
      %v380 = vld [vmem:[%s258 + $0x128] sm:$0xff]
      %v381 = vld [vmem:[%s258 + $0x130] sm:$0xff]
      %v382 = vld [vmem:[%s258 + $0x138] sm:$0xff]
      %v383 = vld [vmem:[%s258 + $0x140] sm:$0xff]
      %v384 = vld [vmem:[%s258 + $0x148] sm:$0xff]
      %v385 = vld [vmem:[%s258 + $0x150] sm:$0xff]
      %v386 = vld [vmem:[%s258 + $0x158] sm:$0xff]
      %v387 = vld [vmem:[%s258 + $0x160] sm:$0xff]
      %v388 = vld [vmem:[%s258 + $0x168] sm:$0xff]
      %v389 = vld [vmem:[%s258 + $0x170] sm:$0xff]
      %v390 = vld [vmem:[%s258 + $0x178] sm:$0xff]
      %v391 = vld [vmem:[%s258 + $0x180] sm:$0xff]
      %v392 = vld [vmem:[%s258 + $0x188] sm:$0xff]
      %v393 = vld [vmem:[%s258 + $0x190] sm:$0xff]
      %v394 = vld [vmem:[%s258 + $0x198] sm:$0xff]
      %v395 = vld [vmem:[%s258 + $0x1a0] sm:$0xff]
      %v396 = vld [vmem:[%s258 + $0x1a8] sm:$0xff]
      %v397 = vld [vmem:[%s258 + $0x1b0] sm:$0xff]
      %v398 = vld [vmem:[%s258 + $0x1b8] sm:$0xff]
      %v399 = vld [vmem:[%s258 + $0x1c0] sm:$0xff]
      %v400 = vld [vmem:[%s258 + $0x1c8] sm:$0xff]
      %v401 = vld [vmem:[%s258 + $0x1d0] sm:$0xff]
      %v402 = vld [vmem:[%s258 + $0x1d8] sm:$0xff]
      %v403 = vld [vmem:[%s258 + $0x1e0] sm:$0xff]
      %v404 = vld [vmem:[%s258 + $0x1e8] sm:$0xff]
      %v405 = vld [vmem:[%s258 + $0x1f0] sm:$0xff]
      %v406 = vld [vmem:[%s258 + $0x1f8] sm:$0xff]
      %s407 = sshra.s32 %s310, 3
      %s408 = sand.u32 %s310, 7
      %s409 = smul.addr %s407, 4
      %s410 = scalar_lea.vmem %s1, %s409
      %v411 = vld [vmem:[%s410] sm:$0xf]
      %v412 = vld [vmem:[%s410 + $0x4] sm:$0xf]
      %v413 = vld [vmem:[%s410 + $0x8] sm:$0xf]
      %v414 = vld [vmem:[%s410 + $0xc] sm:$0xf]
      %v415 = vld [vmem:[%s410 + $0x10] sm:$0xf]
      %v416 = vld [vmem:[%s410 + $0x14] sm:$0xf]
      %v417 = vld [vmem:[%s410 + $0x18] sm:$0xf]
      %v418 = vld [vmem:[%s410 + $0x1c] sm:$0xf]
      %v419 = vld [vmem:[%s410 + $0x20] sm:$0xf]
      %v420 = vld [vmem:[%s410 + $0x24] sm:$0xf]
      %v421 = vld [vmem:[%s410 + $0x28] sm:$0xf]
      %v422 = vld [vmem:[%s410 + $0x2c] sm:$0xf]
      %v423 = vld [vmem:[%s410 + $0x30] sm:$0xf]
      %v424 = vld [vmem:[%s410 + $0x34] sm:$0xf]
      %v425 = vld [vmem:[%s410 + $0x38] sm:$0xf]
      %v426 = vld [vmem:[%s410 + $0x3c] sm:$0xf]
      %v427 = vld [vmem:[%s410 + $0x40] sm:$0xf]
      %v428 = vld [vmem:[%s410 + $0x44] sm:$0xf]
      %v429 = vld [vmem:[%s410 + $0x48] sm:$0xf]
      %v430 = vld [vmem:[%s410 + $0x4c] sm:$0xf]
      %v431 = vld [vmem:[%s410 + $0x50] sm:$0xf]
      %v432 = vld [vmem:[%s410 + $0x54] sm:$0xf]
      %v433 = vld [vmem:[%s410 + $0x58] sm:$0xf]
      %v434 = vld [vmem:[%s410 + $0x5c] sm:$0xf]
      %v435 = vld [vmem:[%s410 + $0x60] sm:$0xf]
      %v436 = vld [vmem:[%s410 + $0x64] sm:$0xf]
      %v437 = vld [vmem:[%s410 + $0x68] sm:$0xf]
      %v438 = vld [vmem:[%s410 + $0x6c] sm:$0xf]
      %v439 = vld [vmem:[%s410 + $0x70] sm:$0xf]
      %v440 = vld [vmem:[%s410 + $0x74] sm:$0xf]
      %v441 = vld [vmem:[%s410 + $0x78] sm:$0xf]
      %v442 = vld [vmem:[%s410 + $0x7c] sm:$0xf]
      %v443 = vld [vmem:[%s410 + $0x80] sm:$0xf]
      %v444 = vld [vmem:[%s410 + $0x84] sm:$0xf]
      %v445 = vld [vmem:[%s410 + $0x88] sm:$0xf]
      %v446 = vld [vmem:[%s410 + $0x8c] sm:$0xf]
      %v447 = vld [vmem:[%s410 + $0x90] sm:$0xf]
      %v448 = vld [vmem:[%s410 + $0x94] sm:$0xf]
      %v449 = vld [vmem:[%s410 + $0x98] sm:$0xf]
      %v450 = vld [vmem:[%s410 + $0x9c] sm:$0xf]
      %v451 = vld [vmem:[%s410 + $0xa0] sm:$0xf]
      %v452 = vld [vmem:[%s410 + $0xa4] sm:$0xf]
      %v453 = vld [vmem:[%s410 + $0xa8] sm:$0xf]
      %v454 = vld [vmem:[%s410 + $0xac] sm:$0xf]
      %v455 = vld [vmem:[%s410 + $0xb0] sm:$0xf]
      %v456 = vld [vmem:[%s410 + $0xb4] sm:$0xf]
      %v457 = vld [vmem:[%s410 + $0xb8] sm:$0xf]
      %v458 = vld [vmem:[%s410 + $0xbc] sm:$0xf]
      %v459 = vld [vmem:[%s410 + $0xc0] sm:$0xf]
      %v460 = vld [vmem:[%s410 + $0xc4] sm:$0xf]
      %v461 = vld [vmem:[%s410 + $0xc8] sm:$0xf]
      %v462 = vld [vmem:[%s410 + $0xcc] sm:$0xf]
      %v463 = vld [vmem:[%s410 + $0xd0] sm:$0xf]
      %v464 = vld [vmem:[%s410 + $0xd4] sm:$0xf]
      %v465 = vld [vmem:[%s410 + $0xd8] sm:$0xf]
      %v466 = vld [vmem:[%s410 + $0xdc] sm:$0xf]
      %v467 = vld [vmem:[%s410 + $0xe0] sm:$0xf]
      %v468 = vld [vmem:[%s410 + $0xe4] sm:$0xf]
      %v469 = vld [vmem:[%s410 + $0xe8] sm:$0xf]
      %v470 = vld [vmem:[%s410 + $0xec] sm:$0xf]
      %v471 = vld [vmem:[%s410 + $0xf0] sm:$0xf]
      %v472 = vld [vmem:[%s410 + $0xf4] sm:$0xf]
      %v473 = vld [vmem:[%s410 + $0xf8] sm:$0xf]
      %v474 = vld [vmem:[%s410 + $0xfc] sm:$0xf]
      %v539 = vunpack.c.l.b16 %v343
      %v540 = vunpack.c.h.b16 %v343
      %v541 = vunpack.c.l.b16 %v344
      %v542 = vunpack.c.h.b16 %v344
      %v543 = vunpack.c.l.b16 %v345
      %v544 = vunpack.c.h.b16 %v345
      %v545 = vunpack.c.l.b16 %v346
      %v546 = vunpack.c.h.b16 %v346
      %v547 = vunpack.c.l.b16 %v347
      %v548 = vunpack.c.h.b16 %v347
      %v549 = vunpack.c.l.b16 %v348
      %v550 = vunpack.c.h.b16 %v348
      %v551 = vunpack.c.l.b16 %v349
      %v552 = vunpack.c.h.b16 %v349
      %v553 = vunpack.c.l.b16 %v350
      %v554 = vunpack.c.h.b16 %v350
      %v555 = vunpack.c.l.b16 %v351
      %v556 = vunpack.c.h.b16 %v351
      %v557 = vunpack.c.l.b16 %v352
      %v558 = vunpack.c.h.b16 %v352
      %v559 = vunpack.c.l.b16 %v353
      %v560 = vunpack.c.h.b16 %v353
      %v561 = vunpack.c.l.b16 %v354
      %v562 = vunpack.c.h.b16 %v354
      %v563 = vunpack.c.l.b16 %v355
      %v564 = vunpack.c.h.b16 %v355
      %v565 = vunpack.c.l.b16 %v356
      %v566 = vunpack.c.h.b16 %v356
      %v567 = vunpack.c.l.b16 %v357
      %v568 = vunpack.c.h.b16 %v357
      %v569 = vunpack.c.l.b16 %v358
      %v570 = vunpack.c.h.b16 %v358
      %v571 = vunpack.c.l.b16 %v359
      %v572 = vunpack.c.h.b16 %v359
      %v573 = vunpack.c.l.b16 %v360
      %v574 = vunpack.c.h.b16 %v360
      %v575 = vunpack.c.l.b16 %v361
      %v576 = vunpack.c.h.b16 %v361
      %v577 = vunpack.c.l.b16 %v362
      %v578 = vunpack.c.h.b16 %v362
      %v579 = vunpack.c.l.b16 %v363
      %v580 = vunpack.c.h.b16 %v363
      %v581 = vunpack.c.l.b16 %v364
      %v582 = vunpack.c.h.b16 %v364
      %v583 = vunpack.c.l.b16 %v365
      %v584 = vunpack.c.h.b16 %v365
      %v585 = vunpack.c.l.b16 %v366
      %v586 = vunpack.c.h.b16 %v366
      %v587 = vunpack.c.l.b16 %v367
      %v588 = vunpack.c.h.b16 %v367
      %v589 = vunpack.c.l.b16 %v368
      %v590 = vunpack.c.h.b16 %v368
      %v591 = vunpack.c.l.b16 %v369
      %v592 = vunpack.c.h.b16 %v369
      %v593 = vunpack.c.l.b16 %v370
      %v594 = vunpack.c.h.b16 %v370
      %v595 = vunpack.c.l.b16 %v371
      %v596 = vunpack.c.h.b16 %v371
      %v597 = vunpack.c.l.b16 %v372
      %v598 = vunpack.c.h.b16 %v372
      %v599 = vunpack.c.l.b16 %v373
      %v600 = vunpack.c.h.b16 %v373
      %v601 = vunpack.c.l.b16 %v374
      %v602 = vunpack.c.h.b16 %v374
      %v603 = vunpack.c.l.b16 %v375
      %v604 = vunpack.c.h.b16 %v375
      %v605 = vunpack.c.l.b16 %v376
      %v606 = vunpack.c.h.b16 %v376
      %v607 = vunpack.c.l.b16 %v377
      %v608 = vunpack.c.h.b16 %v377
      %v609 = vunpack.c.l.b16 %v378
      %v610 = vunpack.c.h.b16 %v378
      %v611 = vunpack.c.l.b16 %v379
      %v612 = vunpack.c.h.b16 %v379
      %v613 = vunpack.c.l.b16 %v380
      %v614 = vunpack.c.h.b16 %v380
      %v615 = vunpack.c.l.b16 %v381
      %v616 = vunpack.c.h.b16 %v381
      %v617 = vunpack.c.l.b16 %v382
      %v618 = vunpack.c.h.b16 %v382
      %v619 = vunpack.c.l.b16 %v383
      %v620 = vunpack.c.h.b16 %v383
      %v621 = vunpack.c.l.b16 %v384
      %v622 = vunpack.c.h.b16 %v384
      %v623 = vunpack.c.l.b16 %v385
      %v624 = vunpack.c.h.b16 %v385
      %v625 = vunpack.c.l.b16 %v386
      %v626 = vunpack.c.h.b16 %v386
      %v627 = vunpack.c.l.b16 %v387
      %v628 = vunpack.c.h.b16 %v387
      %v629 = vunpack.c.l.b16 %v388
      %v630 = vunpack.c.h.b16 %v388
      %v631 = vunpack.c.l.b16 %v389
      %v632 = vunpack.c.h.b16 %v389
      %v633 = vunpack.c.l.b16 %v390
      %v634 = vunpack.c.h.b16 %v390
      %v635 = vunpack.c.l.b16 %v391
      %v636 = vunpack.c.h.b16 %v391
      %v637 = vunpack.c.l.b16 %v392
      %v638 = vunpack.c.h.b16 %v392
      %v639 = vunpack.c.l.b16 %v393
      %v640 = vunpack.c.h.b16 %v393
      %v641 = vunpack.c.l.b16 %v394
      %v642 = vunpack.c.h.b16 %v394
      %v643 = vunpack.c.l.b16 %v395
      %v644 = vunpack.c.h.b16 %v395
      %v645 = vunpack.c.l.b16 %v396
      %v646 = vunpack.c.h.b16 %v396
      %v647 = vunpack.c.l.b16 %v397
      %v648 = vunpack.c.h.b16 %v397
      %v649 = vunpack.c.l.b16 %v398
      %v650 = vunpack.c.h.b16 %v398
      %v651 = vunpack.c.l.b16 %v399
      %v652 = vunpack.c.h.b16 %v399
      %v653 = vunpack.c.l.b16 %v400
      %v654 = vunpack.c.h.b16 %v400
      %v655 = vunpack.c.l.b16 %v401
      %v656 = vunpack.c.h.b16 %v401
      %v657 = vunpack.c.l.b16 %v402
      %v658 = vunpack.c.h.b16 %v402
      %v659 = vunpack.c.l.b16 %v403
      %v660 = vunpack.c.h.b16 %v403
      %v661 = vunpack.c.l.b16 %v404
      %v662 = vunpack.c.h.b16 %v404
      %v663 = vunpack.c.l.b16 %v405
      %v664 = vunpack.c.h.b16 %v405
      %v665 = vunpack.c.l.b16 %v406
      %v666 = vunpack.c.h.b16 %v406
      %v667 = vpack.c.b16 %v543, %v539
      %v668 = vpack.c.b16 %v544, %v540
      %v669 = vpack.c.b16 %v545, %v541
      %v670 = vpack.c.b16 %v546, %v542
      %v671 = vpack.c.b16 %v551, %v547
      %v672 = vpack.c.b16 %v552, %v548
      %v673 = vpack.c.b16 %v553, %v549
      %v674 = vpack.c.b16 %v554, %v550
      %v675 = vpack.c.b16 %v559, %v555
      %v676 = vpack.c.b16 %v560, %v556
      %v677 = vpack.c.b16 %v561, %v557
      %v678 = vpack.c.b16 %v562, %v558
      %v679 = vpack.c.b16 %v567, %v563
      %v680 = vpack.c.b16 %v568, %v564
      %v681 = vpack.c.b16 %v569, %v565
      %v682 = vpack.c.b16 %v570, %v566
      %v683 = vpack.c.b16 %v575, %v571
      %v684 = vpack.c.b16 %v576, %v572
      %v685 = vpack.c.b16 %v577, %v573
      %v686 = vpack.c.b16 %v578, %v574
      %v687 = vpack.c.b16 %v583, %v579
      %v688 = vpack.c.b16 %v584, %v580
      %v689 = vpack.c.b16 %v585, %v581
      %v690 = vpack.c.b16 %v586, %v582
      %v691 = vpack.c.b16 %v591, %v587
      %v692 = vpack.c.b16 %v592, %v588
      %v693 = vpack.c.b16 %v593, %v589
      %v694 = vpack.c.b16 %v594, %v590
      %v695 = vpack.c.b16 %v599, %v595
      %v696 = vpack.c.b16 %v600, %v596
      %v697 = vpack.c.b16 %v601, %v597
      %v698 = vpack.c.b16 %v602, %v598
      %v699 = vpack.c.b16 %v607, %v603
      %v700 = vpack.c.b16 %v608, %v604
      %v701 = vpack.c.b16 %v609, %v605
      %v702 = vpack.c.b16 %v610, %v606
      %v703 = vpack.c.b16 %v615, %v611
      %v704 = vpack.c.b16 %v616, %v612
      %v705 = vpack.c.b16 %v617, %v613
      %v706 = vpack.c.b16 %v618, %v614
      %v707 = vpack.c.b16 %v623, %v619
      %v708 = vpack.c.b16 %v624, %v620
      %v709 = vpack.c.b16 %v625, %v621
      %v710 = vpack.c.b16 %v626, %v622
      %v711 = vpack.c.b16 %v631, %v627
      %v712 = vpack.c.b16 %v632, %v628
      %v713 = vpack.c.b16 %v633, %v629
      %v714 = vpack.c.b16 %v634, %v630
      %v715 = vpack.c.b16 %v639, %v635
      %v716 = vpack.c.b16 %v640, %v636
      %v717 = vpack.c.b16 %v641, %v637
      %v718 = vpack.c.b16 %v642, %v638
      %v719 = vpack.c.b16 %v647, %v643
      %v720 = vpack.c.b16 %v648, %v644
      %v721 = vpack.c.b16 %v649, %v645
      %v722 = vpack.c.b16 %v650, %v646
      %v723 = vpack.c.b16 %v655, %v651
      %v724 = vpack.c.b16 %v656, %v652
      %v725 = vpack.c.b16 %v657, %v653
      %v726 = vpack.c.b16 %v658, %v654
      %v727 = vpack.c.b16 %v663, %v659
      %v728 = vpack.c.b16 %v664, %v660
      %v729 = vpack.c.b16 %v665, %v661
      %v730 = vpack.c.b16 %v666, %v662
      %v859 = vunpack.c.l.b16 %v411
      %v860 = vunpack.c.l.b16 %v412
      %v861 = vunpack.c.l.b16 %v413
      %v862 = vunpack.c.l.b16 %v414
      %v863 = vunpack.c.l.b16 %v415
      %v864 = vunpack.c.l.b16 %v416
      %v865 = vunpack.c.l.b16 %v417
      %v866 = vunpack.c.l.b16 %v418
      %v867 = vunpack.c.l.b16 %v419
      %v868 = vunpack.c.l.b16 %v420
      %v869 = vunpack.c.l.b16 %v421
      %v870 = vunpack.c.l.b16 %v422
      %v871 = vunpack.c.l.b16 %v423
      %v872 = vunpack.c.l.b16 %v424
      %v873 = vunpack.c.l.b16 %v425
      %v874 = vunpack.c.l.b16 %v426
      %v875 = vunpack.c.l.b16 %v427
      %v876 = vunpack.c.l.b16 %v428
      %v877 = vunpack.c.l.b16 %v429
      %v878 = vunpack.c.l.b16 %v430
      %v879 = vunpack.c.l.b16 %v431
      %v880 = vunpack.c.l.b16 %v432
      %v881 = vunpack.c.l.b16 %v433
      %v882 = vunpack.c.l.b16 %v434
      %v883 = vunpack.c.l.b16 %v435
      %v884 = vunpack.c.l.b16 %v436
      %v885 = vunpack.c.l.b16 %v437
      %v886 = vunpack.c.l.b16 %v438
      %v887 = vunpack.c.l.b16 %v439
      %v888 = vunpack.c.l.b16 %v440
      %v889 = vunpack.c.l.b16 %v441
      %v890 = vunpack.c.l.b16 %v442
      %v891 = vunpack.c.l.b16 %v443
      %v892 = vunpack.c.l.b16 %v444
      %v893 = vunpack.c.l.b16 %v445
      %v894 = vunpack.c.l.b16 %v446
      %v895 = vunpack.c.l.b16 %v447
      %v896 = vunpack.c.l.b16 %v448
      %v897 = vunpack.c.l.b16 %v449
      %v898 = vunpack.c.l.b16 %v450
      %v899 = vunpack.c.l.b16 %v451
      %v900 = vunpack.c.l.b16 %v452
      %v901 = vunpack.c.l.b16 %v453
      %v902 = vunpack.c.l.b16 %v454
      %v903 = vunpack.c.l.b16 %v455
      %v904 = vunpack.c.l.b16 %v456
      %v905 = vunpack.c.l.b16 %v457
      %v906 = vunpack.c.l.b16 %v458
      %v907 = vunpack.c.l.b16 %v459
      %v908 = vunpack.c.l.b16 %v460
      %v909 = vunpack.c.l.b16 %v461
      %v910 = vunpack.c.l.b16 %v462
      %v911 = vunpack.c.l.b16 %v463
      %v912 = vunpack.c.l.b16 %v464
      %v913 = vunpack.c.l.b16 %v465
      %v914 = vunpack.c.l.b16 %v466
      %v915 = vunpack.c.l.b16 %v467
      %v916 = vunpack.c.l.b16 %v468
      %v917 = vunpack.c.l.b16 %v469
      %v918 = vunpack.c.l.b16 %v470
      %v919 = vunpack.c.l.b16 %v471
      %v920 = vunpack.c.l.b16 %v472
      %v921 = vunpack.c.l.b16 %v473
      %v922 = vunpack.c.l.b16 %v474
      %v923 = vpack.c.b16 %v860, %v859
      %v924 = vpack.c.b16 %v862, %v861
      %v925 = vpack.c.b16 %v864, %v863
      %v926 = vpack.c.b16 %v866, %v865
      %v927 = vpack.c.b16 %v868, %v867
      %v928 = vpack.c.b16 %v870, %v869
      %v929 = vpack.c.b16 %v872, %v871
      %v930 = vpack.c.b16 %v874, %v873
      %v931 = vpack.c.b16 %v876, %v875
      %v932 = vpack.c.b16 %v878, %v877
      %v933 = vpack.c.b16 %v880, %v879
      %v934 = vpack.c.b16 %v882, %v881
      %v935 = vpack.c.b16 %v884, %v883
      %v936 = vpack.c.b16 %v886, %v885
      %v937 = vpack.c.b16 %v888, %v887
      %v938 = vpack.c.b16 %v890, %v889
      %v939 = vpack.c.b16 %v892, %v891
      %v940 = vpack.c.b16 %v894, %v893
      %v941 = vpack.c.b16 %v896, %v895
      %v942 = vpack.c.b16 %v898, %v897
      %v943 = vpack.c.b16 %v900, %v899
      %v944 = vpack.c.b16 %v902, %v901
      %v945 = vpack.c.b16 %v904, %v903
      %v946 = vpack.c.b16 %v906, %v905
      %v947 = vpack.c.b16 %v908, %v907
      %v948 = vpack.c.b16 %v910, %v909
      %v949 = vpack.c.b16 %v912, %v911
      %v950 = vpack.c.b16 %v914, %v913
      %v951 = vpack.c.b16 %v916, %v915
      %v952 = vpack.c.b16 %v918, %v917
      %v953 = vpack.c.b16 %v920, %v919
      %v954 = vpack.c.b16 %v922, %v921
      %987 = vmatprep.subr.bf16.mxu0 0
      %988 = vmatpush1.bf16.msra.mxu0 %v923
      %989 = vmatprep.subr.bf16.mxu0 0
      %990 = vmatpush1.bf16.msra.mxu0 %v924
      %991 = vmatprep.subr.bf16.mxu0 0
      %992 = vmatpush1.bf16.msra.mxu0 %v925
      %993 = vmatprep.subr.bf16.mxu0 0
      %994 = vmatpush1.bf16.msra.mxu0 %v926
      %995 = vmatprep.subr.bf16.mxu0 0
      %996 = vmatpush1.bf16.msra.mxu0 %v927
      %997 = vmatprep.subr.bf16.mxu0 0
      %998 = vmatpush1.bf16.msra.mxu0 %v928
      %999 = vmatprep.subr.bf16.mxu0 0
      %1000 = vmatpush1.bf16.msra.mxu0 %v929
      %1001 = vmatprep.subr.bf16.mxu0 0
      %1002 = vmatpush1.bf16.msra.mxu0 %v930
      %1003 = vmatprep.subr.bf16.mxu0 0
      %1004 = vmatpush1.bf16.msra.mxu0 %v931
      %1005 = vmatprep.subr.bf16.mxu0 0
      %1006 = vmatpush1.bf16.msra.mxu0 %v932
      %1007 = vmatprep.subr.bf16.mxu0 0
      %1008 = vmatpush1.bf16.msra.mxu0 %v933
      %1009 = vmatprep.subr.bf16.mxu0 0
      %1010 = vmatpush1.bf16.msra.mxu0 %v934
      %1011 = vmatprep.subr.bf16.mxu0 0
      %1012 = vmatpush1.bf16.msra.mxu0 %v935
      %1013 = vmatprep.subr.bf16.mxu0 0
      %1014 = vmatpush1.bf16.msra.mxu0 %v936
      %1015 = vmatprep.subr.bf16.mxu0 0
      %1016 = vmatpush1.bf16.msra.mxu0 %v937
      %1017 = vmatprep.subr.bf16.mxu0 0
      %1018 = vmatpush1.bf16.msra.mxu0 %v938
      %1019 = vmatprep.mubr.bf16.mxu0 %v668
      %1020 = vmatmul.mubr.bf16.gmra.mrb[0].mxu0 %v667
      %v1021 = vpop.f32.mrb[0].mxu0
      %v1022 = vadd.f32 0.0, %v1021
      %v1023 = vpop.f32.mrb[0].mxu0
      %v1024 = vpop.f32.mrb[0].mxu0
      %v1025 = vadd.f32 0.0, %v1024
      %v1026 = vpop.f32.mrb[0].mxu0
      %1027 = vmatprep.mubr.bf16.mxu0 %v672
      %1028 = vmatmul.mubr.bf16.gmra.mrb[0].mxu0 %v671
      %v1029 = vpop.f32.mrb[0].mxu0
      %v1030 = vadd.f32 0.0, %v1029
      %v1031 = vpop.f32.mrb[0].mxu0
      %v1032 = vpop.f32.mrb[0].mxu0
      %v1033 = vadd.f32 0.0, %v1032
      %v1034 = vpop.f32.mrb[0].mxu0
      %1035 = vmatprep.mubr.bf16.mxu0 %v676
      %1036 = vmatmul.mubr.bf16.gmra.mrb[0].mxu0 %v675
      %v1037 = vpop.f32.mrb[0].mxu0
      %v1038 = vadd.f32 0.0, %v1037
      %v1039 = vpop.f32.mrb[0].mxu0
      %v1040 = vpop.f32.mrb[0].mxu0
      %v1041 = vadd.f32 0.0, %v1040
      %v1042 = vpop.f32.mrb[0].mxu0
      %1043 = vmatprep.mubr.bf16.mxu0 %v680
      %1044 = vmatmul.mubr.bf16.gmra.mrb[0].mxu0 %v679
      %v1045 = vpop.f32.mrb[0].mxu0
      %v1046 = vadd.f32 0.0, %v1045
      %v1047 = vpop.f32.mrb[0].mxu0
      %v1048 = vpop.f32.mrb[0].mxu0
      %v1049 = vadd.f32 0.0, %v1048
      %v1050 = vpop.f32.mrb[0].mxu0
      %1051 = vmatprep.mubr.bf16.mxu0 %v684
      %1052 = vmatmul.mubr.bf16.gmra.mrb[0].mxu0 %v683
      %v1053 = vpop.f32.mrb[0].mxu0
      %v1054 = vadd.f32 0.0, %v1053
      %v1055 = vpop.f32.mrb[0].mxu0
      %v1056 = vpop.f32.mrb[0].mxu0
      %v1057 = vadd.f32 0.0, %v1056
      %v1058 = vpop.f32.mrb[0].mxu0
      %1059 = vmatprep.mubr.bf16.mxu0 %v688
      %1060 = vmatmul.mubr.bf16.gmra.mrb[0].mxu0 %v687
      %v1061 = vpop.f32.mrb[0].mxu0
      %v1062 = vadd.f32 0.0, %v1061
      %v1063 = vpop.f32.mrb[0].mxu0
      %v1064 = vpop.f32.mrb[0].mxu0
      %v1065 = vadd.f32 0.0, %v1064
      %v1066 = vpop.f32.mrb[0].mxu0
      %1067 = vmatprep.mubr.bf16.mxu0 %v692
      %1068 = vmatmul.mubr.bf16.gmra.mrb[0].mxu0 %v691
      %v1069 = vpop.f32.mrb[0].mxu0
      %v1070 = vadd.f32 0.0, %v1069
      %v1071 = vpop.f32.mrb[0].mxu0
      %v1072 = vpop.f32.mrb[0].mxu0
      %v1073 = vadd.f32 0.0, %v1072
      %v1074 = vpop.f32.mrb[0].mxu0
      %1075 = vmatprep.mubr.bf16.mxu0 %v696
      %1076 = vmatmul.mubr.bf16.gmra.mrb[0].mxu0 %v695
      %v1077 = vpop.f32.mrb[0].mxu0
      %v1078 = vadd.f32 0.0, %v1077
      %v1079 = vpop.f32.mrb[0].mxu0
      %v1080 = vpop.f32.mrb[0].mxu0
      %v1081 = vadd.f32 0.0, %v1080
      %v1082 = vpop.f32.mrb[0].mxu0
      %1083 = vmatprep.mubr.bf16.mxu0 %v700
      %1084 = vmatmul.mubr.bf16.gmra.mrb[0].mxu0 %v699
      %v1085 = vpop.f32.mrb[0].mxu0
      %v1086 = vadd.f32 0.0, %v1085
      %v1087 = vpop.f32.mrb[0].mxu0
      %v1088 = vpop.f32.mrb[0].mxu0
      %v1089 = vadd.f32 0.0, %v1088
      %v1090 = vpop.f32.mrb[0].mxu0
      %1091 = vmatprep.mubr.bf16.mxu0 %v704
      %1092 = vmatmul.mubr.bf16.gmra.mrb[0].mxu0 %v703
      %v1093 = vpop.f32.mrb[0].mxu0
      %v1094 = vadd.f32 0.0, %v1093
      %v1095 = vpop.f32.mrb[0].mxu0
      %v1096 = vpop.f32.mrb[0].mxu0
      %v1097 = vadd.f32 0.0, %v1096
      %v1098 = vpop.f32.mrb[0].mxu0
      %1099 = vmatprep.mubr.bf16.mxu0 %v708
      %1100 = vmatmul.mubr.bf16.gmra.mrb[0].mxu0 %v707
      %v1101 = vpop.f32.mrb[0].mxu0
      %v1102 = vadd.f32 0.0, %v1101
      %v1103 = vpop.f32.mrb[0].mxu0
      %v1104 = vpop.f32.mrb[0].mxu0
      %v1105 = vadd.f32 0.0, %v1104
      %v1106 = vpop.f32.mrb[0].mxu0
      %1107 = vmatprep.mubr.bf16.mxu0 %v712
      %1108 = vmatmul.mubr.bf16.gmra.mrb[0].mxu0 %v711
      %v1109 = vpop.f32.mrb[0].mxu0
      %v1110 = vadd.f32 0.0, %v1109
      %v1111 = vpop.f32.mrb[0].mxu0
      %v1112 = vpop.f32.mrb[0].mxu0
      %v1113 = vadd.f32 0.0, %v1112
      %v1114 = vpop.f32.mrb[0].mxu0
      %1115 = vmatprep.mubr.bf16.mxu0 %v716
      %1116 = vmatmul.mubr.bf16.gmra.mrb[0].mxu0 %v715
      %v1117 = vpop.f32.mrb[0].mxu0
      %v1118 = vadd.f32 0.0, %v1117
      %v1119 = vpop.f32.mrb[0].mxu0
      %v1120 = vpop.f32.mrb[0].mxu0
      %v1121 = vadd.f32 0.0, %v1120
      %v1122 = vpop.f32.mrb[0].mxu0
      %1123 = vmatprep.mubr.bf16.mxu0 %v720
      %1124 = vmatmul.mubr.bf16.gmra.mrb[0].mxu0 %v719
      %v1125 = vpop.f32.mrb[0].mxu0
      %v1126 = vadd.f32 0.0, %v1125
      %v1127 = vpop.f32.mrb[0].mxu0
      %v1128 = vpop.f32.mrb[0].mxu0
      %v1129 = vadd.f32 0.0, %v1128
      %v1130 = vpop.f32.mrb[0].mxu0
      %1131 = vmatprep.mubr.bf16.mxu0 %v724
      %1132 = vmatmul.mubr.bf16.gmra.mrb[0].mxu0 %v723
      %v1133 = vpop.f32.mrb[0].mxu0
      %v1134 = vadd.f32 0.0, %v1133
      %v1135 = vpop.f32.mrb[0].mxu0
      %v1136 = vpop.f32.mrb[0].mxu0
      %v1137 = vadd.f32 0.0, %v1136
      %v1138 = vpop.f32.mrb[0].mxu0
      %1139 = vmatprep.mubr.bf16.mxu0 %v728
      %1140 = vmatmul.mubr.bf16.gmra.mrb[0].mxu0 %v727
      %v1141 = vpop.f32.mrb[0].mxu0
      %v1142 = vadd.f32 0.0, %v1141
      %v1143 = vpop.f32.mrb[0].mxu0
      %v1144 = vpop.f32.mrb[0].mxu0
      %v1145 = vadd.f32 0.0, %v1144
      %v1146 = vpop.f32.mrb[0].mxu0
      %1147 = vdwg.mxu0
      %1148 = vmatprep.subr.bf16.mxu0 0
      %1149 = vmatpush1.bf16.msra.mxu0 %v939
      %1150 = vmatprep.subr.bf16.mxu0 0
      %1151 = vmatpush1.bf16.msra.mxu0 %v940
      %1152 = vmatprep.subr.bf16.mxu0 0
      %1153 = vmatpush1.bf16.msra.mxu0 %v941
      %1154 = vmatprep.subr.bf16.mxu0 0
      %1155 = vmatpush1.bf16.msra.mxu0 %v942
      %1156 = vmatprep.subr.bf16.mxu0 0
      %1157 = vmatpush1.bf16.msra.mxu0 %v943
      %1158 = vmatprep.subr.bf16.mxu0 0
      %1159 = vmatpush1.bf16.msra.mxu0 %v944
      %1160 = vmatprep.subr.bf16.mxu0 0
      %1161 = vmatpush1.bf16.msra.mxu0 %v945
      %1162 = vmatprep.subr.bf16.mxu0 0
      %1163 = vmatpush1.bf16.msra.mxu0 %v946
      %1164 = vmatprep.subr.bf16.mxu0 0
      %1165 = vmatpush1.bf16.msra.mxu0 %v947
      %1166 = vmatprep.subr.bf16.mxu0 0
      %1167 = vmatpush1.bf16.msra.mxu0 %v948
      %1168 = vmatprep.subr.bf16.mxu0 0
      %1169 = vmatpush1.bf16.msra.mxu0 %v949
      %1170 = vmatprep.subr.bf16.mxu0 0
      %1171 = vmatpush1.bf16.msra.mxu0 %v950
      %1172 = vmatprep.subr.bf16.mxu0 0
      %1173 = vmatpush1.bf16.msra.mxu0 %v951
      %1174 = vmatprep.subr.bf16.mxu0 0
      %1175 = vmatpush1.bf16.msra.mxu0 %v952
      %1176 = vmatprep.subr.bf16.mxu0 0
      %1177 = vmatpush1.bf16.msra.mxu0 %v953
      %1178 = vmatprep.subr.bf16.mxu0 0
      %1179 = vmatpush1.bf16.msra.mxu0 %v954
      %1180 = vmatprep.mubr.bf16.mxu0 %v670
      %1181 = vmatmul.mubr.bf16.gmra.mrb[0].mxu0 %v669
      %v1182 = vpop.f32.mrb[0].mxu0
      %v1183 = vadd.f32 %v1022, %v1182
      %v1184 = vpop.f32.mrb[0].mxu0
      %v1185 = vpop.f32.mrb[0].mxu0
      %v1186 = vadd.f32 %v1025, %v1185
      %v1187 = vpop.f32.mrb[0].mxu0
      %1188 = vmatprep.mubr.bf16.mxu0 %v674
      %1189 = vmatmul.mubr.bf16.gmra.mrb[0].mxu0 %v673
      %v1190 = vpop.f32.mrb[0].mxu0
      %v1191 = vadd.f32 %v1030, %v1190
      %v1192 = vpop.f32.mrb[0].mxu0
      %v1193 = vpop.f32.mrb[0].mxu0
      %v1194 = vadd.f32 %v1033, %v1193
      %v1195 = vpop.f32.mrb[0].mxu0
      %1196 = vmatprep.mubr.bf16.mxu0 %v678
      %1197 = vmatmul.mubr.bf16.gmra.mrb[0].mxu0 %v677
      %v1198 = vpop.f32.mrb[0].mxu0
      %v1199 = vadd.f32 %v1038, %v1198
      %v1200 = vpop.f32.mrb[0].mxu0
      %v1201 = vpop.f32.mrb[0].mxu0
      %v1202 = vadd.f32 %v1041, %v1201
      %v1203 = vpop.f32.mrb[0].mxu0
      %1204 = vmatprep.mubr.bf16.mxu0 %v682
      %1205 = vmatmul.mubr.bf16.gmra.mrb[0].mxu0 %v681
      %v1206 = vpop.f32.mrb[0].mxu0
      %v1207 = vadd.f32 %v1046, %v1206
      %v1208 = vpop.f32.mrb[0].mxu0
      %v1209 = vpop.f32.mrb[0].mxu0
      %v1210 = vadd.f32 %v1049, %v1209
      %v1211 = vpop.f32.mrb[0].mxu0
      %1212 = vmatprep.mubr.bf16.mxu0 %v686
      %1213 = vmatmul.mubr.bf16.gmra.mrb[0].mxu0 %v685
      %v1214 = vpop.f32.mrb[0].mxu0
      %v1215 = vadd.f32 %v1054, %v1214
      %v1216 = vpop.f32.mrb[0].mxu0
      %v1217 = vpop.f32.mrb[0].mxu0
      %v1218 = vadd.f32 %v1057, %v1217
      %v1219 = vpop.f32.mrb[0].mxu0
      %1220 = vmatprep.mubr.bf16.mxu0 %v690
      %1221 = vmatmul.mubr.bf16.gmra.mrb[0].mxu0 %v689
      %v1222 = vpop.f32.mrb[0].mxu0
      %v1223 = vadd.f32 %v1062, %v1222
      %v1224 = vpop.f32.mrb[0].mxu0
      %v1225 = vpop.f32.mrb[0].mxu0
      %v1226 = vadd.f32 %v1065, %v1225
      %v1227 = vpop.f32.mrb[0].mxu0
      %1228 = vmatprep.mubr.bf16.mxu0 %v694
      %1229 = vmatmul.mubr.bf16.gmra.mrb[0].mxu0 %v693
      %v1230 = vpop.f32.mrb[0].mxu0
      %v1231 = vadd.f32 %v1070, %v1230
      %v1232 = vpop.f32.mrb[0].mxu0
      %v1233 = vpop.f32.mrb[0].mxu0
      %v1234 = vadd.f32 %v1073, %v1233
      %v1235 = vpop.f32.mrb[0].mxu0
      %1236 = vmatprep.mubr.bf16.mxu0 %v698
      %1237 = vmatmul.mubr.bf16.gmra.mrb[0].mxu0 %v697
      %v1238 = vpop.f32.mrb[0].mxu0
      %v1239 = vadd.f32 %v1078, %v1238
      %v1240 = vpop.f32.mrb[0].mxu0
      %v1241 = vpop.f32.mrb[0].mxu0
      %v1242 = vadd.f32 %v1081, %v1241
      %v1243 = vpop.f32.mrb[0].mxu0
      %1244 = vmatprep.mubr.bf16.mxu0 %v702
      %1245 = vmatmul.mubr.bf16.gmra.mrb[0].mxu0 %v701
      %v1246 = vpop.f32.mrb[0].mxu0
      %v1247 = vadd.f32 %v1086, %v1246
      %v1248 = vpop.f32.mrb[0].mxu0
      %v1249 = vpop.f32.mrb[0].mxu0
      %v1250 = vadd.f32 %v1089, %v1249
      %v1251 = vpop.f32.mrb[0].mxu0
      %1252 = vmatprep.mubr.bf16.mxu0 %v706
      %1253 = vmatmul.mubr.bf16.gmra.mrb[0].mxu0 %v705
      %v1254 = vpop.f32.mrb[0].mxu0
      %v1255 = vadd.f32 %v1094, %v1254
      %v1256 = vpop.f32.mrb[0].mxu0
      %v1257 = vpop.f32.mrb[0].mxu0
      %v1258 = vadd.f32 %v1097, %v1257
      %v1259 = vpop.f32.mrb[0].mxu0
      %1260 = vmatprep.mubr.bf16.mxu0 %v710
      %1261 = vmatmul.mubr.bf16.gmra.mrb[0].mxu0 %v709
      %v1262 = vpop.f32.mrb[0].mxu0
      %v1263 = vadd.f32 %v1102, %v1262
      %v1264 = vpop.f32.mrb[0].mxu0
      %v1265 = vpop.f32.mrb[0].mxu0
      %v1266 = vadd.f32 %v1105, %v1265
      %v1267 = vpop.f32.mrb[0].mxu0
      %1268 = vmatprep.mubr.bf16.mxu0 %v714
      %1269 = vmatmul.mubr.bf16.gmra.mrb[0].mxu0 %v713
      %v1270 = vpop.f32.mrb[0].mxu0
      %v1271 = vadd.f32 %v1110, %v1270
      %v1272 = vpop.f32.mrb[0].mxu0
      %v1273 = vpop.f32.mrb[0].mxu0
      %v1274 = vadd.f32 %v1113, %v1273
      %v1275 = vpop.f32.mrb[0].mxu0
      %1276 = vmatprep.mubr.bf16.mxu0 %v718
      %1277 = vmatmul.mubr.bf16.gmra.mrb[0].mxu0 %v717
      %v1278 = vpop.f32.mrb[0].mxu0
      %v1279 = vadd.f32 %v1118, %v1278
      %v1280 = vpop.f32.mrb[0].mxu0
      %v1281 = vpop.f32.mrb[0].mxu0
      %v1282 = vadd.f32 %v1121, %v1281
      %v1283 = vpop.f32.mrb[0].mxu0
      %1284 = vmatprep.mubr.bf16.mxu0 %v722
      %1285 = vmatmul.mubr.bf16.gmra.mrb[0].mxu0 %v721
      %v1286 = vpop.f32.mrb[0].mxu0
      %v1287 = vadd.f32 %v1126, %v1286
      %v1288 = vpop.f32.mrb[0].mxu0
      %v1289 = vpop.f32.mrb[0].mxu0
      %v1290 = vadd.f32 %v1129, %v1289
      %v1291 = vpop.f32.mrb[0].mxu0
      %1292 = vmatprep.mubr.bf16.mxu0 %v726
      %1293 = vmatmul.mubr.bf16.gmra.mrb[0].mxu0 %v725
      %v1294 = vpop.f32.mrb[0].mxu0
      %v1295 = vadd.f32 %v1134, %v1294
      %v1296 = vpop.f32.mrb[0].mxu0
      %v1297 = vpop.f32.mrb[0].mxu0
      %v1298 = vadd.f32 %v1137, %v1297
      %v1299 = vpop.f32.mrb[0].mxu0
      %1300 = vmatprep.mubr.bf16.mxu0 %v730
      %1301 = vmatmul.mubr.bf16.gmra.mrb[0].mxu0 %v729
      %v1302 = vpop.f32.mrb[0].mxu0
      %v1303 = vadd.f32 %v1142, %v1302
      %v1304 = vpop.f32.mrb[0].mxu0
      %v1305 = vpop.f32.mrb[0].mxu0
      %v1306 = vadd.f32 %v1145, %v1305
      %v1307 = vpop.f32.mrb[0].mxu0
      %1308 = vdwg.mxu0
      %v1309 = vadd.f32 %v311, %v1183
      %v1310 = vadd.f32 %v312, %v1186
      %v1311 = vadd.f32 %v313, %v1191
      %v1312 = vadd.f32 %v314, %v1194
      %v1313 = vadd.f32 %v315, %v1199
      %v1314 = vadd.f32 %v316, %v1202
      %v1315 = vadd.f32 %v317, %v1207
      %v1316 = vadd.f32 %v318, %v1210
      %v1317 = vadd.f32 %v319, %v1215
      %v1318 = vadd.f32 %v320, %v1218
      %v1319 = vadd.f32 %v321, %v1223
      %v1320 = vadd.f32 %v322, %v1226
      %v1321 = vadd.f32 %v323, %v1231
      %v1322 = vadd.f32 %v324, %v1234
      %v1323 = vadd.f32 %v325, %v1239
      %v1324 = vadd.f32 %v326, %v1242
      %v1325 = vadd.f32 %v327, %v1247
      %v1326 = vadd.f32 %v328, %v1250
      %v1327 = vadd.f32 %v329, %v1255
      %v1328 = vadd.f32 %v330, %v1258
      %v1329 = vadd.f32 %v331, %v1263
      %v1330 = vadd.f32 %v332, %v1266
      %v1331 = vadd.f32 %v333, %v1271
      %v1332 = vadd.f32 %v334, %v1274
      %v1333 = vadd.f32 %v335, %v1279
      %v1334 = vadd.f32 %v336, %v1282
      %v1335 = vadd.f32 %v337, %v1287
      %v1336 = vadd.f32 %v338, %v1290
      %v1337 = vadd.f32 %v339, %v1295
      %v1338 = vadd.f32 %v340, %v1298
      %v1339 = vadd.f32 %v341, %v1303
      %v1340 = vadd.f32 %v342, %v1306
      %1341 = vst [vmem:[#allocation2] sm:$0xff] %v1309
      %1342 = vst [vmem:[#allocation2 + $0x8] sm:$0xff] %v1310
      %1343 = vst [vmem:[#allocation2 + $0x10] sm:$0xff] %v1311
      %1344 = vst [vmem:[#allocation2 + $0x18] sm:$0xff] %v1312
      %1345 = vst [vmem:[#allocation2 + $0x20] sm:$0xff] %v1313
      %1346 = vst [vmem:[#allocation2 + $0x28] sm:$0xff] %v1314
      %1347 = vst [vmem:[#allocation2 + $0x30] sm:$0xff] %v1315
      %1348 = vst [vmem:[#allocation2 + $0x38] sm:$0xff] %v1316
      %1349 = vst [vmem:[#allocation2 + $0x40] sm:$0xff] %v1317
      %1350 = vst [vmem:[#allocation2 + $0x48] sm:$0xff] %v1318
      %1351 = vst [vmem:[#allocation2 + $0x50] sm:$0xff] %v1319
      %1352 = vst [vmem:[#allocation2 + $0x58] sm:$0xff] %v1320
      %1353 = vst [vmem:[#allocation2 + $0x60] sm:$0xff] %v1321
      %1354 = vst [vmem:[#allocation2 + $0x68] sm:$0xff] %v1322
      %1355 = vst [vmem:[#allocation2 + $0x70] sm:$0xff] %v1323
      %1356 = vst [vmem:[#allocation2 + $0x78] sm:$0xff] %v1324
      %1357 = vst [vmem:[#allocation2 + $0x80] sm:$0xff] %v1325
      %1358 = vst [vmem:[#allocation2 + $0x88] sm:$0xff] %v1326
      %1359 = vst [vmem:[#allocation2 + $0x90] sm:$0xff] %v1327
      %1360 = vst [vmem:[#allocation2 + $0x98] sm:$0xff] %v1328
      %1361 = vst [vmem:[#allocation2 + $0xa0] sm:$0xff] %v1329
      %1362 = vst [vmem:[#allocation2 + $0xa8] sm:$0xff] %v1330
      %1363 = vst [vmem:[#allocation2 + $0xb0] sm:$0xff] %v1331
      %1364 = vst [vmem:[#allocation2 + $0xb8] sm:$0xff] %v1332
      %1365 = vst [vmem:[#allocation2 + $0xc0] sm:$0xff] %v1333
      %1366 = vst [vmem:[#allocation2 + $0xc8] sm:$0xff] %v1334
      %1367 = vst [vmem:[#allocation2 + $0xd0] sm:$0xff] %v1335
      %1368 = vst [vmem:[#allocation2 + $0xd8] sm:$0xff] %v1336
      %1369 = vst [vmem:[#allocation2 + $0xe0] sm:$0xff] %v1337
      %1370 = vst [vmem:[#allocation2 + $0xe8] sm:$0xff] %v1338
      %1371 = vst [vmem:[#allocation2 + $0xf0] sm:$0xff] %v1339
      %1372 = vst [vmem:[#allocation2 + $0xf8] sm:$0xff] %v1340
      // Predicated region
      $region41: #{conad_forward.7} parent=35 // pred_check
        %p1373 = pneg %p274
      $region42: #{conad_forward.7} parent=35 // pred_check_branch
        %1375 = sbr.rel (%p1373) target = $region44
      $region43: #{conad_forward.7} parent=35 // pred_region
        %v1376 = vld [vmem:[#allocation2] sm:$0xff]
        %v1377 = vld [vmem:[#allocation2 + $0x8] sm:$0xff]
        %v1378 = vld [vmem:[#allocation2 + $0x10] sm:$0xff]
        %v1379 = vld [vmem:[#allocation2 + $0x18] sm:$0xff]
        %v1380 = vld [vmem:[#allocation2 + $0x20] sm:$0xff]
        %v1381 = vld [vmem:[#allocation2 + $0x28] sm:$0xff]
        %v1382 = vld [vmem:[#allocation2 + $0x30] sm:$0xff]
        %v1383 = vld [vmem:[#allocation2 + $0x38] sm:$0xff]
        %v1384 = vld [vmem:[#allocation2 + $0x40] sm:$0xff]
        %v1385 = vld [vmem:[#allocation2 + $0x48] sm:$0xff]
        %v1386 = vld [vmem:[#allocation2 + $0x50] sm:$0xff]
        %v1387 = vld [vmem:[#allocation2 + $0x58] sm:$0xff]
        %v1388 = vld [vmem:[#allocation2 + $0x60] sm:$0xff]
        %v1389 = vld [vmem:[#allocation2 + $0x68] sm:$0xff]
        %v1390 = vld [vmem:[#allocation2 + $0x70] sm:$0xff]
        %v1391 = vld [vmem:[#allocation2 + $0x78] sm:$0xff]
        %v1392 = vld [vmem:[#allocation2 + $0x80] sm:$0xff]
        %v1393 = vld [vmem:[#allocation2 + $0x88] sm:$0xff]
        %v1394 = vld [vmem:[#allocation2 + $0x90] sm:$0xff]
        %v1395 = vld [vmem:[#allocation2 + $0x98] sm:$0xff]
        %v1396 = vld [vmem:[#allocation2 + $0xa0] sm:$0xff]
        %v1397 = vld [vmem:[#allocation2 + $0xa8] sm:$0xff]
        %v1398 = vld [vmem:[#allocation2 + $0xb0] sm:$0xff]
        %v1399 = vld [vmem:[#allocation2 + $0xb8] sm:$0xff]
        %v1400 = vld [vmem:[#allocation2 + $0xc0] sm:$0xff]
        %v1401 = vld [vmem:[#allocation2 + $0xc8] sm:$0xff]
        %v1402 = vld [vmem:[#allocation2 + $0xd0] sm:$0xff]
        %v1403 = vld [vmem:[#allocation2 + $0xd8] sm:$0xff]
        %v1404 = vld [vmem:[#allocation2 + $0xe0] sm:$0xff]
        %v1405 = vld [vmem:[#allocation2 + $0xe8] sm:$0xff]
        %v1406 = vld [vmem:[#allocation2 + $0xf0] sm:$0xff]
        %v1407 = vld [vmem:[#allocation2 + $0xf8] sm:$0xff]
        %v1408 = vpack.c.bf16 %v1377, %v1376
        %v1409 = vpack.c.bf16 %v1379, %v1378
        %v1410 = vpack.c.bf16 %v1381, %v1380
        %v1411 = vpack.c.bf16 %v1383, %v1382
        %v1412 = vpack.c.bf16 %v1385, %v1384
        %v1413 = vpack.c.bf16 %v1387, %v1386
        %v1414 = vpack.c.bf16 %v1389, %v1388
        %v1415 = vpack.c.bf16 %v1391, %v1390
        %v1416 = vpack.c.bf16 %v1393, %v1392
        %v1417 = vpack.c.bf16 %v1395, %v1394
        %v1418 = vpack.c.bf16 %v1397, %v1396
        %v1419 = vpack.c.bf16 %v1399, %v1398
        %v1420 = vpack.c.bf16 %v1401, %v1400
        %v1421 = vpack.c.bf16 %v1403, %v1402
        %v1422 = vpack.c.bf16 %v1405, %v1404
        %v1423 = vpack.c.bf16 %v1407, %v1406
        %v1424 = vld [vmem:[%s2] sm:$0xff]
        %v1425 = vld [vmem:[%s2 + $0x8] sm:$0xff]
        %v1426 = vld [vmem:[%s2 + $0x10] sm:$0xff]
        %v1427 = vld [vmem:[%s2 + $0x18] sm:$0xff]
        %v1428 = vld [vmem:[%s2 + $0x20] sm:$0xff]
        %v1429 = vld [vmem:[%s2 + $0x28] sm:$0xff]
        %v1430 = vld [vmem:[%s2 + $0x30] sm:$0xff]
        %v1431 = vld [vmem:[%s2 + $0x38] sm:$0xff]
        %v1432 = vld [vmem:[%s2 + $0x40] sm:$0xff]
        %v1433 = vld [vmem:[%s2 + $0x48] sm:$0xff]
        %v1434 = vld [vmem:[%s2 + $0x50] sm:$0xff]
        %v1435 = vld [vmem:[%s2 + $0x58] sm:$0xff]
        %v1436 = vld [vmem:[%s2 + $0x60] sm:$0xff]
        %v1437 = vld [vmem:[%s2 + $0x68] sm:$0xff]
        %v1438 = vld [vmem:[%s2 + $0x70] sm:$0xff]
        %v1439 = vld [vmem:[%s2 + $0x78] sm:$0xff]
        %v1440 = vld [vmem:[%s3] sm:$0x3]
        %v1442 = vlaneseq
        %v1443 = vshrl.u32 %v1442, 7
        %v1444 = vsub.s32 0, %v1443
        %v1445 = vrot.slane %v1440, %v1444
        %v1446 = vlaneseq
        %v1447 = vshrl.u32 %v1446, 7
        %v1448 = vsub.s32 1, %v1447
        %v1449 = vrot.slane %v1440, %v1448
        %v1468 = vunpack.c.l.b16 %v1424
        %v1469 = vunpack.c.h.b16 %v1424
        %v1470 = vunpack.c.l.b16 %v1425
        %v1471 = vunpack.c.h.b16 %v1425
        %v1472 = vunpack.c.l.b16 %v1426
        %v1473 = vunpack.c.h.b16 %v1426
        %v1474 = vunpack.c.l.b16 %v1427
        %v1475 = vunpack.c.h.b16 %v1427
        %v1476 = vunpack.c.l.b16 %v1428
        %v1477 = vunpack.c.h.b16 %v1428
        %v1478 = vunpack.c.l.b16 %v1429
        %v1479 = vunpack.c.h.b16 %v1429
        %v1480 = vunpack.c.l.b16 %v1430
        %v1481 = vunpack.c.h.b16 %v1430
        %v1482 = vunpack.c.l.b16 %v1431
        %v1483 = vunpack.c.h.b16 %v1431
        %v1484 = vunpack.c.l.b16 %v1432
        %v1485 = vunpack.c.h.b16 %v1432
        %v1486 = vunpack.c.l.b16 %v1433
        %v1487 = vunpack.c.h.b16 %v1433
        %v1488 = vunpack.c.l.b16 %v1434
        %v1489 = vunpack.c.h.b16 %v1434
        %v1490 = vunpack.c.l.b16 %v1435
        %v1491 = vunpack.c.h.b16 %v1435
        %v1492 = vunpack.c.l.b16 %v1436
        %v1493 = vunpack.c.h.b16 %v1436
        %v1494 = vunpack.c.l.b16 %v1437
        %v1495 = vunpack.c.h.b16 %v1437
        %v1496 = vunpack.c.l.b16 %v1438
        %v1497 = vunpack.c.h.b16 %v1438
        %v1498 = vunpack.c.l.b16 %v1439
        %v1499 = vunpack.c.h.b16 %v1439
        %v1500 = vpack.c.b16 %v1470, %v1468
        %v1501 = vpack.c.b16 %v1471, %v1469
        %v1502 = vpack.c.b16 %v1474, %v1472
        %v1503 = vpack.c.b16 %v1475, %v1473
        %v1504 = vpack.c.b16 %v1478, %v1476
        %v1505 = vpack.c.b16 %v1479, %v1477
        %v1506 = vpack.c.b16 %v1482, %v1480
        %v1507 = vpack.c.b16 %v1483, %v1481
        %v1508 = vpack.c.b16 %v1486, %v1484
        %v1509 = vpack.c.b16 %v1487, %v1485
        %v1510 = vpack.c.b16 %v1490, %v1488
        %v1511 = vpack.c.b16 %v1491, %v1489
        %v1512 = vpack.c.b16 %v1494, %v1492
        %v1513 = vpack.c.b16 %v1495, %v1493
        %v1514 = vpack.c.b16 %v1498, %v1496
        %v1515 = vpack.c.b16 %v1499, %v1497
        %1532 = vmatprep.subr.bf16.mxu0 %v1501
        %1533 = vmatpush1.bf16.msra.mxu0 %v1500
        %1534 = vmatprep.subr.bf16.mxu0 %v1503
        %1535 = vmatpush1.bf16.msra.mxu0 %v1502
        %1536 = vmatprep.subr.bf16.mxu0 %v1505
        %1537 = vmatpush1.bf16.msra.mxu0 %v1504
        %1538 = vmatprep.subr.bf16.mxu0 %v1507
        %1539 = vmatpush1.bf16.msra.mxu0 %v1506
        %1540 = vmatprep.subr.bf16.mxu0 %v1509
        %1541 = vmatpush1.bf16.msra.mxu0 %v1508
        %1542 = vmatprep.subr.bf16.mxu0 %v1511
        %1543 = vmatpush1.bf16.msra.mxu0 %v1510
        %1544 = vmatprep.subr.bf16.mxu0 %v1513
        %1545 = vmatpush1.bf16.msra.mxu0 %v1512
        %1546 = vmatprep.subr.bf16.mxu0 %v1515
        %1547 = vmatpush1.bf16.msra.mxu0 %v1514
        %1548 = vmatprep.subr.bf16.mxu0 0
        %1549 = vmatpush1.bf16.msra.mxu0 0
        %1550 = vmatprep.subr.bf16.mxu0 0
        %1551 = vmatpush1.bf16.msra.mxu0 0
        %1552 = vmatprep.subr.bf16.mxu0 0
        %1553 = vmatpush1.bf16.msra.mxu0 0
        %1554 = vmatprep.subr.bf16.mxu0 0
        %1555 = vmatpush1.bf16.msra.mxu0 0
        %1556 = vmatprep.subr.bf16.mxu0 0
        %1557 = vmatpush1.bf16.msra.mxu0 0
        %1558 = vmatprep.subr.bf16.mxu0 0
        %1559 = vmatpush1.bf16.msra.mxu0 0
        %1560 = vmatprep.subr.bf16.mxu0 0
        %1561 = vmatpush1.bf16.msra.mxu0 0
        %1562 = vmatprep.subr.bf16.mxu0 0
        %1563 = vmatpush1.bf16.msra.mxu0 0
        %1564 = vmatprep.mubr.bf16.mxu0 0
        %1565 = vmatmul.mubr.bf16.gmra.mrb[0].mxu0 %v1408
        %v1566 = vpop.f32.mrb[0].mxu0
        %v1567 = vadd.f32 %v1445, %v1566
        %v1568 = vpop.f32.mrb[0].mxu0
        %v1569 = vadd.f32 %v1449, %v1568
        %v1570 = vpop.f32.mrb[0].mxu0
        %v1571 = vadd.f32 %v1445, %v1570
        %v1572 = vpop.f32.mrb[0].mxu0
        %v1573 = vadd.f32 %v1449, %v1572
        %1574 = vmatprep.mubr.bf16.mxu0 0
        %1575 = vmatmul.mubr.bf16.gmra.mrb[0].mxu0 %v1409
        %v1576 = vpop.f32.mrb[0].mxu0
        %v1577 = vadd.f32 %v1445, %v1576
        %v1578 = vpop.f32.mrb[0].mxu0
        %v1579 = vadd.f32 %v1449, %v1578
        %v1580 = vpop.f32.mrb[0].mxu0
        %v1581 = vadd.f32 %v1445, %v1580
        %v1582 = vpop.f32.mrb[0].mxu0
        %v1583 = vadd.f32 %v1449, %v1582
        %1584 = vmatprep.mubr.bf16.mxu0 0
        %1585 = vmatmul.mubr.bf16.gmra.mrb[0].mxu0 %v1410
        %v1586 = vpop.f32.mrb[0].mxu0
        %v1587 = vadd.f32 %v1445, %v1586
        %v1588 = vpop.f32.mrb[0].mxu0
        %v1589 = vadd.f32 %v1449, %v1588
        %v1590 = vpop.f32.mrb[0].mxu0
        %v1591 = vadd.f32 %v1445, %v1590
        %v1592 = vpop.f32.mrb[0].mxu0
        %v1593 = vadd.f32 %v1449, %v1592
        %1594 = vmatprep.mubr.bf16.mxu0 0
        %1595 = vmatmul.mubr.bf16.gmra.mrb[0].mxu0 %v1411
        %v1596 = vpop.f32.mrb[0].mxu0
        %v1597 = vadd.f32 %v1445, %v1596
        %v1598 = vpop.f32.mrb[0].mxu0
        %v1599 = vadd.f32 %v1449, %v1598
        %v1600 = vpop.f32.mrb[0].mxu0
        %v1601 = vadd.f32 %v1445, %v1600
        %v1602 = vpop.f32.mrb[0].mxu0
        %v1603 = vadd.f32 %v1449, %v1602
        %1604 = vmatprep.mubr.bf16.mxu0 0
        %1605 = vmatmul.mubr.bf16.gmra.mrb[0].mxu0 %v1412
        %v1606 = vpop.f32.mrb[0].mxu0
        %v1607 = vadd.f32 %v1445, %v1606
        %v1608 = vpop.f32.mrb[0].mxu0
        %v1609 = vadd.f32 %v1449, %v1608
        %v1610 = vpop.f32.mrb[0].mxu0
        %v1611 = vadd.f32 %v1445, %v1610
        %v1612 = vpop.f32.mrb[0].mxu0
        %v1613 = vadd.f32 %v1449, %v1612
        %1614 = vmatprep.mubr.bf16.mxu0 0
        %1615 = vmatmul.mubr.bf16.gmra.mrb[0].mxu0 %v1413
        %v1616 = vpop.f32.mrb[0].mxu0
        %v1617 = vadd.f32 %v1445, %v1616
        %v1618 = vpop.f32.mrb[0].mxu0
        %v1619 = vadd.f32 %v1449, %v1618
        %v1620 = vpop.f32.mrb[0].mxu0
        %v1621 = vadd.f32 %v1445, %v1620
        %v1622 = vpop.f32.mrb[0].mxu0
        %v1623 = vadd.f32 %v1449, %v1622
        %1624 = vmatprep.mubr.bf16.mxu0 0
        %1625 = vmatmul.mubr.bf16.gmra.mrb[0].mxu0 %v1414
        %v1626 = vpop.f32.mrb[0].mxu0
        %v1627 = vadd.f32 %v1445, %v1626
        %v1628 = vpop.f32.mrb[0].mxu0
        %v1629 = vadd.f32 %v1449, %v1628
        %v1630 = vpop.f32.mrb[0].mxu0
        %v1631 = vadd.f32 %v1445, %v1630
        %v1632 = vpop.f32.mrb[0].mxu0
        %v1633 = vadd.f32 %v1449, %v1632
        %1634 = vmatprep.mubr.bf16.mxu0 0
        %1635 = vmatmul.mubr.bf16.gmra.mrb[0].mxu0 %v1415
        %v1636 = vpop.f32.mrb[0].mxu0
        %v1637 = vadd.f32 %v1445, %v1636
        %v1638 = vpop.f32.mrb[0].mxu0
        %v1639 = vadd.f32 %v1449, %v1638
        %v1640 = vpop.f32.mrb[0].mxu0
        %v1641 = vadd.f32 %v1445, %v1640
        %v1642 = vpop.f32.mrb[0].mxu0
        %v1643 = vadd.f32 %v1449, %v1642
        %1644 = vmatprep.mubr.bf16.mxu0 0
        %1645 = vmatmul.mubr.bf16.gmra.mrb[0].mxu0 %v1416
        %v1646 = vpop.f32.mrb[0].mxu0
        %v1647 = vadd.f32 %v1445, %v1646
        %v1648 = vpop.f32.mrb[0].mxu0
        %v1649 = vadd.f32 %v1449, %v1648
        %v1650 = vpop.f32.mrb[0].mxu0
        %v1651 = vadd.f32 %v1445, %v1650
        %v1652 = vpop.f32.mrb[0].mxu0
        %v1653 = vadd.f32 %v1449, %v1652
        %1654 = vmatprep.mubr.bf16.mxu0 0
        %1655 = vmatmul.mubr.bf16.gmra.mrb[0].mxu0 %v1417
        %v1656 = vpop.f32.mrb[0].mxu0
        %v1657 = vadd.f32 %v1445, %v1656
        %v1658 = vpop.f32.mrb[0].mxu0
        %v1659 = vadd.f32 %v1449, %v1658
        %v1660 = vpop.f32.mrb[0].mxu0
        %v1661 = vadd.f32 %v1445, %v1660
        %v1662 = vpop.f32.mrb[0].mxu0
        %v1663 = vadd.f32 %v1449, %v1662
        %1664 = vmatprep.mubr.bf16.mxu0 0
        %1665 = vmatmul.mubr.bf16.gmra.mrb[0].mxu0 %v1418
        %v1666 = vpop.f32.mrb[0].mxu0
        %v1667 = vadd.f32 %v1445, %v1666
        %v1668 = vpop.f32.mrb[0].mxu0
        %v1669 = vadd.f32 %v1449, %v1668
        %v1670 = vpop.f32.mrb[0].mxu0
        %v1671 = vadd.f32 %v1445, %v1670
        %v1672 = vpop.f32.mrb[0].mxu0
        %v1673 = vadd.f32 %v1449, %v1672
        %1674 = vmatprep.mubr.bf16.mxu0 0
        %1675 = vmatmul.mubr.bf16.gmra.mrb[0].mxu0 %v1419
        %v1676 = vpop.f32.mrb[0].mxu0
        %v1677 = vadd.f32 %v1445, %v1676
        %v1678 = vpop.f32.mrb[0].mxu0
        %v1679 = vadd.f32 %v1449, %v1678
        %v1680 = vpop.f32.mrb[0].mxu0
        %v1681 = vadd.f32 %v1445, %v1680
        %v1682 = vpop.f32.mrb[0].mxu0
        %v1683 = vadd.f32 %v1449, %v1682
        %1684 = vmatprep.mubr.bf16.mxu0 0
        %1685 = vmatmul.mubr.bf16.gmra.mrb[0].mxu0 %v1420
        %v1686 = vpop.f32.mrb[0].mxu0
        %v1687 = vadd.f32 %v1445, %v1686
        %v1688 = vpop.f32.mrb[0].mxu0
        %v1689 = vadd.f32 %v1449, %v1688
        %v1690 = vpop.f32.mrb[0].mxu0
        %v1691 = vadd.f32 %v1445, %v1690
        %v1692 = vpop.f32.mrb[0].mxu0
        %v1693 = vadd.f32 %v1449, %v1692
        %1694 = vmatprep.mubr.bf16.mxu0 0
        %1695 = vmatmul.mubr.bf16.gmra.mrb[0].mxu0 %v1421
        %v1696 = vpop.f32.mrb[0].mxu0
        %v1697 = vadd.f32 %v1445, %v1696
        %v1698 = vpop.f32.mrb[0].mxu0
        %v1699 = vadd.f32 %v1449, %v1698
        %v1700 = vpop.f32.mrb[0].mxu0
        %v1701 = vadd.f32 %v1445, %v1700
        %v1702 = vpop.f32.mrb[0].mxu0
        %v1703 = vadd.f32 %v1449, %v1702
        %1704 = vmatprep.mubr.bf16.mxu0 0
        %1705 = vmatmul.mubr.bf16.gmra.mrb[0].mxu0 %v1422
        %v1706 = vpop.f32.mrb[0].mxu0
        %v1707 = vadd.f32 %v1445, %v1706
        %v1708 = vpop.f32.mrb[0].mxu0
        %v1709 = vadd.f32 %v1449, %v1708
        %v1710 = vpop.f32.mrb[0].mxu0
        %v1711 = vadd.f32 %v1445, %v1710
        %v1712 = vpop.f32.mrb[0].mxu0
        %v1713 = vadd.f32 %v1449, %v1712
        %1714 = vmatprep.mubr.bf16.mxu0 0
        %1715 = vmatmul.mubr.bf16.gmra.mrb[0].mxu0 %v1423
        %v1716 = vpop.f32.mrb[0].mxu0
        %v1717 = vadd.f32 %v1445, %v1716
        %v1718 = vpop.f32.mrb[0].mxu0
        %v1719 = vadd.f32 %v1449, %v1718
        %v1720 = vpop.f32.mrb[0].mxu0
        %v1721 = vadd.f32 %v1445, %v1720
        %v1722 = vpop.f32.mrb[0].mxu0
        %v1723 = vadd.f32 %v1449, %v1722
        %1724 = vdwg.mxu0
        %v1725 = vmax.f32 %v1567, 0.0
        %v1726 = vmax.f32 %v1571, 0.0
        %v1727 = vmax.f32 %v1577, 0.0
        %v1728 = vmax.f32 %v1581, 0.0
        %v1729 = vmax.f32 %v1587, 0.0
        %v1730 = vmax.f32 %v1591, 0.0
        %v1731 = vmax.f32 %v1597, 0.0
        %v1732 = vmax.f32 %v1601, 0.0
        %v1733 = vmax.f32 %v1607, 0.0
        %v1734 = vmax.f32 %v1611, 0.0
        %v1735 = vmax.f32 %v1617, 0.0
        %v1736 = vmax.f32 %v1621, 0.0
        %v1737 = vmax.f32 %v1627, 0.0
        %v1738 = vmax.f32 %v1631, 0.0
        %v1739 = vmax.f32 %v1637, 0.0
        %v1740 = vmax.f32 %v1641, 0.0
        %v1741 = vmax.f32 %v1647, 0.0
        %v1742 = vmax.f32 %v1651, 0.0
        %v1743 = vmax.f32 %v1657, 0.0
        %v1744 = vmax.f32 %v1661, 0.0
        %v1745 = vmax.f32 %v1667, 0.0
        %v1746 = vmax.f32 %v1671, 0.0
        %v1747 = vmax.f32 %v1677, 0.0
        %v1748 = vmax.f32 %v1681, 0.0
        %v1749 = vmax.f32 %v1687, 0.0
        %v1750 = vmax.f32 %v1691, 0.0
        %v1751 = vmax.f32 %v1697, 0.0
        %v1752 = vmax.f32 %v1701, 0.0
        %v1753 = vmax.f32 %v1707, 0.0
        %v1754 = vmax.f32 %v1711, 0.0
        %v1755 = vmax.f32 %v1717, 0.0
        %v1756 = vmax.f32 %v1721, 0.0
        %v1757 = vpack.c.bf16 %v1726, %v1725
        %v1758 = vpack.c.bf16 %v1728, %v1727
        %v1759 = vpack.c.bf16 %v1730, %v1729
        %v1760 = vpack.c.bf16 %v1732, %v1731
        %v1761 = vpack.c.bf16 %v1734, %v1733
        %v1762 = vpack.c.bf16 %v1736, %v1735
        %v1763 = vpack.c.bf16 %v1738, %v1737
        %v1764 = vpack.c.bf16 %v1740, %v1739
        %v1765 = vpack.c.bf16 %v1742, %v1741
        %v1766 = vpack.c.bf16 %v1744, %v1743
        %v1767 = vpack.c.bf16 %v1746, %v1745
        %v1768 = vpack.c.bf16 %v1748, %v1747
        %v1769 = vpack.c.bf16 %v1750, %v1749
        %v1770 = vpack.c.bf16 %v1752, %v1751
        %v1771 = vpack.c.bf16 %v1754, %v1753
        %v1772 = vpack.c.bf16 %v1756, %v1755
        %v1789 = vunpack.c.l.b16 %v1757
        %v1790 = vunpack.c.h.b16 %v1757
        %v1791 = vunpack.c.l.b16 %v1758
        %v1792 = vunpack.c.h.b16 %v1758
        %v1793 = vunpack.c.l.b16 %v1759
        %v1794 = vunpack.c.h.b16 %v1759
        %v1795 = vunpack.c.l.b16 %v1760
        %v1796 = vunpack.c.h.b16 %v1760
        %v1797 = vunpack.c.l.b16 %v1761
        %v1798 = vunpack.c.h.b16 %v1761
        %v1799 = vunpack.c.l.b16 %v1762
        %v1800 = vunpack.c.h.b16 %v1762
        %v1801 = vunpack.c.l.b16 %v1763
        %v1802 = vunpack.c.h.b16 %v1763
        %v1803 = vunpack.c.l.b16 %v1764
        %v1804 = vunpack.c.h.b16 %v1764
        %v1805 = vunpack.c.l.b16 %v1765
        %v1806 = vunpack.c.h.b16 %v1765
        %v1807 = vunpack.c.l.b16 %v1766
        %v1808 = vunpack.c.h.b16 %v1766
        %v1809 = vunpack.c.l.b16 %v1767
        %v1810 = vunpack.c.h.b16 %v1767
        %v1811 = vunpack.c.l.b16 %v1768
        %v1812 = vunpack.c.h.b16 %v1768
        %v1813 = vunpack.c.l.b16 %v1769
        %v1814 = vunpack.c.h.b16 %v1769
        %v1815 = vunpack.c.l.b16 %v1770
        %v1816 = vunpack.c.h.b16 %v1770
        %v1817 = vunpack.c.l.b16 %v1771
        %v1818 = vunpack.c.h.b16 %v1771
        %v1819 = vunpack.c.l.b16 %v1772
        %v1820 = vunpack.c.h.b16 %v1772
        %v1821 = vpack.c.b16 %v1789, %v1789
        %v1822 = vpack.c.b16 %v1790, %v1790
        %v1823 = vpack.c.b16 %v1791, %v1791
        %v1824 = vpack.c.b16 %v1792, %v1792
        %v1825 = vpack.c.b16 %v1793, %v1793
        %v1826 = vpack.c.b16 %v1794, %v1794
        %v1827 = vpack.c.b16 %v1795, %v1795
        %v1828 = vpack.c.b16 %v1796, %v1796
        %v1829 = vpack.c.b16 %v1797, %v1797
        %v1830 = vpack.c.b16 %v1798, %v1798
        %v1831 = vpack.c.b16 %v1799, %v1799
        %v1832 = vpack.c.b16 %v1800, %v1800
        %v1833 = vpack.c.b16 %v1801, %v1801
        %v1834 = vpack.c.b16 %v1802, %v1802
        %v1835 = vpack.c.b16 %v1803, %v1803
        %v1836 = vpack.c.b16 %v1804, %v1804
        %v1837 = vpack.c.b16 %v1805, %v1805
        %v1838 = vpack.c.b16 %v1806, %v1806
        %v1839 = vpack.c.b16 %v1807, %v1807
        %v1840 = vpack.c.b16 %v1808, %v1808
        %v1841 = vpack.c.b16 %v1809, %v1809
        %v1842 = vpack.c.b16 %v1810, %v1810
        %v1843 = vpack.c.b16 %v1811, %v1811
        %v1844 = vpack.c.b16 %v1812, %v1812
        %v1845 = vpack.c.b16 %v1813, %v1813
        %v1846 = vpack.c.b16 %v1814, %v1814
        %v1847 = vpack.c.b16 %v1815, %v1815
        %v1848 = vpack.c.b16 %v1816, %v1816
        %v1849 = vpack.c.b16 %v1817, %v1817
        %v1850 = vpack.c.b16 %v1818, %v1818
        %v1851 = vpack.c.b16 %v1819, %v1819
        %v1852 = vpack.c.b16 %v1820, %v1820
        %1885 = vst [vmem:[%s265] sm:$0xf] %v1821
        %1886 = vst [vmem:[%s265 + $0x4] sm:$0xf] %v1822
        %1887 = vst [vmem:[%s265 + $0x8] sm:$0xf] %v1823
        %1888 = vst [vmem:[%s265 + $0xc] sm:$0xf] %v1824
        %1889 = vst [vmem:[%s265 + $0x10] sm:$0xf] %v1825
        %1890 = vst [vmem:[%s265 + $0x14] sm:$0xf] %v1826
        %1891 = vst [vmem:[%s265 + $0x18] sm:$0xf] %v1827
        %1892 = vst [vmem:[%s265 + $0x1c] sm:$0xf] %v1828
        %1893 = vst [vmem:[%s265 + $0x20] sm:$0xf] %v1829
        %1894 = vst [vmem:[%s265 + $0x24] sm:$0xf] %v1830
        %1895 = vst [vmem:[%s265 + $0x28] sm:$0xf] %v1831
        %1896 = vst [vmem:[%s265 + $0x2c] sm:$0xf] %v1832
        %1897 = vst [vmem:[%s265 + $0x30] sm:$0xf] %v1833
        %1898 = vst [vmem:[%s265 + $0x34] sm:$0xf] %v1834
        %1899 = vst [vmem:[%s265 + $0x38] sm:$0xf] %v1835
        %1900 = vst [vmem:[%s265 + $0x3c] sm:$0xf] %v1836
        %1901 = vst [vmem:[%s265 + $0x40] sm:$0xf] %v1837
        %1902 = vst [vmem:[%s265 + $0x44] sm:$0xf] %v1838
        %1903 = vst [vmem:[%s265 + $0x48] sm:$0xf] %v1839
        %1904 = vst [vmem:[%s265 + $0x4c] sm:$0xf] %v1840
        %1905 = vst [vmem:[%s265 + $0x50] sm:$0xf] %v1841
        %1906 = vst [vmem:[%s265 + $0x54] sm:$0xf] %v1842
        %1907 = vst [vmem:[%s265 + $0x58] sm:$0xf] %v1843
        %1908 = vst [vmem:[%s265 + $0x5c] sm:$0xf] %v1844
        %1909 = vst [vmem:[%s265 + $0x60] sm:$0xf] %v1845
        %1910 = vst [vmem:[%s265 + $0x64] sm:$0xf] %v1846
        %1911 = vst [vmem:[%s265 + $0x68] sm:$0xf] %v1847
        %1912 = vst [vmem:[%s265 + $0x6c] sm:$0xf] %v1848
        %1913 = vst [vmem:[%s265 + $0x70] sm:$0xf] %v1849
        %1914 = vst [vmem:[%s265 + $0x74] sm:$0xf] %v1850
        %1915 = vst [vmem:[%s265 + $0x78] sm:$0xf] %v1851
        %1916 = vst [vmem:[%s265 + $0x7c] sm:$0xf] %v1852
        %v1917 = vpack.c.bf16 %v1573, %v1569
        %v1918 = vpack.c.bf16 %v1583, %v1579
        %v1919 = vpack.c.bf16 %v1593, %v1589
        %v1920 = vpack.c.bf16 %v1603, %v1599
        %v1921 = vpack.c.bf16 %v1613, %v1609
        %v1922 = vpack.c.bf16 %v1623, %v1619
        %v1923 = vpack.c.bf16 %v1633, %v1629
        %v1924 = vpack.c.bf16 %v1643, %v1639
        %v1925 = vpack.c.bf16 %v1653, %v1649
        %v1926 = vpack.c.bf16 %v1663, %v1659
        %v1927 = vpack.c.bf16 %v1673, %v1669
        %v1928 = vpack.c.bf16 %v1683, %v1679
        %v1929 = vpack.c.bf16 %v1693, %v1689
        %v1930 = vpack.c.bf16 %v1703, %v1699
        %v1931 = vpack.c.bf16 %v1713, %v1709
        %v1932 = vpack.c.bf16 %v1723, %v1719
        %v1949 = vunpack.c.l.b16 %v1917
        %v1950 = vunpack.c.h.b16 %v1917
        %v1951 = vunpack.c.l.b16 %v1918
        %v1952 = vunpack.c.h.b16 %v1918
        %v1953 = vunpack.c.l.b16 %v1919
        %v1954 = vunpack.c.h.b16 %v1919
        %v1955 = vunpack.c.l.b16 %v1920
        %v1956 = vunpack.c.h.b16 %v1920
        %v1957 = vunpack.c.l.b16 %v1921
        %v1958 = vunpack.c.h.b16 %v1921
        %v1959 = vunpack.c.l.b16 %v1922
        %v1960 = vunpack.c.h.b16 %v1922
        %v1961 = vunpack.c.l.b16 %v1923
        %v1962 = vunpack.c.h.b16 %v1923
        %v1963 = vunpack.c.l.b16 %v1924
        %v1964 = vunpack.c.h.b16 %v1924
        %v1965 = vunpack.c.l.b16 %v1925
        %v1966 = vunpack.c.h.b16 %v1925
        %v1967 = vunpack.c.l.b16 %v1926
        %v1968 = vunpack.c.h.b16 %v1926
        %v1969 = vunpack.c.l.b16 %v1927
        %v1970 = vunpack.c.h.b16 %v1927
        %v1971 = vunpack.c.l.b16 %v1928
        %v1972 = vunpack.c.h.b16 %v1928
        %v1973 = vunpack.c.l.b16 %v1929
        %v1974 = vunpack.c.h.b16 %v1929
        %v1975 = vunpack.c.l.b16 %v1930
        %v1976 = vunpack.c.h.b16 %v1930
        %v1977 = vunpack.c.l.b16 %v1931
        %v1978 = vunpack.c.h.b16 %v1931
        %v1979 = vunpack.c.l.b16 %v1932
        %v1980 = vunpack.c.h.b16 %v1932
        %v1981 = vpack.c.b16 %v1949, %v1949
        %v1982 = vpack.c.b16 %v1950, %v1950
        %v1983 = vpack.c.b16 %v1951, %v1951
        %v1984 = vpack.c.b16 %v1952, %v1952
        %v1985 = vpack.c.b16 %v1953, %v1953
        %v1986 = vpack.c.b16 %v1954, %v1954
        %v1987 = vpack.c.b16 %v1955, %v1955
        %v1988 = vpack.c.b16 %v1956, %v1956
        %v1989 = vpack.c.b16 %v1957, %v1957
        %v1990 = vpack.c.b16 %v1958, %v1958
        %v1991 = vpack.c.b16 %v1959, %v1959
        %v1992 = vpack.c.b16 %v1960, %v1960
        %v1993 = vpack.c.b16 %v1961, %v1961
        %v1994 = vpack.c.b16 %v1962, %v1962
        %v1995 = vpack.c.b16 %v1963, %v1963
        %v1996 = vpack.c.b16 %v1964, %v1964
        %v1997 = vpack.c.b16 %v1965, %v1965
        %v1998 = vpack.c.b16 %v1966, %v1966
        %v1999 = vpack.c.b16 %v1967, %v1967
        %v2000 = vpack.c.b16 %v1968, %v1968
        %v2001 = vpack.c.b16 %v1969, %v1969
        %v2002 = vpack.c.b16 %v1970, %v1970
        %v2003 = vpack.c.b16 %v1971, %v1971
        %v2004 = vpack.c.b16 %v1972, %v1972
        %v2005 = vpack.c.b16 %v1973, %v1973
        %v2006 = vpack.c.b16 %v1974, %v1974
        %v2007 = vpack.c.b16 %v1975, %v1975
        %v2008 = vpack.c.b16 %v1976, %v1976
        %v2009 = vpack.c.b16 %v1977, %v1977
        %v2010 = vpack.c.b16 %v1978, %v1978
        %v2011 = vpack.c.b16 %v1979, %v1979
        %v2012 = vpack.c.b16 %v1980, %v1980
        %2045 = vst [vmem:[%s271] sm:$0xf] %v1981
        %2046 = vst [vmem:[%s271 + $0x4] sm:$0xf] %v1982
        %2047 = vst [vmem:[%s271 + $0x8] sm:$0xf] %v1983
        %2048 = vst [vmem:[%s271 + $0xc] sm:$0xf] %v1984
        %2049 = vst [vmem:[%s271 + $0x10] sm:$0xf] %v1985
        %2050 = vst [vmem:[%s271 + $0x14] sm:$0xf] %v1986
        %2051 = vst [vmem:[%s271 + $0x18] sm:$0xf] %v1987
        %2052 = vst [vmem:[%s271 + $0x1c] sm:$0xf] %v1988
        %2053 = vst [vmem:[%s271 + $0x20] sm:$0xf] %v1989
        %2054 = vst [vmem:[%s271 + $0x24] sm:$0xf] %v1990
        %2055 = vst [vmem:[%s271 + $0x28] sm:$0xf] %v1991
        %2056 = vst [vmem:[%s271 + $0x2c] sm:$0xf] %v1992
        %2057 = vst [vmem:[%s271 + $0x30] sm:$0xf] %v1993
        %2058 = vst [vmem:[%s271 + $0x34] sm:$0xf] %v1994
        %2059 = vst [vmem:[%s271 + $0x38] sm:$0xf] %v1995
        %2060 = vst [vmem:[%s271 + $0x3c] sm:$0xf] %v1996
        %2061 = vst [vmem:[%s271 + $0x40] sm:$0xf] %v1997
        %2062 = vst [vmem:[%s271 + $0x44] sm:$0xf] %v1998
        %2063 = vst [vmem:[%s271 + $0x48] sm:$0xf] %v1999
        %2064 = vst [vmem:[%s271 + $0x4c] sm:$0xf] %v2000
        %2065 = vst [vmem:[%s271 + $0x50] sm:$0xf] %v2001
        %2066 = vst [vmem:[%s271 + $0x54] sm:$0xf] %v2002
        %2067 = vst [vmem:[%s271 + $0x58] sm:$0xf] %v2003
        %2068 = vst [vmem:[%s271 + $0x5c] sm:$0xf] %v2004
        %2069 = vst [vmem:[%s271 + $0x60] sm:$0xf] %v2005
        %2070 = vst [vmem:[%s271 + $0x64] sm:$0xf] %v2006
        %2071 = vst [vmem:[%s271 + $0x68] sm:$0xf] %v2007
        %2072 = vst [vmem:[%s271 + $0x6c] sm:$0xf] %v2008
        %2073 = vst [vmem:[%s271 + $0x70] sm:$0xf] %v2009
        %2074 = vst [vmem:[%s271 + $0x74] sm:$0xf] %v2010
        %2075 = vst [vmem:[%s271 + $0x78] sm:$0xf] %v2011
        %2076 = vst [vmem:[%s271 + $0x7c] sm:$0xf] %v2012
      $region44: #{conad_forward.7} parent=35 // pred_fallthru
        _
      %s2077 = smul.u32 32, %s21
      %p2078 = scmp.lt.s32.totalorder %s2077, 63
      %s2079 = scalar_select %p2078, %s2077, 63
      %s2080 = smul.addr %s2079, 4
      %s2081 = scalar_lea.vmem %s4, %s2080
      %s2082 = smul.u32 32, %s21
      %p2083 = scmp.lt.s32.totalorder %s2082, 63
      %s2084 = scalar_select %p2083, %s2082, 63
      %s2085 = smul.addr %s2084, 4
      %s2086 = scalar_lea.vmem %s5, %s2085
      // Predicated region
      $region45: #{conad_forward.7} parent=35 // pred_check
        %p2087 = pneg %p138
      $region46: #{conad_forward.7} parent=35 // pred_check_branch
        %2089 = sbr.rel (%p2087) target = $region48
      $region47: #{conad_forward.7} parent=35 // pred_region
        %s2090 = smul.u32 32, %s21
      $region48: #{conad_forward.7} parent=35 // pred_fallthru
        _
      // Predicated region
      $region49: #{conad_forward.7} parent=35 // pred_check
        %p2091 = pneg %p164
      $region50: #{conad_forward.7} parent=35 // pred_check_branch
        %2093 = sbr.rel (%p2091) target = $region52
      $region51: #{conad_forward.7} parent=35 // pred_region
        %s2094 = smul.u32 32, %s21
      $region52: #{conad_forward.7} parent=35 // pred_fallthru
        _
    $region36: #{conad_forward.7} parent=5 // pred_fallthru
      _
    %p2095 = scmp.le.s32.totalorder 2, %s12
    // Predicated region
    $region53: #{conad_forward.7} parent=5 // pred_check
      %p2096 = pneg %p2095
    $region54: #{conad_forward.7} parent=5 // pred_check_branch
      %2098 = sbr.rel (%p2096) target = $region56
    $region55: #{conad_forward.7} parent=5 // pred_region
      %s2099 = ssub.s32 %s12, 2
      // Predicated region
      $region57: #{conad_forward.7} parent=55 // pred_check
        %p2100 = pneg %p144
      $region58: #{conad_forward.7} parent=55 // pred_check_branch
        %2102 = sbr.rel (%p2100) target = $region60
      $region59: #{conad_forward.7} parent=55 // pred_region
        %s2103 = smul.u32 32, %s23
        %p2104 = scmp.lt.s32.totalorder %s2103, 63
        %s2105 = scalar_select %p2104, %s2103, 63
        %s2106 = smul.addr %s2105, 4
        %s2107 = scalar_lea.vmem %s4, %s2106
      $region60: #{conad_forward.7} parent=55 // pred_fallthru
        _
      // Predicated region
      $region61: #{conad_forward.7} parent=55 // pred_check
        %p2108 = pneg %p170
      $region62: #{conad_forward.7} parent=55 // pred_check_branch
        %2110 = sbr.rel (%p2108) target = $region64
      $region63: #{conad_forward.7} parent=55 // pred_region
        %s2111 = smul.u32 32, %s23
        %p2112 = scmp.lt.s32.totalorder %s2111, 63
        %s2113 = scalar_select %p2112, %s2111, 63
        %s2114 = smul.addr %s2113, 4
        %s2115 = scalar_lea.vmem %s5, %s2114
      $region64: #{conad_forward.7} parent=55 // pred_fallthru
        _
    $region56: #{conad_forward.7} parent=5 // pred_fallthru
      _
  $region6: #{conad_forward.7} parent=0 // loop_footer
    %s16 = sadd.s32 1, %s12
  $region7: #{conad_forward.7} parent=0 // loop_footer_branch
    %11 = sbr.rel target = $region3
  $region8: #{conad_forward.7} parent=0 // loop_exit
    _

// kernel: conad_forward.9
$region0: #{conad_forward.9}
  #allocation0 [shape = 'u32[]', space=smem, size = 0x4, offset = 0x4, fixed_abs, tag = 'smem constant byte address 0x4 - core index']
  #allocation1 [shape = 'u32[144,128]{1,0:T(1,128)}', space=vmem, size = 0x12000, scoped, tag = 'internal scratch']
  %s0 = inlined_call_operand.vmem [shape: bf16[512,128], index: 0, kind: input, shape index: {}, may-alias: {0,1}]
  %s1 = inlined_call_operand.vmem [shape: bf16[512,128], index: 1, kind: input, shape index: {}, may-alias: {0,1}]
  %s2 = inlined_call_operand.vmem [shape: f32[512,512], index: 2, kind: output, shape index: {}]
  %s3 = sld [smem:[#allocation0]]
  $region60: #{conad_forward.9} parent=0
    _
  %s5 = ssub.s32 1, %s3
  %s6 = scalar_select 0, %s5, %s3
  $region1: #{conad_forward.9} parent=0
    #allocation2 [shape = 'u8[524288]{0}', space=vmem, size = 0x80000, scoped, tag = 'output window, operand 0']
    loop: start=0, step=1, limit=6
    $region2: #{conad_forward.9} parent=1 // loop_pre_header
      _
    $region3: #{conad_forward.9} parent=1 // loop_header
      %s8 = sphi 0, %s12
      %p9 = scmp.ge.s32.totalorder %s8, 6
      %s15 = sphi 0, %s27
      %s16 = sphi 0, %s23
      %s17 = sphi 0, %s15
      %s18 = sphi 0, %s16
      %s19 = sphi 0, %s17
      %s20 = sphi 0, %s18
      %s30 = sphi 0, %s32
      %s33 = sphi 0, %s30
      %s34 = sphi 0, %s33
      %s50 = sphi 0, %s34
      %s56 = sphi 0, %s58
      %s59 = sphi 0, %s56
      %s60 = sphi 0, %s59
      %s76 = sphi 0, %s60
      %s84 = sphi 0, %s86
      %s87 = sphi 0, %s84
      %s88 = sphi 0, %s87
      %s104 = sphi 0, %s88
    $region4: #{conad_forward.9} parent=1 // loop_header_branch
      %11 = sbr.rel (%p9) target = $region8
    $region5: #{conad_forward.9} parent=1 // loop_body
      %s13 = ssub.s32 %s8, 1
      %s14 = ssub.s32 %s8, 2
      %s21 = sadd.s32 1, %s16
      %p22 = scmp.ge.s32.totalorder %s21, 2
      %s23 = scalar_select %p22, 0, %s21
      %s24 = sadd.s32 1, %s15
      %s25 = scalar_select %p22, %s24, %s15
      %p26 = scmp.ge.s32.totalorder %s25, 2
      %s27 = scalar_select %p26, 0, %s25
      %s28 = ssub.s32 %s15, %s27
      %p29 = scmp.eq.s32.totalorder %s28, 0
      %s31 = sadd.s32 %s30, 1
      %s32 = scalar_select %p29, %s30, %s31
      %p35 = pneg %p29
      %p36 = scmp.eq.s32.totalorder %s8, 3
      %p37 = por %p35, %p36
      %p38 = scmp.ne.s32.totalorder %s30, %s33
      %p39 = scmp.eq.s32.totalorder %s8, 0
      %p40 = por %p38, %p39
      %p41 = scmp.ne.s32.totalorder %s30, %s33
      %p42 = scmp.eq.s32.totalorder %s13, 3
      %p43 = por %p41, %p42
      %p44 = scmp.ne.s32.totalorder %s33, %s34
      %p45 = scmp.eq.s32.totalorder %s13, 0
      %p46 = por %p44, %p45
      %p47 = scmp.ne.s32.totalorder %s33, %s34
      %p48 = scmp.eq.s32.totalorder %s14, 3
      %p49 = por %p47, %p48
      %p51 = scmp.ne.s32.totalorder %s34, %s50
      %p52 = scmp.eq.s32.totalorder %s14, 0
      %p53 = por %p51, %p52
      %s54 = ssub.s32 %s16, %s23
      %p55 = scmp.eq.s32.totalorder %s54, 0
      %s57 = sadd.s32 %s56, 1
      %s58 = scalar_select %p55, %s56, %s57
      %p61 = pneg %p55
      %p62 = scmp.eq.s32.totalorder %s8, 3
      %p63 = por %p61, %p62
      %p64 = scmp.ne.s32.totalorder %s56, %s59
      %p65 = scmp.eq.s32.totalorder %s8, 0
      %p66 = por %p64, %p65
      %p67 = scmp.ne.s32.totalorder %s56, %s59
      %p68 = scmp.eq.s32.totalorder %s13, 3
      %p69 = por %p67, %p68
      %p70 = scmp.ne.s32.totalorder %s59, %s60
      %p71 = scmp.eq.s32.totalorder %s13, 0
      %p72 = por %p70, %p71
      %p73 = scmp.ne.s32.totalorder %s59, %s60
      %p74 = scmp.eq.s32.totalorder %s14, 3
      %p75 = por %p73, %p74
      %p77 = scmp.ne.s32.totalorder %s60, %s76
      %p78 = scmp.eq.s32.totalorder %s14, 0
      %p79 = por %p77, %p78
      %s80 = ssub.s32 %s15, %s27
      %s81 = ssub.s32 %s16, %s23
      %s82 = sor.u32 %s80, %s81
      %p83 = scmp.eq.s32.totalorder %s82, 0
      %s85 = sadd.s32 %s84, 1
      %s86 = scalar_select %p83, %s84, %s85
      %p89 = pneg %p83
      %p90 = scmp.eq.s32.totalorder %s8, 3
      %p91 = por %p89, %p90
      %p92 = scmp.ne.s32.totalorder %s84, %s87
      %p93 = scmp.eq.s32.totalorder %s8, 0
      %p94 = por %p92, %p93
      %p95 = scmp.ne.s32.totalorder %s84, %s87
      %p96 = scmp.eq.s32.totalorder %s13, 3
      %p97 = por %p95, %p96
      %p98 = scmp.ne.s32.totalorder %s87, %s88
      %p99 = scmp.eq.s32.totalorder %s13, 0
      %p100 = por %p98, %p99
      %p101 = scmp.ne.s32.totalorder %s87, %s88
      %p102 = scmp.eq.s32.totalorder %s14, 3
      %p103 = por %p101, %p102
      %p105 = scmp.ne.s32.totalorder %s88, %s104
      %p106 = scmp.eq.s32.totalorder %s14, 0
      %p107 = por %p105, %p106
      %p108 = scmp.le.s32.totalorder 1, %s8
      %p109 = scmp.lt.s32.totalorder %s8, 5
      %p110 = pnand %p108, %p109
      %p111 = pneg %p110
      // Predicated region
      $region9: #{conad_forward.9} parent=5 // pred_check
        _
      $region10: #{conad_forward.9} parent=5 // pred_check_branch
        %113 = sbr.rel (%p110) target = $region12
      $region11: #{conad_forward.9} parent=5 // pred_region
        %s114 = ssub.s32 %s8, 1
      $region12: #{conad_forward.9} parent=5 // pred_fallthru
        _
      %p115 = scmp.lt.s32.totalorder %s8, 4
      // Predicated region
      $region13: #{conad_forward.9} parent=5 // pred_check
        %p116 = pneg %p115
      $region14: #{conad_forward.9} parent=5 // pred_check_branch
        %118 = sbr.rel (%p116) target = $region16
      $region15: #{conad_forward.9} parent=5 // pred_region
        // Predicated region
        $region17: #{conad_forward.9} parent=15 // pred_check
          %p119 = pneg %p40
        $region18: #{conad_forward.9} parent=15 // pred_check_branch
          %121 = sbr.rel (%p119) target = $region20
        $region19: #{conad_forward.9} parent=15 // pred_region
          %s122 = smul.u32 32, %s15
          %p123 = scmp.lt.s32.totalorder %s122, 63
          %s124 = scalar_select %p123, %s122, 63
          %s125 = smul.addr %s124, 4
          %s126 = scalar_lea.vmem %s0, %s125
          %s127 = smul.u32 32, %s15
        $region20: #{conad_forward.9} parent=15 // pred_fallthru
          _
        // Predicated region
        $region21: #{conad_forward.9} parent=15 // pred_check
          %p128 = pneg %p66
        $region22: #{conad_forward.9} parent=15 // pred_check_branch
          %130 = sbr.rel (%p128) target = $region24
        $region23: #{conad_forward.9} parent=15 // pred_region
          %s131 = smul.u32 32, %s16
          %p132 = scmp.lt.s32.totalorder %s131, 63
          %s133 = scalar_select %p132, %s131, 63
          %s134 = smul.addr %s133, 4
          %s135 = scalar_lea.vmem %s1, %s134
          %s136 = smul.u32 32, %s16
        $region24: #{conad_forward.9} parent=15 // pred_fallthru
          _
      $region16: #{conad_forward.9} parent=5 // pred_fallthru
        _
      %p137 = scmp.le.s32.totalorder 1, %s8
      %p138 = scmp.lt.s32.totalorder %s8, 5
      %p139 = pnand %p137, %p138
      %p140 = pneg %p139
      // Predicated region
      $region25: #{conad_forward.9} parent=5 // pred_check
        _
      $region26: #{conad_forward.9} parent=5 // pred_check_branch
        %142 = sbr.rel (%p139) target = $region28
      $region27: #{conad_forward.9} parent=5 // pred_region
        %s143 = ssub.s32 %s8, 1
        %s144 = smul.u32 32, %s17
        %p145 = scmp.lt.s32.totalorder %s144, 63
        %s146 = scalar_select %p145, %s144, 63
        %s147 = smul.addr %s146, 4
        %s148 = scalar_lea.vmem %s0, %s147
        %p149 = pneg %p46
        %p150 = pneg %p43
        %s151 = smul.u32 32, %s18
        %p152 = scmp.lt.s32.totalorder %s151, 63
        %s153 = scalar_select %p152, %s151, 63
        %s154 = smul.addr %s153, 4
        %s155 = scalar_lea.vmem %s1, %s154
        %p156 = pneg %p72
        %p157 = pneg %p69
        %p158 = pneg %p100
        %p159 = pneg %p97
        %s160 = sand.u32 %s87, 1
        %s161 = sand.u32 %s87, 1
        %s162 = smul.addr %s161, 512
        %s163 = scalar_lea.vmem [#allocation2], %s162
        %s164 = smul.u32 32, %s17
        %p165 = scmp.lt.s32.totalorder %s164, 63
        %s166 = scalar_select %p165, %s164, 63
        %s167 = smul.addr %s166, 4
        %s168 = scalar_lea.vmem %s0, %s167
        %s169 = smul.u32 32, %s17
        %s170 = smul.u32 32, %s18
        %p171 = scmp.lt.s32.totalorder %s170, 63
        %s172 = scalar_select %p171, %s170, 63
        %s173 = smul.addr %s172, 4
        %s174 = scalar_lea.vmem %s1, %s173
        %s175 = smul.u32 32, %s18
        %s176 = smul.u32 32, %s17
        %s177 = smul.u32 2, %s18
        %v179 = vld [vmem:[%s168] sm:$0xf]
        %v180 = vld [vmem:[%s168 + $0x4] sm:$0xf]
        %v181 = vld [vmem:[%s168 + $0x8] sm:$0xf]
        %v182 = vld [vmem:[%s168 + $0xc] sm:$0xf]
        %v183 = vld [vmem:[%s168 + $0x10] sm:$0xf]
        %v184 = vld [vmem:[%s168 + $0x14] sm:$0xf]
        %v185 = vld [vmem:[%s168 + $0x18] sm:$0xf]
        %v186 = vld [vmem:[%s168 + $0x1c] sm:$0xf]
        %v187 = vld [vmem:[%s168 + $0x20] sm:$0xf]
        %v188 = vld [vmem:[%s168 + $0x24] sm:$0xf]
        %v189 = vld [vmem:[%s168 + $0x28] sm:$0xf]
        %v190 = vld [vmem:[%s168 + $0x2c] sm:$0xf]
        %v191 = vld [vmem:[%s168 + $0x30] sm:$0xf]
        %v192 = vld [vmem:[%s168 + $0x34] sm:$0xf]
        %v193 = vld [vmem:[%s168 + $0x38] sm:$0xf]
        %v194 = vld [vmem:[%s168 + $0x3c] sm:$0xf]
        %v195 = vld [vmem:[%s168 + $0x40] sm:$0xf]
        %v196 = vld [vmem:[%s168 + $0x44] sm:$0xf]
        %v197 = vld [vmem:[%s168 + $0x48] sm:$0xf]
        %v198 = vld [vmem:[%s168 + $0x4c] sm:$0xf]
        %v199 = vld [vmem:[%s168 + $0x50] sm:$0xf]
        %v200 = vld [vmem:[%s168 + $0x54] sm:$0xf]
        %v201 = vld [vmem:[%s168 + $0x58] sm:$0xf]
        %v202 = vld [vmem:[%s168 + $0x5c] sm:$0xf]
        %v203 = vld [vmem:[%s168 + $0x60] sm:$0xf]
        %v204 = vld [vmem:[%s168 + $0x64] sm:$0xf]
        %v205 = vld [vmem:[%s168 + $0x68] sm:$0xf]
        %v206 = vld [vmem:[%s168 + $0x6c] sm:$0xf]
        %v207 = vld [vmem:[%s168 + $0x70] sm:$0xf]
        %v208 = vld [vmem:[%s168 + $0x74] sm:$0xf]
        %v209 = vld [vmem:[%s168 + $0x78] sm:$0xf]
        %v210 = vld [vmem:[%s168 + $0x7c] sm:$0xf]
        %v211 = vld [vmem:[%s174] sm:$0xf]
        %v212 = vld [vmem:[%s174 + $0x4] sm:$0xf]
        %v213 = vld [vmem:[%s174 + $0x8] sm:$0xf]
        %v214 = vld [vmem:[%s174 + $0xc] sm:$0xf]
        %v215 = vld [vmem:[%s174 + $0x10] sm:$0xf]
        %v216 = vld [vmem:[%s174 + $0x14] sm:$0xf]
        %v217 = vld [vmem:[%s174 + $0x18] sm:$0xf]
        %v218 = vld [vmem:[%s174 + $0x1c] sm:$0xf]
        %v219 = vld [vmem:[%s174 + $0x20] sm:$0xf]
        %v220 = vld [vmem:[%s174 + $0x24] sm:$0xf]
        %v221 = vld [vmem:[%s174 + $0x28] sm:$0xf]
        %v222 = vld [vmem:[%s174 + $0x2c] sm:$0xf]
        %v223 = vld [vmem:[%s174 + $0x30] sm:$0xf]
        %v224 = vld [vmem:[%s174 + $0x34] sm:$0xf]
        %v225 = vld [vmem:[%s174 + $0x38] sm:$0xf]
        %v226 = vld [vmem:[%s174 + $0x3c] sm:$0xf]
        %v227 = vld [vmem:[%s174 + $0x40] sm:$0xf]
        %v228 = vld [vmem:[%s174 + $0x44] sm:$0xf]
        %v229 = vld [vmem:[%s174 + $0x48] sm:$0xf]
        %v230 = vld [vmem:[%s174 + $0x4c] sm:$0xf]
        %v231 = vld [vmem:[%s174 + $0x50] sm:$0xf]
        %v232 = vld [vmem:[%s174 + $0x54] sm:$0xf]
        %v233 = vld [vmem:[%s174 + $0x58] sm:$0xf]
        %v234 = vld [vmem:[%s174 + $0x5c] sm:$0xf]
        %v235 = vld [vmem:[%s174 + $0x60] sm:$0xf]
        %v236 = vld [vmem:[%s174 + $0x64] sm:$0xf]
        %v237 = vld [vmem:[%s174 + $0x68] sm:$0xf]
        %v238 = vld [vmem:[%s174 + $0x6c] sm:$0xf]
        %v239 = vld [vmem:[%s174 + $0x70] sm:$0xf]
        %v240 = vld [vmem:[%s174 + $0x74] sm:$0xf]
        %v241 = vld [vmem:[%s174 + $0x78] sm:$0xf]
        %v242 = vld [vmem:[%s174 + $0x7c] sm:$0xf]
        %v275 = vunpack.c.l.b16 %v179
        %v276 = vunpack.c.l.b16 %v180
        %v277 = vunpack.c.l.b16 %v181
        %v278 = vunpack.c.l.b16 %v182
        %v279 = vunpack.c.l.b16 %v183
        %v280 = vunpack.c.l.b16 %v184
        %v281 = vunpack.c.l.b16 %v185
        %v282 = vunpack.c.l.b16 %v186
        %v283 = vunpack.c.l.b16 %v187
        %v284 = vunpack.c.l.b16 %v188
        %v285 = vunpack.c.l.b16 %v189
        %v286 = vunpack.c.l.b16 %v190
        %v287 = vunpack.c.l.b16 %v191
        %v288 = vunpack.c.l.b16 %v192
        %v289 = vunpack.c.l.b16 %v193
        %v290 = vunpack.c.l.b16 %v194
        %v291 = vunpack.c.l.b16 %v195
        %v292 = vunpack.c.l.b16 %v196
        %v293 = vunpack.c.l.b16 %v197
        %v294 = vunpack.c.l.b16 %v198
        %v295 = vunpack.c.l.b16 %v199
        %v296 = vunpack.c.l.b16 %v200
        %v297 = vunpack.c.l.b16 %v201
        %v298 = vunpack.c.l.b16 %v202
        %v299 = vunpack.c.l.b16 %v203
        %v300 = vunpack.c.l.b16 %v204
        %v301 = vunpack.c.l.b16 %v205
        %v302 = vunpack.c.l.b16 %v206
        %v303 = vunpack.c.l.b16 %v207
        %v304 = vunpack.c.l.b16 %v208
        %v305 = vunpack.c.l.b16 %v209
        %v306 = vunpack.c.l.b16 %v210
        %v307 = vpack.c.b16 %v276, %v275
        %v308 = vpack.c.b16 %v278, %v277
        %v309 = vpack.c.b16 %v280, %v279
        %v310 = vpack.c.b16 %v282, %v281
        %v311 = vpack.c.b16 %v284, %v283
        %v312 = vpack.c.b16 %v286, %v285
        %v313 = vpack.c.b16 %v288, %v287
        %v314 = vpack.c.b16 %v290, %v289
        %v315 = vpack.c.b16 %v292, %v291
        %v316 = vpack.c.b16 %v294, %v293
        %v317 = vpack.c.b16 %v296, %v295
        %v318 = vpack.c.b16 %v298, %v297
        %v319 = vpack.c.b16 %v300, %v299
        %v320 = vpack.c.b16 %v302, %v301
        %v321 = vpack.c.b16 %v304, %v303
        %v322 = vpack.c.b16 %v306, %v305
        %v371 = vunpack.c.l.b16 %v211
        %v372 = vunpack.c.l.b16 %v212
        %v373 = vunpack.c.l.b16 %v213
        %v374 = vunpack.c.l.b16 %v214
        %v375 = vunpack.c.l.b16 %v215
        %v376 = vunpack.c.l.b16 %v216
        %v377 = vunpack.c.l.b16 %v217
        %v378 = vunpack.c.l.b16 %v218
        %v379 = vunpack.c.l.b16 %v219
        %v380 = vunpack.c.l.b16 %v220
        %v381 = vunpack.c.l.b16 %v221
        %v382 = vunpack.c.l.b16 %v222
        %v383 = vunpack.c.l.b16 %v223
        %v384 = vunpack.c.l.b16 %v224
        %v385 = vunpack.c.l.b16 %v225
        %v386 = vunpack.c.l.b16 %v226
        %v387 = vunpack.c.l.b16 %v227
        %v388 = vunpack.c.l.b16 %v228
        %v389 = vunpack.c.l.b16 %v229
        %v390 = vunpack.c.l.b16 %v230
        %v391 = vunpack.c.l.b16 %v231
        %v392 = vunpack.c.l.b16 %v232
        %v393 = vunpack.c.l.b16 %v233
        %v394 = vunpack.c.l.b16 %v234
        %v395 = vunpack.c.l.b16 %v235
        %v396 = vunpack.c.l.b16 %v236
        %v397 = vunpack.c.l.b16 %v237
        %v398 = vunpack.c.l.b16 %v238
        %v399 = vunpack.c.l.b16 %v239
        %v400 = vunpack.c.l.b16 %v240
        %v401 = vunpack.c.l.b16 %v241
        %v402 = vunpack.c.l.b16 %v242
        %v403 = vpack.c.b16 %v372, %v371
        %v404 = vpack.c.b16 %v374, %v373
        %v405 = vpack.c.b16 %v376, %v375
        %v406 = vpack.c.b16 %v378, %v377
        %v407 = vpack.c.b16 %v380, %v379
        %v408 = vpack.c.b16 %v382, %v381
        %v409 = vpack.c.b16 %v384, %v383
        %v410 = vpack.c.b16 %v386, %v385
        %v411 = vpack.c.b16 %v388, %v387
        %v412 = vpack.c.b16 %v390, %v389
        %v413 = vpack.c.b16 %v392, %v391
        %v414 = vpack.c.b16 %v394, %v393
        %v415 = vpack.c.b16 %v396, %v395
        %v416 = vpack.c.b16 %v398, %v397
        %v417 = vpack.c.b16 %v400, %v399
        %v418 = vpack.c.b16 %v402, %v401
        %435 = vmatprep.subr.bf16.mxu0 0
        %436 = vmatpush1.bf16.xpose.msra.mxu0 %v403
        %437 = vmatprep.subr.bf16.mxu0 0
        %438 = vmatpush1.bf16.xpose.msra.mxu0 %v404
        %439 = vmatprep.subr.bf16.mxu0 0
        %440 = vmatpush1.bf16.xpose.msra.mxu0 %v405
        %441 = vmatprep.subr.bf16.mxu0 0
        %442 = vmatpush1.bf16.xpose.msra.mxu0 %v406
        %443 = vmatprep.subr.bf16.mxu0 0
        %444 = vmatpush1.bf16.xpose.msra.mxu0 %v407
        %445 = vmatprep.subr.bf16.mxu0 0
        %446 = vmatpush1.bf16.xpose.msra.mxu0 %v408
        %447 = vmatprep.subr.bf16.mxu0 0
        %448 = vmatpush1.bf16.xpose.msra.mxu0 %v409
        %449 = vmatprep.subr.bf16.mxu0 0
        %450 = vmatpush1.bf16.xpose.msra.mxu0 %v410
        %451 = vmatprep.subr.bf16.mxu0 0
        %452 = vmatpush1.bf16.xpose.msra.mxu0 %v411
        %453 = vmatprep.subr.bf16.mxu0 0
        %454 = vmatpush1.bf16.xpose.msra.mxu0 %v412
        %455 = vmatprep.subr.bf16.mxu0 0
        %456 = vmatpush1.bf16.xpose.msra.mxu0 %v413
        %457 = vmatprep.subr.bf16.mxu0 0
        %458 = vmatpush1.bf16.xpose.msra.mxu0 %v414
        %459 = vmatprep.subr.bf16.mxu0 0
        %460 = vmatpush1.bf16.xpose.msra.mxu0 %v415
        %461 = vmatprep.subr.bf16.mxu0 0
        %462 = vmatpush1.bf16.xpose.msra.mxu0 %v416
        %463 = vmatprep.subr.bf16.mxu0 0
        %464 = vmatpush1.bf16.xpose.msra.mxu0 %v417
        %465 = vmatprep.subr.bf16.mxu0 0
        %466 = vmatpush1.bf16.xpose.msra.mxu0 %v418
        %467 = vmatprep.mubr.bf16.mxu0 0
        %468 = vmatmul.mubr.bf16.gmra.mrb[0].mxu0 %v307
        %v469 = vpop.f32.mrb[0].mxu0
        %v470 = vadd.f32 0.0, %v469
        %v471 = vpop.f32.mrb[0].mxu0
        %v472 = vadd.f32 0.0, %v471
        %v473 = vpop.f32.mrb[0].mxu0
        %v474 = vadd.f32 0.0, %v473
        %v475 = vpop.f32.mrb[0].mxu0
        %v476 = vadd.f32 0.0, %v475
        %477 = vmatprep.mubr.bf16.mxu0 0
        %478 = vmatmul.mubr.bf16.gmra.mrb[0].mxu0 %v308
        %v479 = vpop.f32.mrb[0].mxu0
        %v480 = vadd.f32 0.0, %v479
        %v481 = vpop.f32.mrb[0].mxu0
        %v482 = vadd.f32 0.0, %v481
        %v483 = vpop.f32.mrb[0].mxu0
        %v484 = vadd.f32 0.0, %v483
        %v485 = vpop.f32.mrb[0].mxu0
        %v486 = vadd.f32 0.0, %v485
        %487 = vmatprep.mubr.bf16.mxu0 0
        %488 = vmatmul.mubr.bf16.gmra.mrb[0].mxu0 %v309
        %v489 = vpop.f32.mrb[0].mxu0
        %v490 = vadd.f32 0.0, %v489
        %v491 = vpop.f32.mrb[0].mxu0
        %v492 = vadd.f32 0.0, %v491
        %v493 = vpop.f32.mrb[0].mxu0
        %v494 = vadd.f32 0.0, %v493
        %v495 = vpop.f32.mrb[0].mxu0
        %v496 = vadd.f32 0.0, %v495
        %497 = vmatprep.mubr.bf16.mxu0 0
        %498 = vmatmul.mubr.bf16.gmra.mrb[0].mxu0 %v310
        %v499 = vpop.f32.mrb[0].mxu0
        %v500 = vadd.f32 0.0, %v499
        %v501 = vpop.f32.mrb[0].mxu0
        %v502 = vadd.f32 0.0, %v501
        %v503 = vpop.f32.mrb[0].mxu0
        %v504 = vadd.f32 0.0, %v503
        %v505 = vpop.f32.mrb[0].mxu0
        %v506 = vadd.f32 0.0, %v505
        %507 = vmatprep.mubr.bf16.mxu0 0
        %508 = vmatmul.mubr.bf16.gmra.mrb[0].mxu0 %v311
        %v509 = vpop.f32.mrb[0].mxu0
        %v510 = vadd.f32 0.0, %v509
        %v511 = vpop.f32.mrb[0].mxu0
        %v512 = vadd.f32 0.0, %v511
        %v513 = vpop.f32.mrb[0].mxu0
        %v514 = vadd.f32 0.0, %v513
        %v515 = vpop.f32.mrb[0].mxu0
        %v516 = vadd.f32 0.0, %v515
        %517 = vmatprep.mubr.bf16.mxu0 0
        %518 = vmatmul.mubr.bf16.gmra.mrb[0].mxu0 %v312
        %v519 = vpop.f32.mrb[0].mxu0
        %v520 = vadd.f32 0.0, %v519
        %v521 = vpop.f32.mrb[0].mxu0
        %v522 = vadd.f32 0.0, %v521
        %v523 = vpop.f32.mrb[0].mxu0
        %v524 = vadd.f32 0.0, %v523
        %v525 = vpop.f32.mrb[0].mxu0
        %v526 = vadd.f32 0.0, %v525
        %527 = vmatprep.mubr.bf16.mxu0 0
        %528 = vmatmul.mubr.bf16.gmra.mrb[0].mxu0 %v313
        %v529 = vpop.f32.mrb[0].mxu0
        %v530 = vadd.f32 0.0, %v529
        %v531 = vpop.f32.mrb[0].mxu0
        %v532 = vadd.f32 0.0, %v531
        %v533 = vpop.f32.mrb[0].mxu0
        %v534 = vadd.f32 0.0, %v533
        %v535 = vpop.f32.mrb[0].mxu0
        %v536 = vadd.f32 0.0, %v535
        %537 = vmatprep.mubr.bf16.mxu0 0
        %538 = vmatmul.mubr.bf16.gmra.mrb[0].mxu0 %v314
        %v539 = vpop.f32.mrb[0].mxu0
        %v540 = vadd.f32 0.0, %v539
        %v541 = vpop.f32.mrb[0].mxu0
        %v542 = vadd.f32 0.0, %v541
        %v543 = vpop.f32.mrb[0].mxu0
        %v544 = vadd.f32 0.0, %v543
        %v545 = vpop.f32.mrb[0].mxu0
        %v546 = vadd.f32 0.0, %v545
        %547 = vmatprep.mubr.bf16.mxu0 0
        %548 = vmatmul.mubr.bf16.gmra.mrb[0].mxu0 %v315
        %v549 = vpop.f32.mrb[0].mxu0
        %v550 = vadd.f32 0.0, %v549
        %v551 = vpop.f32.mrb[0].mxu0
        %v552 = vadd.f32 0.0, %v551
        %v553 = vpop.f32.mrb[0].mxu0
        %v554 = vadd.f32 0.0, %v553
        %v555 = vpop.f32.mrb[0].mxu0
        %v556 = vadd.f32 0.0, %v555
        %557 = vmatprep.mubr.bf16.mxu0 0
        %558 = vmatmul.mubr.bf16.gmra.mrb[0].mxu0 %v316
        %v559 = vpop.f32.mrb[0].mxu0
        %v560 = vadd.f32 0.0, %v559
        %v561 = vpop.f32.mrb[0].mxu0
        %v562 = vadd.f32 0.0, %v561
        %v563 = vpop.f32.mrb[0].mxu0
        %v564 = vadd.f32 0.0, %v563
        %v565 = vpop.f32.mrb[0].mxu0
        %v566 = vadd.f32 0.0, %v565
        %567 = vmatprep.mubr.bf16.mxu0 0
        %568 = vmatmul.mubr.bf16.gmra.mrb[0].mxu0 %v317
        %v569 = vpop.f32.mrb[0].mxu0
        %v570 = vadd.f32 0.0, %v569
        %v571 = vpop.f32.mrb[0].mxu0
        %v572 = vadd.f32 0.0, %v571
        %v573 = vpop.f32.mrb[0].mxu0
        %v574 = vadd.f32 0.0, %v573
        %v575 = vpop.f32.mrb[0].mxu0
        %v576 = vadd.f32 0.0, %v575
        %577 = vmatprep.mubr.bf16.mxu0 0
        %578 = vmatmul.mubr.bf16.gmra.mrb[0].mxu0 %v318
        %v579 = vpop.f32.mrb[0].mxu0
        %v580 = vadd.f32 0.0, %v579
        %v581 = vpop.f32.mrb[0].mxu0
        %v582 = vadd.f32 0.0, %v581
        %v583 = vpop.f32.mrb[0].mxu0
        %v584 = vadd.f32 0.0, %v583
        %v585 = vpop.f32.mrb[0].mxu0
        %v586 = vadd.f32 0.0, %v585
        %587 = vmatprep.mubr.bf16.mxu0 0
        %588 = vmatmul.mubr.bf16.gmra.mrb[0].mxu0 %v319
        %v589 = vpop.f32.mrb[0].mxu0
        %v590 = vadd.f32 0.0, %v589
        %v591 = vpop.f32.mrb[0].mxu0
        %v592 = vadd.f32 0.0, %v591
        %v593 = vpop.f32.mrb[0].mxu0
        %v594 = vadd.f32 0.0, %v593
        %v595 = vpop.f32.mrb[0].mxu0
        %v596 = vadd.f32 0.0, %v595
        %597 = vmatprep.mubr.bf16.mxu0 0
        %598 = vmatmul.mubr.bf16.gmra.mrb[0].mxu0 %v320
        %v599 = vpop.f32.mrb[0].mxu0
        %v600 = vadd.f32 0.0, %v599
        %v601 = vpop.f32.mrb[0].mxu0
        %v602 = vadd.f32 0.0, %v601
        %v603 = vpop.f32.mrb[0].mxu0
        %v604 = vadd.f32 0.0, %v603
        %v605 = vpop.f32.mrb[0].mxu0
        %v606 = vadd.f32 0.0, %v605
        %607 = vmatprep.mubr.bf16.mxu0 0
        %608 = vmatmul.mubr.bf16.gmra.mrb[0].mxu0 %v321
        %v609 = vpop.f32.mrb[0].mxu0
        %v610 = vadd.f32 0.0, %v609
        %v611 = vpop.f32.mrb[0].mxu0
        %v612 = vadd.f32 0.0, %v611
        %v613 = vpop.f32.mrb[0].mxu0
        %v614 = vadd.f32 0.0, %v613
        %v615 = vpop.f32.mrb[0].mxu0
        %v616 = vadd.f32 0.0, %v615
        %617 = vmatprep.mubr.bf16.mxu0 0
        %618 = vmatmul.mubr.bf16.gmra.mrb[0].mxu0 %v322
        %v619 = vpop.f32.mrb[0].mxu0
        %v620 = vadd.f32 0.0, %v619
        %v621 = vpop.f32.mrb[0].mxu0
        %v622 = vadd.f32 0.0, %v621
        %v623 = vpop.f32.mrb[0].mxu0
        %v624 = vadd.f32 0.0, %v623
        %v625 = vpop.f32.mrb[0].mxu0
        %v626 = vadd.f32 0.0, %v625
        %627 = vdwg.mxu0
        %628 = vst [vmem:[%s163] sm:$0xff] %v470
        %629 = vst [vmem:[%s163 + $0x8] sm:$0xff] %v472
        %630 = vst [vmem:[%s163 + $0x10] sm:$0xff] %v474
        %631 = vst [vmem:[%s163 + $0x18] sm:$0xff] %v476
        %632 = vst [vmem:[%s163 + $0x20] sm:$0xff] %v480
        %633 = vst [vmem:[%s163 + $0x28] sm:$0xff] %v482
        %634 = vst [vmem:[%s163 + $0x30] sm:$0xff] %v484
        %635 = vst [vmem:[%s163 + $0x38] sm:$0xff] %v486
        %636 = vst [vmem:[%s163 + $0x40] sm:$0xff] %v490
        %637 = vst [vmem:[%s163 + $0x48] sm:$0xff] %v492
        %638 = vst [vmem:[%s163 + $0x50] sm:$0xff] %v494
        %639 = vst [vmem:[%s163 + $0x58] sm:$0xff] %v496
        %640 = vst [vmem:[%s163 + $0x60] sm:$0xff] %v500
        %641 = vst [vmem:[%s163 + $0x68] sm:$0xff] %v502
        %642 = vst [vmem:[%s163 + $0x70] sm:$0xff] %v504
        %643 = vst [vmem:[%s163 + $0x78] sm:$0xff] %v506
        %644 = vst [vmem:[%s163 + $0x80] sm:$0xff] %v510
        %645 = vst [vmem:[%s163 + $0x88] sm:$0xff] %v512
        %646 = vst [vmem:[%s163 + $0x90] sm:$0xff] %v514
        %647 = vst [vmem:[%s163 + $0x98] sm:$0xff] %v516
        %648 = vst [vmem:[%s163 + $0xa0] sm:$0xff] %v520
        %649 = vst [vmem:[%s163 + $0xa8] sm:$0xff] %v522
        %650 = vst [vmem:[%s163 + $0xb0] sm:$0xff] %v524
        %651 = vst [vmem:[%s163 + $0xb8] sm:$0xff] %v526
        %652 = vst [vmem:[%s163 + $0xc0] sm:$0xff] %v530
        %653 = vst [vmem:[%s163 + $0xc8] sm:$0xff] %v532
        %654 = vst [vmem:[%s163 + $0xd0] sm:$0xff] %v534
        %655 = vst [vmem:[%s163 + $0xd8] sm:$0xff] %v536
        %656 = vst [vmem:[%s163 + $0xe0] sm:$0xff] %v540
        %657 = vst [vmem:[%s163 + $0xe8] sm:$0xff] %v542
        %658 = vst [vmem:[%s163 + $0xf0] sm:$0xff] %v544
        %659 = vst [vmem:[%s163 + $0xf8] sm:$0xff] %v546
        %660 = vst [vmem:[%s163 + $0x100] sm:$0xff] %v550
        %661 = vst [vmem:[%s163 + $0x108] sm:$0xff] %v552
        %662 = vst [vmem:[%s163 + $0x110] sm:$0xff] %v554
        %663 = vst [vmem:[%s163 + $0x118] sm:$0xff] %v556
        %664 = vst [vmem:[%s163 + $0x120] sm:$0xff] %v560
        %665 = vst [vmem:[%s163 + $0x128] sm:$0xff] %v562
        %666 = vst [vmem:[%s163 + $0x130] sm:$0xff] %v564
        %667 = vst [vmem:[%s163 + $0x138] sm:$0xff] %v566
        %668 = vst [vmem:[%s163 + $0x140] sm:$0xff] %v570
        %669 = vst [vmem:[%s163 + $0x148] sm:$0xff] %v572
        %670 = vst [vmem:[%s163 + $0x150] sm:$0xff] %v574
        %671 = vst [vmem:[%s163 + $0x158] sm:$0xff] %v576
        %672 = vst [vmem:[%s163 + $0x160] sm:$0xff] %v580
        %673 = vst [vmem:[%s163 + $0x168] sm:$0xff] %v582
        %674 = vst [vmem:[%s163 + $0x170] sm:$0xff] %v584
        %675 = vst [vmem:[%s163 + $0x178] sm:$0xff] %v586
        %676 = vst [vmem:[%s163 + $0x180] sm:$0xff] %v590
        %677 = vst [vmem:[%s163 + $0x188] sm:$0xff] %v592
        %678 = vst [vmem:[%s163 + $0x190] sm:$0xff] %v594
        %679 = vst [vmem:[%s163 + $0x198] sm:$0xff] %v596
        %680 = vst [vmem:[%s163 + $0x1a0] sm:$0xff] %v600
        %681 = vst [vmem:[%s163 + $0x1a8] sm:$0xff] %v602
        %682 = vst [vmem:[%s163 + $0x1b0] sm:$0xff] %v604
        %683 = vst [vmem:[%s163 + $0x1b8] sm:$0xff] %v606
        %684 = vst [vmem:[%s163 + $0x1c0] sm:$0xff] %v610
        %685 = vst [vmem:[%s163 + $0x1c8] sm:$0xff] %v612
        %686 = vst [vmem:[%s163 + $0x1d0] sm:$0xff] %v614
        %687 = vst [vmem:[%s163 + $0x1d8] sm:$0xff] %v616
        %688 = vst [vmem:[%s163 + $0x1e0] sm:$0xff] %v620
        %689 = vst [vmem:[%s163 + $0x1e8] sm:$0xff] %v622
        %690 = vst [vmem:[%s163 + $0x1f0] sm:$0xff] %v624
        %691 = vst [vmem:[%s163 + $0x1f8] sm:$0xff] %v626
        %s692 = sand.u32 %s87, 1
        %s693 = sand.u32 %s87, 1
        %s694 = smul.addr %s693, 512
        %s695 = scalar_lea.vmem [#allocation2], %s694
        // Predicated region
        $region29: #{conad_forward.9} parent=27 // pred_check
          %p696 = pneg %p97
        $region30: #{conad_forward.9} parent=27 // pred_check_branch
          %698 = sbr.rel (%p696) target = $region32
        $region31: #{conad_forward.9} parent=27 // pred_region
          %s699 = smul.u32 32, %s17
          %s700 = smul.u32 2, %s18
          %s701 = smul.addr %s699, 4
          %s702 = sadd.s32 %s700, %s701
          %s703 = smul.addr %s702, 8
          %s704 = scalar_lea.vmem %s2, %s703
          // Predicated region
          $region33: #{conad_forward.9} parent=31 // pred_check
            _
          $region34: #{conad_forward.9} parent=31 // pred_check_branch
            %706 = sbr.rel (0) target = $region36
          $region35: #{conad_forward.9} parent=31 // pred_region
            // Predicated region
            $region37: #{conad_forward.9} parent=35 // pred_check
              _
            $region38: #{conad_forward.9} parent=35 // pred_check_branch
              %708 = sbr.rel (0) target = $region40
            $region39: #{conad_forward.9} parent=35 // pred_region
              loop: start=0, step=1, limit=1
              $region41: #{conad_forward.9} parent=39 // loop_pre_header
                _
              $region42: #{conad_forward.9} parent=39 // loop_header
                %s710 = sphi 0, %s714
                %p711 = scmp.ge.s32.totalorder %s710, 1
                %s715 = sphi %s695, %s695
                %s716 = sphi %s704, %s704
              $region43: #{conad_forward.9} parent=39 // loop_header_branch
                %713 = sbr.rel (%p711) target = $region47
              $region44: #{conad_forward.9} parent=39 // loop_body
                %v717 = vld [vmem:[%s715] sm:$0xff]
                %718 = vst [vmem:[%s716] sm:$0xff] %v717
                %v719 = vld [vmem:[%s715 + $0x8] sm:$0xff]
                %720 = vst [vmem:[%s716 + $0x8] sm:$0xff] %v719
                %v721 = vld [vmem:[%s715 + $0x10] sm:$0xff]
                %722 = vst [vmem:[%s716 + $0x20] sm:$0xff] %v721
                %v723 = vld [vmem:[%s715 + $0x18] sm:$0xff]
                %724 = vst [vmem:[%s716 + $0x28] sm:$0xff] %v723
                %v725 = vld [vmem:[%s715 + $0x20] sm:$0xff]
                %726 = vst [vmem:[%s716 + $0x40] sm:$0xff] %v725
                %v727 = vld [vmem:[%s715 + $0x28] sm:$0xff]
                %728 = vst [vmem:[%s716 + $0x48] sm:$0xff] %v727
                %v729 = vld [vmem:[%s715 + $0x30] sm:$0xff]
                %730 = vst [vmem:[%s716 + $0x60] sm:$0xff] %v729
                %v731 = vld [vmem:[%s715 + $0x38] sm:$0xff]
                %732 = vst [vmem:[%s716 + $0x68] sm:$0xff] %v731
                %v733 = vld [vmem:[%s715 + $0x40] sm:$0xff]
                %734 = vst [vmem:[%s716 + $0x80] sm:$0xff] %v733
                %v735 = vld [vmem:[%s715 + $0x48] sm:$0xff]
                %736 = vst [vmem:[%s716 + $0x88] sm:$0xff] %v735
                %v737 = vld [vmem:[%s715 + $0x50] sm:$0xff]
                %738 = vst [vmem:[%s716 + $0xa0] sm:$0xff] %v737
                %v739 = vld [vmem:[%s715 + $0x58] sm:$0xff]
                %740 = vst [vmem:[%s716 + $0xa8] sm:$0xff] %v739
                %v741 = vld [vmem:[%s715 + $0x60] sm:$0xff]
                %742 = vst [vmem:[%s716 + $0xc0] sm:$0xff] %v741
                %v743 = vld [vmem:[%s715 + $0x68] sm:$0xff]
                %744 = vst [vmem:[%s716 + $0xc8] sm:$0xff] %v743
                %v745 = vld [vmem:[%s715 + $0x70] sm:$0xff]
                %746 = vst [vmem:[%s716 + $0xe0] sm:$0xff] %v745
                %v747 = vld [vmem:[%s715 + $0x78] sm:$0xff]
                %748 = vst [vmem:[%s716 + $0xe8] sm:$0xff] %v747
                %v749 = vld [vmem:[%s715 + $0x80] sm:$0xff]
                %750 = vst [vmem:[%s716 + $0x100] sm:$0xff] %v749
                %v751 = vld [vmem:[%s715 + $0x88] sm:$0xff]
                %752 = vst [vmem:[%s716 + $0x108] sm:$0xff] %v751
                %v753 = vld [vmem:[%s715 + $0x90] sm:$0xff]
                %754 = vst [vmem:[%s716 + $0x120] sm:$0xff] %v753
                %v755 = vld [vmem:[%s715 + $0x98] sm:$0xff]
                %756 = vst [vmem:[%s716 + $0x128] sm:$0xff] %v755
                %v757 = vld [vmem:[%s715 + $0xa0] sm:$0xff]
                %758 = vst [vmem:[%s716 + $0x140] sm:$0xff] %v757
                %v759 = vld [vmem:[%s715 + $0xa8] sm:$0xff]
                %760 = vst [vmem:[%s716 + $0x148] sm:$0xff] %v759
                %v761 = vld [vmem:[%s715 + $0xb0] sm:$0xff]
                %762 = vst [vmem:[%s716 + $0x160] sm:$0xff] %v761
                %v763 = vld [vmem:[%s715 + $0xb8] sm:$0xff]
                %764 = vst [vmem:[%s716 + $0x168] sm:$0xff] %v763
                %v765 = vld [vmem:[%s715 + $0xc0] sm:$0xff]
                %766 = vst [vmem:[%s716 + $0x180] sm:$0xff] %v765
                %v767 = vld [vmem:[%s715 + $0xc8] sm:$0xff]
                %768 = vst [vmem:[%s716 + $0x188] sm:$0xff] %v767
                %v769 = vld [vmem:[%s715 + $0xd0] sm:$0xff]
                %770 = vst [vmem:[%s716 + $0x1a0] sm:$0xff] %v769
                %v771 = vld [vmem:[%s715 + $0xd8] sm:$0xff]
                %772 = vst [vmem:[%s716 + $0x1a8] sm:$0xff] %v771
                %v773 = vld [vmem:[%s715 + $0xe0] sm:$0xff]
                %774 = vst [vmem:[%s716 + $0x1c0] sm:$0xff] %v773
                %v775 = vld [vmem:[%s715 + $0xe8] sm:$0xff]
                %776 = vst [vmem:[%s716 + $0x1c8] sm:$0xff] %v775
                %v777 = vld [vmem:[%s715 + $0xf0] sm:$0xff]
                %778 = vst [vmem:[%s716 + $0x1e0] sm:$0xff] %v777
                %v779 = vld [vmem:[%s715 + $0xf8] sm:$0xff]
                %780 = vst [vmem:[%s716 + $0x1e8] sm:$0xff] %v779
                %v781 = vld [vmem:[%s715 + $0x100] sm:$0xff]
                %782 = vst [vmem:[%s716 + $0x200] sm:$0xff] %v781
                %v783 = vld [vmem:[%s715 + $0x108] sm:$0xff]
                %784 = vst [vmem:[%s716 + $0x208] sm:$0xff] %v783
                %v785 = vld [vmem:[%s715 + $0x110] sm:$0xff]
                %786 = vst [vmem:[%s716 + $0x220] sm:$0xff] %v785
                %v787 = vld [vmem:[%s715 + $0x118] sm:$0xff]
                %788 = vst [vmem:[%s716 + $0x228] sm:$0xff] %v787
                %v789 = vld [vmem:[%s715 + $0x120] sm:$0xff]
                %790 = vst [vmem:[%s716 + $0x240] sm:$0xff] %v789
                %v791 = vld [vmem:[%s715 + $0x128] sm:$0xff]
                %792 = vst [vmem:[%s716 + $0x248] sm:$0xff] %v791
                %v793 = vld [vmem:[%s715 + $0x130] sm:$0xff]
                %794 = vst [vmem:[%s716 + $0x260] sm:$0xff] %v793
                %v795 = vld [vmem:[%s715 + $0x138] sm:$0xff]
                %796 = vst [vmem:[%s716 + $0x268] sm:$0xff] %v795
                %v797 = vld [vmem:[%s715 + $0x140] sm:$0xff]
                %798 = vst [vmem:[%s716 + $0x280] sm:$0xff] %v797
                %v799 = vld [vmem:[%s715 + $0x148] sm:$0xff]
                %800 = vst [vmem:[%s716 + $0x288] sm:$0xff] %v799
                %v801 = vld [vmem:[%s715 + $0x150] sm:$0xff]
                %802 = vst [vmem:[%s716 + $0x2a0] sm:$0xff] %v801
                %v803 = vld [vmem:[%s715 + $0x158] sm:$0xff]
                %804 = vst [vmem:[%s716 + $0x2a8] sm:$0xff] %v803
                %v805 = vld [vmem:[%s715 + $0x160] sm:$0xff]
                %806 = vst [vmem:[%s716 + $0x2c0] sm:$0xff] %v805
                %v807 = vld [vmem:[%s715 + $0x168] sm:$0xff]
                %808 = vst [vmem:[%s716 + $0x2c8] sm:$0xff] %v807
                %v809 = vld [vmem:[%s715 + $0x170] sm:$0xff]
                %810 = vst [vmem:[%s716 + $0x2e0] sm:$0xff] %v809
                %v811 = vld [vmem:[%s715 + $0x178] sm:$0xff]
                %812 = vst [vmem:[%s716 + $0x2e8] sm:$0xff] %v811
                %v813 = vld [vmem:[%s715 + $0x180] sm:$0xff]
                %814 = vst [vmem:[%s716 + $0x300] sm:$0xff] %v813
                %v815 = vld [vmem:[%s715 + $0x188] sm:$0xff]
                %816 = vst [vmem:[%s716 + $0x308] sm:$0xff] %v815
                %v817 = vld [vmem:[%s715 + $0x190] sm:$0xff]
                %818 = vst [vmem:[%s716 + $0x320] sm:$0xff] %v817
                %v819 = vld [vmem:[%s715 + $0x198] sm:$0xff]
                %820 = vst [vmem:[%s716 + $0x328] sm:$0xff] %v819
                %v821 = vld [vmem:[%s715 + $0x1a0] sm:$0xff]
                %822 = vst [vmem:[%s716 + $0x340] sm:$0xff] %v821
                %v823 = vld [vmem:[%s715 + $0x1a8] sm:$0xff]
                %824 = vst [vmem:[%s716 + $0x348] sm:$0xff] %v823
                %v825 = vld [vmem:[%s715 + $0x1b0] sm:$0xff]
                %826 = vst [vmem:[%s716 + $0x360] sm:$0xff] %v825
                %v827 = vld [vmem:[%s715 + $0x1b8] sm:$0xff]
                %828 = vst [vmem:[%s716 + $0x368] sm:$0xff] %v827
                %v829 = vld [vmem:[%s715 + $0x1c0] sm:$0xff]
                %830 = vst [vmem:[%s716 + $0x380] sm:$0xff] %v829
                %v831 = vld [vmem:[%s715 + $0x1c8] sm:$0xff]
                %832 = vst [vmem:[%s716 + $0x388] sm:$0xff] %v831
                %v833 = vld [vmem:[%s715 + $0x1d0] sm:$0xff]
                %834 = vst [vmem:[%s716 + $0x3a0] sm:$0xff] %v833
                %v835 = vld [vmem:[%s715 + $0x1d8] sm:$0xff]
                %836 = vst [vmem:[%s716 + $0x3a8] sm:$0xff] %v835
                %v837 = vld [vmem:[%s715 + $0x1e0] sm:$0xff]
                %838 = vst [vmem:[%s716 + $0x3c0] sm:$0xff] %v837
                %v839 = vld [vmem:[%s715 + $0x1e8] sm:$0xff]
                %840 = vst [vmem:[%s716 + $0x3c8] sm:$0xff] %v839
                %v841 = vld [vmem:[%s715 + $0x1f0] sm:$0xff]
                %842 = vst [vmem:[%s716 + $0x3e0] sm:$0xff] %v841
                %v843 = vld [vmem:[%s715 + $0x1f8] sm:$0xff]
                %844 = vst [vmem:[%s716 + $0x3e8] sm:$0xff] %v843
              $region45: #{conad_forward.9} parent=39 // loop_footer
                %s714 = sadd.s32 1, %s710
              $region46: #{conad_forward.9} parent=39 // loop_footer_branch
                %709 = sbr.rel target = $region42
              $region47: #{conad_forward.9} parent=39 // loop_exit
                _
            $region40: #{conad_forward.9} parent=35 // pred_fallthru
              _
            // Predicated region
            $region48: #{conad_forward.9} parent=35 // pred_check
              _
            $region49: #{conad_forward.9} parent=35 // pred_check_branch
              %846 = sbr.rel target = $region51
            $region50: #{conad_forward.9} parent=35 // pred_region
              _
            $region51: #{conad_forward.9} parent=35 // pred_fallthru
              _
          $region36: #{conad_forward.9} parent=31 // pred_fallthru
            _
          %847 = vnop
        $region32: #{conad_forward.9} parent=27 // pred_fallthru
          _
      $region28: #{conad_forward.9} parent=5 // pred_fallthru
        _
      %p848 = scmp.le.s32.totalorder 2, %s8
      // Predicated region
      $region52: #{conad_forward.9} parent=5 // pred_check
        %p849 = pneg %p848
      $region53: #{conad_forward.9} parent=5 // pred_check_branch
        %851 = sbr.rel (%p849) target = $region55
      $region54: #{conad_forward.9} parent=5 // pred_region
        %s852 = ssub.s32 %s8, 2
        // Predicated region
        $region56: #{conad_forward.9} parent=54 // pred_check
          %p853 = pneg %p103
        $region57: #{conad_forward.9} parent=54 // pred_check_branch
          %855 = sbr.rel (%p853) target = $region59
        $region58: #{conad_forward.9} parent=54 // pred_region
          %s856 = sand.u32 %s88, 1
          %s857 = sand.u32 %s88, 1
          %s858 = smul.addr %s857, 512
          %s859 = scalar_lea.vmem [#allocation2], %s858
        $region59: #{conad_forward.9} parent=54 // pred_fallthru
          _
      $region55: #{conad_forward.9} parent=5 // pred_fallthru
        _
    $region6: #{conad_forward.9} parent=1 // loop_footer
      %s12 = sadd.s32 1, %s8
    $region7: #{conad_forward.9} parent=1 // loop_footer_branch
      %7 = sbr.rel target = $region3
    $region8: #{conad_forward.9} parent=1 // loop_exit
      _

</llo_original>
